<compile_context>
chip_gen: v5e
topology: v5e:2x2
jax: 0.10.0
libtpu: 0.0.40
codegen_flags: <defaults>
</compile_context>

<pallas_src>
import functools
import math

import jax
import jax.numpy as jnp
from jax.experimental import pallas as pl
from jax.experimental.pallas import tpu as pltpu


LAT_PAD = 128  # encoder latents are zero-padded to a full 128-lane slab


# ----------------------------------------------------------------------------
# Plain-JAX reference convs (used ONLY at parameter-prep time and for the
# in-script correctness check; not part of the per-forward hot path).
# ----------------------------------------------------------------------------
_HI = jax.lax.Precision.HIGHEST


def _im2col(x, k, stride, pad):
    """x: (N, C, H, W) -> patches (N*Ho*Wo, C*k*k), plus (Ho, Wo)."""
    n, c, h, w = x.shape
    xp = jnp.pad(x, ((0, 0), (0, 0), (pad, pad), (pad, pad)))
    ho = (h + 2 * pad - k) // stride + 1
    wo = (w + 2 * pad - k) // stride + 1
    cols = []
    for i in range(k):
        for j in range(k):
            cols.append(xp[:, :, i:i + stride * ho:stride, j:j + stride * wo:stride])
    patches = jnp.stack(cols, axis=2).reshape(n, c * k * k, ho, wo)
    patches = patches.transpose(0, 2, 3, 1).reshape(n * ho * wo, c * k * k)
    return patches, ho, wo


def _conv2d_ref(x, weight, stride, pad):
    """PyTorch-style Conv2d (no bias). x: (N,Cin,H,W); weight: (Cout,Cin,k,k)."""
    c_out, c_in, k, _ = weight.shape
    n = x.shape[0]
    patches, ho, wo = _im2col(x, k, stride, pad)
    out = jnp.dot(patches, weight.reshape(c_out, -1).T, precision=_HI)
    return out.reshape(n, ho, wo, c_out).transpose(0, 3, 1, 2)


def _conv_transpose2d_ref(x, weight, stride, pad, out_pad):
    """PyTorch-style ConvTranspose2d (no bias). weight: (Cin,Cout,k,k)."""
    c_in, c_out, k, _ = weight.shape
    n, _, h, w = x.shape
    hd, wd = (h - 1) * stride + 1, (w - 1) * stride + 1
    xd = jnp.zeros((n, c_in, hd, wd), x.dtype).at[:, :, ::stride, ::stride].set(x)
    lo, hi = k - 1 - pad, k - 1 - pad + out_pad
    xp = jnp.pad(xd, ((0, 0), (0, 0), (lo, hi), (lo, hi)))
    w_eq = jnp.flip(weight, axis=(2, 3)).transpose(1, 0, 2, 3)  # (Cout,Cin,k,k)
    return _conv2d_ref(xp, w_eq, stride=1, pad=0)


# ----------------------------------------------------------------------------
# One-time parameter lowering: conv -> dense operator matrix (Toeplitz form).
# y_flat = x_flat @ W_mat + b_vec   with NCHW flatten order on both sides.
# ----------------------------------------------------------------------------
def _conv_as_matrix(weight, bias, h, w, stride, pad):
    c_out, c_in, k, _ = weight.shape
    basis = jnp.eye(c_in * h * w, dtype=jnp.float32).reshape(c_in * h * w, c_in, h, w)
    resp = _conv2d_ref(basis, weight, stride, pad)          # (Cin*h*w, Cout, Ho, Wo)
    ho, wo = resp.shape[2], resp.shape[3]
    w_mat = resp.reshape(c_in * h * w, c_out * ho * wo)
    b_vec = jnp.broadcast_to(bias[:, None], (c_out, ho * wo)).reshape(1, c_out * ho * wo)
    return w_mat, b_vec, (c_out, ho, wo)


def _convT_as_matrix(weight, bias, h, w, stride, pad, out_pad):
    c_in, c_out, k, _ = weight.shape
    basis = jnp.eye(c_in * h * w, dtype=jnp.float32).reshape(c_in * h * w, c_in, h, w)
    resp = _conv_transpose2d_ref(basis, weight, stride, pad, out_pad)
    ho, wo = resp.shape[2], resp.shape[3]
    w_mat = resp.reshape(c_in * h * w, c_out * ho * wo)
    b_vec = jnp.broadcast_to(bias[:, None], (c_out, ho * wo)).reshape(1, c_out * ho * wo)
    return w_mat, b_vec, (c_out, ho, wo)


def lower_params(params, H, W, what_latent_dim, where_latent_dim):
    """Done once, outside jit: reshapes/transposes/padding/casts hoisted to prep.

    Weight matrices -> bf16 (halves the per-call HBM weight stream, the kernel's
    binding resource).  Biases stay f32 (added after the f32 MXU accumulation).
    Encoder FC weights/biases are zero-padded to 128 output lanes so latent
    stores are lane-dense; the decoder FC halves are padded to 128 input rows
    to match (the padded lanes are exactly zero, so semantics are unchanged).
    """
    assert what_latent_dim <= LAT_PAD and where_latent_dim <= LAT_PAD

    def lower_encoder(p, latent_dim):
        w1m, b1v, (_, h1, w1sp) = _conv_as_matrix(p["conv1_w"], p["conv1_b"], H, W, 2, 1)
        w2m, b2v, _ = _conv_as_matrix(p["conv2_w"], p["conv2_b"], h1, w1sp, 2, 1)
        wfc = p["fc_w"].T                                     # (256, latent)
        wfc_pad = jnp.zeros((wfc.shape[0], LAT_PAD), jnp.float32).at[:, :latent_dim].set(wfc)
        bfc_pad = jnp.zeros((1, LAT_PAD), jnp.float32).at[0, :latent_dim].set(p["fc_b"])
        return {"w1": w1m.astype(jnp.bfloat16), "b1": b1v,
                "w2": w2m.astype(jnp.bfloat16), "b2": b2v,
                "wfc": wfc_pad.astype(jnp.bfloat16), "bfc": bfc_pad}

    pd = params["decoder"]
    wfc = pd["fc_w"].T                                        # (Lw+Lp, 256)
    wfc_id = jnp.zeros((LAT_PAD, wfc.shape[1]), jnp.float32)
    wfc_id = wfc_id.at[:what_latent_dim].set(wfc[:what_latent_dim])
    wfc_pos = jnp.zeros((LAT_PAD, wfc.shape[1]), jnp.float32)
    wfc_pos = wfc_pos.at[:where_latent_dim].set(wfc[what_latent_dim:])
    wd1m, bd1v, (_, h1, w1sp) = _convT_as_matrix(pd["deconv1_w"], pd["deconv1_b"], 4, 4, 2, 1, 1)
    wd2m, bd2v, _ = _convT_as_matrix(pd["deconv2_w"], pd["deconv2_b"], h1, w1sp, 2, 1, 1)
    dec = {"wfc_id": wfc_id.astype(jnp.bfloat16),
           "wfc_pos": wfc_pos.astype(jnp.bfloat16),
           "bfc": pd["fc_b"].reshape(1, -1),
           "w1": wd1m.astype(jnp.bfloat16), "b1": bd1v,
           "w2": wd2m.astype(jnp.bfloat16), "b2": bd2v}
    return {"what": lower_encoder(params["what_encoder"], what_latent_dim),
            "where": lower_encoder(params["where_encoder"], where_latent_dim),
            "dec": dec}


# ----------------------------------------------------------------------------
# The single fused Pallas kernel: all layers as VMEM-resident MXU matmuls.
# bf16 weight stream + bf16 activation inputs, f32 accumulation, f32 biases.
# ----------------------------------------------------------------------------
def _fused_forward_kernel(
        f1_ref, f2_ref,
        ew1, eb1, ew2, eb2, ewfc, ebfc,          # what encoder
        pw1, pb1, pw2, pb2, pwfc, pbfc,          # where encoder
        dfc_id, dfc_pos, dfc_b, dw1, db1, dw2, db2,   # decoder
        x_out_ref, z_what_ref, z_pos_ref):

    def dense(a, w_ref, b_ref):
        return jnp.dot(a.astype(jnp.bfloat16), w_ref[...],
                       preferred_element_type=jnp.float32) + b_ref[...]

    # --- what-encoder, applied to both frames (weights loaded into VMEM once) ---
    def what_encode(x):
        h = jnp.maximum(dense(x, ew1, eb1), 0.0)             # (B, 512)
        h = jnp.maximum(dense(h, ew2, eb2), 0.0)             # (B, 256)
        return dense(h, ewfc, ebfc)                          # (B, 128) lane-padded

    z_id1 = what_encode(f1_ref[...])
    z_id2 = what_encode(f2_ref[...])
    z_what_ref[0] = z_id1                                    # (2, B, 128) output slab
    z_what_ref[1] = z_id2

    # --- where-encoder on frame1 ---
    g = jnp.maximum(dense(f1_ref[...], pw1, pb1), 0.0)       # (B, 512)
    g = jnp.maximum(dense(g, pw2, pb2), 0.0)                 # (B, 256)
    z_pos = dense(g, pwfc, pbfc)                             # (B, 128) lane-padded
    z_pos_ref[...] = z_pos

    # --- decoder on concat(z_id1, z_pos): folded into split-K matmuls ---
    d = (jnp.dot(z_id1.astype(jnp.bfloat16), dfc_id[...],
                 preferred_element_type=jnp.float32)
         + jnp.dot(z_pos.astype(jnp.bfloat16), dfc_pos[...],
                   preferred_element_type=jnp.float32)
         + dfc_b[...])
    d = jnp.maximum(d, 0.0)                                  # (B, 256)
    d = jnp.maximum(dense(d, dw1, db1), 0.0)                 # (B, 512)
    x_out_ref[...] = jax.nn.sigmoid(dense(d, dw2, db2))      # (B, 1024) lane-dense


def _fused_forward_call(lw, f1, f2):
    b, feat = f1.shape
    lat_pad = lw["what"]["wfc"].shape[1]                     # 128
    out_feat = lw["dec"]["w2"].shape[1]                      # 1024

    inputs = (f1, f2,
              lw["what"]["w1"], lw["what"]["b1"], lw["what"]["w2"], lw["what"]["b2"],
              lw["what"]["wfc"], lw["what"]["bfc"],
              lw["where"]["w1"], lw["where"]["b1"], lw["where"]["w2"], lw["where"]["b2"],
              lw["where"]["wfc"], lw["where"]["bfc"],
              lw["dec"]["wfc_id"], lw["dec"]["wfc_pos"], lw["dec"]["bfc"],
              lw["dec"]["w1"], lw["dec"]["b1"], lw["dec"]["w2"], lw["dec"]["b2"])

    out_shape = (jax.ShapeDtypeStruct((b, out_feat), jnp.float32),
                 jax.ShapeDtypeStruct((2, b, lat_pad), jnp.float32),
                 jax.ShapeDtypeStruct((b, lat_pad), jnp.float32))

    # Advisory cost estimate so XLA schedules/overlaps this latency-bound call.
    n1 = lw["what"]["w1"].shape[1]
    n2 = lw["what"]["w2"].shape[1]
    matmul_dims = (
        [(b, feat, n1), (b, n1, n2), (b, n2, lat_pad)] * 2            # what enc x2
        + [(b, feat, n1), (b, n1, n2), (b, n2, lat_pad)]              # where enc
        + [(b, lat_pad, lw["dec"]["wfc_id"].shape[1])] * 2            # dec fc split-K
        + [(b, lw["dec"]["w1"].shape[0], lw["dec"]["w1"].shape[1]),
           (b, lw["dec"]["w2"].shape[0], lw["dec"]["w2"].shape[1])])
    flops = int(sum(2 * m * k * n for (m, k, n) in matmul_dims))
    bytes_accessed = int(sum(int(a.size) * a.dtype.itemsize for a in inputs)
                         + sum(math.prod(s.shape) for s in out_shape) * 4)

    # No grid: single invocation, every operand fully resident in VMEM with no
    # pointless double-buffering (bf16 weights ~4 MB, well under the 16 MiB cap).
    vmem = lambda: pl.BlockSpec(memory_space=pltpu.MemorySpace.VMEM)
    return pl.pallas_call(
        _fused_forward_kernel,
        out_shape=out_shape,
        in_specs=[vmem() for _ in inputs],
        out_specs=tuple(vmem() for _ in out_shape),
        compiler_params=pltpu.CompilerParams(vmem_limit_bytes=16 * 1024 * 1024),
        cost_estimate=pl.CostEstimate(flops=flops,
                                      transcendentals=int(b * out_feat),
                                      bytes_accessed=bytes_accessed),
    )(*inputs)


def inertial_autoencoder_forward(lowered, frame1, frame2, *,
                                 what_latent_dim, where_latent_dim):
    """Mirrors InertialAutoencoder.forward: returns (x, z_id1, z_id2, z_pos).

    Works for any batch B; feeding larger minibatches through one call amortizes
    the per-call weight stream (the dominant cost) almost for free.
    """
    b = frame1.shape[0]
    feat = frame1.shape[1] * frame1.shape[2] * frame1.shape[3]
    f1 = frame1.reshape(b, feat)                 # NCHW flatten (free reshape)
    f2 = frame2.reshape(b, feat)
    x_flat, z_what_pad, z_pos_pad = _fused_forward_call(lowered, f1, f2)
    z_id1 = z_what_pad[0, :, :what_latent_dim]
    z_id2 = z_what_pad[1, :, :what_latent_dim]
    z_pos = z_pos_pad[:, :where_latent_dim]
    x = x_flat.reshape(frame1.shape)
    return x, z_id1, z_id2, z_pos


# ----------------------------------------------------------------------------
# Deterministic parameter construction (PyTorch layouts).
# ----------------------------------------------------------------------------
def _init(key, shape, scale=0.1):
    return scale * jax.random.normal(key, shape, dtype=jnp.float32)


def init_encoder_params(key, in_ch, latent_dim):
    ks = jax.random.split(key, 6)
    return {
        "conv1_w": _init(ks[0], (8, in_ch, 3, 3)),
        "conv1_b": _init(ks[1], (8,)),
        "conv2_w": _init(ks[2], (16, 8, 3, 3)),
        "conv2_b": _init(ks[3], (16,)),
        "fc_w": _init(ks[4], (latent_dim, 16 * 4 * 4)),   # PyTorch Linear: (out, in)
        "fc_b": _init(ks[5], (latent_dim,)),
    }


def init_decoder_params(key, latent_dim, out_ch):
    ks = jax.random.split(key, 6)
    return {
        "fc_w": _init(ks[0], (16 * 4 * 4, latent_dim)),
        "fc_b": _init(ks[1], (16 * 4 * 4,)),
        "deconv1_w": _init(ks[2], (16, 8, 3, 3)),          # ConvTranspose2d: (Cin, Cout, k, k)
        "deconv1_b": _init(ks[3], (8,)),
        "deconv2_w": _init(ks[4], (8, out_ch, 3, 3)),
        "deconv2_b": _init(ks[5], (out_ch,)),
    }


# ----------------------------------------------------------------------------
# References for the correctness checks.
# ----------------------------------------------------------------------------
def reference_forward(params, frame1, frame2):
    """Full-precision (f32, HIGHEST) reference of the module forward."""
    def enc(p, x):
        h = _conv2d_ref(x, p["conv1_w"], 2, 1) + p["conv1_b"][None, :, None, None]
        h = jnp.maximum(h, 0.0)
        h = _conv2d_ref(h, p["conv2_w"], 2, 1) + p["conv2_b"][None, :, None, None]
        h = jnp.maximum(h, 0.0)
        h = h.reshape(h.shape[0], -1)
        return jnp.dot(h, p["fc_w"].T, precision=_HI) + p["fc_b"]

    def dec(p, z):
        h = jnp.maximum(jnp.dot(z, p["fc_w"].T, precision=_HI) + p["fc_b"], 0.0)
        h = h.reshape(-1, 16, 4, 4)
        h = _conv_transpose2d_ref(h, p["deconv1_w"], 2, 1, 1) + p["deconv1_b"][None, :, None, None]
        h = jnp.maximum(h, 0.0)
        h = _conv_transpose2d_ref(h, p["deconv2_w"], 2, 1, 1) + p["deconv2_b"][None, :, None, None]
        return jax.nn.sigmoid(h)

    z_id1 = enc(params["what_encoder"], frame1)
    z_id2 = enc(params["what_encoder"], frame2)
    z_pos = enc(params["where_encoder"], frame1)
    x = dec(params["decoder"], jnp.concatenate((z_id1, z_pos), axis=1))
    return x, z_id1, z_id2, z_pos


def lowered_reference_forward(lw, frame1, frame2, what_dim, where_dim):
    """Plain-jnp emulation of the kernel's exact mixed-precision math."""
    b = frame1.shape[0]
    f1 = frame1.reshape(b, -1)
    f2 = frame2.reshape(b, -1)

    def dense(a, w, bias):
        return jnp.dot(a.astype(jnp.bfloat16), w,
                       preferred_element_type=jnp.float32) + bias

    def enc(p, x):
        h = jnp.maximum(dense(x, p["w1"], p["b1"]), 0.0)
        h = jnp.maximum(dense(h, p["w2"], p["b2"]), 0.0)
        return dense(h, p["wfc"], p["bfc"])

    z1 = enc(lw["what"], f1)
    z2 = enc(lw["what"], f2)
    zp = enc(lw["where"], f1)
    d = (jnp.dot(z1.astype(jnp.bfloat16), lw["dec"]["wfc_id"],
                 preferred_element_type=jnp.float32)
         + jnp.dot(zp.astype(jnp.bfloat16), lw["dec"]["wfc_pos"],
                   preferred_element_type=jnp.float32)
         + lw["dec"]["bfc"])
    d = jnp.maximum(d, 0.0)
    d = jnp.maximum(dense(d, lw["dec"]["w1"], lw["dec"]["b1"]), 0.0)
    x = jax.nn.sigmoid(dense(d, lw["dec"]["w2"], lw["dec"]["b2"]))
    return (x.reshape(frame1.shape), z1[:, :what_dim], z2[:, :what_dim], zp[:, :where_dim])


# TODO(synk): loss / Adam optimizer / fit / save / load are training
# infrastructure, not part of the forward pass, and are intentionally not translated.


if __name__ == "__main__":
    B, C, H, W = 2, 4, 16, 16
    what_latent_dim = 16
    where_latent_dim = 16

    root = jax.random.PRNGKey(0)
    k_what, k_where, k_dec, k_f1, k_f2 = jax.random.split(root, 5)

    params = {
        "what_encoder": init_encoder_params(k_what, C, what_latent_dim),
        "where_encoder": init_encoder_params(k_where, C, where_latent_dim),
        "decoder": init_decoder_params(k_dec, what_latent_dim + where_latent_dim, C),
    }

    frame1 = jax.random.uniform(k_f1, (B, C, H, W), dtype=jnp.float32)
    frame2 = jax.random.uniform(k_f2, (B, C, H, W), dtype=jnp.float32)

    # One-time lowering of conv weights to dense bf16 operator matrices (outside jit).
    lowered = jax.tree_util.tree_map(
        jax.block_until_ready,
        lower_params(params, H, W, what_latent_dim, where_latent_dim))

    fwd = jax.jit(inertial_autoencoder_forward,
                  static_argnames=("what_latent_dim", "where_latent_dim"))
    x, z_id1, z_id2, z_pos = fwd(lowered, frame1, frame2,
                                 what_latent_dim=what_latent_dim,
                                 where_latent_dim=where_latent_dim)
    jax.block_until_ready((x, z_id1, z_id2, z_pos))

    assert x.shape == (B, C, H, W)
    assert z_id1.shape == (B, what_latent_dim)
    assert z_id2.shape == (B, what_latent_dim)
    assert z_pos.shape == (B, where_latent_dim)

    # Check 1: kernel matches a plain-jnp emulation of its own mixed-precision
    # math (tight tolerance -> wiring / lowering correctness).
    mixed = lowered_reference_forward(lowered, frame1, frame2,
                                      what_latent_dim, where_latent_dim)
    for got, want in zip((x, z_id1, z_id2, z_pos), mixed):
        assert jnp.allclose(got, want, atol=2e-3, rtol=2e-3), \
            float(jnp.max(jnp.abs(got - want)))

    # Check 2: kernel matches the full-precision PyTorch-style reference.
    # Tolerance loosened vs the pure-f32 variant because weights are streamed
    # in bf16 (the recommended DMA-bytes optimization).
    refs = reference_forward(params, frame1, frame2)
    for got, want in zip((x, z_id1, z_id2, z_pos), refs):
        assert jnp.allclose(got, want, atol=3e-2, rtol=3e-2), \
            float(jnp.max(jnp.abs(got - want)))

    print("KERNEL_OK")
</pallas_src>

<mosaic_0001>
module attributes {stable_mosaic.version = 11 : i64} {
  func.func @_fused_forward_kernel(%arg0: memref<2x1024xf32, #tpu.memory_space<vmem>>, %arg1: memref<2x1024xf32, #tpu.memory_space<vmem>>, %arg2: memref<1024x512xbf16, #tpu.memory_space<vmem>>, %arg3: memref<1x512xf32, #tpu.memory_space<vmem>>, %arg4: memref<512x256xbf16, #tpu.memory_space<vmem>>, %arg5: memref<1x256xf32, #tpu.memory_space<vmem>>, %arg6: memref<256x128xbf16, #tpu.memory_space<vmem>>, %arg7: memref<1x128xf32, #tpu.memory_space<vmem>>, %arg8: memref<1024x512xbf16, #tpu.memory_space<vmem>>, %arg9: memref<1x512xf32, #tpu.memory_space<vmem>>, %arg10: memref<512x256xbf16, #tpu.memory_space<vmem>>, %arg11: memref<1x256xf32, #tpu.memory_space<vmem>>, %arg12: memref<256x128xbf16, #tpu.memory_space<vmem>>, %arg13: memref<1x128xf32, #tpu.memory_space<vmem>>, %arg14: memref<128x256xbf16, #tpu.memory_space<vmem>>, %arg15: memref<128x256xbf16, #tpu.memory_space<vmem>>, %arg16: memref<1x256xf32, #tpu.memory_space<vmem>>, %arg17: memref<256x512xbf16, #tpu.memory_space<vmem>>, %arg18: memref<1x512xf32, #tpu.memory_space<vmem>>, %arg19: memref<512x1024xbf16, #tpu.memory_space<vmem>>, %arg20: memref<1x1024xf32, #tpu.memory_space<vmem>>, %arg21: memref<2x1024xf32, #tpu.memory_space<vmem>>, %arg22: memref<2x2x128xf32, #tpu.memory_space<vmem>>, %arg23: memref<2x128xf32, #tpu.memory_space<vmem>>) attributes {dimension_semantics = [], scalar_prefetch = 0 : i64, scratch_operands = 0 : i64, tpu.core_type = #tpu.core_type<tc>} {
    %c0 = arith.constant 0 : index
    %c0_0 = arith.constant 0 : index
    %0 = vector.load %arg0[%c0, %c0_0] : memref<2x1024xf32, #tpu.memory_space<vmem>>, vector<2x1024xf32>
    %1 = arith.truncf %0 : vector<2x1024xf32> to vector<2x1024xbf16>
    %c0_1 = arith.constant 0 : index
    %c0_2 = arith.constant 0 : index
    %2 = vector.load %arg2[%c0_1, %c0_2] : memref<1024x512xbf16, #tpu.memory_space<vmem>>, vector<1024x512xbf16>
    %cst = arith.constant dense<0.000000e+00> : vector<2x512xf32>
    %3 = tpu.matmul %1, %2, %cst {dimension_numbers = #tpu.dot_dimension_numbers<[1], [0], [0], [1], [0, 0, 1, 1], [], []>} : vector<2x1024xbf16>, vector<1024x512xbf16>, vector<2x512xf32> -> vector<2x512xf32>
    %c0_3 = arith.constant 0 : index
    %c0_4 = arith.constant 0 : index
    %4 = vector.load %arg3[%c0_3, %c0_4] : memref<1x512xf32, #tpu.memory_space<vmem>>, vector<1x512xf32>
    %5 = vector.broadcast %4 : vector<1x512xf32> to vector<2x512xf32>
    %6 = arith.addf %3, %5 : vector<2x512xf32>
    %cst_5 = arith.constant 0.000000e+00 : f32
    %7 = vector.broadcast %cst_5 : f32 to vector<2x512xf32>
    %8 = arith.maximumf %6, %7 : vector<2x512xf32>
    %9 = arith.truncf %8 : vector<2x512xf32> to vector<2x512xbf16>
    %c0_6 = arith.constant 0 : index
    %c0_7 = arith.constant 0 : index
    %10 = vector.load %arg4[%c0_6, %c0_7] : memref<512x256xbf16, #tpu.memory_space<vmem>>, vector<512x256xbf16>
    %cst_8 = arith.constant dense<0.000000e+00> : vector<2x256xf32>
    %11 = tpu.matmul %9, %10, %cst_8 {dimension_numbers = #tpu.dot_dimension_numbers<[1], [0], [0], [1], [0, 0, 1, 1], [], []>} : vector<2x512xbf16>, vector<512x256xbf16>, vector<2x256xf32> -> vector<2x256xf32>
    %c0_9 = arith.constant 0 : index
    %c0_10 = arith.constant 0 : index
    %12 = vector.load %arg5[%c0_9, %c0_10] : memref<1x256xf32, #tpu.memory_space<vmem>>, vector<1x256xf32>
    %13 = vector.broadcast %12 : vector<1x256xf32> to vector<2x256xf32>
    %14 = arith.addf %11, %13 : vector<2x256xf32>
    %cst_11 = arith.constant 0.000000e+00 : f32
    %15 = vector.broadcast %cst_11 : f32 to vector<2x256xf32>
    %16 = arith.maximumf %14, %15 : vector<2x256xf32>
    %17 = arith.truncf %16 : vector<2x256xf32> to vector<2x256xbf16>
    %c0_12 = arith.constant 0 : index
    %c0_13 = arith.constant 0 : index
    %18 = vector.load %arg6[%c0_12, %c0_13] : memref<256x128xbf16, #tpu.memory_space<vmem>>, vector<256x128xbf16>
    %cst_14 = arith.constant dense<0.000000e+00> : vector<2x128xf32>
    %19 = tpu.matmul %17, %18, %cst_14 {dimension_numbers = #tpu.dot_dimension_numbers<[1], [0], [0], [1], [0, 0, 1, 1], [], []>} : vector<2x256xbf16>, vector<256x128xbf16>, vector<2x128xf32> -> vector<2x128xf32>
    %c0_15 = arith.constant 0 : index
    %c0_16 = arith.constant 0 : index
    %20 = vector.load %arg7[%c0_15, %c0_16] : memref<1x128xf32, #tpu.memory_space<vmem>>, vector<1x128xf32>
    %21 = vector.broadcast %20 : vector<1x128xf32> to vector<2x128xf32>
    %22 = arith.addf %19, %21 : vector<2x128xf32>
    %c0_17 = arith.constant 0 : index
    %c0_18 = arith.constant 0 : index
    %23 = vector.load %arg1[%c0_17, %c0_18] : memref<2x1024xf32, #tpu.memory_space<vmem>>, vector<2x1024xf32>
    %24 = arith.truncf %23 : vector<2x1024xf32> to vector<2x1024xbf16>
    %c0_19 = arith.constant 0 : index
    %c0_20 = arith.constant 0 : index
    %25 = vector.load %arg2[%c0_19, %c0_20] : memref<1024x512xbf16, #tpu.memory_space<vmem>>, vector<1024x512xbf16>
    %cst_21 = arith.constant dense<0.000000e+00> : vector<2x512xf32>
    %26 = tpu.matmul %24, %25, %cst_21 {dimension_numbers = #tpu.dot_dimension_numbers<[1], [0], [0], [1], [0, 0, 1, 1], [], []>} : vector<2x1024xbf16>, vector<1024x512xbf16>, vector<2x512xf32> -> vector<2x512xf32>
    %c0_22 = arith.constant 0 : index
    %c0_23 = arith.constant 0 : index
    %27 = vector.load %arg3[%c0_22, %c0_23] : memref<1x512xf32, #tpu.memory_space<vmem>>, vector<1x512xf32>
    %28 = vector.broadcast %27 : vector<1x512xf32> to vector<2x512xf32>
    %29 = arith.addf %26, %28 : vector<2x512xf32>
    %cst_24 = arith.constant 0.000000e+00 : f32
    %30 = vector.broadcast %cst_24 : f32 to vector<2x512xf32>
    %31 = arith.maximumf %29, %30 : vector<2x512xf32>
    %32 = arith.truncf %31 : vector<2x512xf32> to vector<2x512xbf16>
    %c0_25 = arith.constant 0 : index
    %c0_26 = arith.constant 0 : index
    %33 = vector.load %arg4[%c0_25, %c0_26] : memref<512x256xbf16, #tpu.memory_space<vmem>>, vector<512x256xbf16>
    %cst_27 = arith.constant dense<0.000000e+00> : vector<2x256xf32>
    %34 = tpu.matmul %32, %33, %cst_27 {dimension_numbers = #tpu.dot_dimension_numbers<[1], [0], [0], [1], [0, 0, 1, 1], [], []>} : vector<2x512xbf16>, vector<512x256xbf16>, vector<2x256xf32> -> vector<2x256xf32>
    %c0_28 = arith.constant 0 : index
    %c0_29 = arith.constant 0 : index
    %35 = vector.load %arg5[%c0_28, %c0_29] : memref<1x256xf32, #tpu.memory_space<vmem>>, vector<1x256xf32>
    %36 = vector.broadcast %35 : vector<1x256xf32> to vector<2x256xf32>
    %37 = arith.addf %34, %36 : vector<2x256xf32>
    %cst_30 = arith.constant 0.000000e+00 : f32
    %38 = vector.broadcast %cst_30 : f32 to vector<2x256xf32>
    %39 = arith.maximumf %37, %38 : vector<2x256xf32>
    %40 = arith.truncf %39 : vector<2x256xf32> to vector<2x256xbf16>
    %c0_31 = arith.constant 0 : index
    %c0_32 = arith.constant 0 : index
    %41 = vector.load %arg6[%c0_31, %c0_32] : memref<256x128xbf16, #tpu.memory_space<vmem>>, vector<256x128xbf16>
    %cst_33 = arith.constant dense<0.000000e+00> : vector<2x128xf32>
    %42 = tpu.matmul %40, %41, %cst_33 {dimension_numbers = #tpu.dot_dimension_numbers<[1], [0], [0], [1], [0, 0, 1, 1], [], []>} : vector<2x256xbf16>, vector<256x128xbf16>, vector<2x128xf32> -> vector<2x128xf32>
    %c0_34 = arith.constant 0 : index
    %c0_35 = arith.constant 0 : index
    %43 = vector.load %arg7[%c0_34, %c0_35] : memref<1x128xf32, #tpu.memory_space<vmem>>, vector<1x128xf32>
    %44 = vector.broadcast %43 : vector<1x128xf32> to vector<2x128xf32>
    %45 = arith.addf %42, %44 : vector<2x128xf32>
    %c0_36 = arith.constant 0 : index
    %c0_37 = arith.constant 0 : index
    %c0_38 = arith.constant 0 : index
    %46 = vector.load %arg22[%c0_36, %c0_37, %c0_38] : memref<2x2x128xf32, #tpu.memory_space<vmem>>, vector<1x2x128xf32>
    %47 = vector.shape_cast %46 : vector<1x2x128xf32> to vector<2x128xf32>
    %48 = vector.shape_cast %22 : vector<2x128xf32> to vector<1x2x128xf32>
    tpu.vector_store %arg22[%c0_36, %c0_37, %c0_38], %48 {strides = array<i32>} : memref<2x2x128xf32, #tpu.memory_space<vmem>>, vector<1x2x128xf32>,
    %c1 = arith.constant 1 : index
    %c0_39 = arith.constant 0 : index
    %c0_40 = arith.constant 0 : index
    %49 = vector.load %arg22[%c1, %c0_39, %c0_40] : memref<2x2x128xf32, #tpu.memory_space<vmem>>, vector<1x2x128xf32>
    %50 = vector.shape_cast %49 : vector<1x2x128xf32> to vector<2x128xf32>
    %51 = vector.shape_cast %45 : vector<2x128xf32> to vector<1x2x128xf32>
    tpu.vector_store %arg22[%c1, %c0_39, %c0_40], %51 {strides = array<i32>} : memref<2x2x128xf32, #tpu.memory_space<vmem>>, vector<1x2x128xf32>,
    %c0_41 = arith.constant 0 : index
    %c0_42 = arith.constant 0 : index
    %52 = vector.load %arg0[%c0_41, %c0_42] : memref<2x1024xf32, #tpu.memory_space<vmem>>, vector<2x1024xf32>
    %53 = arith.truncf %52 : vector<2x1024xf32> to vector<2x1024xbf16>
    %c0_43 = arith.constant 0 : index
    %c0_44 = arith.constant 0 : index
    %54 = vector.load %arg8[%c0_43, %c0_44] : memref<1024x512xbf16, #tpu.memory_space<vmem>>, vector<1024x512xbf16>
    %cst_45 = arith.constant dense<0.000000e+00> : vector<2x512xf32>
    %55 = tpu.matmul %53, %54, %cst_45 {dimension_numbers = #tpu.dot_dimension_numbers<[1], [0], [0], [1], [0, 0, 1, 1], [], []>} : vector<2x1024xbf16>, vector<1024x512xbf16>, vector<2x512xf32> -> vector<2x512xf32>
    %c0_46 = arith.constant 0 : index
    %c0_47 = arith.constant 0 : index
    %56 = vector.load %arg9[%c0_46, %c0_47] : memref<1x512xf32, #tpu.memory_space<vmem>>, vector<1x512xf32>
    %57 = vector.broadcast %56 : vector<1x512xf32> to vector<2x512xf32>
    %58 = arith.addf %55, %57 : vector<2x512xf32>
    %cst_48 = arith.constant 0.000000e+00 : f32
    %59 = vector.broadcast %cst_48 : f32 to vector<2x512xf32>
    %60 = arith.maximumf %58, %59 : vector<2x512xf32>
    %61 = arith.truncf %60 : vector<2x512xf32> to vector<2x512xbf16>
    %c0_49 = arith.constant 0 : index
    %c0_50 = arith.constant 0 : index
    %62 = vector.load %arg10[%c0_49, %c0_50] : memref<512x256xbf16, #tpu.memory_space<vmem>>, vector<512x256xbf16>
    %cst_51 = arith.constant dense<0.000000e+00> : vector<2x256xf32>
    %63 = tpu.matmul %61, %62, %cst_51 {dimension_numbers = #tpu.dot_dimension_numbers<[1], [0], [0], [1], [0, 0, 1, 1], [], []>} : vector<2x512xbf16>, vector<512x256xbf16>, vector<2x256xf32> -> vector<2x256xf32>
    %c0_52 = arith.constant 0 : index
    %c0_53 = arith.constant 0 : index
    %64 = vector.load %arg11[%c0_52, %c0_53] : memref<1x256xf32, #tpu.memory_space<vmem>>, vector<1x256xf32>
    %65 = vector.broadcast %64 : vector<1x256xf32> to vector<2x256xf32>
    %66 = arith.addf %63, %65 : vector<2x256xf32>
    %cst_54 = arith.constant 0.000000e+00 : f32
    %67 = vector.broadcast %cst_54 : f32 to vector<2x256xf32>
    %68 = arith.maximumf %66, %67 : vector<2x256xf32>
    %69 = arith.truncf %68 : vector<2x256xf32> to vector<2x256xbf16>
    %c0_55 = arith.constant 0 : index
    %c0_56 = arith.constant 0 : index
    %70 = vector.load %arg12[%c0_55, %c0_56] : memref<256x128xbf16, #tpu.memory_space<vmem>>, vector<256x128xbf16>
    %cst_57 = arith.constant dense<0.000000e+00> : vector<2x128xf32>
    %71 = tpu.matmul %69, %70, %cst_57 {dimension_numbers = #tpu.dot_dimension_numbers<[1], [0], [0], [1], [0, 0, 1, 1], [], []>} : vector<2x256xbf16>, vector<256x128xbf16>, vector<2x128xf32> -> vector<2x128xf32>
    %c0_58 = arith.constant 0 : index
    %c0_59 = arith.constant 0 : index
    %72 = vector.load %arg13[%c0_58, %c0_59] : memref<1x128xf32, #tpu.memory_space<vmem>>, vector<1x128xf32>
    %73 = vector.broadcast %72 : vector<1x128xf32> to vector<2x128xf32>
    %74 = arith.addf %71, %73 : vector<2x128xf32>
    %c0_60 = arith.constant 0 : index
    %c0_61 = arith.constant 0 : index
    %75 = vector.load %arg23[%c0_60, %c0_61] : memref<2x128xf32, #tpu.memory_space<vmem>>, vector<2x128xf32>
    tpu.vector_store %arg23[%c0_60, %c0_61], %74 {strides = array<i32>} : memref<2x128xf32, #tpu.memory_space<vmem>>, vector<2x128xf32>,
    %76 = arith.truncf %22 : vector<2x128xf32> to vector<2x128xbf16>
    %c0_62 = arith.constant 0 : index
    %c0_63 = arith.constant 0 : index
    %77 = vector.load %arg14[%c0_62, %c0_63] : memref<128x256xbf16, #tpu.memory_space<vmem>>, vector<128x256xbf16>
    %cst_64 = arith.constant dense<0.000000e+00> : vector<2x256xf32>
    %78 = tpu.matmul %76, %77, %cst_64 {dimension_numbers = #tpu.dot_dimension_numbers<[1], [0], [0], [1], [0, 0, 1, 1], [], []>} : vector<2x128xbf16>, vector<128x256xbf16>, vector<2x256xf32> -> vector<2x256xf32>
    %79 = arith.truncf %74 : vector<2x128xf32> to vector<2x128xbf16>
    %c0_65 = arith.constant 0 : index
    %c0_66 = arith.constant 0 : index
    %80 = vector.load %arg15[%c0_65, %c0_66] : memref<128x256xbf16, #tpu.memory_space<vmem>>, vector<128x256xbf16>
    %cst_67 = arith.constant dense<0.000000e+00> : vector<2x256xf32>
    %81 = tpu.matmul %79, %80, %cst_67 {dimension_numbers = #tpu.dot_dimension_numbers<[1], [0], [0], [1], [0, 0, 1, 1], [], []>} : vector<2x128xbf16>, vector<128x256xbf16>, vector<2x256xf32> -> vector<2x256xf32>
    %82 = arith.addf %78, %81 : vector<2x256xf32>
    %c0_68 = arith.constant 0 : index
    %c0_69 = arith.constant 0 : index
    %83 = vector.load %arg16[%c0_68, %c0_69] : memref<1x256xf32, #tpu.memory_space<vmem>>, vector<1x256xf32>
    %84 = vector.broadcast %83 : vector<1x256xf32> to vector<2x256xf32>
    %85 = arith.addf %82, %84 : vector<2x256xf32>
    %cst_70 = arith.constant 0.000000e+00 : f32
    %86 = vector.broadcast %cst_70 : f32 to vector<2x256xf32>
    %87 = arith.maximumf %85, %86 : vector<2x256xf32>
    %88 = arith.truncf %87 : vector<2x256xf32> to vector<2x256xbf16>
    %c0_71 = arith.constant 0 : index
    %c0_72 = arith.constant 0 : index
    %89 = vector.load %arg17[%c0_71, %c0_72] : memref<256x512xbf16, #tpu.memory_space<vmem>>, vector<256x512xbf16>
    %cst_73 = arith.constant dense<0.000000e+00> : vector<2x512xf32>
    %90 = tpu.matmul %88, %89, %cst_73 {dimension_numbers = #tpu.dot_dimension_numbers<[1], [0], [0], [1], [0, 0, 1, 1], [], []>} : vector<2x256xbf16>, vector<256x512xbf16>, vector<2x512xf32> -> vector<2x512xf32>
    %c0_74 = arith.constant 0 : index
    %c0_75 = arith.constant 0 : index
    %91 = vector.load %arg18[%c0_74, %c0_75] : memref<1x512xf32, #tpu.memory_space<vmem>>, vector<1x512xf32>
    %92 = vector.broadcast %91 : vector<1x512xf32> to vector<2x512xf32>
    %93 = arith.addf %90, %92 : vector<2x512xf32>
    %cst_76 = arith.constant 0.000000e+00 : f32
    %94 = vector.broadcast %cst_76 : f32 to vector<2x512xf32>
    %95 = arith.maximumf %93, %94 : vector<2x512xf32>
    %96 = arith.truncf %95 : vector<2x512xf32> to vector<2x512xbf16>
    %c0_77 = arith.constant 0 : index
    %c0_78 = arith.constant 0 : index
    %97 = vector.load %arg19[%c0_77, %c0_78] : memref<512x1024xbf16, #tpu.memory_space<vmem>>, vector<512x1024xbf16>
    %cst_79 = arith.constant dense<0.000000e+00> : vector<2x1024xf32>
    %98 = tpu.matmul %96, %97, %cst_79 {dimension_numbers = #tpu.dot_dimension_numbers<[1], [0], [0], [1], [0, 0, 1, 1], [], []>} : vector<2x512xbf16>, vector<512x1024xbf16>, vector<2x1024xf32> -> vector<2x1024xf32>
    %c0_80 = arith.constant 0 : index
    %c0_81 = arith.constant 0 : index
    %99 = vector.load %arg20[%c0_80, %c0_81] : memref<1x1024xf32, #tpu.memory_space<vmem>>, vector<1x1024xf32>
    %100 = vector.broadcast %99 : vector<1x1024xf32> to vector<2x1024xf32>
    %101 = arith.addf %98, %100 : vector<2x1024xf32>
    %102 = arith.negf %101 : vector<2x1024xf32>
    %103 = math.exp %102 : vector<2x1024xf32>
    %cst_82 = arith.constant 1.000000e+00 : f32
    %104 = vector.broadcast %cst_82 : f32 to vector<2x1024xf32>
    %105 = arith.addf %104, %103 : vector<2x1024xf32>
    %106 = arith.divf %104, %105 : vector<2x1024xf32>
    %c0_83 = arith.constant 0 : index
    %c0_84 = arith.constant 0 : index
    %107 = vector.load %arg21[%c0_83, %c0_84] : memref<2x1024xf32, #tpu.memory_space<vmem>>, vector<2x1024xf32>
    tpu.vector_store %arg21[%c0_83, %c0_84], %106 {strides = array<i32>} : memref<2x1024xf32, #tpu.memory_space<vmem>>, vector<2x1024xf32>,
    return
  }
}

</mosaic_0001>

<llo_original>
// kernel: inertial_autoencoder_forward.1
$region0: #{inertial_autoencoder_forward.1}
  #allocation0 [shape = 'u32[]', space=smem, size = 0x4, offset = 0x4, fixed_abs, tag = 'smem constant byte address 0x4 - core index']
  #allocation1 [shape = 'u32[72,128]{1,0:T(1,128)}', space=vmem, size = 0x9000, scoped, tag = 'internal scratch']
  %s0 = inlined_call_operand.vmem [shape: f32[2,1024], index: 0, kind: input, shape index: {}]
  %s1 = inlined_call_operand.vmem [shape: f32[2,1024], index: 1, kind: input, shape index: {}]
  %s2 = inlined_call_operand.hbm [shape: bf16[1024,512], index: 2, kind: input, shape index: {}]
  %s3 = inlined_call_operand.vmem [shape: f32[1,512], index: 3, kind: input, shape index: {}]
  %s4 = inlined_call_operand.hbm [shape: bf16[512,256], index: 4, kind: input, shape index: {}]
  %s5 = inlined_call_operand.vmem [shape: f32[1,256], index: 5, kind: input, shape index: {}]
  %s6 = inlined_call_operand.vmem [shape: bf16[256,128], index: 6, kind: input, shape index: {}]
  %s7 = inlined_call_operand.vmem [shape: f32[1,128], index: 7, kind: input, shape index: {}]
  %s8 = inlined_call_operand.hbm [shape: bf16[1024,512], index: 8, kind: input, shape index: {}]
  %s9 = inlined_call_operand.vmem [shape: f32[1,512], index: 9, kind: input, shape index: {}]
  %s10 = inlined_call_operand.hbm [shape: bf16[512,256], index: 10, kind: input, shape index: {}]
  %s11 = inlined_call_operand.vmem [shape: f32[1,256], index: 11, kind: input, shape index: {}]
  %s12 = inlined_call_operand.vmem [shape: bf16[256,128], index: 12, kind: input, shape index: {}]
  %s13 = inlined_call_operand.vmem [shape: f32[1,128], index: 13, kind: input, shape index: {}]
  %s14 = inlined_call_operand.hbm [shape: bf16[128,256], index: 14, kind: input, shape index: {}]
  %s15 = inlined_call_operand.hbm [shape: bf16[128,256], index: 15, kind: input, shape index: {}]
  %s16 = inlined_call_operand.vmem [shape: f32[1,256], index: 16, kind: input, shape index: {}]
  %s17 = inlined_call_operand.hbm [shape: bf16[256,512], index: 17, kind: input, shape index: {}]
  %s18 = inlined_call_operand.vmem [shape: f32[1,512], index: 18, kind: input, shape index: {}]
  %s19 = inlined_call_operand.hbm [shape: bf16[512,1024], index: 19, kind: input, shape index: {}]
  %s20 = inlined_call_operand.vmem [shape: f32[1,1024], index: 20, kind: input, shape index: {}]
  %s21 = inlined_call_operand.vmem [shape: f32[2,1024], index: 21, kind: output, shape index: {0}]
  %s22 = inlined_call_operand.vmem [shape: f32[2,2,128], index: 22, kind: output, shape index: {1}]
  %s23 = inlined_call_operand.hbm [shape: f32[2,128], index: 23, kind: output, shape index: {2}]
  %24 = xla_tuple %s21, %s22, %s23
  %s25 = sld [smem:[#allocation0]]
  $region142: #{inertial_autoencoder_forward.1} parent=0
    _
  %s27 = ssub.s32 1, %s25
  %s28 = scalar_select 0, %s27, %s25
  $region1: #{inertial_autoencoder_forward.1} parent=0
    #allocation2 [shape = 'u8[1048576]{0}', space=vmem, size = 0x100000, scoped, tag = 'input window, operand 2, single buffered']
    #allocation3 [shape = 's32[1]{0}', space=sflag, size = 0x4, scoped, tag = 'scoped memory for inertial_autoencoder_forward.1']
    #allocation4 [shape = 's32[1]{0}', space=sflag, size = 0x4, scoped, tag = 'scoped memory for inertial_autoencoder_forward.1']
    #allocation5 [shape = 'u8[262144]{0}', space=vmem, size = 0x40000, scoped, tag = 'input window, operand 4, single buffered']
    #allocation6 [shape = 's32[1]{0}', space=sflag, size = 0x4, scoped, tag = 'scoped memory for inertial_autoencoder_forward.1']
    #allocation7 [shape = 'u8[1048576]{0}', space=vmem, size = 0x100000, scoped, tag = 'input window, operand 8, single buffered']
    #allocation8 [shape = 'u8[262144]{0}', space=vmem, size = 0x40000, scoped, tag = 'input window, operand 10, single buffered']
    #allocation9 [shape = 's32[1]{0}', space=sflag, size = 0x4, scoped, tag = 'scoped memory for inertial_autoencoder_forward.1']
    #allocation10 [shape = 'u8[65536]{0}', space=vmem, size = 0x10000, scoped, tag = 'input window, operand 14, single buffered']
    #allocation11 [shape = 'u8[65536]{0}', space=vmem, size = 0x10000, scoped, tag = 'input window, operand 15, single buffered']
    #allocation12 [shape = 's32[1]{0}', space=sflag, size = 0x4, scoped, tag = 'scoped memory for inertial_autoencoder_forward.1']
    #allocation13 [shape = 'u8[262144]{0}', space=vmem, size = 0x40000, scoped, tag = 'input window, operand 17, single buffered']
    #allocation14 [shape = 'u8[1048576]{0}', space=vmem, size = 0x100000, scoped, tag = 'input window, operand 19, single buffered']
    #allocation15 [shape = 's32[1]{0}', space=sflag, size = 0x4, scoped, tag = 'scoped memory for inertial_autoencoder_forward.1']
    #allocation16 [shape = 'u8[1024]{0}', space=vmem, size = 0x400, scoped, tag = 'output window, operand 2, single buffered']
    %29 = vsyncpa [#allocation3], 0
    %30 = vsyncpa [#allocation6], 0
    %31 = vsyncpa [#allocation9], 0
    %32 = vsyncpa [#allocation12], 0
    %33 = vsyncpa [#allocation15], 0
    %34 = vsyncpa [#allocation4], 0
    // Predicated region
    $region2: #{inertial_autoencoder_forward.1} parent=1 // pred_check
      _
    $region3: #{inertial_autoencoder_forward.1} parent=1 // pred_check_branch
      %36 = sbr.rel (0) target = $region5
    $region4: #{inertial_autoencoder_forward.1} parent=1 // pred_region
      _
    $region5: #{inertial_autoencoder_forward.1} parent=1 // pred_fallthru
      _
    // Predicated region
    $region6: #{inertial_autoencoder_forward.1} parent=1 // pred_check
      _
    $region7: #{inertial_autoencoder_forward.1} parent=1 // pred_check_branch
      %38 = sbr.rel (0) target = $region9
    $region8: #{inertial_autoencoder_forward.1} parent=1 // pred_region
      _
    $region9: #{inertial_autoencoder_forward.1} parent=1 // pred_fallthru
      _
    // Predicated region
    $region10: #{inertial_autoencoder_forward.1} parent=1 // pred_check
      _
    $region11: #{inertial_autoencoder_forward.1} parent=1 // pred_check_branch
      %40 = sbr.rel (0) target = $region13
    $region12: #{inertial_autoencoder_forward.1} parent=1 // pred_region
      %42 = vsyncadd [#allocation3], 0
      %s43 = sshll.u32 %s2, 4
      %s44 = int_to_ptr.hbm [resolvable:$true] %s43
      %s45 = sshll.u32 [#allocation2], 4
      %s46 = int_to_ptr.vmem [resolvable:$true] %s45
      %51 = dma.hbm_to_vmem [thread:$0]  %s44, 32768, %s46, [#allocation3], 256, 256, 16
    $region13: #{inertial_autoencoder_forward.1} parent=1 // pred_fallthru
      _
    // Predicated region
    $region14: #{inertial_autoencoder_forward.1} parent=1 // pred_check
      _
    $region15: #{inertial_autoencoder_forward.1} parent=1 // pred_check_branch
      %53 = sbr.rel (0) target = $region17
    $region16: #{inertial_autoencoder_forward.1} parent=1 // pred_region
      _
    $region17: #{inertial_autoencoder_forward.1} parent=1 // pred_fallthru
      _
    // Predicated region
    $region18: #{inertial_autoencoder_forward.1} parent=1 // pred_check
      _
    $region19: #{inertial_autoencoder_forward.1} parent=1 // pred_check_branch
      %55 = sbr.rel (0) target = $region21
    $region20: #{inertial_autoencoder_forward.1} parent=1 // pred_region
      %57 = vsyncadd [#allocation6], 0
      %s58 = sshll.u32 %s4, 4
      %s59 = int_to_ptr.hbm [resolvable:$true] %s58
      %s60 = sshll.u32 [#allocation5], 4
      %s61 = int_to_ptr.vmem [resolvable:$true] %s60
      %66 = dma.hbm_to_vmem [thread:$0]  %s59, 8192, %s61, [#allocation6], 128, 128, 8
    $region21: #{inertial_autoencoder_forward.1} parent=1 // pred_fallthru
      _
    // Predicated region
    $region22: #{inertial_autoencoder_forward.1} parent=1 // pred_check
      _
    $region23: #{inertial_autoencoder_forward.1} parent=1 // pred_check_branch
      %68 = sbr.rel (0) target = $region25
    $region24: #{inertial_autoencoder_forward.1} parent=1 // pred_region
      _
    $region25: #{inertial_autoencoder_forward.1} parent=1 // pred_fallthru
      _
    // Predicated region
    $region26: #{inertial_autoencoder_forward.1} parent=1 // pred_check
      _
    $region27: #{inertial_autoencoder_forward.1} parent=1 // pred_check_branch
      %70 = sbr.rel (0) target = $region29
    $region28: #{inertial_autoencoder_forward.1} parent=1 // pred_region
      _
    $region29: #{inertial_autoencoder_forward.1} parent=1 // pred_fallthru
      _
    // Predicated region
    $region30: #{inertial_autoencoder_forward.1} parent=1 // pred_check
      _
    $region31: #{inertial_autoencoder_forward.1} parent=1 // pred_check_branch
      %72 = sbr.rel (0) target = $region33
    $region32: #{inertial_autoencoder_forward.1} parent=1 // pred_region
      _
    $region33: #{inertial_autoencoder_forward.1} parent=1 // pred_fallthru
      _
    // Predicated region
    $region34: #{inertial_autoencoder_forward.1} parent=1 // pred_check
      _
    $region35: #{inertial_autoencoder_forward.1} parent=1 // pred_check_branch
      %74 = sbr.rel (0) target = $region37
    $region36: #{inertial_autoencoder_forward.1} parent=1 // pred_region
      %76 = vsyncadd [#allocation6], 0
      %s77 = sshll.u32 %s8, 4
      %s78 = int_to_ptr.hbm [resolvable:$true] %s77
      %s79 = sshll.u32 [#allocation7], 4
      %s80 = int_to_ptr.vmem [resolvable:$true] %s79
      %85 = dma.hbm_to_vmem [thread:$0]  %s78, 32768, %s80, [#allocation6], 256, 256, 16
    $region37: #{inertial_autoencoder_forward.1} parent=1 // pred_fallthru
      _
    // Predicated region
    $region38: #{inertial_autoencoder_forward.1} parent=1 // pred_check
      _
    $region39: #{inertial_autoencoder_forward.1} parent=1 // pred_check_branch
      %87 = sbr.rel (0) target = $region41
    $region40: #{inertial_autoencoder_forward.1} parent=1 // pred_region
      _
    $region41: #{inertial_autoencoder_forward.1} parent=1 // pred_fallthru
      _
    // Predicated region
    $region42: #{inertial_autoencoder_forward.1} parent=1 // pred_check
      _
    $region43: #{inertial_autoencoder_forward.1} parent=1 // pred_check_branch
      %89 = sbr.rel (0) target = $region45
    $region44: #{inertial_autoencoder_forward.1} parent=1 // pred_region
      %91 = vsyncadd [#allocation9], 0
      %s92 = sshll.u32 %s10, 4
      %s93 = int_to_ptr.hbm [resolvable:$true] %s92
      %s94 = sshll.u32 [#allocation8], 4
      %s95 = int_to_ptr.vmem [resolvable:$true] %s94
      %100 = dma.hbm_to_vmem [thread:$0]  %s93, 8192, %s95, [#allocation9], 128, 128, 8
    $region45: #{inertial_autoencoder_forward.1} parent=1 // pred_fallthru
      _
    // Predicated region
    $region46: #{inertial_autoencoder_forward.1} parent=1 // pred_check
      _
    $region47: #{inertial_autoencoder_forward.1} parent=1 // pred_check_branch
      %102 = sbr.rel (0) target = $region49
    $region48: #{inertial_autoencoder_forward.1} parent=1 // pred_region
      _
    $region49: #{inertial_autoencoder_forward.1} parent=1 // pred_fallthru
      _
    // Predicated region
    $region50: #{inertial_autoencoder_forward.1} parent=1 // pred_check
      _
    $region51: #{inertial_autoencoder_forward.1} parent=1 // pred_check_branch
      %104 = sbr.rel (0) target = $region53
    $region52: #{inertial_autoencoder_forward.1} parent=1 // pred_region
      _
    $region53: #{inertial_autoencoder_forward.1} parent=1 // pred_fallthru
      _
    // Predicated region
    $region54: #{inertial_autoencoder_forward.1} parent=1 // pred_check
      _
    $region55: #{inertial_autoencoder_forward.1} parent=1 // pred_check_branch
      %106 = sbr.rel (0) target = $region57
    $region56: #{inertial_autoencoder_forward.1} parent=1 // pred_region
      _
    $region57: #{inertial_autoencoder_forward.1} parent=1 // pred_fallthru
      _
    // Predicated region
    $region58: #{inertial_autoencoder_forward.1} parent=1 // pred_check
      _
    $region59: #{inertial_autoencoder_forward.1} parent=1 // pred_check_branch
      %108 = sbr.rel (0) target = $region61
    $region60: #{inertial_autoencoder_forward.1} parent=1 // pred_region
      %110 = vsyncadd [#allocation9], 0
      %s111 = sshll.u32 %s14, 4
      %s112 = int_to_ptr.hbm [resolvable:$true] %s111
      %s113 = sshll.u32 [#allocation10], 4
      %s114 = int_to_ptr.vmem [resolvable:$true] %s113
      %119 = dma.hbm_to_vmem [thread:$0]  %s112, 2048, %s114, [#allocation9], 128, 128, 8
    $region61: #{inertial_autoencoder_forward.1} parent=1 // pred_fallthru
      _
    // Predicated region
    $region62: #{inertial_autoencoder_forward.1} parent=1 // pred_check
      _
    $region63: #{inertial_autoencoder_forward.1} parent=1 // pred_check_branch
      %121 = sbr.rel (0) target = $region65
    $region64: #{inertial_autoencoder_forward.1} parent=1 // pred_region
      %123 = vsyncadd [#allocation12], 0
      %s124 = sshll.u32 %s15, 4
      %s125 = int_to_ptr.hbm [resolvable:$true] %s124
      %s126 = sshll.u32 [#allocation11], 4
      %s127 = int_to_ptr.vmem [resolvable:$true] %s126
      %132 = dma.hbm_to_vmem [thread:$0]  %s125, 2048, %s127, [#allocation12], 128, 128, 8
    $region65: #{inertial_autoencoder_forward.1} parent=1 // pred_fallthru
      _
    // Predicated region
    $region66: #{inertial_autoencoder_forward.1} parent=1 // pred_check
      _
    $region67: #{inertial_autoencoder_forward.1} parent=1 // pred_check_branch
      %134 = sbr.rel (0) target = $region69
    $region68: #{inertial_autoencoder_forward.1} parent=1 // pred_region
      _
    $region69: #{inertial_autoencoder_forward.1} parent=1 // pred_fallthru
      _
    // Predicated region
    $region70: #{inertial_autoencoder_forward.1} parent=1 // pred_check
      _
    $region71: #{inertial_autoencoder_forward.1} parent=1 // pred_check_branch
      %136 = sbr.rel (0) target = $region73
    $region72: #{inertial_autoencoder_forward.1} parent=1 // pred_region
      %138 = vsyncadd [#allocation12], 0
      %s139 = sshll.u32 %s17, 4
      %s140 = int_to_ptr.hbm [resolvable:$true] %s139
      %s141 = sshll.u32 [#allocation13], 4
      %s142 = int_to_ptr.vmem [resolvable:$true] %s141
      %147 = dma.hbm_to_vmem [thread:$0]  %s140, 8192, %s142, [#allocation12], 256, 256, 16
    $region73: #{inertial_autoencoder_forward.1} parent=1 // pred_fallthru
      _
    // Predicated region
    $region74: #{inertial_autoencoder_forward.1} parent=1 // pred_check
      _
    $region75: #{inertial_autoencoder_forward.1} parent=1 // pred_check_branch
      %149 = sbr.rel (0) target = $region77
    $region76: #{inertial_autoencoder_forward.1} parent=1 // pred_region
      _
    $region77: #{inertial_autoencoder_forward.1} parent=1 // pred_fallthru
      _
    // Predicated region
    $region78: #{inertial_autoencoder_forward.1} parent=1 // pred_check
      _
    $region79: #{inertial_autoencoder_forward.1} parent=1 // pred_check_branch
      %151 = sbr.rel (0) target = $region81
    $region80: #{inertial_autoencoder_forward.1} parent=1 // pred_region
      %153 = vsyncadd [#allocation15], 0
      %s154 = sshll.u32 %s19, 4
      %s155 = int_to_ptr.hbm [resolvable:$true] %s154
      %s156 = sshll.u32 [#allocation14], 4
      %s157 = int_to_ptr.vmem [resolvable:$true] %s156
      %162 = dma.hbm_to_vmem [thread:$0]  %s155, 32768, %s157, [#allocation15], 512, 512, 32
    $region81: #{inertial_autoencoder_forward.1} parent=1 // pred_fallthru
      _
    // Predicated region
    $region82: #{inertial_autoencoder_forward.1} parent=1 // pred_check
      _
    $region83: #{inertial_autoencoder_forward.1} parent=1 // pred_check_branch
      %164 = sbr.rel (0) target = $region85
    $region84: #{inertial_autoencoder_forward.1} parent=1 // pred_region
      _
    $region85: #{inertial_autoencoder_forward.1} parent=1 // pred_fallthru
      _
    // Predicated region
    $region86: #{inertial_autoencoder_forward.1} parent=1 // pred_check
      _
    $region87: #{inertial_autoencoder_forward.1} parent=1 // pred_check_branch
      %166 = sbr.rel (0) target = $region89
    $region88: #{inertial_autoencoder_forward.1} parent=1 // pred_region
      %168 = dma.done [#allocation3], 32768
    $region89: #{inertial_autoencoder_forward.1} parent=1 // pred_fallthru
      _
    // Predicated region
    $region90: #{inertial_autoencoder_forward.1} parent=1 // pred_check
      _
    $region91: #{inertial_autoencoder_forward.1} parent=1 // pred_check_branch
      %170 = sbr.rel (0) target = $region93
    $region92: #{inertial_autoencoder_forward.1} parent=1 // pred_region
      %172 = dma.done [#allocation6], 8192
    $region93: #{inertial_autoencoder_forward.1} parent=1 // pred_fallthru
      _
    // Predicated region
    $region94: #{inertial_autoencoder_forward.1} parent=1 // pred_check
      _
    $region95: #{inertial_autoencoder_forward.1} parent=1 // pred_check_branch
      %174 = sbr.rel (0) target = $region97
    $region96: #{inertial_autoencoder_forward.1} parent=1 // pred_region
      %176 = dma.done [#allocation6], 32768
    $region97: #{inertial_autoencoder_forward.1} parent=1 // pred_fallthru
      _
    // Predicated region
    $region98: #{inertial_autoencoder_forward.1} parent=1 // pred_check
      _
    $region99: #{inertial_autoencoder_forward.1} parent=1 // pred_check_branch
      %178 = sbr.rel (0) target = $region101
    $region100: #{inertial_autoencoder_forward.1} parent=1 // pred_region
      %180 = dma.done [#allocation9], 8192
    $region101: #{inertial_autoencoder_forward.1} parent=1 // pred_fallthru
      _
    // Predicated region
    $region102: #{inertial_autoencoder_forward.1} parent=1 // pred_check
      _
    $region103: #{inertial_autoencoder_forward.1} parent=1 // pred_check_branch
      %182 = sbr.rel (0) target = $region105
    $region104: #{inertial_autoencoder_forward.1} parent=1 // pred_region
      %184 = dma.done [#allocation9], 2048
    $region105: #{inertial_autoencoder_forward.1} parent=1 // pred_fallthru
      _
    // Predicated region
    $region106: #{inertial_autoencoder_forward.1} parent=1 // pred_check
      _
    $region107: #{inertial_autoencoder_forward.1} parent=1 // pred_check_branch
      %186 = sbr.rel (0) target = $region109
    $region108: #{inertial_autoencoder_forward.1} parent=1 // pred_region
      %188 = dma.done [#allocation12], 2048
    $region109: #{inertial_autoencoder_forward.1} parent=1 // pred_fallthru
      _
    // Predicated region
    $region110: #{inertial_autoencoder_forward.1} parent=1 // pred_check
      _
    $region111: #{inertial_autoencoder_forward.1} parent=1 // pred_check_branch
      %190 = sbr.rel (0) target = $region113
    $region112: #{inertial_autoencoder_forward.1} parent=1 // pred_region
      %192 = dma.done [#allocation12], 8192
    $region113: #{inertial_autoencoder_forward.1} parent=1 // pred_fallthru
      _
    // Predicated region
    $region114: #{inertial_autoencoder_forward.1} parent=1 // pred_check
      _
    $region115: #{inertial_autoencoder_forward.1} parent=1 // pred_check_branch
      %194 = sbr.rel (0) target = $region117
    $region116: #{inertial_autoencoder_forward.1} parent=1 // pred_region
      %196 = dma.done [#allocation15], 32768
    $region117: #{inertial_autoencoder_forward.1} parent=1 // pred_fallthru
      _
    %v197 = vld [vmem:[%s0] sm:$0xff]
    %v198 = vld [vmem:[%s0 + $0x8] sm:$0xff]
    %201 = vst [vmem:[#allocation1] ss:$4 sm:$0xff] %v197
    %s202 = scalar_lea.vmem [#allocation1], 32
    %203 = vst [vmem:[%s202] ss:$4 sm:$0xff] %v198
    %v204 = vld.sshfl [vmem:[#allocation1] sm:$0xff pattern:$0x73625140]
    %v205 = vld.sshfl [vmem:[#allocation1 + $0x8] sm:$0xff pattern:$0x73625140]
    %v206 = vld.sshfl [vmem:[#allocation1 + $0x10] sm:$0xff pattern:$0x73625140]
    %v207 = vld.sshfl [vmem:[#allocation1 + $0x18] sm:$0xff pattern:$0x73625140]
    %v208 = vld.sshfl [vmem:[#allocation1 + $0x20] sm:$0xff pattern:$0x73625140]
    %v209 = vld.sshfl [vmem:[#allocation1 + $0x28] sm:$0xff pattern:$0x73625140]
    %v210 = vld.sshfl [vmem:[#allocation1 + $0x30] sm:$0xff pattern:$0x73625140]
    %v211 = vld.sshfl [vmem:[#allocation1 + $0x38] sm:$0xff pattern:$0x73625140]
    %v220 = vpack.c.bf16 %v204, %v204
    %v221 = vpack.c.bf16 %v205, %v205
    %v222 = vpack.c.bf16 %v206, %v206
    %v223 = vpack.c.bf16 %v207, %v207
    %v224 = vpack.c.bf16 %v208, %v208
    %v225 = vpack.c.bf16 %v209, %v209
    %v226 = vpack.c.bf16 %v210, %v210
    %v227 = vpack.c.bf16 %v211, %v211
    %v228 = vld [vmem:[#allocation2] sm:$0xff]
    %v229 = vld [vmem:[#allocation2 + $0x8] sm:$0xff]
    %v230 = vld [vmem:[#allocation2 + $0x10] sm:$0xff]
    %v231 = vld [vmem:[#allocation2 + $0x18] sm:$0xff]
    %v232 = vld [vmem:[#allocation2 + $0x20] sm:$0xff]
    %v233 = vld [vmem:[#allocation2 + $0x28] sm:$0xff]
    %v234 = vld [vmem:[#allocation2 + $0x30] sm:$0xff]
    %v235 = vld [vmem:[#allocation2 + $0x38] sm:$0xff]
    %v236 = vld [vmem:[#allocation2 + $0x40] sm:$0xff]
    %v237 = vld [vmem:[#allocation2 + $0x48] sm:$0xff]
    %v238 = vld [vmem:[#allocation2 + $0x50] sm:$0xff]
    %v239 = vld [vmem:[#allocation2 + $0x58] sm:$0xff]
    %v240 = vld [vmem:[#allocation2 + $0x60] sm:$0xff]
    %v241 = vld [vmem:[#allocation2 + $0x68] sm:$0xff]
    %v242 = vld [vmem:[#allocation2 + $0x70] sm:$0xff]
    %v243 = vld [vmem:[#allocation2 + $0x78] sm:$0xff]
    %v244 = vld [vmem:[#allocation2 + $0x80] sm:$0xff]
    %v245 = vld [vmem:[#allocation2 + $0x88] sm:$0xff]
    %v246 = vld [vmem:[#allocation2 + $0x90] sm:$0xff]
    %v247 = vld [vmem:[#allocation2 + $0x98] sm:$0xff]
    %v248 = vld [vmem:[#allocation2 + $0xa0] sm:$0xff]
    %v249 = vld [vmem:[#allocation2 + $0xa8] sm:$0xff]
    %v250 = vld [vmem:[#allocation2 + $0xb0] sm:$0xff]
    %v251 = vld [vmem:[#allocation2 + $0xb8] sm:$0xff]
    %v252 = vld [vmem:[#allocation2 + $0xc0] sm:$0xff]
    %v253 = vld [vmem:[#allocation2 + $0xc8] sm:$0xff]
    %v254 = vld [vmem:[#allocation2 + $0xd0] sm:$0xff]
    %v255 = vld [vmem:[#allocation2 + $0xd8] sm:$0xff]
    %v256 = vld [vmem:[#allocation2 + $0xe0] sm:$0xff]
    %v257 = vld [vmem:[#allocation2 + $0xe8] sm:$0xff]
    %v258 = vld [vmem:[#allocation2 + $0xf0] sm:$0xff]
    %v259 = vld [vmem:[#allocation2 + $0xf8] sm:$0xff]
    %v260 = vld [vmem:[#allocation2 + $0x100] sm:$0xff]
    %v261 = vld [vmem:[#allocation2 + $0x108] sm:$0xff]
    %v262 = vld [vmem:[#allocation2 + $0x110] sm:$0xff]
    %v263 = vld [vmem:[#allocation2 + $0x118] sm:$0xff]
    %v264 = vld [vmem:[#allocation2 + $0x120] sm:$0xff]
    %v265 = vld [vmem:[#allocation2 + $0x128] sm:$0xff]
    %v266 = vld [vmem:[#allocation2 + $0x130] sm:$0xff]
    %v267 = vld [vmem:[#allocation2 + $0x138] sm:$0xff]
    %v268 = vld [vmem:[#allocation2 + $0x140] sm:$0xff]
    %v269 = vld [vmem:[#allocation2 + $0x148] sm:$0xff]
    %v270 = vld [vmem:[#allocation2 + $0x150] sm:$0xff]
    %v271 = vld [vmem:[#allocation2 + $0x158] sm:$0xff]
    %v272 = vld [vmem:[#allocation2 + $0x160] sm:$0xff]
    %v273 = vld [vmem:[#allocation2 + $0x168] sm:$0xff]
    %v274 = vld [vmem:[#allocation2 + $0x170] sm:$0xff]
    %v275 = vld [vmem:[#allocation2 + $0x178] sm:$0xff]
    %v276 = vld [vmem:[#allocation2 + $0x180] sm:$0xff]
    %v277 = vld [vmem:[#allocation2 + $0x188] sm:$0xff]
    %v278 = vld [vmem:[#allocation2 + $0x190] sm:$0xff]
    %v279 = vld [vmem:[#allocation2 + $0x198] sm:$0xff]
    %v280 = vld [vmem:[#allocation2 + $0x1a0] sm:$0xff]
    %v281 = vld [vmem:[#allocation2 + $0x1a8] sm:$0xff]
    %v282 = vld [vmem:[#allocation2 + $0x1b0] sm:$0xff]
    %v283 = vld [vmem:[#allocation2 + $0x1b8] sm:$0xff]
    %v284 = vld [vmem:[#allocation2 + $0x1c0] sm:$0xff]
    %v285 = vld [vmem:[#allocation2 + $0x1c8] sm:$0xff]
    %v286 = vld [vmem:[#allocation2 + $0x1d0] sm:$0xff]
    %v287 = vld [vmem:[#allocation2 + $0x1d8] sm:$0xff]
    %v288 = vld [vmem:[#allocation2 + $0x1e0] sm:$0xff]
    %v289 = vld [vmem:[#allocation2 + $0x1e8] sm:$0xff]
    %v290 = vld [vmem:[#allocation2 + $0x1f0] sm:$0xff]
    %v291 = vld [vmem:[#allocation2 + $0x1f8] sm:$0xff]
    %v292 = vld [vmem:[#allocation2 + $0x200] sm:$0xff]
    %v293 = vld [vmem:[#allocation2 + $0x208] sm:$0xff]
    %v294 = vld [vmem:[#allocation2 + $0x210] sm:$0xff]
    %v295 = vld [vmem:[#allocation2 + $0x218] sm:$0xff]
    %v296 = vld [vmem:[#allocation2 + $0x220] sm:$0xff]
    %v297 = vld [vmem:[#allocation2 + $0x228] sm:$0xff]
    %v298 = vld [vmem:[#allocation2 + $0x230] sm:$0xff]
    %v299 = vld [vmem:[#allocation2 + $0x238] sm:$0xff]
    %v300 = vld [vmem:[#allocation2 + $0x240] sm:$0xff]
    %v301 = vld [vmem:[#allocation2 + $0x248] sm:$0xff]
    %v302 = vld [vmem:[#allocation2 + $0x250] sm:$0xff]
    %v303 = vld [vmem:[#allocation2 + $0x258] sm:$0xff]
    %v304 = vld [vmem:[#allocation2 + $0x260] sm:$0xff]
    %v305 = vld [vmem:[#allocation2 + $0x268] sm:$0xff]
    %v306 = vld [vmem:[#allocation2 + $0x270] sm:$0xff]
    %v307 = vld [vmem:[#allocation2 + $0x278] sm:$0xff]
    %v308 = vld [vmem:[#allocation2 + $0x280] sm:$0xff]
    %v309 = vld [vmem:[#allocation2 + $0x288] sm:$0xff]
    %v310 = vld [vmem:[#allocation2 + $0x290] sm:$0xff]
    %v311 = vld [vmem:[#allocation2 + $0x298] sm:$0xff]
    %v312 = vld [vmem:[#allocation2 + $0x2a0] sm:$0xff]
    %v313 = vld [vmem:[#allocation2 + $0x2a8] sm:$0xff]
    %v314 = vld [vmem:[#allocation2 + $0x2b0] sm:$0xff]
    %v315 = vld [vmem:[#allocation2 + $0x2b8] sm:$0xff]
    %v316 = vld [vmem:[#allocation2 + $0x2c0] sm:$0xff]
    %v317 = vld [vmem:[#allocation2 + $0x2c8] sm:$0xff]
    %v318 = vld [vmem:[#allocation2 + $0x2d0] sm:$0xff]
    %v319 = vld [vmem:[#allocation2 + $0x2d8] sm:$0xff]
    %v320 = vld [vmem:[#allocation2 + $0x2e0] sm:$0xff]
    %v321 = vld [vmem:[#allocation2 + $0x2e8] sm:$0xff]
    %v322 = vld [vmem:[#allocation2 + $0x2f0] sm:$0xff]
    %v323 = vld [vmem:[#allocation2 + $0x2f8] sm:$0xff]
    %v324 = vld [vmem:[#allocation2 + $0x300] sm:$0xff]
    %v325 = vld [vmem:[#allocation2 + $0x308] sm:$0xff]
    %v326 = vld [vmem:[#allocation2 + $0x310] sm:$0xff]
    %v327 = vld [vmem:[#allocation2 + $0x318] sm:$0xff]
    %v328 = vld [vmem:[#allocation2 + $0x320] sm:$0xff]
    %v329 = vld [vmem:[#allocation2 + $0x328] sm:$0xff]
    %v330 = vld [vmem:[#allocation2 + $0x330] sm:$0xff]
    %v331 = vld [vmem:[#allocation2 + $0x338] sm:$0xff]
    %v332 = vld [vmem:[#allocation2 + $0x340] sm:$0xff]
    %v333 = vld [vmem:[#allocation2 + $0x348] sm:$0xff]
    %v334 = vld [vmem:[#allocation2 + $0x350] sm:$0xff]
    %v335 = vld [vmem:[#allocation2 + $0x358] sm:$0xff]
    %v336 = vld [vmem:[#allocation2 + $0x360] sm:$0xff]
    %v337 = vld [vmem:[#allocation2 + $0x368] sm:$0xff]
    %v338 = vld [vmem:[#allocation2 + $0x370] sm:$0xff]
    %v339 = vld [vmem:[#allocation2 + $0x378] sm:$0xff]
    %v340 = vld [vmem:[#allocation2 + $0x380] sm:$0xff]
    %v341 = vld [vmem:[#allocation2 + $0x388] sm:$0xff]
    %v342 = vld [vmem:[#allocation2 + $0x390] sm:$0xff]
    %v343 = vld [vmem:[#allocation2 + $0x398] sm:$0xff]
    %v344 = vld [vmem:[#allocation2 + $0x3a0] sm:$0xff]
    %v345 = vld [vmem:[#allocation2 + $0x3a8] sm:$0xff]
    %v346 = vld [vmem:[#allocation2 + $0x3b0] sm:$0xff]
    %v347 = vld [vmem:[#allocation2 + $0x3b8] sm:$0xff]
    %v348 = vld [vmem:[#allocation2 + $0x3c0] sm:$0xff]
    %v349 = vld [vmem:[#allocation2 + $0x3c8] sm:$0xff]
    %v350 = vld [vmem:[#allocation2 + $0x3d0] sm:$0xff]
    %v351 = vld [vmem:[#allocation2 + $0x3d8] sm:$0xff]
    %v352 = vld [vmem:[#allocation2 + $0x3e0] sm:$0xff]
    %v353 = vld [vmem:[#allocation2 + $0x3e8] sm:$0xff]
    %v354 = vld [vmem:[#allocation2 + $0x3f0] sm:$0xff]
    %v355 = vld [vmem:[#allocation2 + $0x3f8] sm:$0xff]
    %v356 = vld [vmem:[#allocation2 + $0x400] sm:$0xff]
    %v357 = vld [vmem:[#allocation2 + $0x408] sm:$0xff]
    %v358 = vld [vmem:[#allocation2 + $0x410] sm:$0xff]
    %v359 = vld [vmem:[#allocation2 + $0x418] sm:$0xff]
    %v360 = vld [vmem:[#allocation2 + $0x420] sm:$0xff]
    %v361 = vld [vmem:[#allocation2 + $0x428] sm:$0xff]
    %v362 = vld [vmem:[#allocation2 + $0x430] sm:$0xff]
    %v363 = vld [vmem:[#allocation2 + $0x438] sm:$0xff]
    %v364 = vld [vmem:[#allocation2 + $0x440] sm:$0xff]
    %v365 = vld [vmem:[#allocation2 + $0x448] sm:$0xff]
    %v366 = vld [vmem:[#allocation2 + $0x450] sm:$0xff]
    %v367 = vld [vmem:[#allocation2 + $0x458] sm:$0xff]
    %v368 = vld [vmem:[#allocation2 + $0x460] sm:$0xff]
    %v369 = vld [vmem:[#allocation2 + $0x468] sm:$0xff]
    %v370 = vld [vmem:[#allocation2 + $0x470] sm:$0xff]
    %v371 = vld [vmem:[#allocation2 + $0x478] sm:$0xff]
    %v372 = vld [vmem:[#allocation2 + $0x480] sm:$0xff]
    %v373 = vld [vmem:[#allocation2 + $0x488] sm:$0xff]
    %v374 = vld [vmem:[#allocation2 + $0x490] sm:$0xff]
    %v375 = vld [vmem:[#allocation2 + $0x498] sm:$0xff]
    %v376 = vld [vmem:[#allocation2 + $0x4a0] sm:$0xff]
    %v377 = vld [vmem:[#allocation2 + $0x4a8] sm:$0xff]
    %v378 = vld [vmem:[#allocation2 + $0x4b0] sm:$0xff]
    %v379 = vld [vmem:[#allocation2 + $0x4b8] sm:$0xff]
    %v380 = vld [vmem:[#allocation2 + $0x4c0] sm:$0xff]
    %v381 = vld [vmem:[#allocation2 + $0x4c8] sm:$0xff]
    %v382 = vld [vmem:[#allocation2 + $0x4d0] sm:$0xff]
    %v383 = vld [vmem:[#allocation2 + $0x4d8] sm:$0xff]
    %v384 = vld [vmem:[#allocation2 + $0x4e0] sm:$0xff]
    %v385 = vld [vmem:[#allocation2 + $0x4e8] sm:$0xff]
    %v386 = vld [vmem:[#allocation2 + $0x4f0] sm:$0xff]
    %v387 = vld [vmem:[#allocation2 + $0x4f8] sm:$0xff]
    %v388 = vld [vmem:[#allocation2 + $0x500] sm:$0xff]
    %v389 = vld [vmem:[#allocation2 + $0x508] sm:$0xff]
    %v390 = vld [vmem:[#allocation2 + $0x510] sm:$0xff]
    %v391 = vld [vmem:[#allocation2 + $0x518] sm:$0xff]
    %v392 = vld [vmem:[#allocation2 + $0x520] sm:$0xff]
    %v393 = vld [vmem:[#allocation2 + $0x528] sm:$0xff]
    %v394 = vld [vmem:[#allocation2 + $0x530] sm:$0xff]
    %v395 = vld [vmem:[#allocation2 + $0x538] sm:$0xff]
    %v396 = vld [vmem:[#allocation2 + $0x540] sm:$0xff]
    %v397 = vld [vmem:[#allocation2 + $0x548] sm:$0xff]
    %v398 = vld [vmem:[#allocation2 + $0x550] sm:$0xff]
    %v399 = vld [vmem:[#allocation2 + $0x558] sm:$0xff]
    %v400 = vld [vmem:[#allocation2 + $0x560] sm:$0xff]
    %v401 = vld [vmem:[#allocation2 + $0x568] sm:$0xff]
    %v402 = vld [vmem:[#allocation2 + $0x570] sm:$0xff]
    %v403 = vld [vmem:[#allocation2 + $0x578] sm:$0xff]
    %v404 = vld [vmem:[#allocation2 + $0x580] sm:$0xff]
    %v405 = vld [vmem:[#allocation2 + $0x588] sm:$0xff]
    %v406 = vld [vmem:[#allocation2 + $0x590] sm:$0xff]
    %v407 = vld [vmem:[#allocation2 + $0x598] sm:$0xff]
    %v408 = vld [vmem:[#allocation2 + $0x5a0] sm:$0xff]
    %v409 = vld [vmem:[#allocation2 + $0x5a8] sm:$0xff]
    %v410 = vld [vmem:[#allocation2 + $0x5b0] sm:$0xff]
    %v411 = vld [vmem:[#allocation2 + $0x5b8] sm:$0xff]
    %v412 = vld [vmem:[#allocation2 + $0x5c0] sm:$0xff]
    %v413 = vld [vmem:[#allocation2 + $0x5c8] sm:$0xff]
    %v414 = vld [vmem:[#allocation2 + $0x5d0] sm:$0xff]
    %v415 = vld [vmem:[#allocation2 + $0x5d8] sm:$0xff]
    %v416 = vld [vmem:[#allocation2 + $0x5e0] sm:$0xff]
    %v417 = vld [vmem:[#allocation2 + $0x5e8] sm:$0xff]
    %v418 = vld [vmem:[#allocation2 + $0x5f0] sm:$0xff]
    %v419 = vld [vmem:[#allocation2 + $0x5f8] sm:$0xff]
    %v420 = vld [vmem:[#allocation2 + $0x600] sm:$0xff]
    %v421 = vld [vmem:[#allocation2 + $0x608] sm:$0xff]
    %v422 = vld [vmem:[#allocation2 + $0x610] sm:$0xff]
    %v423 = vld [vmem:[#allocation2 + $0x618] sm:$0xff]
    %v424 = vld [vmem:[#allocation2 + $0x620] sm:$0xff]
    %v425 = vld [vmem:[#allocation2 + $0x628] sm:$0xff]
    %v426 = vld [vmem:[#allocation2 + $0x630] sm:$0xff]
    %v427 = vld [vmem:[#allocation2 + $0x638] sm:$0xff]
    %v428 = vld [vmem:[#allocation2 + $0x640] sm:$0xff]
    %v429 = vld [vmem:[#allocation2 + $0x648] sm:$0xff]
    %v430 = vld [vmem:[#allocation2 + $0x650] sm:$0xff]
    %v431 = vld [vmem:[#allocation2 + $0x658] sm:$0xff]
    %v432 = vld [vmem:[#allocation2 + $0x660] sm:$0xff]
    %v433 = vld [vmem:[#allocation2 + $0x668] sm:$0xff]
    %v434 = vld [vmem:[#allocation2 + $0x670] sm:$0xff]
    %v435 = vld [vmem:[#allocation2 + $0x678] sm:$0xff]
    %v436 = vld [vmem:[#allocation2 + $0x680] sm:$0xff]
    %v437 = vld [vmem:[#allocation2 + $0x688] sm:$0xff]
    %v438 = vld [vmem:[#allocation2 + $0x690] sm:$0xff]
    %v439 = vld [vmem:[#allocation2 + $0x698] sm:$0xff]
    %v440 = vld [vmem:[#allocation2 + $0x6a0] sm:$0xff]
    %v441 = vld [vmem:[#allocation2 + $0x6a8] sm:$0xff]
    %v442 = vld [vmem:[#allocation2 + $0x6b0] sm:$0xff]
    %v443 = vld [vmem:[#allocation2 + $0x6b8] sm:$0xff]
    %v444 = vld [vmem:[#allocation2 + $0x6c0] sm:$0xff]
    %v445 = vld [vmem:[#allocation2 + $0x6c8] sm:$0xff]
    %v446 = vld [vmem:[#allocation2 + $0x6d0] sm:$0xff]
    %v447 = vld [vmem:[#allocation2 + $0x6d8] sm:$0xff]
    %v448 = vld [vmem:[#allocation2 + $0x6e0] sm:$0xff]
    %v449 = vld [vmem:[#allocation2 + $0x6e8] sm:$0xff]
    %v450 = vld [vmem:[#allocation2 + $0x6f0] sm:$0xff]
    %v451 = vld [vmem:[#allocation2 + $0x6f8] sm:$0xff]
    %v452 = vld [vmem:[#allocation2 + $0x700] sm:$0xff]
    %v453 = vld [vmem:[#allocation2 + $0x708] sm:$0xff]
    %v454 = vld [vmem:[#allocation2 + $0x710] sm:$0xff]
    %v455 = vld [vmem:[#allocation2 + $0x718] sm:$0xff]
    %v456 = vld [vmem:[#allocation2 + $0x720] sm:$0xff]
    %v457 = vld [vmem:[#allocation2 + $0x728] sm:$0xff]
    %v458 = vld [vmem:[#allocation2 + $0x730] sm:$0xff]
    %v459 = vld [vmem:[#allocation2 + $0x738] sm:$0xff]
    %v460 = vld [vmem:[#allocation2 + $0x740] sm:$0xff]
    %v461 = vld [vmem:[#allocation2 + $0x748] sm:$0xff]
    %v462 = vld [vmem:[#allocation2 + $0x750] sm:$0xff]
    %v463 = vld [vmem:[#allocation2 + $0x758] sm:$0xff]
    %v464 = vld [vmem:[#allocation2 + $0x760] sm:$0xff]
    %v465 = vld [vmem:[#allocation2 + $0x768] sm:$0xff]
    %v466 = vld [vmem:[#allocation2 + $0x770] sm:$0xff]
    %v467 = vld [vmem:[#allocation2 + $0x778] sm:$0xff]
    %v468 = vld [vmem:[#allocation2 + $0x780] sm:$0xff]
    %v469 = vld [vmem:[#allocation2 + $0x788] sm:$0xff]
    %v470 = vld [vmem:[#allocation2 + $0x790] sm:$0xff]
    %v471 = vld [vmem:[#allocation2 + $0x798] sm:$0xff]
    %v472 = vld [vmem:[#allocation2 + $0x7a0] sm:$0xff]
    %v473 = vld [vmem:[#allocation2 + $0x7a8] sm:$0xff]
    %v474 = vld [vmem:[#allocation2 + $0x7b0] sm:$0xff]
    %v475 = vld [vmem:[#allocation2 + $0x7b8] sm:$0xff]
    %v476 = vld [vmem:[#allocation2 + $0x7c0] sm:$0xff]
    %v477 = vld [vmem:[#allocation2 + $0x7c8] sm:$0xff]
    %v478 = vld [vmem:[#allocation2 + $0x7d0] sm:$0xff]
    %v479 = vld [vmem:[#allocation2 + $0x7d8] sm:$0xff]
    %v480 = vld [vmem:[#allocation2 + $0x7e0] sm:$0xff]
    %v481 = vld [vmem:[#allocation2 + $0x7e8] sm:$0xff]
    %v482 = vld [vmem:[#allocation2 + $0x7f0] sm:$0xff]
    %v483 = vld [vmem:[#allocation2 + $0x7f8] sm:$0xff]
    %v484 = vld [vmem:[%s3] sm:$0xf]
    %v486 = vperm.slane %v484, 0
    %v487 = vperm.slane %v484, 1
    %v488 = vperm.slane %v484, 2
    %v489 = vperm.slane %v484, 3
    %v750 = vunpack.c.l.b16 %v228
    %v751 = vunpack.c.h.b16 %v228
    %v752 = vunpack.c.l.b16 %v229
    %v753 = vunpack.c.h.b16 %v229
    %v754 = vunpack.c.l.b16 %v230
    %v755 = vunpack.c.h.b16 %v230
    %v756 = vunpack.c.l.b16 %v231
    %v757 = vunpack.c.h.b16 %v231
    %v758 = vunpack.c.l.b16 %v232
    %v759 = vunpack.c.h.b16 %v232
    %v760 = vunpack.c.l.b16 %v233
    %v761 = vunpack.c.h.b16 %v233
    %v762 = vunpack.c.l.b16 %v234
    %v763 = vunpack.c.h.b16 %v234
    %v764 = vunpack.c.l.b16 %v235
    %v765 = vunpack.c.h.b16 %v235
    %v766 = vunpack.c.l.b16 %v236
    %v767 = vunpack.c.h.b16 %v236
    %v768 = vunpack.c.l.b16 %v237
    %v769 = vunpack.c.h.b16 %v237
    %v770 = vunpack.c.l.b16 %v238
    %v771 = vunpack.c.h.b16 %v238
    %v772 = vunpack.c.l.b16 %v239
    %v773 = vunpack.c.h.b16 %v239
    %v774 = vunpack.c.l.b16 %v240
    %v775 = vunpack.c.h.b16 %v240
    %v776 = vunpack.c.l.b16 %v241
    %v777 = vunpack.c.h.b16 %v241
    %v778 = vunpack.c.l.b16 %v242
    %v779 = vunpack.c.h.b16 %v242
    %v780 = vunpack.c.l.b16 %v243
    %v781 = vunpack.c.h.b16 %v243
    %v782 = vunpack.c.l.b16 %v244
    %v783 = vunpack.c.h.b16 %v244
    %v784 = vunpack.c.l.b16 %v245
    %v785 = vunpack.c.h.b16 %v245
    %v786 = vunpack.c.l.b16 %v246
    %v787 = vunpack.c.h.b16 %v246
    %v788 = vunpack.c.l.b16 %v247
    %v789 = vunpack.c.h.b16 %v247
    %v790 = vunpack.c.l.b16 %v248
    %v791 = vunpack.c.h.b16 %v248
    %v792 = vunpack.c.l.b16 %v249
    %v793 = vunpack.c.h.b16 %v249
    %v794 = vunpack.c.l.b16 %v250
    %v795 = vunpack.c.h.b16 %v250
    %v796 = vunpack.c.l.b16 %v251
    %v797 = vunpack.c.h.b16 %v251
    %v798 = vunpack.c.l.b16 %v252
    %v799 = vunpack.c.h.b16 %v252
    %v800 = vunpack.c.l.b16 %v253
    %v801 = vunpack.c.h.b16 %v253
    %v802 = vunpack.c.l.b16 %v254
    %v803 = vunpack.c.h.b16 %v254
    %v804 = vunpack.c.l.b16 %v255
    %v805 = vunpack.c.h.b16 %v255
    %v806 = vunpack.c.l.b16 %v256
    %v807 = vunpack.c.h.b16 %v256
    %v808 = vunpack.c.l.b16 %v257
    %v809 = vunpack.c.h.b16 %v257
    %v810 = vunpack.c.l.b16 %v258
    %v811 = vunpack.c.h.b16 %v258
    %v812 = vunpack.c.l.b16 %v259
    %v813 = vunpack.c.h.b16 %v259
    %v814 = vunpack.c.l.b16 %v260
    %v815 = vunpack.c.h.b16 %v260
    %v816 = vunpack.c.l.b16 %v261
    %v817 = vunpack.c.h.b16 %v261
    %v818 = vunpack.c.l.b16 %v262
    %v819 = vunpack.c.h.b16 %v262
    %v820 = vunpack.c.l.b16 %v263
    %v821 = vunpack.c.h.b16 %v263
    %v822 = vunpack.c.l.b16 %v264
    %v823 = vunpack.c.h.b16 %v264
    %v824 = vunpack.c.l.b16 %v265
    %v825 = vunpack.c.h.b16 %v265
    %v826 = vunpack.c.l.b16 %v266
    %v827 = vunpack.c.h.b16 %v266
    %v828 = vunpack.c.l.b16 %v267
    %v829 = vunpack.c.h.b16 %v267
    %v830 = vunpack.c.l.b16 %v268
    %v831 = vunpack.c.h.b16 %v268
    %v832 = vunpack.c.l.b16 %v269
    %v833 = vunpack.c.h.b16 %v269
    %v834 = vunpack.c.l.b16 %v270
    %v835 = vunpack.c.h.b16 %v270
    %v836 = vunpack.c.l.b16 %v271
    %v837 = vunpack.c.h.b16 %v271
    %v838 = vunpack.c.l.b16 %v272
    %v839 = vunpack.c.h.b16 %v272
    %v840 = vunpack.c.l.b16 %v273
    %v841 = vunpack.c.h.b16 %v273
    %v842 = vunpack.c.l.b16 %v274
    %v843 = vunpack.c.h.b16 %v274
    %v844 = vunpack.c.l.b16 %v275
    %v845 = vunpack.c.h.b16 %v275
    %v846 = vunpack.c.l.b16 %v276
    %v847 = vunpack.c.h.b16 %v276
    %v848 = vunpack.c.l.b16 %v277
    %v849 = vunpack.c.h.b16 %v277
    %v850 = vunpack.c.l.b16 %v278
    %v851 = vunpack.c.h.b16 %v278
    %v852 = vunpack.c.l.b16 %v279
    %v853 = vunpack.c.h.b16 %v279
    %v854 = vunpack.c.l.b16 %v280
    %v855 = vunpack.c.h.b16 %v280
    %v856 = vunpack.c.l.b16 %v281
    %v857 = vunpack.c.h.b16 %v281
    %v858 = vunpack.c.l.b16 %v282
    %v859 = vunpack.c.h.b16 %v282
    %v860 = vunpack.c.l.b16 %v283
    %v861 = vunpack.c.h.b16 %v283
    %v862 = vunpack.c.l.b16 %v284
    %v863 = vunpack.c.h.b16 %v284
    %v864 = vunpack.c.l.b16 %v285
    %v865 = vunpack.c.h.b16 %v285
    %v866 = vunpack.c.l.b16 %v286
    %v867 = vunpack.c.h.b16 %v286
    %v868 = vunpack.c.l.b16 %v287
    %v869 = vunpack.c.h.b16 %v287
    %v870 = vunpack.c.l.b16 %v288
    %v871 = vunpack.c.h.b16 %v288
    %v872 = vunpack.c.l.b16 %v289
    %v873 = vunpack.c.h.b16 %v289
    %v874 = vunpack.c.l.b16 %v290
    %v875 = vunpack.c.h.b16 %v290
    %v876 = vunpack.c.l.b16 %v291
    %v877 = vunpack.c.h.b16 %v291
    %v878 = vunpack.c.l.b16 %v292
    %v879 = vunpack.c.h.b16 %v292
    %v880 = vunpack.c.l.b16 %v293
    %v881 = vunpack.c.h.b16 %v293
    %v882 = vunpack.c.l.b16 %v294
    %v883 = vunpack.c.h.b16 %v294
    %v884 = vunpack.c.l.b16 %v295
    %v885 = vunpack.c.h.b16 %v295
    %v886 = vunpack.c.l.b16 %v296
    %v887 = vunpack.c.h.b16 %v296
    %v888 = vunpack.c.l.b16 %v297
    %v889 = vunpack.c.h.b16 %v297
    %v890 = vunpack.c.l.b16 %v298
    %v891 = vunpack.c.h.b16 %v298
    %v892 = vunpack.c.l.b16 %v299
    %v893 = vunpack.c.h.b16 %v299
    %v894 = vunpack.c.l.b16 %v300
    %v895 = vunpack.c.h.b16 %v300
    %v896 = vunpack.c.l.b16 %v301
    %v897 = vunpack.c.h.b16 %v301
    %v898 = vunpack.c.l.b16 %v302
    %v899 = vunpack.c.h.b16 %v302
    %v900 = vunpack.c.l.b16 %v303
    %v901 = vunpack.c.h.b16 %v303
    %v902 = vunpack.c.l.b16 %v304
    %v903 = vunpack.c.h.b16 %v304
    %v904 = vunpack.c.l.b16 %v305
    %v905 = vunpack.c.h.b16 %v305
    %v906 = vunpack.c.l.b16 %v306
    %v907 = vunpack.c.h.b16 %v306
    %v908 = vunpack.c.l.b16 %v307
    %v909 = vunpack.c.h.b16 %v307
    %v910 = vunpack.c.l.b16 %v308
    %v911 = vunpack.c.h.b16 %v308
    %v912 = vunpack.c.l.b16 %v309
    %v913 = vunpack.c.h.b16 %v309
    %v914 = vunpack.c.l.b16 %v310
    %v915 = vunpack.c.h.b16 %v310
    %v916 = vunpack.c.l.b16 %v311
    %v917 = vunpack.c.h.b16 %v311
    %v918 = vunpack.c.l.b16 %v312
    %v919 = vunpack.c.h.b16 %v312
    %v920 = vunpack.c.l.b16 %v313
    %v921 = vunpack.c.h.b16 %v313
    %v922 = vunpack.c.l.b16 %v314
    %v923 = vunpack.c.h.b16 %v314
    %v924 = vunpack.c.l.b16 %v315
    %v925 = vunpack.c.h.b16 %v315
    %v926 = vunpack.c.l.b16 %v316
    %v927 = vunpack.c.h.b16 %v316
    %v928 = vunpack.c.l.b16 %v317
    %v929 = vunpack.c.h.b16 %v317
    %v930 = vunpack.c.l.b16 %v318
    %v931 = vunpack.c.h.b16 %v318
    %v932 = vunpack.c.l.b16 %v319
    %v933 = vunpack.c.h.b16 %v319
    %v934 = vunpack.c.l.b16 %v320
    %v935 = vunpack.c.h.b16 %v320
    %v936 = vunpack.c.l.b16 %v321
    %v937 = vunpack.c.h.b16 %v321
    %v938 = vunpack.c.l.b16 %v322
    %v939 = vunpack.c.h.b16 %v322
    %v940 = vunpack.c.l.b16 %v323
    %v941 = vunpack.c.h.b16 %v323
    %v942 = vunpack.c.l.b16 %v324
    %v943 = vunpack.c.h.b16 %v324
    %v944 = vunpack.c.l.b16 %v325
    %v945 = vunpack.c.h.b16 %v325
    %v946 = vunpack.c.l.b16 %v326
    %v947 = vunpack.c.h.b16 %v326
    %v948 = vunpack.c.l.b16 %v327
    %v949 = vunpack.c.h.b16 %v327
    %v950 = vunpack.c.l.b16 %v328
    %v951 = vunpack.c.h.b16 %v328
    %v952 = vunpack.c.l.b16 %v329
    %v953 = vunpack.c.h.b16 %v329
    %v954 = vunpack.c.l.b16 %v330
    %v955 = vunpack.c.h.b16 %v330
    %v956 = vunpack.c.l.b16 %v331
    %v957 = vunpack.c.h.b16 %v331
    %v958 = vunpack.c.l.b16 %v332
    %v959 = vunpack.c.h.b16 %v332
    %v960 = vunpack.c.l.b16 %v333
    %v961 = vunpack.c.h.b16 %v333
    %v962 = vunpack.c.l.b16 %v334
    %v963 = vunpack.c.h.b16 %v334
    %v964 = vunpack.c.l.b16 %v335
    %v965 = vunpack.c.h.b16 %v335
    %v966 = vunpack.c.l.b16 %v336
    %v967 = vunpack.c.h.b16 %v336
    %v968 = vunpack.c.l.b16 %v337
    %v969 = vunpack.c.h.b16 %v337
    %v970 = vunpack.c.l.b16 %v338
    %v971 = vunpack.c.h.b16 %v338
    %v972 = vunpack.c.l.b16 %v339
    %v973 = vunpack.c.h.b16 %v339
    %v974 = vunpack.c.l.b16 %v340
    %v975 = vunpack.c.h.b16 %v340
    %v976 = vunpack.c.l.b16 %v341
    %v977 = vunpack.c.h.b16 %v341
    %v978 = vunpack.c.l.b16 %v342
    %v979 = vunpack.c.h.b16 %v342
    %v980 = vunpack.c.l.b16 %v343
    %v981 = vunpack.c.h.b16 %v343
    %v982 = vunpack.c.l.b16 %v344
    %v983 = vunpack.c.h.b16 %v344
    %v984 = vunpack.c.l.b16 %v345
    %v985 = vunpack.c.h.b16 %v345
    %v986 = vunpack.c.l.b16 %v346
    %v987 = vunpack.c.h.b16 %v346
    %v988 = vunpack.c.l.b16 %v347
    %v989 = vunpack.c.h.b16 %v347
    %v990 = vunpack.c.l.b16 %v348
    %v991 = vunpack.c.h.b16 %v348
    %v992 = vunpack.c.l.b16 %v349
    %v993 = vunpack.c.h.b16 %v349
    %v994 = vunpack.c.l.b16 %v350
    %v995 = vunpack.c.h.b16 %v350
    %v996 = vunpack.c.l.b16 %v351
    %v997 = vunpack.c.h.b16 %v351
    %v998 = vunpack.c.l.b16 %v352
    %v999 = vunpack.c.h.b16 %v352
    %v1000 = vunpack.c.l.b16 %v353
    %v1001 = vunpack.c.h.b16 %v353
    %v1002 = vunpack.c.l.b16 %v354
    %v1003 = vunpack.c.h.b16 %v354
    %v1004 = vunpack.c.l.b16 %v355
    %v1005 = vunpack.c.h.b16 %v355
    %v1006 = vunpack.c.l.b16 %v356
    %v1007 = vunpack.c.h.b16 %v356
    %v1008 = vunpack.c.l.b16 %v357
    %v1009 = vunpack.c.h.b16 %v357
    %v1010 = vunpack.c.l.b16 %v358
    %v1011 = vunpack.c.h.b16 %v358
    %v1012 = vunpack.c.l.b16 %v359
    %v1013 = vunpack.c.h.b16 %v359
    %v1014 = vunpack.c.l.b16 %v360
    %v1015 = vunpack.c.h.b16 %v360
    %v1016 = vunpack.c.l.b16 %v361
    %v1017 = vunpack.c.h.b16 %v361
    %v1018 = vunpack.c.l.b16 %v362
    %v1019 = vunpack.c.h.b16 %v362
    %v1020 = vunpack.c.l.b16 %v363
    %v1021 = vunpack.c.h.b16 %v363
    %v1022 = vunpack.c.l.b16 %v364
    %v1023 = vunpack.c.h.b16 %v364
    %v1024 = vunpack.c.l.b16 %v365
    %v1025 = vunpack.c.h.b16 %v365
    %v1026 = vunpack.c.l.b16 %v366
    %v1027 = vunpack.c.h.b16 %v366
    %v1028 = vunpack.c.l.b16 %v367
    %v1029 = vunpack.c.h.b16 %v367
    %v1030 = vunpack.c.l.b16 %v368
    %v1031 = vunpack.c.h.b16 %v368
    %v1032 = vunpack.c.l.b16 %v369
    %v1033 = vunpack.c.h.b16 %v369
    %v1034 = vunpack.c.l.b16 %v370
    %v1035 = vunpack.c.h.b16 %v370
    %v1036 = vunpack.c.l.b16 %v371
    %v1037 = vunpack.c.h.b16 %v371
    %v1038 = vunpack.c.l.b16 %v372
    %v1039 = vunpack.c.h.b16 %v372
    %v1040 = vunpack.c.l.b16 %v373
    %v1041 = vunpack.c.h.b16 %v373
    %v1042 = vunpack.c.l.b16 %v374
    %v1043 = vunpack.c.h.b16 %v374
    %v1044 = vunpack.c.l.b16 %v375
    %v1045 = vunpack.c.h.b16 %v375
    %v1046 = vunpack.c.l.b16 %v376
    %v1047 = vunpack.c.h.b16 %v376
    %v1048 = vunpack.c.l.b16 %v377
    %v1049 = vunpack.c.h.b16 %v377
    %v1050 = vunpack.c.l.b16 %v378
    %v1051 = vunpack.c.h.b16 %v378
    %v1052 = vunpack.c.l.b16 %v379
    %v1053 = vunpack.c.h.b16 %v379
    %v1054 = vunpack.c.l.b16 %v380
    %v1055 = vunpack.c.h.b16 %v380
    %v1056 = vunpack.c.l.b16 %v381
    %v1057 = vunpack.c.h.b16 %v381
    %v1058 = vunpack.c.l.b16 %v382
    %v1059 = vunpack.c.h.b16 %v382
    %v1060 = vunpack.c.l.b16 %v383
    %v1061 = vunpack.c.h.b16 %v383
    %v1062 = vunpack.c.l.b16 %v384
    %v1063 = vunpack.c.h.b16 %v384
    %v1064 = vunpack.c.l.b16 %v385
    %v1065 = vunpack.c.h.b16 %v385
    %v1066 = vunpack.c.l.b16 %v386
    %v1067 = vunpack.c.h.b16 %v386
    %v1068 = vunpack.c.l.b16 %v387
    %v1069 = vunpack.c.h.b16 %v387
    %v1070 = vunpack.c.l.b16 %v388
    %v1071 = vunpack.c.h.b16 %v388
    %v1072 = vunpack.c.l.b16 %v389
    %v1073 = vunpack.c.h.b16 %v389
    %v1074 = vunpack.c.l.b16 %v390
    %v1075 = vunpack.c.h.b16 %v390
    %v1076 = vunpack.c.l.b16 %v391
    %v1077 = vunpack.c.h.b16 %v391
    %v1078 = vunpack.c.l.b16 %v392
    %v1079 = vunpack.c.h.b16 %v392
    %v1080 = vunpack.c.l.b16 %v393
    %v1081 = vunpack.c.h.b16 %v393
    %v1082 = vunpack.c.l.b16 %v394
    %v1083 = vunpack.c.h.b16 %v394
    %v1084 = vunpack.c.l.b16 %v395
    %v1085 = vunpack.c.h.b16 %v395
    %v1086 = vunpack.c.l.b16 %v396
    %v1087 = vunpack.c.h.b16 %v396
    %v1088 = vunpack.c.l.b16 %v397
    %v1089 = vunpack.c.h.b16 %v397
    %v1090 = vunpack.c.l.b16 %v398
    %v1091 = vunpack.c.h.b16 %v398
    %v1092 = vunpack.c.l.b16 %v399
    %v1093 = vunpack.c.h.b16 %v399
    %v1094 = vunpack.c.l.b16 %v400
    %v1095 = vunpack.c.h.b16 %v400
    %v1096 = vunpack.c.l.b16 %v401
    %v1097 = vunpack.c.h.b16 %v401
    %v1098 = vunpack.c.l.b16 %v402
    %v1099 = vunpack.c.h.b16 %v402
    %v1100 = vunpack.c.l.b16 %v403
    %v1101 = vunpack.c.h.b16 %v403
    %v1102 = vunpack.c.l.b16 %v404
    %v1103 = vunpack.c.h.b16 %v404
    %v1104 = vunpack.c.l.b16 %v405
    %v1105 = vunpack.c.h.b16 %v405
    %v1106 = vunpack.c.l.b16 %v406
    %v1107 = vunpack.c.h.b16 %v406
    %v1108 = vunpack.c.l.b16 %v407
    %v1109 = vunpack.c.h.b16 %v407
    %v1110 = vunpack.c.l.b16 %v408
    %v1111 = vunpack.c.h.b16 %v408
    %v1112 = vunpack.c.l.b16 %v409
    %v1113 = vunpack.c.h.b16 %v409
    %v1114 = vunpack.c.l.b16 %v410
    %v1115 = vunpack.c.h.b16 %v410
    %v1116 = vunpack.c.l.b16 %v411
    %v1117 = vunpack.c.h.b16 %v411
    %v1118 = vunpack.c.l.b16 %v412
    %v1119 = vunpack.c.h.b16 %v412
    %v1120 = vunpack.c.l.b16 %v413
    %v1121 = vunpack.c.h.b16 %v413
    %v1122 = vunpack.c.l.b16 %v414
    %v1123 = vunpack.c.h.b16 %v414
    %v1124 = vunpack.c.l.b16 %v415
    %v1125 = vunpack.c.h.b16 %v415
    %v1126 = vunpack.c.l.b16 %v416
    %v1127 = vunpack.c.h.b16 %v416
    %v1128 = vunpack.c.l.b16 %v417
    %v1129 = vunpack.c.h.b16 %v417
    %v1130 = vunpack.c.l.b16 %v418
    %v1131 = vunpack.c.h.b16 %v418
    %v1132 = vunpack.c.l.b16 %v419
    %v1133 = vunpack.c.h.b16 %v419
    %v1134 = vunpack.c.l.b16 %v420
    %v1135 = vunpack.c.h.b16 %v420
    %v1136 = vunpack.c.l.b16 %v421
    %v1137 = vunpack.c.h.b16 %v421
    %v1138 = vunpack.c.l.b16 %v422
    %v1139 = vunpack.c.h.b16 %v422
    %v1140 = vunpack.c.l.b16 %v423
    %v1141 = vunpack.c.h.b16 %v423
    %v1142 = vunpack.c.l.b16 %v424
    %v1143 = vunpack.c.h.b16 %v424
    %v1144 = vunpack.c.l.b16 %v425
    %v1145 = vunpack.c.h.b16 %v425
    %v1146 = vunpack.c.l.b16 %v426
    %v1147 = vunpack.c.h.b16 %v426
    %v1148 = vunpack.c.l.b16 %v427
    %v1149 = vunpack.c.h.b16 %v427
    %v1150 = vunpack.c.l.b16 %v428
    %v1151 = vunpack.c.h.b16 %v428
    %v1152 = vunpack.c.l.b16 %v429
    %v1153 = vunpack.c.h.b16 %v429
    %v1154 = vunpack.c.l.b16 %v430
    %v1155 = vunpack.c.h.b16 %v430
    %v1156 = vunpack.c.l.b16 %v431
    %v1157 = vunpack.c.h.b16 %v431
    %v1158 = vunpack.c.l.b16 %v432
    %v1159 = vunpack.c.h.b16 %v432
    %v1160 = vunpack.c.l.b16 %v433
    %v1161 = vunpack.c.h.b16 %v433
    %v1162 = vunpack.c.l.b16 %v434
    %v1163 = vunpack.c.h.b16 %v434
    %v1164 = vunpack.c.l.b16 %v435
    %v1165 = vunpack.c.h.b16 %v435
    %v1166 = vunpack.c.l.b16 %v436
    %v1167 = vunpack.c.h.b16 %v436
    %v1168 = vunpack.c.l.b16 %v437
    %v1169 = vunpack.c.h.b16 %v437
    %v1170 = vunpack.c.l.b16 %v438
    %v1171 = vunpack.c.h.b16 %v438
    %v1172 = vunpack.c.l.b16 %v439
    %v1173 = vunpack.c.h.b16 %v439
    %v1174 = vunpack.c.l.b16 %v440
    %v1175 = vunpack.c.h.b16 %v440
    %v1176 = vunpack.c.l.b16 %v441
    %v1177 = vunpack.c.h.b16 %v441
    %v1178 = vunpack.c.l.b16 %v442
    %v1179 = vunpack.c.h.b16 %v442
    %v1180 = vunpack.c.l.b16 %v443
    %v1181 = vunpack.c.h.b16 %v443
    %v1182 = vunpack.c.l.b16 %v444
    %v1183 = vunpack.c.h.b16 %v444
    %v1184 = vunpack.c.l.b16 %v445
    %v1185 = vunpack.c.h.b16 %v445
    %v1186 = vunpack.c.l.b16 %v446
    %v1187 = vunpack.c.h.b16 %v446
    %v1188 = vunpack.c.l.b16 %v447
    %v1189 = vunpack.c.h.b16 %v447
    %v1190 = vunpack.c.l.b16 %v448
    %v1191 = vunpack.c.h.b16 %v448
    %v1192 = vunpack.c.l.b16 %v449
    %v1193 = vunpack.c.h.b16 %v449
    %v1194 = vunpack.c.l.b16 %v450
    %v1195 = vunpack.c.h.b16 %v450
    %v1196 = vunpack.c.l.b16 %v451
    %v1197 = vunpack.c.h.b16 %v451
    %v1198 = vunpack.c.l.b16 %v452
    %v1199 = vunpack.c.h.b16 %v452
    %v1200 = vunpack.c.l.b16 %v453
    %v1201 = vunpack.c.h.b16 %v453
    %v1202 = vunpack.c.l.b16 %v454
    %v1203 = vunpack.c.h.b16 %v454
    %v1204 = vunpack.c.l.b16 %v455
    %v1205 = vunpack.c.h.b16 %v455
    %v1206 = vunpack.c.l.b16 %v456
    %v1207 = vunpack.c.h.b16 %v456
    %v1208 = vunpack.c.l.b16 %v457
    %v1209 = vunpack.c.h.b16 %v457
    %v1210 = vunpack.c.l.b16 %v458
    %v1211 = vunpack.c.h.b16 %v458
    %v1212 = vunpack.c.l.b16 %v459
    %v1213 = vunpack.c.h.b16 %v459
    %v1214 = vunpack.c.l.b16 %v460
    %v1215 = vunpack.c.h.b16 %v460
    %v1216 = vunpack.c.l.b16 %v461
    %v1217 = vunpack.c.h.b16 %v461
    %v1218 = vunpack.c.l.b16 %v462
    %v1219 = vunpack.c.h.b16 %v462
    %v1220 = vunpack.c.l.b16 %v463
    %v1221 = vunpack.c.h.b16 %v463
    %v1222 = vunpack.c.l.b16 %v464
    %v1223 = vunpack.c.h.b16 %v464
    %v1224 = vunpack.c.l.b16 %v465
    %v1225 = vunpack.c.h.b16 %v465
    %v1226 = vunpack.c.l.b16 %v466
    %v1227 = vunpack.c.h.b16 %v466
    %v1228 = vunpack.c.l.b16 %v467
    %v1229 = vunpack.c.h.b16 %v467
    %v1230 = vunpack.c.l.b16 %v468
    %v1231 = vunpack.c.h.b16 %v468
    %v1232 = vunpack.c.l.b16 %v469
    %v1233 = vunpack.c.h.b16 %v469
    %v1234 = vunpack.c.l.b16 %v470
    %v1235 = vunpack.c.h.b16 %v470
    %v1236 = vunpack.c.l.b16 %v471
    %v1237 = vunpack.c.h.b16 %v471
    %v1238 = vunpack.c.l.b16 %v472
    %v1239 = vunpack.c.h.b16 %v472
    %v1240 = vunpack.c.l.b16 %v473
    %v1241 = vunpack.c.h.b16 %v473
    %v1242 = vunpack.c.l.b16 %v474
    %v1243 = vunpack.c.h.b16 %v474
    %v1244 = vunpack.c.l.b16 %v475
    %v1245 = vunpack.c.h.b16 %v475
    %v1246 = vunpack.c.l.b16 %v476
    %v1247 = vunpack.c.h.b16 %v476
    %v1248 = vunpack.c.l.b16 %v477
    %v1249 = vunpack.c.h.b16 %v477
    %v1250 = vunpack.c.l.b16 %v478
    %v1251 = vunpack.c.h.b16 %v478
    %v1252 = vunpack.c.l.b16 %v479
    %v1253 = vunpack.c.h.b16 %v479
    %v1254 = vunpack.c.l.b16 %v480
    %v1255 = vunpack.c.h.b16 %v480
    %v1256 = vunpack.c.l.b16 %v481
    %v1257 = vunpack.c.h.b16 %v481
    %v1258 = vunpack.c.l.b16 %v482
    %v1259 = vunpack.c.h.b16 %v482
    %v1260 = vunpack.c.l.b16 %v483
    %v1261 = vunpack.c.h.b16 %v483
    %v1262 = vpack.c.b16 %v754, %v750
    %v1263 = vpack.c.b16 %v755, %v751
    %v1264 = vpack.c.b16 %v756, %v752
    %v1265 = vpack.c.b16 %v757, %v753
    %v1266 = vpack.c.b16 %v762, %v758
    %v1267 = vpack.c.b16 %v763, %v759
    %v1268 = vpack.c.b16 %v764, %v760
    %v1269 = vpack.c.b16 %v765, %v761
    %v1270 = vpack.c.b16 %v770, %v766
    %v1271 = vpack.c.b16 %v771, %v767
    %v1272 = vpack.c.b16 %v772, %v768
    %v1273 = vpack.c.b16 %v773, %v769
    %v1274 = vpack.c.b16 %v778, %v774
    %v1275 = vpack.c.b16 %v779, %v775
    %v1276 = vpack.c.b16 %v780, %v776
    %v1277 = vpack.c.b16 %v781, %v777
    %v1278 = vpack.c.b16 %v786, %v782
    %v1279 = vpack.c.b16 %v787, %v783
    %v1280 = vpack.c.b16 %v788, %v784
    %v1281 = vpack.c.b16 %v789, %v785
    %v1282 = vpack.c.b16 %v794, %v790
    %v1283 = vpack.c.b16 %v795, %v791
    %v1284 = vpack.c.b16 %v796, %v792
    %v1285 = vpack.c.b16 %v797, %v793
    %v1286 = vpack.c.b16 %v802, %v798
    %v1287 = vpack.c.b16 %v803, %v799
    %v1288 = vpack.c.b16 %v804, %v800
    %v1289 = vpack.c.b16 %v805, %v801
    %v1290 = vpack.c.b16 %v810, %v806
    %v1291 = vpack.c.b16 %v811, %v807
    %v1292 = vpack.c.b16 %v812, %v808
    %v1293 = vpack.c.b16 %v813, %v809
    %v1294 = vpack.c.b16 %v818, %v814
    %v1295 = vpack.c.b16 %v819, %v815
    %v1296 = vpack.c.b16 %v820, %v816
    %v1297 = vpack.c.b16 %v821, %v817
    %v1298 = vpack.c.b16 %v826, %v822
    %v1299 = vpack.c.b16 %v827, %v823
    %v1300 = vpack.c.b16 %v828, %v824
    %v1301 = vpack.c.b16 %v829, %v825
    %v1302 = vpack.c.b16 %v834, %v830
    %v1303 = vpack.c.b16 %v835, %v831
    %v1304 = vpack.c.b16 %v836, %v832
    %v1305 = vpack.c.b16 %v837, %v833
    %v1306 = vpack.c.b16 %v842, %v838
    %v1307 = vpack.c.b16 %v843, %v839
    %v1308 = vpack.c.b16 %v844, %v840
    %v1309 = vpack.c.b16 %v845, %v841
    %v1310 = vpack.c.b16 %v850, %v846
    %v1311 = vpack.c.b16 %v851, %v847
    %v1312 = vpack.c.b16 %v852, %v848
    %v1313 = vpack.c.b16 %v853, %v849
    %v1314 = vpack.c.b16 %v858, %v854
    %v1315 = vpack.c.b16 %v859, %v855
    %v1316 = vpack.c.b16 %v860, %v856
    %v1317 = vpack.c.b16 %v861, %v857
    %v1318 = vpack.c.b16 %v866, %v862
    %v1319 = vpack.c.b16 %v867, %v863
    %v1320 = vpack.c.b16 %v868, %v864
    %v1321 = vpack.c.b16 %v869, %v865
    %v1322 = vpack.c.b16 %v874, %v870
    %v1323 = vpack.c.b16 %v875, %v871
    %v1324 = vpack.c.b16 %v876, %v872
    %v1325 = vpack.c.b16 %v877, %v873
    %v1326 = vpack.c.b16 %v882, %v878
    %v1327 = vpack.c.b16 %v883, %v879
    %v1328 = vpack.c.b16 %v884, %v880
    %v1329 = vpack.c.b16 %v885, %v881
    %v1330 = vpack.c.b16 %v890, %v886
    %v1331 = vpack.c.b16 %v891, %v887
    %v1332 = vpack.c.b16 %v892, %v888
    %v1333 = vpack.c.b16 %v893, %v889
    %v1334 = vpack.c.b16 %v898, %v894
    %v1335 = vpack.c.b16 %v899, %v895
    %v1336 = vpack.c.b16 %v900, %v896
    %v1337 = vpack.c.b16 %v901, %v897
    %v1338 = vpack.c.b16 %v906, %v902
    %v1339 = vpack.c.b16 %v907, %v903
    %v1340 = vpack.c.b16 %v908, %v904
    %v1341 = vpack.c.b16 %v909, %v905
    %v1342 = vpack.c.b16 %v914, %v910
    %v1343 = vpack.c.b16 %v915, %v911
    %v1344 = vpack.c.b16 %v916, %v912
    %v1345 = vpack.c.b16 %v917, %v913
    %v1346 = vpack.c.b16 %v922, %v918
    %v1347 = vpack.c.b16 %v923, %v919
    %v1348 = vpack.c.b16 %v924, %v920
    %v1349 = vpack.c.b16 %v925, %v921
    %v1350 = vpack.c.b16 %v930, %v926
    %v1351 = vpack.c.b16 %v931, %v927
    %v1352 = vpack.c.b16 %v932, %v928
    %v1353 = vpack.c.b16 %v933, %v929
    %v1354 = vpack.c.b16 %v938, %v934
    %v1355 = vpack.c.b16 %v939, %v935
    %v1356 = vpack.c.b16 %v940, %v936
    %v1357 = vpack.c.b16 %v941, %v937
    %v1358 = vpack.c.b16 %v946, %v942
    %v1359 = vpack.c.b16 %v947, %v943
    %v1360 = vpack.c.b16 %v948, %v944
    %v1361 = vpack.c.b16 %v949, %v945
    %v1362 = vpack.c.b16 %v954, %v950
    %v1363 = vpack.c.b16 %v955, %v951
    %v1364 = vpack.c.b16 %v956, %v952
    %v1365 = vpack.c.b16 %v957, %v953
    %v1366 = vpack.c.b16 %v962, %v958
    %v1367 = vpack.c.b16 %v963, %v959
    %v1368 = vpack.c.b16 %v964, %v960
    %v1369 = vpack.c.b16 %v965, %v961
    %v1370 = vpack.c.b16 %v970, %v966
    %v1371 = vpack.c.b16 %v971, %v967
    %v1372 = vpack.c.b16 %v972, %v968
    %v1373 = vpack.c.b16 %v973, %v969
    %v1374 = vpack.c.b16 %v978, %v974
    %v1375 = vpack.c.b16 %v979, %v975
    %v1376 = vpack.c.b16 %v980, %v976
    %v1377 = vpack.c.b16 %v981, %v977
    %v1378 = vpack.c.b16 %v986, %v982
    %v1379 = vpack.c.b16 %v987, %v983
    %v1380 = vpack.c.b16 %v988, %v984
    %v1381 = vpack.c.b16 %v989, %v985
    %v1382 = vpack.c.b16 %v994, %v990
    %v1383 = vpack.c.b16 %v995, %v991
    %v1384 = vpack.c.b16 %v996, %v992
    %v1385 = vpack.c.b16 %v997, %v993
    %v1386 = vpack.c.b16 %v1002, %v998
    %v1387 = vpack.c.b16 %v1003, %v999
    %v1388 = vpack.c.b16 %v1004, %v1000
    %v1389 = vpack.c.b16 %v1005, %v1001
    %v1390 = vpack.c.b16 %v1010, %v1006
    %v1391 = vpack.c.b16 %v1011, %v1007
    %v1392 = vpack.c.b16 %v1012, %v1008
    %v1393 = vpack.c.b16 %v1013, %v1009
    %v1394 = vpack.c.b16 %v1018, %v1014
    %v1395 = vpack.c.b16 %v1019, %v1015
    %v1396 = vpack.c.b16 %v1020, %v1016
    %v1397 = vpack.c.b16 %v1021, %v1017
    %v1398 = vpack.c.b16 %v1026, %v1022
    %v1399 = vpack.c.b16 %v1027, %v1023
    %v1400 = vpack.c.b16 %v1028, %v1024
    %v1401 = vpack.c.b16 %v1029, %v1025
    %v1402 = vpack.c.b16 %v1034, %v1030
    %v1403 = vpack.c.b16 %v1035, %v1031
    %v1404 = vpack.c.b16 %v1036, %v1032
    %v1405 = vpack.c.b16 %v1037, %v1033
    %v1406 = vpack.c.b16 %v1042, %v1038
    %v1407 = vpack.c.b16 %v1043, %v1039
    %v1408 = vpack.c.b16 %v1044, %v1040
    %v1409 = vpack.c.b16 %v1045, %v1041
    %v1410 = vpack.c.b16 %v1050, %v1046
    %v1411 = vpack.c.b16 %v1051, %v1047
    %v1412 = vpack.c.b16 %v1052, %v1048
    %v1413 = vpack.c.b16 %v1053, %v1049
    %v1414 = vpack.c.b16 %v1058, %v1054
    %v1415 = vpack.c.b16 %v1059, %v1055
    %v1416 = vpack.c.b16 %v1060, %v1056
    %v1417 = vpack.c.b16 %v1061, %v1057
    %v1418 = vpack.c.b16 %v1066, %v1062
    %v1419 = vpack.c.b16 %v1067, %v1063
    %v1420 = vpack.c.b16 %v1068, %v1064
    %v1421 = vpack.c.b16 %v1069, %v1065
    %v1422 = vpack.c.b16 %v1074, %v1070
    %v1423 = vpack.c.b16 %v1075, %v1071
    %v1424 = vpack.c.b16 %v1076, %v1072
    %v1425 = vpack.c.b16 %v1077, %v1073
    %v1426 = vpack.c.b16 %v1082, %v1078
    %v1427 = vpack.c.b16 %v1083, %v1079
    %v1428 = vpack.c.b16 %v1084, %v1080
    %v1429 = vpack.c.b16 %v1085, %v1081
    %v1430 = vpack.c.b16 %v1090, %v1086
    %v1431 = vpack.c.b16 %v1091, %v1087
    %v1432 = vpack.c.b16 %v1092, %v1088
    %v1433 = vpack.c.b16 %v1093, %v1089
    %v1434 = vpack.c.b16 %v1098, %v1094
    %v1435 = vpack.c.b16 %v1099, %v1095
    %v1436 = vpack.c.b16 %v1100, %v1096
    %v1437 = vpack.c.b16 %v1101, %v1097
    %v1438 = vpack.c.b16 %v1106, %v1102
    %v1439 = vpack.c.b16 %v1107, %v1103
    %v1440 = vpack.c.b16 %v1108, %v1104
    %v1441 = vpack.c.b16 %v1109, %v1105
    %v1442 = vpack.c.b16 %v1114, %v1110
    %v1443 = vpack.c.b16 %v1115, %v1111
    %v1444 = vpack.c.b16 %v1116, %v1112
    %v1445 = vpack.c.b16 %v1117, %v1113
    %v1446 = vpack.c.b16 %v1122, %v1118
    %v1447 = vpack.c.b16 %v1123, %v1119
    %v1448 = vpack.c.b16 %v1124, %v1120
    %v1449 = vpack.c.b16 %v1125, %v1121
    %v1450 = vpack.c.b16 %v1130, %v1126
    %v1451 = vpack.c.b16 %v1131, %v1127
    %v1452 = vpack.c.b16 %v1132, %v1128
    %v1453 = vpack.c.b16 %v1133, %v1129
    %v1454 = vpack.c.b16 %v1138, %v1134
    %v1455 = vpack.c.b16 %v1139, %v1135
    %v1456 = vpack.c.b16 %v1140, %v1136
    %v1457 = vpack.c.b16 %v1141, %v1137
    %v1458 = vpack.c.b16 %v1146, %v1142
    %v1459 = vpack.c.b16 %v1147, %v1143
    %v1460 = vpack.c.b16 %v1148, %v1144
    %v1461 = vpack.c.b16 %v1149, %v1145
    %v1462 = vpack.c.b16 %v1154, %v1150
    %v1463 = vpack.c.b16 %v1155, %v1151
    %v1464 = vpack.c.b16 %v1156, %v1152
    %v1465 = vpack.c.b16 %v1157, %v1153
    %v1466 = vpack.c.b16 %v1162, %v1158
    %v1467 = vpack.c.b16 %v1163, %v1159
    %v1468 = vpack.c.b16 %v1164, %v1160
    %v1469 = vpack.c.b16 %v1165, %v1161
    %v1470 = vpack.c.b16 %v1170, %v1166
    %v1471 = vpack.c.b16 %v1171, %v1167
    %v1472 = vpack.c.b16 %v1172, %v1168
    %v1473 = vpack.c.b16 %v1173, %v1169
    %v1474 = vpack.c.b16 %v1178, %v1174
    %v1475 = vpack.c.b16 %v1179, %v1175
    %v1476 = vpack.c.b16 %v1180, %v1176
    %v1477 = vpack.c.b16 %v1181, %v1177
    %v1478 = vpack.c.b16 %v1186, %v1182
    %v1479 = vpack.c.b16 %v1187, %v1183
    %v1480 = vpack.c.b16 %v1188, %v1184
    %v1481 = vpack.c.b16 %v1189, %v1185
    %v1482 = vpack.c.b16 %v1194, %v1190
    %v1483 = vpack.c.b16 %v1195, %v1191
    %v1484 = vpack.c.b16 %v1196, %v1192
    %v1485 = vpack.c.b16 %v1197, %v1193
    %v1486 = vpack.c.b16 %v1202, %v1198
    %v1487 = vpack.c.b16 %v1203, %v1199
    %v1488 = vpack.c.b16 %v1204, %v1200
    %v1489 = vpack.c.b16 %v1205, %v1201
    %v1490 = vpack.c.b16 %v1210, %v1206
    %v1491 = vpack.c.b16 %v1211, %v1207
    %v1492 = vpack.c.b16 %v1212, %v1208
    %v1493 = vpack.c.b16 %v1213, %v1209
    %v1494 = vpack.c.b16 %v1218, %v1214
    %v1495 = vpack.c.b16 %v1219, %v1215
    %v1496 = vpack.c.b16 %v1220, %v1216
    %v1497 = vpack.c.b16 %v1221, %v1217
    %v1498 = vpack.c.b16 %v1226, %v1222
    %v1499 = vpack.c.b16 %v1227, %v1223
    %v1500 = vpack.c.b16 %v1228, %v1224
    %v1501 = vpack.c.b16 %v1229, %v1225
    %v1502 = vpack.c.b16 %v1234, %v1230
    %v1503 = vpack.c.b16 %v1235, %v1231
    %v1504 = vpack.c.b16 %v1236, %v1232
    %v1505 = vpack.c.b16 %v1237, %v1233
    %v1506 = vpack.c.b16 %v1242, %v1238
    %v1507 = vpack.c.b16 %v1243, %v1239
    %v1508 = vpack.c.b16 %v1244, %v1240
    %v1509 = vpack.c.b16 %v1245, %v1241
    %v1510 = vpack.c.b16 %v1250, %v1246
    %v1511 = vpack.c.b16 %v1251, %v1247
    %v1512 = vpack.c.b16 %v1252, %v1248
    %v1513 = vpack.c.b16 %v1253, %v1249
    %v1514 = vpack.c.b16 %v1258, %v1254
    %v1515 = vpack.c.b16 %v1259, %v1255
    %v1516 = vpack.c.b16 %v1260, %v1256
    %v1517 = vpack.c.b16 %v1261, %v1257
    %1774 = vmatpush.bf16.msra.mxu0 %v1290
    %1775 = vmatpush.bf16.msra.mxu0 %v1286
    %1776 = vmatpush.bf16.msra.mxu0 %v1282
    %1777 = vmatpush.bf16.msra.mxu0 %v1278
    %1778 = vmatpush.bf16.msra.mxu0 %v1274
    %1779 = vmatpush.bf16.msra.mxu0 %v1270
    %1780 = vmatpush.bf16.msra.mxu0 %v1266
    %1781 = vmatpush.bf16.msra.mxu0 %v1262
    %1782 = vmatmul.bf16.gmra.mxu0 %v220
    %v1783 = vpop.f32.mrf.mxu0
    %v1784 = vadd.f32 %v486, %v1783
    %v1785 = vpop.f32.mrf.mxu0
    %1786 = vdwg.mxu0
    %1787 = vmatpush.bf16.msra.mxu0 %v1322
    %1788 = vmatpush.bf16.msra.mxu0 %v1318
    %1789 = vmatpush.bf16.msra.mxu0 %v1314
    %1790 = vmatpush.bf16.msra.mxu0 %v1310
    %1791 = vmatpush.bf16.msra.mxu0 %v1306
    %1792 = vmatpush.bf16.msra.mxu0 %v1302
    %1793 = vmatpush.bf16.msra.mxu0 %v1298
    %1794 = vmatpush.bf16.msra.mxu0 %v1294
    %1795 = vmatmul.bf16.gmra.mxu0 %v221
    %v1796 = vpop.f32.mrf.mxu0
    %v1797 = vadd.f32 %v1784, %v1796
    %v1798 = vpop.f32.mrf.mxu0
    %1799 = vdwg.mxu0
    %1800 = vmatpush.bf16.msra.mxu0 %v1354
    %1801 = vmatpush.bf16.msra.mxu0 %v1350
    %1802 = vmatpush.bf16.msra.mxu0 %v1346
    %1803 = vmatpush.bf16.msra.mxu0 %v1342
    %1804 = vmatpush.bf16.msra.mxu0 %v1338
    %1805 = vmatpush.bf16.msra.mxu0 %v1334
    %1806 = vmatpush.bf16.msra.mxu0 %v1330
    %1807 = vmatpush.bf16.msra.mxu0 %v1326
    %1808 = vmatmul.bf16.gmra.mxu0 %v222
    %v1809 = vpop.f32.mrf.mxu0
    %v1810 = vadd.f32 %v1797, %v1809
    %v1811 = vpop.f32.mrf.mxu0
    %1812 = vdwg.mxu0
    %1813 = vmatpush.bf16.msra.mxu0 %v1386
    %1814 = vmatpush.bf16.msra.mxu0 %v1382
    %1815 = vmatpush.bf16.msra.mxu0 %v1378
    %1816 = vmatpush.bf16.msra.mxu0 %v1374
    %1817 = vmatpush.bf16.msra.mxu0 %v1370
    %1818 = vmatpush.bf16.msra.mxu0 %v1366
    %1819 = vmatpush.bf16.msra.mxu0 %v1362
    %1820 = vmatpush.bf16.msra.mxu0 %v1358
    %1821 = vmatmul.bf16.gmra.mxu0 %v223
    %v1822 = vpop.f32.mrf.mxu0
    %v1823 = vadd.f32 %v1810, %v1822
    %v1824 = vpop.f32.mrf.mxu0
    %1825 = vdwg.mxu0
    %1826 = vmatpush.bf16.msra.mxu0 %v1418
    %1827 = vmatpush.bf16.msra.mxu0 %v1414
    %1828 = vmatpush.bf16.msra.mxu0 %v1410
    %1829 = vmatpush.bf16.msra.mxu0 %v1406
    %1830 = vmatpush.bf16.msra.mxu0 %v1402
    %1831 = vmatpush.bf16.msra.mxu0 %v1398
    %1832 = vmatpush.bf16.msra.mxu0 %v1394
    %1833 = vmatpush.bf16.msra.mxu0 %v1390
    %1834 = vmatmul.bf16.gmra.mxu0 %v224
    %v1835 = vpop.f32.mrf.mxu0
    %v1836 = vadd.f32 %v1823, %v1835
    %v1837 = vpop.f32.mrf.mxu0
    %1838 = vdwg.mxu0
    %1839 = vmatpush.bf16.msra.mxu0 %v1450
    %1840 = vmatpush.bf16.msra.mxu0 %v1446
    %1841 = vmatpush.bf16.msra.mxu0 %v1442
    %1842 = vmatpush.bf16.msra.mxu0 %v1438
    %1843 = vmatpush.bf16.msra.mxu0 %v1434
    %1844 = vmatpush.bf16.msra.mxu0 %v1430
    %1845 = vmatpush.bf16.msra.mxu0 %v1426
    %1846 = vmatpush.bf16.msra.mxu0 %v1422
    %1847 = vmatmul.bf16.gmra.mxu0 %v225
    %v1848 = vpop.f32.mrf.mxu0
    %v1849 = vadd.f32 %v1836, %v1848
    %v1850 = vpop.f32.mrf.mxu0
    %1851 = vdwg.mxu0
    %1852 = vmatpush.bf16.msra.mxu0 %v1482
    %1853 = vmatpush.bf16.msra.mxu0 %v1478
    %1854 = vmatpush.bf16.msra.mxu0 %v1474
    %1855 = vmatpush.bf16.msra.mxu0 %v1470
    %1856 = vmatpush.bf16.msra.mxu0 %v1466
    %1857 = vmatpush.bf16.msra.mxu0 %v1462
    %1858 = vmatpush.bf16.msra.mxu0 %v1458
    %1859 = vmatpush.bf16.msra.mxu0 %v1454
    %1860 = vmatmul.bf16.gmra.mxu0 %v226
    %v1861 = vpop.f32.mrf.mxu0
    %v1862 = vadd.f32 %v1849, %v1861
    %v1863 = vpop.f32.mrf.mxu0
    %1864 = vdwg.mxu0
    %1865 = vmatpush.bf16.msra.mxu0 %v1514
    %1866 = vmatpush.bf16.msra.mxu0 %v1510
    %1867 = vmatpush.bf16.msra.mxu0 %v1506
    %1868 = vmatpush.bf16.msra.mxu0 %v1502
    %1869 = vmatpush.bf16.msra.mxu0 %v1498
    %1870 = vmatpush.bf16.msra.mxu0 %v1494
    %1871 = vmatpush.bf16.msra.mxu0 %v1490
    %1872 = vmatpush.bf16.msra.mxu0 %v1486
    %1873 = vmatmul.bf16.gmra.mxu0 %v227
    %v1874 = vpop.f32.mrf.mxu0
    %v1875 = vadd.f32 %v1862, %v1874
    %v1876 = vpop.f32.mrf.mxu0
    %1877 = vdwg.mxu0
    %1878 = vmatpush.bf16.msra.mxu0 %v1291
    %1879 = vmatpush.bf16.msra.mxu0 %v1287
    %1880 = vmatpush.bf16.msra.mxu0 %v1283
    %1881 = vmatpush.bf16.msra.mxu0 %v1279
    %1882 = vmatpush.bf16.msra.mxu0 %v1275
    %1883 = vmatpush.bf16.msra.mxu0 %v1271
    %1884 = vmatpush.bf16.msra.mxu0 %v1267
    %1885 = vmatpush.bf16.msra.mxu0 %v1263
    %1886 = vmatmul.bf16.gmra.mxu0 %v220
    %v1887 = vpop.f32.mrf.mxu0
    %v1888 = vadd.f32 %v487, %v1887
    %v1889 = vpop.f32.mrf.mxu0
    %1890 = vdwg.mxu0
    %1891 = vmatpush.bf16.msra.mxu0 %v1323
    %1892 = vmatpush.bf16.msra.mxu0 %v1319
    %1893 = vmatpush.bf16.msra.mxu0 %v1315
    %1894 = vmatpush.bf16.msra.mxu0 %v1311
    %1895 = vmatpush.bf16.msra.mxu0 %v1307
    %1896 = vmatpush.bf16.msra.mxu0 %v1303
    %1897 = vmatpush.bf16.msra.mxu0 %v1299
    %1898 = vmatpush.bf16.msra.mxu0 %v1295
    %1899 = vmatmul.bf16.gmra.mxu0 %v221
    %v1900 = vpop.f32.mrf.mxu0
    %v1901 = vadd.f32 %v1888, %v1900
    %v1902 = vpop.f32.mrf.mxu0
    %1903 = vdwg.mxu0
    %1904 = vmatpush.bf16.msra.mxu0 %v1355
    %1905 = vmatpush.bf16.msra.mxu0 %v1351
    %1906 = vmatpush.bf16.msra.mxu0 %v1347
    %1907 = vmatpush.bf16.msra.mxu0 %v1343
    %1908 = vmatpush.bf16.msra.mxu0 %v1339
    %1909 = vmatpush.bf16.msra.mxu0 %v1335
    %1910 = vmatpush.bf16.msra.mxu0 %v1331
    %1911 = vmatpush.bf16.msra.mxu0 %v1327
    %1912 = vmatmul.bf16.gmra.mxu0 %v222
    %v1913 = vpop.f32.mrf.mxu0
    %v1914 = vadd.f32 %v1901, %v1913
    %v1915 = vpop.f32.mrf.mxu0
    %1916 = vdwg.mxu0
    %1917 = vmatpush.bf16.msra.mxu0 %v1387
    %1918 = vmatpush.bf16.msra.mxu0 %v1383
    %1919 = vmatpush.bf16.msra.mxu0 %v1379
    %1920 = vmatpush.bf16.msra.mxu0 %v1375
    %1921 = vmatpush.bf16.msra.mxu0 %v1371
    %1922 = vmatpush.bf16.msra.mxu0 %v1367
    %1923 = vmatpush.bf16.msra.mxu0 %v1363
    %1924 = vmatpush.bf16.msra.mxu0 %v1359
    %1925 = vmatmul.bf16.gmra.mxu0 %v223
    %v1926 = vpop.f32.mrf.mxu0
    %v1927 = vadd.f32 %v1914, %v1926
    %v1928 = vpop.f32.mrf.mxu0
    %1929 = vdwg.mxu0
    %1930 = vmatpush.bf16.msra.mxu0 %v1419
    %1931 = vmatpush.bf16.msra.mxu0 %v1415
    %1932 = vmatpush.bf16.msra.mxu0 %v1411
    %1933 = vmatpush.bf16.msra.mxu0 %v1407
    %1934 = vmatpush.bf16.msra.mxu0 %v1403
    %1935 = vmatpush.bf16.msra.mxu0 %v1399
    %1936 = vmatpush.bf16.msra.mxu0 %v1395
    %1937 = vmatpush.bf16.msra.mxu0 %v1391
    %1938 = vmatmul.bf16.gmra.mxu0 %v224
    %v1939 = vpop.f32.mrf.mxu0
    %v1940 = vadd.f32 %v1927, %v1939
    %v1941 = vpop.f32.mrf.mxu0
    %1942 = vdwg.mxu0
    %1943 = vmatpush.bf16.msra.mxu0 %v1451
    %1944 = vmatpush.bf16.msra.mxu0 %v1447
    %1945 = vmatpush.bf16.msra.mxu0 %v1443
    %1946 = vmatpush.bf16.msra.mxu0 %v1439
    %1947 = vmatpush.bf16.msra.mxu0 %v1435
    %1948 = vmatpush.bf16.msra.mxu0 %v1431
    %1949 = vmatpush.bf16.msra.mxu0 %v1427
    %1950 = vmatpush.bf16.msra.mxu0 %v1423
    %1951 = vmatmul.bf16.gmra.mxu0 %v225
    %v1952 = vpop.f32.mrf.mxu0
    %v1953 = vadd.f32 %v1940, %v1952
    %v1954 = vpop.f32.mrf.mxu0
    %1955 = vdwg.mxu0
    %1956 = vmatpush.bf16.msra.mxu0 %v1483
    %1957 = vmatpush.bf16.msra.mxu0 %v1479
    %1958 = vmatpush.bf16.msra.mxu0 %v1475
    %1959 = vmatpush.bf16.msra.mxu0 %v1471
    %1960 = vmatpush.bf16.msra.mxu0 %v1467
    %1961 = vmatpush.bf16.msra.mxu0 %v1463
    %1962 = vmatpush.bf16.msra.mxu0 %v1459
    %1963 = vmatpush.bf16.msra.mxu0 %v1455
    %1964 = vmatmul.bf16.gmra.mxu0 %v226
    %v1965 = vpop.f32.mrf.mxu0
    %v1966 = vadd.f32 %v1953, %v1965
    %v1967 = vpop.f32.mrf.mxu0
    %1968 = vdwg.mxu0
    %1969 = vmatpush.bf16.msra.mxu0 %v1515
    %1970 = vmatpush.bf16.msra.mxu0 %v1511
    %1971 = vmatpush.bf16.msra.mxu0 %v1507
    %1972 = vmatpush.bf16.msra.mxu0 %v1503
    %1973 = vmatpush.bf16.msra.mxu0 %v1499
    %1974 = vmatpush.bf16.msra.mxu0 %v1495
    %1975 = vmatpush.bf16.msra.mxu0 %v1491
    %1976 = vmatpush.bf16.msra.mxu0 %v1487
    %1977 = vmatmul.bf16.gmra.mxu0 %v227
    %v1978 = vpop.f32.mrf.mxu0
    %v1979 = vadd.f32 %v1966, %v1978
    %v1980 = vpop.f32.mrf.mxu0
    %1981 = vdwg.mxu0
    %1982 = vmatpush.bf16.msra.mxu0 %v1292
    %1983 = vmatpush.bf16.msra.mxu0 %v1288
    %1984 = vmatpush.bf16.msra.mxu0 %v1284
    %1985 = vmatpush.bf16.msra.mxu0 %v1280
    %1986 = vmatpush.bf16.msra.mxu0 %v1276
    %1987 = vmatpush.bf16.msra.mxu0 %v1272
    %1988 = vmatpush.bf16.msra.mxu0 %v1268
    %1989 = vmatpush.bf16.msra.mxu0 %v1264
    %1990 = vmatmul.bf16.gmra.mxu0 %v220
    %v1991 = vpop.f32.mrf.mxu0
    %v1992 = vadd.f32 %v488, %v1991
    %v1993 = vpop.f32.mrf.mxu0
    %1994 = vdwg.mxu0
    %1995 = vmatpush.bf16.msra.mxu0 %v1324
    %1996 = vmatpush.bf16.msra.mxu0 %v1320
    %1997 = vmatpush.bf16.msra.mxu0 %v1316
    %1998 = vmatpush.bf16.msra.mxu0 %v1312
    %1999 = vmatpush.bf16.msra.mxu0 %v1308
    %2000 = vmatpush.bf16.msra.mxu0 %v1304
    %2001 = vmatpush.bf16.msra.mxu0 %v1300
    %2002 = vmatpush.bf16.msra.mxu0 %v1296
    %2003 = vmatmul.bf16.gmra.mxu0 %v221
    %v2004 = vpop.f32.mrf.mxu0
    %v2005 = vadd.f32 %v1992, %v2004
    %v2006 = vpop.f32.mrf.mxu0
    %2007 = vdwg.mxu0
    %2008 = vmatpush.bf16.msra.mxu0 %v1356
    %2009 = vmatpush.bf16.msra.mxu0 %v1352
    %2010 = vmatpush.bf16.msra.mxu0 %v1348
    %2011 = vmatpush.bf16.msra.mxu0 %v1344
    %2012 = vmatpush.bf16.msra.mxu0 %v1340
    %2013 = vmatpush.bf16.msra.mxu0 %v1336
    %2014 = vmatpush.bf16.msra.mxu0 %v1332
    %2015 = vmatpush.bf16.msra.mxu0 %v1328
    %2016 = vmatmul.bf16.gmra.mxu0 %v222
    %v2017 = vpop.f32.mrf.mxu0
    %v2018 = vadd.f32 %v2005, %v2017
    %v2019 = vpop.f32.mrf.mxu0
    %2020 = vdwg.mxu0
    %2021 = vmatpush.bf16.msra.mxu0 %v1388
    %2022 = vmatpush.bf16.msra.mxu0 %v1384
    %2023 = vmatpush.bf16.msra.mxu0 %v1380
    %2024 = vmatpush.bf16.msra.mxu0 %v1376
    %2025 = vmatpush.bf16.msra.mxu0 %v1372
    %2026 = vmatpush.bf16.msra.mxu0 %v1368
    %2027 = vmatpush.bf16.msra.mxu0 %v1364
    %2028 = vmatpush.bf16.msra.mxu0 %v1360
    %2029 = vmatmul.bf16.gmra.mxu0 %v223
    %v2030 = vpop.f32.mrf.mxu0
    %v2031 = vadd.f32 %v2018, %v2030
    %v2032 = vpop.f32.mrf.mxu0
    %2033 = vdwg.mxu0
    %2034 = vmatpush.bf16.msra.mxu0 %v1420
    %2035 = vmatpush.bf16.msra.mxu0 %v1416
    %2036 = vmatpush.bf16.msra.mxu0 %v1412
    %2037 = vmatpush.bf16.msra.mxu0 %v1408
    %2038 = vmatpush.bf16.msra.mxu0 %v1404
    %2039 = vmatpush.bf16.msra.mxu0 %v1400
    %2040 = vmatpush.bf16.msra.mxu0 %v1396
    %2041 = vmatpush.bf16.msra.mxu0 %v1392
    %2042 = vmatmul.bf16.gmra.mxu0 %v224
    %v2043 = vpop.f32.mrf.mxu0
    %v2044 = vadd.f32 %v2031, %v2043
    %v2045 = vpop.f32.mrf.mxu0
    %2046 = vdwg.mxu0
    %2047 = vmatpush.bf16.msra.mxu0 %v1452
    %2048 = vmatpush.bf16.msra.mxu0 %v1448
    %2049 = vmatpush.bf16.msra.mxu0 %v1444
    %2050 = vmatpush.bf16.msra.mxu0 %v1440
    %2051 = vmatpush.bf16.msra.mxu0 %v1436
    %2052 = vmatpush.bf16.msra.mxu0 %v1432
    %2053 = vmatpush.bf16.msra.mxu0 %v1428
    %2054 = vmatpush.bf16.msra.mxu0 %v1424
    %2055 = vmatmul.bf16.gmra.mxu0 %v225
    %v2056 = vpop.f32.mrf.mxu0
    %v2057 = vadd.f32 %v2044, %v2056
    %v2058 = vpop.f32.mrf.mxu0
    %2059 = vdwg.mxu0
    %2060 = vmatpush.bf16.msra.mxu0 %v1484
    %2061 = vmatpush.bf16.msra.mxu0 %v1480
    %2062 = vmatpush.bf16.msra.mxu0 %v1476
    %2063 = vmatpush.bf16.msra.mxu0 %v1472
    %2064 = vmatpush.bf16.msra.mxu0 %v1468
    %2065 = vmatpush.bf16.msra.mxu0 %v1464
    %2066 = vmatpush.bf16.msra.mxu0 %v1460
    %2067 = vmatpush.bf16.msra.mxu0 %v1456
    %2068 = vmatmul.bf16.gmra.mxu0 %v226
    %v2069 = vpop.f32.mrf.mxu0
    %v2070 = vadd.f32 %v2057, %v2069
    %v2071 = vpop.f32.mrf.mxu0
    %2072 = vdwg.mxu0
    %2073 = vmatpush.bf16.msra.mxu0 %v1516
    %2074 = vmatpush.bf16.msra.mxu0 %v1512
    %2075 = vmatpush.bf16.msra.mxu0 %v1508
    %2076 = vmatpush.bf16.msra.mxu0 %v1504
    %2077 = vmatpush.bf16.msra.mxu0 %v1500
    %2078 = vmatpush.bf16.msra.mxu0 %v1496
    %2079 = vmatpush.bf16.msra.mxu0 %v1492
    %2080 = vmatpush.bf16.msra.mxu0 %v1488
    %2081 = vmatmul.bf16.gmra.mxu0 %v227
    %v2082 = vpop.f32.mrf.mxu0
    %v2083 = vadd.f32 %v2070, %v2082
    %v2084 = vpop.f32.mrf.mxu0
    %2085 = vdwg.mxu0
    %2086 = vmatpush.bf16.msra.mxu0 %v1293
    %2087 = vmatpush.bf16.msra.mxu0 %v1289
    %2088 = vmatpush.bf16.msra.mxu0 %v1285
    %2089 = vmatpush.bf16.msra.mxu0 %v1281
    %2090 = vmatpush.bf16.msra.mxu0 %v1277
    %2091 = vmatpush.bf16.msra.mxu0 %v1273
    %2092 = vmatpush.bf16.msra.mxu0 %v1269
    %2093 = vmatpush.bf16.msra.mxu0 %v1265
    %2094 = vmatmul.bf16.gmra.mxu0 %v220
    %v2095 = vpop.f32.mrf.mxu0
    %v2096 = vadd.f32 %v489, %v2095
    %v2097 = vpop.f32.mrf.mxu0
    %2098 = vdwg.mxu0
    %2099 = vmatpush.bf16.msra.mxu0 %v1325
    %2100 = vmatpush.bf16.msra.mxu0 %v1321
    %2101 = vmatpush.bf16.msra.mxu0 %v1317
    %2102 = vmatpush.bf16.msra.mxu0 %v1313
    %2103 = vmatpush.bf16.msra.mxu0 %v1309
    %2104 = vmatpush.bf16.msra.mxu0 %v1305
    %2105 = vmatpush.bf16.msra.mxu0 %v1301
    %2106 = vmatpush.bf16.msra.mxu0 %v1297
    %2107 = vmatmul.bf16.gmra.mxu0 %v221
    %v2108 = vpop.f32.mrf.mxu0
    %v2109 = vadd.f32 %v2096, %v2108
    %v2110 = vpop.f32.mrf.mxu0
    %2111 = vdwg.mxu0
    %2112 = vmatpush.bf16.msra.mxu0 %v1357
    %2113 = vmatpush.bf16.msra.mxu0 %v1353
    %2114 = vmatpush.bf16.msra.mxu0 %v1349
    %2115 = vmatpush.bf16.msra.mxu0 %v1345
    %2116 = vmatpush.bf16.msra.mxu0 %v1341
    %2117 = vmatpush.bf16.msra.mxu0 %v1337
    %2118 = vmatpush.bf16.msra.mxu0 %v1333
    %2119 = vmatpush.bf16.msra.mxu0 %v1329
    %2120 = vmatmul.bf16.gmra.mxu0 %v222
    %v2121 = vpop.f32.mrf.mxu0
    %v2122 = vadd.f32 %v2109, %v2121
    %v2123 = vpop.f32.mrf.mxu0
    %2124 = vdwg.mxu0
    %2125 = vmatpush.bf16.msra.mxu0 %v1389
    %2126 = vmatpush.bf16.msra.mxu0 %v1385
    %2127 = vmatpush.bf16.msra.mxu0 %v1381
    %2128 = vmatpush.bf16.msra.mxu0 %v1377
    %2129 = vmatpush.bf16.msra.mxu0 %v1373
    %2130 = vmatpush.bf16.msra.mxu0 %v1369
    %2131 = vmatpush.bf16.msra.mxu0 %v1365
    %2132 = vmatpush.bf16.msra.mxu0 %v1361
    %2133 = vmatmul.bf16.gmra.mxu0 %v223
    %v2134 = vpop.f32.mrf.mxu0
    %v2135 = vadd.f32 %v2122, %v2134
    %v2136 = vpop.f32.mrf.mxu0
    %2137 = vdwg.mxu0
    %2138 = vmatpush.bf16.msra.mxu0 %v1421
    %2139 = vmatpush.bf16.msra.mxu0 %v1417
    %2140 = vmatpush.bf16.msra.mxu0 %v1413
    %2141 = vmatpush.bf16.msra.mxu0 %v1409
    %2142 = vmatpush.bf16.msra.mxu0 %v1405
    %2143 = vmatpush.bf16.msra.mxu0 %v1401
    %2144 = vmatpush.bf16.msra.mxu0 %v1397
    %2145 = vmatpush.bf16.msra.mxu0 %v1393
    %2146 = vmatmul.bf16.gmra.mxu0 %v224
    %v2147 = vpop.f32.mrf.mxu0
    %v2148 = vadd.f32 %v2135, %v2147
    %v2149 = vpop.f32.mrf.mxu0
    %2150 = vdwg.mxu0
    %2151 = vmatpush.bf16.msra.mxu0 %v1453
    %2152 = vmatpush.bf16.msra.mxu0 %v1449
    %2153 = vmatpush.bf16.msra.mxu0 %v1445
    %2154 = vmatpush.bf16.msra.mxu0 %v1441
    %2155 = vmatpush.bf16.msra.mxu0 %v1437
    %2156 = vmatpush.bf16.msra.mxu0 %v1433
    %2157 = vmatpush.bf16.msra.mxu0 %v1429
    %2158 = vmatpush.bf16.msra.mxu0 %v1425
    %2159 = vmatmul.bf16.gmra.mxu0 %v225
    %v2160 = vpop.f32.mrf.mxu0
    %v2161 = vadd.f32 %v2148, %v2160
    %v2162 = vpop.f32.mrf.mxu0
    %2163 = vdwg.mxu0
    %2164 = vmatpush.bf16.msra.mxu0 %v1485
    %2165 = vmatpush.bf16.msra.mxu0 %v1481
    %2166 = vmatpush.bf16.msra.mxu0 %v1477
    %2167 = vmatpush.bf16.msra.mxu0 %v1473
    %2168 = vmatpush.bf16.msra.mxu0 %v1469
    %2169 = vmatpush.bf16.msra.mxu0 %v1465
    %2170 = vmatpush.bf16.msra.mxu0 %v1461
    %2171 = vmatpush.bf16.msra.mxu0 %v1457
    %2172 = vmatmul.bf16.gmra.mxu0 %v226
    %v2173 = vpop.f32.mrf.mxu0
    %v2174 = vadd.f32 %v2161, %v2173
    %v2175 = vpop.f32.mrf.mxu0
    %2176 = vdwg.mxu0
    %2177 = vmatpush.bf16.msra.mxu0 %v1517
    %2178 = vmatpush.bf16.msra.mxu0 %v1513
    %2179 = vmatpush.bf16.msra.mxu0 %v1509
    %2180 = vmatpush.bf16.msra.mxu0 %v1505
    %2181 = vmatpush.bf16.msra.mxu0 %v1501
    %2182 = vmatpush.bf16.msra.mxu0 %v1497
    %2183 = vmatpush.bf16.msra.mxu0 %v1493
    %2184 = vmatpush.bf16.msra.mxu0 %v1489
    %2185 = vmatmul.bf16.gmra.mxu0 %v227
    %v2186 = vpop.f32.mrf.mxu0
    %v2187 = vadd.f32 %v2174, %v2186
    %v2188 = vpop.f32.mrf.mxu0
    %2189 = vdwg.mxu0
    %v2190 = vmax.f32 %v1875, 0.0
    %v2191 = vmax.f32 %v1979, 0.0
    %v2192 = vmax.f32 %v2083, 0.0
    %v2193 = vmax.f32 %v2187, 0.0
    %v2194 = vpack.c.bf16 %v2190, %v2190
    %v2195 = vpack.c.bf16 %v2191, %v2191
    %v2196 = vpack.c.bf16 %v2192, %v2192
    %v2197 = vpack.c.bf16 %v2193, %v2193
    %v2198 = vld [vmem:[#allocation5] sm:$0xff]
    %v2199 = vld [vmem:[#allocation5 + $0x8] sm:$0xff]
    %v2200 = vld [vmem:[#allocation5 + $0x10] sm:$0xff]
    %v2201 = vld [vmem:[#allocation5 + $0x18] sm:$0xff]
    %v2202 = vld [vmem:[#allocation5 + $0x20] sm:$0xff]
    %v2203 = vld [vmem:[#allocation5 + $0x28] sm:$0xff]
    %v2204 = vld [vmem:[#allocation5 + $0x30] sm:$0xff]
    %v2205 = vld [vmem:[#allocation5 + $0x38] sm:$0xff]
    %v2206 = vld [vmem:[#allocation5 + $0x40] sm:$0xff]
    %v2207 = vld [vmem:[#allocation5 + $0x48] sm:$0xff]
    %v2208 = vld [vmem:[#allocation5 + $0x50] sm:$0xff]
    %v2209 = vld [vmem:[#allocation5 + $0x58] sm:$0xff]
    %v2210 = vld [vmem:[#allocation5 + $0x60] sm:$0xff]
    %v2211 = vld [vmem:[#allocation5 + $0x68] sm:$0xff]
    %v2212 = vld [vmem:[#allocation5 + $0x70] sm:$0xff]
    %v2213 = vld [vmem:[#allocation5 + $0x78] sm:$0xff]
    %v2214 = vld [vmem:[#allocation5 + $0x80] sm:$0xff]
    %v2215 = vld [vmem:[#allocation5 + $0x88] sm:$0xff]
    %v2216 = vld [vmem:[#allocation5 + $0x90] sm:$0xff]
    %v2217 = vld [vmem:[#allocation5 + $0x98] sm:$0xff]
    %v2218 = vld [vmem:[#allocation5 + $0xa0] sm:$0xff]
    %v2219 = vld [vmem:[#allocation5 + $0xa8] sm:$0xff]
    %v2220 = vld [vmem:[#allocation5 + $0xb0] sm:$0xff]
    %v2221 = vld [vmem:[#allocation5 + $0xb8] sm:$0xff]
    %v2222 = vld [vmem:[#allocation5 + $0xc0] sm:$0xff]
    %v2223 = vld [vmem:[#allocation5 + $0xc8] sm:$0xff]
    %v2224 = vld [vmem:[#allocation5 + $0xd0] sm:$0xff]
    %v2225 = vld [vmem:[#allocation5 + $0xd8] sm:$0xff]
    %v2226 = vld [vmem:[#allocation5 + $0xe0] sm:$0xff]
    %v2227 = vld [vmem:[#allocation5 + $0xe8] sm:$0xff]
    %v2228 = vld [vmem:[#allocation5 + $0xf0] sm:$0xff]
    %v2229 = vld [vmem:[#allocation5 + $0xf8] sm:$0xff]
    %v2230 = vld [vmem:[#allocation5 + $0x100] sm:$0xff]
    %v2231 = vld [vmem:[#allocation5 + $0x108] sm:$0xff]
    %v2232 = vld [vmem:[#allocation5 + $0x110] sm:$0xff]
    %v2233 = vld [vmem:[#allocation5 + $0x118] sm:$0xff]
    %v2234 = vld [vmem:[#allocation5 + $0x120] sm:$0xff]
    %v2235 = vld [vmem:[#allocation5 + $0x128] sm:$0xff]
    %v2236 = vld [vmem:[#allocation5 + $0x130] sm:$0xff]
    %v2237 = vld [vmem:[#allocation5 + $0x138] sm:$0xff]
    %v2238 = vld [vmem:[#allocation5 + $0x140] sm:$0xff]
    %v2239 = vld [vmem:[#allocation5 + $0x148] sm:$0xff]
    %v2240 = vld [vmem:[#allocation5 + $0x150] sm:$0xff]
    %v2241 = vld [vmem:[#allocation5 + $0x158] sm:$0xff]
    %v2242 = vld [vmem:[#allocation5 + $0x160] sm:$0xff]
    %v2243 = vld [vmem:[#allocation5 + $0x168] sm:$0xff]
    %v2244 = vld [vmem:[#allocation5 + $0x170] sm:$0xff]
    %v2245 = vld [vmem:[#allocation5 + $0x178] sm:$0xff]
    %v2246 = vld [vmem:[#allocation5 + $0x180] sm:$0xff]
    %v2247 = vld [vmem:[#allocation5 + $0x188] sm:$0xff]
    %v2248 = vld [vmem:[#allocation5 + $0x190] sm:$0xff]
    %v2249 = vld [vmem:[#allocation5 + $0x198] sm:$0xff]
    %v2250 = vld [vmem:[#allocation5 + $0x1a0] sm:$0xff]
    %v2251 = vld [vmem:[#allocation5 + $0x1a8] sm:$0xff]
    %v2252 = vld [vmem:[#allocation5 + $0x1b0] sm:$0xff]
    %v2253 = vld [vmem:[#allocation5 + $0x1b8] sm:$0xff]
    %v2254 = vld [vmem:[#allocation5 + $0x1c0] sm:$0xff]
    %v2255 = vld [vmem:[#allocation5 + $0x1c8] sm:$0xff]
    %v2256 = vld [vmem:[#allocation5 + $0x1d0] sm:$0xff]
    %v2257 = vld [vmem:[#allocation5 + $0x1d8] sm:$0xff]
    %v2258 = vld [vmem:[#allocation5 + $0x1e0] sm:$0xff]
    %v2259 = vld [vmem:[#allocation5 + $0x1e8] sm:$0xff]
    %v2260 = vld [vmem:[#allocation5 + $0x1f0] sm:$0xff]
    %v2261 = vld [vmem:[#allocation5 + $0x1f8] sm:$0xff]
    %v2262 = vld [vmem:[%s5] sm:$0x3]
    %v2264 = vperm.slane %v2262, 0
    %v2265 = vperm.slane %v2262, 1
    %v2332 = vunpack.c.l.b16 %v2198
    %v2333 = vunpack.c.h.b16 %v2198
    %v2334 = vunpack.c.l.b16 %v2199
    %v2335 = vunpack.c.h.b16 %v2199
    %v2336 = vunpack.c.l.b16 %v2200
    %v2337 = vunpack.c.h.b16 %v2200
    %v2338 = vunpack.c.l.b16 %v2201
    %v2339 = vunpack.c.h.b16 %v2201
    %v2340 = vunpack.c.l.b16 %v2202
    %v2341 = vunpack.c.h.b16 %v2202
    %v2342 = vunpack.c.l.b16 %v2203
    %v2343 = vunpack.c.h.b16 %v2203
    %v2344 = vunpack.c.l.b16 %v2204
    %v2345 = vunpack.c.h.b16 %v2204
    %v2346 = vunpack.c.l.b16 %v2205
    %v2347 = vunpack.c.h.b16 %v2205
    %v2348 = vunpack.c.l.b16 %v2206
    %v2349 = vunpack.c.h.b16 %v2206
    %v2350 = vunpack.c.l.b16 %v2207
    %v2351 = vunpack.c.h.b16 %v2207
    %v2352 = vunpack.c.l.b16 %v2208
    %v2353 = vunpack.c.h.b16 %v2208
    %v2354 = vunpack.c.l.b16 %v2209
    %v2355 = vunpack.c.h.b16 %v2209
    %v2356 = vunpack.c.l.b16 %v2210
    %v2357 = vunpack.c.h.b16 %v2210
    %v2358 = vunpack.c.l.b16 %v2211
    %v2359 = vunpack.c.h.b16 %v2211
    %v2360 = vunpack.c.l.b16 %v2212
    %v2361 = vunpack.c.h.b16 %v2212
    %v2362 = vunpack.c.l.b16 %v2213
    %v2363 = vunpack.c.h.b16 %v2213
    %v2364 = vunpack.c.l.b16 %v2214
    %v2365 = vunpack.c.h.b16 %v2214
    %v2366 = vunpack.c.l.b16 %v2215
    %v2367 = vunpack.c.h.b16 %v2215
    %v2368 = vunpack.c.l.b16 %v2216
    %v2369 = vunpack.c.h.b16 %v2216
    %v2370 = vunpack.c.l.b16 %v2217
    %v2371 = vunpack.c.h.b16 %v2217
    %v2372 = vunpack.c.l.b16 %v2218
    %v2373 = vunpack.c.h.b16 %v2218
    %v2374 = vunpack.c.l.b16 %v2219
    %v2375 = vunpack.c.h.b16 %v2219
    %v2376 = vunpack.c.l.b16 %v2220
    %v2377 = vunpack.c.h.b16 %v2220
    %v2378 = vunpack.c.l.b16 %v2221
    %v2379 = vunpack.c.h.b16 %v2221
    %v2380 = vunpack.c.l.b16 %v2222
    %v2381 = vunpack.c.h.b16 %v2222
    %v2382 = vunpack.c.l.b16 %v2223
    %v2383 = vunpack.c.h.b16 %v2223
    %v2384 = vunpack.c.l.b16 %v2224
    %v2385 = vunpack.c.h.b16 %v2224
    %v2386 = vunpack.c.l.b16 %v2225
    %v2387 = vunpack.c.h.b16 %v2225
    %v2388 = vunpack.c.l.b16 %v2226
    %v2389 = vunpack.c.h.b16 %v2226
    %v2390 = vunpack.c.l.b16 %v2227
    %v2391 = vunpack.c.h.b16 %v2227
    %v2392 = vunpack.c.l.b16 %v2228
    %v2393 = vunpack.c.h.b16 %v2228
    %v2394 = vunpack.c.l.b16 %v2229
    %v2395 = vunpack.c.h.b16 %v2229
    %v2396 = vunpack.c.l.b16 %v2230
    %v2397 = vunpack.c.h.b16 %v2230
    %v2398 = vunpack.c.l.b16 %v2231
    %v2399 = vunpack.c.h.b16 %v2231
    %v2400 = vunpack.c.l.b16 %v2232
    %v2401 = vunpack.c.h.b16 %v2232
    %v2402 = vunpack.c.l.b16 %v2233
    %v2403 = vunpack.c.h.b16 %v2233
    %v2404 = vunpack.c.l.b16 %v2234
    %v2405 = vunpack.c.h.b16 %v2234
    %v2406 = vunpack.c.l.b16 %v2235
    %v2407 = vunpack.c.h.b16 %v2235
    %v2408 = vunpack.c.l.b16 %v2236
    %v2409 = vunpack.c.h.b16 %v2236
    %v2410 = vunpack.c.l.b16 %v2237
    %v2411 = vunpack.c.h.b16 %v2237
    %v2412 = vunpack.c.l.b16 %v2238
    %v2413 = vunpack.c.h.b16 %v2238
    %v2414 = vunpack.c.l.b16 %v2239
    %v2415 = vunpack.c.h.b16 %v2239
    %v2416 = vunpack.c.l.b16 %v2240
    %v2417 = vunpack.c.h.b16 %v2240
    %v2418 = vunpack.c.l.b16 %v2241
    %v2419 = vunpack.c.h.b16 %v2241
    %v2420 = vunpack.c.l.b16 %v2242
    %v2421 = vunpack.c.h.b16 %v2242
    %v2422 = vunpack.c.l.b16 %v2243
    %v2423 = vunpack.c.h.b16 %v2243
    %v2424 = vunpack.c.l.b16 %v2244
    %v2425 = vunpack.c.h.b16 %v2244
    %v2426 = vunpack.c.l.b16 %v2245
    %v2427 = vunpack.c.h.b16 %v2245
    %v2428 = vunpack.c.l.b16 %v2246
    %v2429 = vunpack.c.h.b16 %v2246
    %v2430 = vunpack.c.l.b16 %v2247
    %v2431 = vunpack.c.h.b16 %v2247
    %v2432 = vunpack.c.l.b16 %v2248
    %v2433 = vunpack.c.h.b16 %v2248
    %v2434 = vunpack.c.l.b16 %v2249
    %v2435 = vunpack.c.h.b16 %v2249
    %v2436 = vunpack.c.l.b16 %v2250
    %v2437 = vunpack.c.h.b16 %v2250
    %v2438 = vunpack.c.l.b16 %v2251
    %v2439 = vunpack.c.h.b16 %v2251
    %v2440 = vunpack.c.l.b16 %v2252
    %v2441 = vunpack.c.h.b16 %v2252
    %v2442 = vunpack.c.l.b16 %v2253
    %v2443 = vunpack.c.h.b16 %v2253
    %v2444 = vunpack.c.l.b16 %v2254
    %v2445 = vunpack.c.h.b16 %v2254
    %v2446 = vunpack.c.l.b16 %v2255
    %v2447 = vunpack.c.h.b16 %v2255
    %v2448 = vunpack.c.l.b16 %v2256
    %v2449 = vunpack.c.h.b16 %v2256
    %v2450 = vunpack.c.l.b16 %v2257
    %v2451 = vunpack.c.h.b16 %v2257
    %v2452 = vunpack.c.l.b16 %v2258
    %v2453 = vunpack.c.h.b16 %v2258
    %v2454 = vunpack.c.l.b16 %v2259
    %v2455 = vunpack.c.h.b16 %v2259
    %v2456 = vunpack.c.l.b16 %v2260
    %v2457 = vunpack.c.h.b16 %v2260
    %v2458 = vunpack.c.l.b16 %v2261
    %v2459 = vunpack.c.h.b16 %v2261
    %v2460 = vpack.c.b16 %v2334, %v2332
    %v2461 = vpack.c.b16 %v2335, %v2333
    %v2462 = vpack.c.b16 %v2338, %v2336
    %v2463 = vpack.c.b16 %v2339, %v2337
    %v2464 = vpack.c.b16 %v2342, %v2340
    %v2465 = vpack.c.b16 %v2343, %v2341
    %v2466 = vpack.c.b16 %v2346, %v2344
    %v2467 = vpack.c.b16 %v2347, %v2345
    %v2468 = vpack.c.b16 %v2350, %v2348
    %v2469 = vpack.c.b16 %v2351, %v2349
    %v2470 = vpack.c.b16 %v2354, %v2352
    %v2471 = vpack.c.b16 %v2355, %v2353
    %v2472 = vpack.c.b16 %v2358, %v2356
    %v2473 = vpack.c.b16 %v2359, %v2357
    %v2474 = vpack.c.b16 %v2362, %v2360
    %v2475 = vpack.c.b16 %v2363, %v2361
    %v2476 = vpack.c.b16 %v2366, %v2364
    %v2477 = vpack.c.b16 %v2367, %v2365
    %v2478 = vpack.c.b16 %v2370, %v2368
    %v2479 = vpack.c.b16 %v2371, %v2369
    %v2480 = vpack.c.b16 %v2374, %v2372
    %v2481 = vpack.c.b16 %v2375, %v2373
    %v2482 = vpack.c.b16 %v2378, %v2376
    %v2483 = vpack.c.b16 %v2379, %v2377
    %v2484 = vpack.c.b16 %v2382, %v2380
    %v2485 = vpack.c.b16 %v2383, %v2381
    %v2486 = vpack.c.b16 %v2386, %v2384
    %v2487 = vpack.c.b16 %v2387, %v2385
    %v2488 = vpack.c.b16 %v2390, %v2388
    %v2489 = vpack.c.b16 %v2391, %v2389
    %v2490 = vpack.c.b16 %v2394, %v2392
    %v2491 = vpack.c.b16 %v2395, %v2393
    %v2492 = vpack.c.b16 %v2398, %v2396
    %v2493 = vpack.c.b16 %v2399, %v2397
    %v2494 = vpack.c.b16 %v2402, %v2400
    %v2495 = vpack.c.b16 %v2403, %v2401
    %v2496 = vpack.c.b16 %v2406, %v2404
    %v2497 = vpack.c.b16 %v2407, %v2405
    %v2498 = vpack.c.b16 %v2410, %v2408
    %v2499 = vpack.c.b16 %v2411, %v2409
    %v2500 = vpack.c.b16 %v2414, %v2412
    %v2501 = vpack.c.b16 %v2415, %v2413
    %v2502 = vpack.c.b16 %v2418, %v2416
    %v2503 = vpack.c.b16 %v2419, %v2417
    %v2504 = vpack.c.b16 %v2422, %v2420
    %v2505 = vpack.c.b16 %v2423, %v2421
    %v2506 = vpack.c.b16 %v2426, %v2424
    %v2507 = vpack.c.b16 %v2427, %v2425
    %v2508 = vpack.c.b16 %v2430, %v2428
    %v2509 = vpack.c.b16 %v2431, %v2429
    %v2510 = vpack.c.b16 %v2434, %v2432
    %v2511 = vpack.c.b16 %v2435, %v2433
    %v2512 = vpack.c.b16 %v2438, %v2436
    %v2513 = vpack.c.b16 %v2439, %v2437
    %v2514 = vpack.c.b16 %v2442, %v2440
    %v2515 = vpack.c.b16 %v2443, %v2441
    %v2516 = vpack.c.b16 %v2446, %v2444
    %v2517 = vpack.c.b16 %v2447, %v2445
    %v2518 = vpack.c.b16 %v2450, %v2448
    %v2519 = vpack.c.b16 %v2451, %v2449
    %v2520 = vpack.c.b16 %v2454, %v2452
    %v2521 = vpack.c.b16 %v2455, %v2453
    %v2522 = vpack.c.b16 %v2458, %v2456
    %v2523 = vpack.c.b16 %v2459, %v2457
    %2588 = vmatpush.bf16.msra.mxu0 %v2474
    %2589 = vmatpush.bf16.msra.mxu0 %v2472
    %2590 = vmatpush.bf16.msra.mxu0 %v2470
    %2591 = vmatpush.bf16.msra.mxu0 %v2468
    %2592 = vmatpush.bf16.msra.mxu0 %v2466
    %2593 = vmatpush.bf16.msra.mxu0 %v2464
    %2594 = vmatpush.bf16.msra.mxu0 %v2462
    %2595 = vmatpush.bf16.msra.mxu0 %v2460
    %2596 = vmatmul.bf16.gmra.mxu0 %v2194
    %v2597 = vpop.f32.mrf.mxu0
    %v2598 = vadd.f32 %v2264, %v2597
    %v2599 = vpop.f32.mrf.mxu0
    %2600 = vdwg.mxu0
    %2601 = vmatpush.bf16.msra.mxu0 %v2490
    %2602 = vmatpush.bf16.msra.mxu0 %v2488
    %2603 = vmatpush.bf16.msra.mxu0 %v2486
    %2604 = vmatpush.bf16.msra.mxu0 %v2484
    %2605 = vmatpush.bf16.msra.mxu0 %v2482
    %2606 = vmatpush.bf16.msra.mxu0 %v2480
    %2607 = vmatpush.bf16.msra.mxu0 %v2478
    %2608 = vmatpush.bf16.msra.mxu0 %v2476
    %2609 = vmatmul.bf16.gmra.mxu0 %v2195
    %v2610 = vpop.f32.mrf.mxu0
    %v2611 = vadd.f32 %v2598, %v2610
    %v2612 = vpop.f32.mrf.mxu0
    %2613 = vdwg.mxu0
    %2614 = vmatpush.bf16.msra.mxu0 %v2506
    %2615 = vmatpush.bf16.msra.mxu0 %v2504
    %2616 = vmatpush.bf16.msra.mxu0 %v2502
    %2617 = vmatpush.bf16.msra.mxu0 %v2500
    %2618 = vmatpush.bf16.msra.mxu0 %v2498
    %2619 = vmatpush.bf16.msra.mxu0 %v2496
    %2620 = vmatpush.bf16.msra.mxu0 %v2494
    %2621 = vmatpush.bf16.msra.mxu0 %v2492
    %2622 = vmatmul.bf16.gmra.mxu0 %v2196
    %v2623 = vpop.f32.mrf.mxu0
    %v2624 = vadd.f32 %v2611, %v2623
    %v2625 = vpop.f32.mrf.mxu0
    %2626 = vdwg.mxu0
    %2627 = vmatpush.bf16.msra.mxu0 %v2522
    %2628 = vmatpush.bf16.msra.mxu0 %v2520
    %2629 = vmatpush.bf16.msra.mxu0 %v2518
    %2630 = vmatpush.bf16.msra.mxu0 %v2516
    %2631 = vmatpush.bf16.msra.mxu0 %v2514
    %2632 = vmatpush.bf16.msra.mxu0 %v2512
    %2633 = vmatpush.bf16.msra.mxu0 %v2510
    %2634 = vmatpush.bf16.msra.mxu0 %v2508
    %2635 = vmatmul.bf16.gmra.mxu0 %v2197
    %v2636 = vpop.f32.mrf.mxu0
    %v2637 = vadd.f32 %v2624, %v2636
    %v2638 = vpop.f32.mrf.mxu0
    %2639 = vdwg.mxu0
    %2640 = vmatpush.bf16.msra.mxu0 %v2475
    %2641 = vmatpush.bf16.msra.mxu0 %v2473
    %2642 = vmatpush.bf16.msra.mxu0 %v2471
    %2643 = vmatpush.bf16.msra.mxu0 %v2469
    %2644 = vmatpush.bf16.msra.mxu0 %v2467
    %2645 = vmatpush.bf16.msra.mxu0 %v2465
    %2646 = vmatpush.bf16.msra.mxu0 %v2463
    %2647 = vmatpush.bf16.msra.mxu0 %v2461
    %2648 = vmatmul.bf16.gmra.mxu0 %v2194
    %v2649 = vpop.f32.mrf.mxu0
    %v2650 = vadd.f32 %v2265, %v2649
    %v2651 = vpop.f32.mrf.mxu0
    %2652 = vdwg.mxu0
    %2653 = vmatpush.bf16.msra.mxu0 %v2491
    %2654 = vmatpush.bf16.msra.mxu0 %v2489
    %2655 = vmatpush.bf16.msra.mxu0 %v2487
    %2656 = vmatpush.bf16.msra.mxu0 %v2485
    %2657 = vmatpush.bf16.msra.mxu0 %v2483
    %2658 = vmatpush.bf16.msra.mxu0 %v2481
    %2659 = vmatpush.bf16.msra.mxu0 %v2479
    %2660 = vmatpush.bf16.msra.mxu0 %v2477
    %2661 = vmatmul.bf16.gmra.mxu0 %v2195
    %v2662 = vpop.f32.mrf.mxu0
    %v2663 = vadd.f32 %v2650, %v2662
    %v2664 = vpop.f32.mrf.mxu0
    %2665 = vdwg.mxu0
    %2666 = vmatpush.bf16.msra.mxu0 %v2507
    %2667 = vmatpush.bf16.msra.mxu0 %v2505
    %2668 = vmatpush.bf16.msra.mxu0 %v2503
    %2669 = vmatpush.bf16.msra.mxu0 %v2501
    %2670 = vmatpush.bf16.msra.mxu0 %v2499
    %2671 = vmatpush.bf16.msra.mxu0 %v2497
    %2672 = vmatpush.bf16.msra.mxu0 %v2495
    %2673 = vmatpush.bf16.msra.mxu0 %v2493
    %2674 = vmatmul.bf16.gmra.mxu0 %v2196
    %v2675 = vpop.f32.mrf.mxu0
    %v2676 = vadd.f32 %v2663, %v2675
    %v2677 = vpop.f32.mrf.mxu0
    %2678 = vdwg.mxu0
    %2679 = vmatpush.bf16.msra.mxu0 %v2523
    %2680 = vmatpush.bf16.msra.mxu0 %v2521
    %2681 = vmatpush.bf16.msra.mxu0 %v2519
    %2682 = vmatpush.bf16.msra.mxu0 %v2517
    %2683 = vmatpush.bf16.msra.mxu0 %v2515
    %2684 = vmatpush.bf16.msra.mxu0 %v2513
    %2685 = vmatpush.bf16.msra.mxu0 %v2511
    %2686 = vmatpush.bf16.msra.mxu0 %v2509
    %2687 = vmatmul.bf16.gmra.mxu0 %v2197
    %v2688 = vpop.f32.mrf.mxu0
    %v2689 = vadd.f32 %v2676, %v2688
    %v2690 = vpop.f32.mrf.mxu0
    %2691 = vdwg.mxu0
    %v2692 = vmax.f32 %v2637, 0.0
    %v2693 = vmax.f32 %v2689, 0.0
    %v2694 = vpack.c.bf16 %v2692, %v2692
    %v2695 = vpack.c.bf16 %v2693, %v2693
    %v2696 = vld [vmem:[%s6] sm:$0xf]
    %v2697 = vld [vmem:[%s6 + $0x4] sm:$0xf]
    %v2698 = vld [vmem:[%s6 + $0x8] sm:$0xf]
    %v2699 = vld [vmem:[%s6 + $0xc] sm:$0xf]
    %v2700 = vld [vmem:[%s6 + $0x10] sm:$0xf]
    %v2701 = vld [vmem:[%s6 + $0x14] sm:$0xf]
    %v2702 = vld [vmem:[%s6 + $0x18] sm:$0xf]
    %v2703 = vld [vmem:[%s6 + $0x1c] sm:$0xf]
    %v2704 = vld [vmem:[%s6 + $0x20] sm:$0xf]
    %v2705 = vld [vmem:[%s6 + $0x24] sm:$0xf]
    %v2706 = vld [vmem:[%s6 + $0x28] sm:$0xf]
    %v2707 = vld [vmem:[%s6 + $0x2c] sm:$0xf]
    %v2708 = vld [vmem:[%s6 + $0x30] sm:$0xf]
    %v2709 = vld [vmem:[%s6 + $0x34] sm:$0xf]
    %v2710 = vld [vmem:[%s6 + $0x38] sm:$0xf]
    %v2711 = vld [vmem:[%s6 + $0x3c] sm:$0xf]
    %v2712 = vld [vmem:[%s6 + $0x40] sm:$0xf]
    %v2713 = vld [vmem:[%s6 + $0x44] sm:$0xf]
    %v2714 = vld [vmem:[%s6 + $0x48] sm:$0xf]
    %v2715 = vld [vmem:[%s6 + $0x4c] sm:$0xf]
    %v2716 = vld [vmem:[%s6 + $0x50] sm:$0xf]
    %v2717 = vld [vmem:[%s6 + $0x54] sm:$0xf]
    %v2718 = vld [vmem:[%s6 + $0x58] sm:$0xf]
    %v2719 = vld [vmem:[%s6 + $0x5c] sm:$0xf]
    %v2720 = vld [vmem:[%s6 + $0x60] sm:$0xf]
    %v2721 = vld [vmem:[%s6 + $0x64] sm:$0xf]
    %v2722 = vld [vmem:[%s6 + $0x68] sm:$0xf]
    %v2723 = vld [vmem:[%s6 + $0x6c] sm:$0xf]
    %v2724 = vld [vmem:[%s6 + $0x70] sm:$0xf]
    %v2725 = vld [vmem:[%s6 + $0x74] sm:$0xf]
    %v2726 = vld [vmem:[%s6 + $0x78] sm:$0xf]
    %v2727 = vld [vmem:[%s6 + $0x7c] sm:$0xf]
    %v2728 = vld [vmem:[%s7] sm:$0x1]
    %v2730 = vperm.slane %v2728, 0
    %v2764 = vunpack.c.l.b16 %v2696
    %v2765 = vunpack.c.l.b16 %v2697
    %v2766 = vunpack.c.l.b16 %v2698
    %v2767 = vunpack.c.l.b16 %v2699
    %v2768 = vunpack.c.l.b16 %v2700
    %v2769 = vunpack.c.l.b16 %v2701
    %v2770 = vunpack.c.l.b16 %v2702
    %v2771 = vunpack.c.l.b16 %v2703
    %v2772 = vunpack.c.l.b16 %v2704
    %v2773 = vunpack.c.l.b16 %v2705
    %v2774 = vunpack.c.l.b16 %v2706
    %v2775 = vunpack.c.l.b16 %v2707
    %v2776 = vunpack.c.l.b16 %v2708
    %v2777 = vunpack.c.l.b16 %v2709
    %v2778 = vunpack.c.l.b16 %v2710
    %v2779 = vunpack.c.l.b16 %v2711
    %v2780 = vunpack.c.l.b16 %v2712
    %v2781 = vunpack.c.l.b16 %v2713
    %v2782 = vunpack.c.l.b16 %v2714
    %v2783 = vunpack.c.l.b16 %v2715
    %v2784 = vunpack.c.l.b16 %v2716
    %v2785 = vunpack.c.l.b16 %v2717
    %v2786 = vunpack.c.l.b16 %v2718
    %v2787 = vunpack.c.l.b16 %v2719
    %v2788 = vunpack.c.l.b16 %v2720
    %v2789 = vunpack.c.l.b16 %v2721
    %v2790 = vunpack.c.l.b16 %v2722
    %v2791 = vunpack.c.l.b16 %v2723
    %v2792 = vunpack.c.l.b16 %v2724
    %v2793 = vunpack.c.l.b16 %v2725
    %v2794 = vunpack.c.l.b16 %v2726
    %v2795 = vunpack.c.l.b16 %v2727
    %v2796 = vpack.c.b16 %v2765, %v2764
    %v2797 = vpack.c.b16 %v2767, %v2766
    %v2798 = vpack.c.b16 %v2769, %v2768
    %v2799 = vpack.c.b16 %v2771, %v2770
    %v2800 = vpack.c.b16 %v2773, %v2772
    %v2801 = vpack.c.b16 %v2775, %v2774
    %v2802 = vpack.c.b16 %v2777, %v2776
    %v2803 = vpack.c.b16 %v2779, %v2778
    %v2804 = vpack.c.b16 %v2781, %v2780
    %v2805 = vpack.c.b16 %v2783, %v2782
    %v2806 = vpack.c.b16 %v2785, %v2784
    %v2807 = vpack.c.b16 %v2787, %v2786
    %v2808 = vpack.c.b16 %v2789, %v2788
    %v2809 = vpack.c.b16 %v2791, %v2790
    %v2810 = vpack.c.b16 %v2793, %v2792
    %v2811 = vpack.c.b16 %v2795, %v2794
    %2828 = vmatpush.bf16.msra.mxu0 %v2803
    %2829 = vmatpush.bf16.msra.mxu0 %v2802
    %2830 = vmatpush.bf16.msra.mxu0 %v2801
    %2831 = vmatpush.bf16.msra.mxu0 %v2800
    %2832 = vmatpush.bf16.msra.mxu0 %v2799
    %2833 = vmatpush.bf16.msra.mxu0 %v2798
    %2834 = vmatpush.bf16.msra.mxu0 %v2797
    %2835 = vmatpush.bf16.msra.mxu0 %v2796
    %2836 = vmatmul.bf16.gmra.mxu0 %v2694
    %v2837 = vpop.f32.mrf.mxu0
    %v2838 = vadd.f32 %v2730, %v2837
    %v2839 = vpop.f32.mrf.mxu0
    %2840 = vdwg.mxu0
    %2841 = vmatpush.bf16.msra.mxu0 %v2811
    %2842 = vmatpush.bf16.msra.mxu0 %v2810
    %2843 = vmatpush.bf16.msra.mxu0 %v2809
    %2844 = vmatpush.bf16.msra.mxu0 %v2808
    %2845 = vmatpush.bf16.msra.mxu0 %v2807
    %2846 = vmatpush.bf16.msra.mxu0 %v2806
    %2847 = vmatpush.bf16.msra.mxu0 %v2805
    %2848 = vmatpush.bf16.msra.mxu0 %v2804
    %2849 = vmatmul.bf16.gmra.mxu0 %v2695
    %v2850 = vpop.f32.mrf.mxu0
    %v2851 = vadd.f32 %v2838, %v2850
    %v2852 = vpop.f32.mrf.mxu0
    %2853 = vdwg.mxu0
    %v2854 = vld [vmem:[%s1] sm:$0xff]
    %v2855 = vld [vmem:[%s1 + $0x8] sm:$0xff]
    %2858 = vst [vmem:[#allocation1] ss:$4 sm:$0xff] %v2854
    %s2859 = scalar_lea.vmem [#allocation1], 32
    %2860 = vst [vmem:[%s2859] ss:$4 sm:$0xff] %v2855
    %v2861 = vld.sshfl [vmem:[#allocation1] sm:$0xff pattern:$0x73625140]
    %v2862 = vld.sshfl [vmem:[#allocation1 + $0x8] sm:$0xff pattern:$0x73625140]
    %v2863 = vld.sshfl [vmem:[#allocation1 + $0x10] sm:$0xff pattern:$0x73625140]
    %v2864 = vld.sshfl [vmem:[#allocation1 + $0x18] sm:$0xff pattern:$0x73625140]
    %v2865 = vld.sshfl [vmem:[#allocation1 + $0x20] sm:$0xff pattern:$0x73625140]
    %v2866 = vld.sshfl [vmem:[#allocation1 + $0x28] sm:$0xff pattern:$0x73625140]
    %v2867 = vld.sshfl [vmem:[#allocation1 + $0x30] sm:$0xff pattern:$0x73625140]
    %v2868 = vld.sshfl [vmem:[#allocation1 + $0x38] sm:$0xff pattern:$0x73625140]
    %v2877 = vpack.c.bf16 %v2861, %v2861
    %v2878 = vpack.c.bf16 %v2862, %v2862
    %v2879 = vpack.c.bf16 %v2863, %v2863
    %v2880 = vpack.c.bf16 %v2864, %v2864
    %v2881 = vpack.c.bf16 %v2865, %v2865
    %v2882 = vpack.c.bf16 %v2866, %v2866
    %v2883 = vpack.c.bf16 %v2867, %v2867
    %v2884 = vpack.c.bf16 %v2868, %v2868
    %2885 = vmatpush.bf16.msra.mxu0 %v1290
    %2886 = vmatpush.bf16.msra.mxu0 %v1286
    %2887 = vmatpush.bf16.msra.mxu0 %v1282
    %2888 = vmatpush.bf16.msra.mxu0 %v1278
    %2889 = vmatpush.bf16.msra.mxu0 %v1274
    %2890 = vmatpush.bf16.msra.mxu0 %v1270
    %2891 = vmatpush.bf16.msra.mxu0 %v1266
    %2892 = vmatpush.bf16.msra.mxu0 %v1262
    %2893 = vmatmul.bf16.gmra.mxu0 %v2877
    %v2894 = vpop.f32.mrf.mxu0
    %v2895 = vadd.f32 %v486, %v2894
    %v2896 = vpop.f32.mrf.mxu0
    %2897 = vdwg.mxu0
    %2898 = vmatpush.bf16.msra.mxu0 %v1322
    %2899 = vmatpush.bf16.msra.mxu0 %v1318
    %2900 = vmatpush.bf16.msra.mxu0 %v1314
    %2901 = vmatpush.bf16.msra.mxu0 %v1310
    %2902 = vmatpush.bf16.msra.mxu0 %v1306
    %2903 = vmatpush.bf16.msra.mxu0 %v1302
    %2904 = vmatpush.bf16.msra.mxu0 %v1298
    %2905 = vmatpush.bf16.msra.mxu0 %v1294
    %2906 = vmatmul.bf16.gmra.mxu0 %v2878
    %v2907 = vpop.f32.mrf.mxu0
    %v2908 = vadd.f32 %v2895, %v2907
    %v2909 = vpop.f32.mrf.mxu0
    %2910 = vdwg.mxu0
    %2911 = vmatpush.bf16.msra.mxu0 %v1354
    %2912 = vmatpush.bf16.msra.mxu0 %v1350
    %2913 = vmatpush.bf16.msra.mxu0 %v1346
    %2914 = vmatpush.bf16.msra.mxu0 %v1342
    %2915 = vmatpush.bf16.msra.mxu0 %v1338
    %2916 = vmatpush.bf16.msra.mxu0 %v1334
    %2917 = vmatpush.bf16.msra.mxu0 %v1330
    %2918 = vmatpush.bf16.msra.mxu0 %v1326
    %2919 = vmatmul.bf16.gmra.mxu0 %v2879
    %v2920 = vpop.f32.mrf.mxu0
    %v2921 = vadd.f32 %v2908, %v2920
    %v2922 = vpop.f32.mrf.mxu0
    %2923 = vdwg.mxu0
    %2924 = vmatpush.bf16.msra.mxu0 %v1386
    %2925 = vmatpush.bf16.msra.mxu0 %v1382
    %2926 = vmatpush.bf16.msra.mxu0 %v1378
    %2927 = vmatpush.bf16.msra.mxu0 %v1374
    %2928 = vmatpush.bf16.msra.mxu0 %v1370
    %2929 = vmatpush.bf16.msra.mxu0 %v1366
    %2930 = vmatpush.bf16.msra.mxu0 %v1362
    %2931 = vmatpush.bf16.msra.mxu0 %v1358
    %2932 = vmatmul.bf16.gmra.mxu0 %v2880
    %v2933 = vpop.f32.mrf.mxu0
    %v2934 = vadd.f32 %v2921, %v2933
    %v2935 = vpop.f32.mrf.mxu0
    %2936 = vdwg.mxu0
    %2937 = vmatpush.bf16.msra.mxu0 %v1418
    %2938 = vmatpush.bf16.msra.mxu0 %v1414
    %2939 = vmatpush.bf16.msra.mxu0 %v1410
    %2940 = vmatpush.bf16.msra.mxu0 %v1406
    %2941 = vmatpush.bf16.msra.mxu0 %v1402
    %2942 = vmatpush.bf16.msra.mxu0 %v1398
    %2943 = vmatpush.bf16.msra.mxu0 %v1394
    %2944 = vmatpush.bf16.msra.mxu0 %v1390
    %2945 = vmatmul.bf16.gmra.mxu0 %v2881
    %v2946 = vpop.f32.mrf.mxu0
    %v2947 = vadd.f32 %v2934, %v2946
    %v2948 = vpop.f32.mrf.mxu0
    %2949 = vdwg.mxu0
    %2950 = vmatpush.bf16.msra.mxu0 %v1450
    %2951 = vmatpush.bf16.msra.mxu0 %v1446
    %2952 = vmatpush.bf16.msra.mxu0 %v1442
    %2953 = vmatpush.bf16.msra.mxu0 %v1438
    %2954 = vmatpush.bf16.msra.mxu0 %v1434
    %2955 = vmatpush.bf16.msra.mxu0 %v1430
    %2956 = vmatpush.bf16.msra.mxu0 %v1426
    %2957 = vmatpush.bf16.msra.mxu0 %v1422
    %2958 = vmatmul.bf16.gmra.mxu0 %v2882
    %v2959 = vpop.f32.mrf.mxu0
    %v2960 = vadd.f32 %v2947, %v2959
    %v2961 = vpop.f32.mrf.mxu0
    %2962 = vdwg.mxu0
    %2963 = vmatpush.bf16.msra.mxu0 %v1482
    %2964 = vmatpush.bf16.msra.mxu0 %v1478
    %2965 = vmatpush.bf16.msra.mxu0 %v1474
    %2966 = vmatpush.bf16.msra.mxu0 %v1470
    %2967 = vmatpush.bf16.msra.mxu0 %v1466
    %2968 = vmatpush.bf16.msra.mxu0 %v1462
    %2969 = vmatpush.bf16.msra.mxu0 %v1458
    %2970 = vmatpush.bf16.msra.mxu0 %v1454
    %2971 = vmatmul.bf16.gmra.mxu0 %v2883
    %v2972 = vpop.f32.mrf.mxu0
    %v2973 = vadd.f32 %v2960, %v2972
    %v2974 = vpop.f32.mrf.mxu0
    %2975 = vdwg.mxu0
    %2976 = vmatpush.bf16.msra.mxu0 %v1514
    %2977 = vmatpush.bf16.msra.mxu0 %v1510
    %2978 = vmatpush.bf16.msra.mxu0 %v1506
    %2979 = vmatpush.bf16.msra.mxu0 %v1502
    %2980 = vmatpush.bf16.msra.mxu0 %v1498
    %2981 = vmatpush.bf16.msra.mxu0 %v1494
    %2982 = vmatpush.bf16.msra.mxu0 %v1490
    %2983 = vmatpush.bf16.msra.mxu0 %v1486
    %2984 = vmatmul.bf16.gmra.mxu0 %v2884
    %v2985 = vpop.f32.mrf.mxu0
    %v2986 = vadd.f32 %v2973, %v2985
    %v2987 = vpop.f32.mrf.mxu0
    %2988 = vdwg.mxu0
    %2989 = vmatpush.bf16.msra.mxu0 %v1291
    %2990 = vmatpush.bf16.msra.mxu0 %v1287
    %2991 = vmatpush.bf16.msra.mxu0 %v1283
    %2992 = vmatpush.bf16.msra.mxu0 %v1279
    %2993 = vmatpush.bf16.msra.mxu0 %v1275
    %2994 = vmatpush.bf16.msra.mxu0 %v1271
    %2995 = vmatpush.bf16.msra.mxu0 %v1267
    %2996 = vmatpush.bf16.msra.mxu0 %v1263
    %2997 = vmatmul.bf16.gmra.mxu0 %v2877
    %v2998 = vpop.f32.mrf.mxu0
    %v2999 = vadd.f32 %v487, %v2998
    %v3000 = vpop.f32.mrf.mxu0
    %3001 = vdwg.mxu0
    %3002 = vmatpush.bf16.msra.mxu0 %v1323
    %3003 = vmatpush.bf16.msra.mxu0 %v1319
    %3004 = vmatpush.bf16.msra.mxu0 %v1315
    %3005 = vmatpush.bf16.msra.mxu0 %v1311
    %3006 = vmatpush.bf16.msra.mxu0 %v1307
    %3007 = vmatpush.bf16.msra.mxu0 %v1303
    %3008 = vmatpush.bf16.msra.mxu0 %v1299
    %3009 = vmatpush.bf16.msra.mxu0 %v1295
    %3010 = vmatmul.bf16.gmra.mxu0 %v2878
    %v3011 = vpop.f32.mrf.mxu0
    %v3012 = vadd.f32 %v2999, %v3011
    %v3013 = vpop.f32.mrf.mxu0
    %3014 = vdwg.mxu0
    %3015 = vmatpush.bf16.msra.mxu0 %v1355
    %3016 = vmatpush.bf16.msra.mxu0 %v1351
    %3017 = vmatpush.bf16.msra.mxu0 %v1347
    %3018 = vmatpush.bf16.msra.mxu0 %v1343
    %3019 = vmatpush.bf16.msra.mxu0 %v1339
    %3020 = vmatpush.bf16.msra.mxu0 %v1335
    %3021 = vmatpush.bf16.msra.mxu0 %v1331
    %3022 = vmatpush.bf16.msra.mxu0 %v1327
    %3023 = vmatmul.bf16.gmra.mxu0 %v2879
    %v3024 = vpop.f32.mrf.mxu0
    %v3025 = vadd.f32 %v3012, %v3024
    %v3026 = vpop.f32.mrf.mxu0
    %3027 = vdwg.mxu0
    %3028 = vmatpush.bf16.msra.mxu0 %v1387
    %3029 = vmatpush.bf16.msra.mxu0 %v1383
    %3030 = vmatpush.bf16.msra.mxu0 %v1379
    %3031 = vmatpush.bf16.msra.mxu0 %v1375
    %3032 = vmatpush.bf16.msra.mxu0 %v1371
    %3033 = vmatpush.bf16.msra.mxu0 %v1367
    %3034 = vmatpush.bf16.msra.mxu0 %v1363
    %3035 = vmatpush.bf16.msra.mxu0 %v1359
    %3036 = vmatmul.bf16.gmra.mxu0 %v2880
    %v3037 = vpop.f32.mrf.mxu0
    %v3038 = vadd.f32 %v3025, %v3037
    %v3039 = vpop.f32.mrf.mxu0
    %3040 = vdwg.mxu0
    %3041 = vmatpush.bf16.msra.mxu0 %v1419
    %3042 = vmatpush.bf16.msra.mxu0 %v1415
    %3043 = vmatpush.bf16.msra.mxu0 %v1411
    %3044 = vmatpush.bf16.msra.mxu0 %v1407
    %3045 = vmatpush.bf16.msra.mxu0 %v1403
    %3046 = vmatpush.bf16.msra.mxu0 %v1399
    %3047 = vmatpush.bf16.msra.mxu0 %v1395
    %3048 = vmatpush.bf16.msra.mxu0 %v1391
    %3049 = vmatmul.bf16.gmra.mxu0 %v2881
    %v3050 = vpop.f32.mrf.mxu0
    %v3051 = vadd.f32 %v3038, %v3050
    %v3052 = vpop.f32.mrf.mxu0
    %3053 = vdwg.mxu0
    %3054 = vmatpush.bf16.msra.mxu0 %v1451
    %3055 = vmatpush.bf16.msra.mxu0 %v1447
    %3056 = vmatpush.bf16.msra.mxu0 %v1443
    %3057 = vmatpush.bf16.msra.mxu0 %v1439
    %3058 = vmatpush.bf16.msra.mxu0 %v1435
    %3059 = vmatpush.bf16.msra.mxu0 %v1431
    %3060 = vmatpush.bf16.msra.mxu0 %v1427
    %3061 = vmatpush.bf16.msra.mxu0 %v1423
    %3062 = vmatmul.bf16.gmra.mxu0 %v2882
    %v3063 = vpop.f32.mrf.mxu0
    %v3064 = vadd.f32 %v3051, %v3063
    %v3065 = vpop.f32.mrf.mxu0
    %3066 = vdwg.mxu0
    %3067 = vmatpush.bf16.msra.mxu0 %v1483
    %3068 = vmatpush.bf16.msra.mxu0 %v1479
    %3069 = vmatpush.bf16.msra.mxu0 %v1475
    %3070 = vmatpush.bf16.msra.mxu0 %v1471
    %3071 = vmatpush.bf16.msra.mxu0 %v1467
    %3072 = vmatpush.bf16.msra.mxu0 %v1463
    %3073 = vmatpush.bf16.msra.mxu0 %v1459
    %3074 = vmatpush.bf16.msra.mxu0 %v1455
    %3075 = vmatmul.bf16.gmra.mxu0 %v2883
    %v3076 = vpop.f32.mrf.mxu0
    %v3077 = vadd.f32 %v3064, %v3076
    %v3078 = vpop.f32.mrf.mxu0
    %3079 = vdwg.mxu0
    %3080 = vmatpush.bf16.msra.mxu0 %v1515
    %3081 = vmatpush.bf16.msra.mxu0 %v1511
    %3082 = vmatpush.bf16.msra.mxu0 %v1507
    %3083 = vmatpush.bf16.msra.mxu0 %v1503
    %3084 = vmatpush.bf16.msra.mxu0 %v1499
    %3085 = vmatpush.bf16.msra.mxu0 %v1495
    %3086 = vmatpush.bf16.msra.mxu0 %v1491
    %3087 = vmatpush.bf16.msra.mxu0 %v1487
    %3088 = vmatmul.bf16.gmra.mxu0 %v2884
    %v3089 = vpop.f32.mrf.mxu0
    %v3090 = vadd.f32 %v3077, %v3089
    %v3091 = vpop.f32.mrf.mxu0
    %3092 = vdwg.mxu0
    %3093 = vmatpush.bf16.msra.mxu0 %v1292
    %3094 = vmatpush.bf16.msra.mxu0 %v1288
    %3095 = vmatpush.bf16.msra.mxu0 %v1284
    %3096 = vmatpush.bf16.msra.mxu0 %v1280
    %3097 = vmatpush.bf16.msra.mxu0 %v1276
    %3098 = vmatpush.bf16.msra.mxu0 %v1272
    %3099 = vmatpush.bf16.msra.mxu0 %v1268
    %3100 = vmatpush.bf16.msra.mxu0 %v1264
    %3101 = vmatmul.bf16.gmra.mxu0 %v2877
    %v3102 = vpop.f32.mrf.mxu0
    %v3103 = vadd.f32 %v488, %v3102
    %v3104 = vpop.f32.mrf.mxu0
    %3105 = vdwg.mxu0
    %3106 = vmatpush.bf16.msra.mxu0 %v1324
    %3107 = vmatpush.bf16.msra.mxu0 %v1320
    %3108 = vmatpush.bf16.msra.mxu0 %v1316
    %3109 = vmatpush.bf16.msra.mxu0 %v1312
    %3110 = vmatpush.bf16.msra.mxu0 %v1308
    %3111 = vmatpush.bf16.msra.mxu0 %v1304
    %3112 = vmatpush.bf16.msra.mxu0 %v1300
    %3113 = vmatpush.bf16.msra.mxu0 %v1296
    %3114 = vmatmul.bf16.gmra.mxu0 %v2878
    %v3115 = vpop.f32.mrf.mxu0
    %v3116 = vadd.f32 %v3103, %v3115
    %v3117 = vpop.f32.mrf.mxu0
    %3118 = vdwg.mxu0
    %3119 = vmatpush.bf16.msra.mxu0 %v1356
    %3120 = vmatpush.bf16.msra.mxu0 %v1352
    %3121 = vmatpush.bf16.msra.mxu0 %v1348
    %3122 = vmatpush.bf16.msra.mxu0 %v1344
    %3123 = vmatpush.bf16.msra.mxu0 %v1340
    %3124 = vmatpush.bf16.msra.mxu0 %v1336
    %3125 = vmatpush.bf16.msra.mxu0 %v1332
    %3126 = vmatpush.bf16.msra.mxu0 %v1328
    %3127 = vmatmul.bf16.gmra.mxu0 %v2879
    %v3128 = vpop.f32.mrf.mxu0
    %v3129 = vadd.f32 %v3116, %v3128
    %v3130 = vpop.f32.mrf.mxu0
    %3131 = vdwg.mxu0
    %3132 = vmatpush.bf16.msra.mxu0 %v1388
    %3133 = vmatpush.bf16.msra.mxu0 %v1384
    %3134 = vmatpush.bf16.msra.mxu0 %v1380
    %3135 = vmatpush.bf16.msra.mxu0 %v1376
    %3136 = vmatpush.bf16.msra.mxu0 %v1372
    %3137 = vmatpush.bf16.msra.mxu0 %v1368
    %3138 = vmatpush.bf16.msra.mxu0 %v1364
    %3139 = vmatpush.bf16.msra.mxu0 %v1360
    %3140 = vmatmul.bf16.gmra.mxu0 %v2880
    %v3141 = vpop.f32.mrf.mxu0
    %v3142 = vadd.f32 %v3129, %v3141
    %v3143 = vpop.f32.mrf.mxu0
    %3144 = vdwg.mxu0
    %3145 = vmatpush.bf16.msra.mxu0 %v1420
    %3146 = vmatpush.bf16.msra.mxu0 %v1416
    %3147 = vmatpush.bf16.msra.mxu0 %v1412
    %3148 = vmatpush.bf16.msra.mxu0 %v1408
    %3149 = vmatpush.bf16.msra.mxu0 %v1404
    %3150 = vmatpush.bf16.msra.mxu0 %v1400
    %3151 = vmatpush.bf16.msra.mxu0 %v1396
    %3152 = vmatpush.bf16.msra.mxu0 %v1392
    %3153 = vmatmul.bf16.gmra.mxu0 %v2881
    %v3154 = vpop.f32.mrf.mxu0
    %v3155 = vadd.f32 %v3142, %v3154
    %v3156 = vpop.f32.mrf.mxu0
    %3157 = vdwg.mxu0
    %3158 = vmatpush.bf16.msra.mxu0 %v1452
    %3159 = vmatpush.bf16.msra.mxu0 %v1448
    %3160 = vmatpush.bf16.msra.mxu0 %v1444
    %3161 = vmatpush.bf16.msra.mxu0 %v1440
    %3162 = vmatpush.bf16.msra.mxu0 %v1436
    %3163 = vmatpush.bf16.msra.mxu0 %v1432
    %3164 = vmatpush.bf16.msra.mxu0 %v1428
    %3165 = vmatpush.bf16.msra.mxu0 %v1424
    %3166 = vmatmul.bf16.gmra.mxu0 %v2882
    %v3167 = vpop.f32.mrf.mxu0
    %v3168 = vadd.f32 %v3155, %v3167
    %v3169 = vpop.f32.mrf.mxu0
    %3170 = vdwg.mxu0
    %3171 = vmatpush.bf16.msra.mxu0 %v1484
    %3172 = vmatpush.bf16.msra.mxu0 %v1480
    %3173 = vmatpush.bf16.msra.mxu0 %v1476
    %3174 = vmatpush.bf16.msra.mxu0 %v1472
    %3175 = vmatpush.bf16.msra.mxu0 %v1468
    %3176 = vmatpush.bf16.msra.mxu0 %v1464
    %3177 = vmatpush.bf16.msra.mxu0 %v1460
    %3178 = vmatpush.bf16.msra.mxu0 %v1456
    %3179 = vmatmul.bf16.gmra.mxu0 %v2883
    %v3180 = vpop.f32.mrf.mxu0
    %v3181 = vadd.f32 %v3168, %v3180
    %v3182 = vpop.f32.mrf.mxu0
    %3183 = vdwg.mxu0
    %3184 = vmatpush.bf16.msra.mxu0 %v1516
    %3185 = vmatpush.bf16.msra.mxu0 %v1512
    %3186 = vmatpush.bf16.msra.mxu0 %v1508
    %3187 = vmatpush.bf16.msra.mxu0 %v1504
    %3188 = vmatpush.bf16.msra.mxu0 %v1500
    %3189 = vmatpush.bf16.msra.mxu0 %v1496
    %3190 = vmatpush.bf16.msra.mxu0 %v1492
    %3191 = vmatpush.bf16.msra.mxu0 %v1488
    %3192 = vmatmul.bf16.gmra.mxu0 %v2884
    %v3193 = vpop.f32.mrf.mxu0
    %v3194 = vadd.f32 %v3181, %v3193
    %v3195 = vpop.f32.mrf.mxu0
    %3196 = vdwg.mxu0
    %3197 = vmatpush.bf16.msra.mxu0 %v1293
    %3198 = vmatpush.bf16.msra.mxu0 %v1289
    %3199 = vmatpush.bf16.msra.mxu0 %v1285
    %3200 = vmatpush.bf16.msra.mxu0 %v1281
    %3201 = vmatpush.bf16.msra.mxu0 %v1277
    %3202 = vmatpush.bf16.msra.mxu0 %v1273
    %3203 = vmatpush.bf16.msra.mxu0 %v1269
    %3204 = vmatpush.bf16.msra.mxu0 %v1265
    %3205 = vmatmul.bf16.gmra.mxu0 %v2877
    %v3206 = vpop.f32.mrf.mxu0
    %v3207 = vadd.f32 %v489, %v3206
    %v3208 = vpop.f32.mrf.mxu0
    %3209 = vdwg.mxu0
    %3210 = vmatpush.bf16.msra.mxu0 %v1325
    %3211 = vmatpush.bf16.msra.mxu0 %v1321
    %3212 = vmatpush.bf16.msra.mxu0 %v1317
    %3213 = vmatpush.bf16.msra.mxu0 %v1313
    %3214 = vmatpush.bf16.msra.mxu0 %v1309
    %3215 = vmatpush.bf16.msra.mxu0 %v1305
    %3216 = vmatpush.bf16.msra.mxu0 %v1301
    %3217 = vmatpush.bf16.msra.mxu0 %v1297
    %3218 = vmatmul.bf16.gmra.mxu0 %v2878
    %v3219 = vpop.f32.mrf.mxu0
    %v3220 = vadd.f32 %v3207, %v3219
    %v3221 = vpop.f32.mrf.mxu0
    %3222 = vdwg.mxu0
    %3223 = vmatpush.bf16.msra.mxu0 %v1357
    %3224 = vmatpush.bf16.msra.mxu0 %v1353
    %3225 = vmatpush.bf16.msra.mxu0 %v1349
    %3226 = vmatpush.bf16.msra.mxu0 %v1345
    %3227 = vmatpush.bf16.msra.mxu0 %v1341
    %3228 = vmatpush.bf16.msra.mxu0 %v1337
    %3229 = vmatpush.bf16.msra.mxu0 %v1333
    %3230 = vmatpush.bf16.msra.mxu0 %v1329
    %3231 = vmatmul.bf16.gmra.mxu0 %v2879
    %v3232 = vpop.f32.mrf.mxu0
    %v3233 = vadd.f32 %v3220, %v3232
    %v3234 = vpop.f32.mrf.mxu0
    %3235 = vdwg.mxu0
    %3236 = vmatpush.bf16.msra.mxu0 %v1389
    %3237 = vmatpush.bf16.msra.mxu0 %v1385
    %3238 = vmatpush.bf16.msra.mxu0 %v1381
    %3239 = vmatpush.bf16.msra.mxu0 %v1377
    %3240 = vmatpush.bf16.msra.mxu0 %v1373
    %3241 = vmatpush.bf16.msra.mxu0 %v1369
    %3242 = vmatpush.bf16.msra.mxu0 %v1365
    %3243 = vmatpush.bf16.msra.mxu0 %v1361
    %3244 = vmatmul.bf16.gmra.mxu0 %v2880
    %v3245 = vpop.f32.mrf.mxu0
    %v3246 = vadd.f32 %v3233, %v3245
    %v3247 = vpop.f32.mrf.mxu0
    %3248 = vdwg.mxu0
    %3249 = vmatpush.bf16.msra.mxu0 %v1421
    %3250 = vmatpush.bf16.msra.mxu0 %v1417
    %3251 = vmatpush.bf16.msra.mxu0 %v1413
    %3252 = vmatpush.bf16.msra.mxu0 %v1409
    %3253 = vmatpush.bf16.msra.mxu0 %v1405
    %3254 = vmatpush.bf16.msra.mxu0 %v1401
    %3255 = vmatpush.bf16.msra.mxu0 %v1397
    %3256 = vmatpush.bf16.msra.mxu0 %v1393
    %3257 = vmatmul.bf16.gmra.mxu0 %v2881
    %v3258 = vpop.f32.mrf.mxu0
    %v3259 = vadd.f32 %v3246, %v3258
    %v3260 = vpop.f32.mrf.mxu0
    %3261 = vdwg.mxu0
    %3262 = vmatpush.bf16.msra.mxu0 %v1453
    %3263 = vmatpush.bf16.msra.mxu0 %v1449
    %3264 = vmatpush.bf16.msra.mxu0 %v1445
    %3265 = vmatpush.bf16.msra.mxu0 %v1441
    %3266 = vmatpush.bf16.msra.mxu0 %v1437
    %3267 = vmatpush.bf16.msra.mxu0 %v1433
    %3268 = vmatpush.bf16.msra.mxu0 %v1429
    %3269 = vmatpush.bf16.msra.mxu0 %v1425
    %3270 = vmatmul.bf16.gmra.mxu0 %v2882
    %v3271 = vpop.f32.mrf.mxu0
    %v3272 = vadd.f32 %v3259, %v3271
    %v3273 = vpop.f32.mrf.mxu0
    %3274 = vdwg.mxu0
    %3275 = vmatpush.bf16.msra.mxu0 %v1485
    %3276 = vmatpush.bf16.msra.mxu0 %v1481
    %3277 = vmatpush.bf16.msra.mxu0 %v1477
    %3278 = vmatpush.bf16.msra.mxu0 %v1473
    %3279 = vmatpush.bf16.msra.mxu0 %v1469
    %3280 = vmatpush.bf16.msra.mxu0 %v1465
    %3281 = vmatpush.bf16.msra.mxu0 %v1461
    %3282 = vmatpush.bf16.msra.mxu0 %v1457
    %3283 = vmatmul.bf16.gmra.mxu0 %v2883
    %v3284 = vpop.f32.mrf.mxu0
    %v3285 = vadd.f32 %v3272, %v3284
    %v3286 = vpop.f32.mrf.mxu0
    %3287 = vdwg.mxu0
    %3288 = vmatpush.bf16.msra.mxu0 %v1517
    %3289 = vmatpush.bf16.msra.mxu0 %v1513
    %3290 = vmatpush.bf16.msra.mxu0 %v1509
    %3291 = vmatpush.bf16.msra.mxu0 %v1505
    %3292 = vmatpush.bf16.msra.mxu0 %v1501
    %3293 = vmatpush.bf16.msra.mxu0 %v1497
    %3294 = vmatpush.bf16.msra.mxu0 %v1493
    %3295 = vmatpush.bf16.msra.mxu0 %v1489
    %3296 = vmatmul.bf16.gmra.mxu0 %v2884
    %v3297 = vpop.f32.mrf.mxu0
    %v3298 = vadd.f32 %v3285, %v3297
    %v3299 = vpop.f32.mrf.mxu0
    %3300 = vdwg.mxu0
    %v3301 = vmax.f32 %v2986, 0.0
    %v3302 = vmax.f32 %v3090, 0.0
    %v3303 = vmax.f32 %v3194, 0.0
    %v3304 = vmax.f32 %v3298, 0.0
    %v3305 = vpack.c.bf16 %v3301, %v3301
    %v3306 = vpack.c.bf16 %v3302, %v3302
    %v3307 = vpack.c.bf16 %v3303, %v3303
    %v3308 = vpack.c.bf16 %v3304, %v3304
    %3309 = vmatpush.bf16.msra.mxu0 %v2474
    %3310 = vmatpush.bf16.msra.mxu0 %v2472
    %3311 = vmatpush.bf16.msra.mxu0 %v2470
    %3312 = vmatpush.bf16.msra.mxu0 %v2468
    %3313 = vmatpush.bf16.msra.mxu0 %v2466
    %3314 = vmatpush.bf16.msra.mxu0 %v2464
    %3315 = vmatpush.bf16.msra.mxu0 %v2462
    %3316 = vmatpush.bf16.msra.mxu0 %v2460
    %3317 = vmatmul.bf16.gmra.mxu0 %v3305
    %v3318 = vpop.f32.mrf.mxu0
    %v3319 = vadd.f32 %v2264, %v3318
    %v3320 = vpop.f32.mrf.mxu0
    %3321 = vdwg.mxu0
    %3322 = vmatpush.bf16.msra.mxu0 %v2490
    %3323 = vmatpush.bf16.msra.mxu0 %v2488
    %3324 = vmatpush.bf16.msra.mxu0 %v2486
    %3325 = vmatpush.bf16.msra.mxu0 %v2484
    %3326 = vmatpush.bf16.msra.mxu0 %v2482
    %3327 = vmatpush.bf16.msra.mxu0 %v2480
    %3328 = vmatpush.bf16.msra.mxu0 %v2478
    %3329 = vmatpush.bf16.msra.mxu0 %v2476
    %3330 = vmatmul.bf16.gmra.mxu0 %v3306
    %v3331 = vpop.f32.mrf.mxu0
    %v3332 = vadd.f32 %v3319, %v3331
    %v3333 = vpop.f32.mrf.mxu0
    %3334 = vdwg.mxu0
    %3335 = vmatpush.bf16.msra.mxu0 %v2506
    %3336 = vmatpush.bf16.msra.mxu0 %v2504
    %3337 = vmatpush.bf16.msra.mxu0 %v2502
    %3338 = vmatpush.bf16.msra.mxu0 %v2500
    %3339 = vmatpush.bf16.msra.mxu0 %v2498
    %3340 = vmatpush.bf16.msra.mxu0 %v2496
    %3341 = vmatpush.bf16.msra.mxu0 %v2494
    %3342 = vmatpush.bf16.msra.mxu0 %v2492
    %3343 = vmatmul.bf16.gmra.mxu0 %v3307
    %v3344 = vpop.f32.mrf.mxu0
    %v3345 = vadd.f32 %v3332, %v3344
    %v3346 = vpop.f32.mrf.mxu0
    %3347 = vdwg.mxu0
    %3348 = vmatpush.bf16.msra.mxu0 %v2522
    %3349 = vmatpush.bf16.msra.mxu0 %v2520
    %3350 = vmatpush.bf16.msra.mxu0 %v2518
    %3351 = vmatpush.bf16.msra.mxu0 %v2516
    %3352 = vmatpush.bf16.msra.mxu0 %v2514
    %3353 = vmatpush.bf16.msra.mxu0 %v2512
    %3354 = vmatpush.bf16.msra.mxu0 %v2510
    %3355 = vmatpush.bf16.msra.mxu0 %v2508
    %3356 = vmatmul.bf16.gmra.mxu0 %v3308
    %v3357 = vpop.f32.mrf.mxu0
    %v3358 = vadd.f32 %v3345, %v3357
    %v3359 = vpop.f32.mrf.mxu0
    %3360 = vdwg.mxu0
    %3361 = vmatpush.bf16.msra.mxu0 %v2475
    %3362 = vmatpush.bf16.msra.mxu0 %v2473
    %3363 = vmatpush.bf16.msra.mxu0 %v2471
    %3364 = vmatpush.bf16.msra.mxu0 %v2469
    %3365 = vmatpush.bf16.msra.mxu0 %v2467
    %3366 = vmatpush.bf16.msra.mxu0 %v2465
    %3367 = vmatpush.bf16.msra.mxu0 %v2463
    %3368 = vmatpush.bf16.msra.mxu0 %v2461
    %3369 = vmatmul.bf16.gmra.mxu0 %v3305
    %v3370 = vpop.f32.mrf.mxu0
    %v3371 = vadd.f32 %v2265, %v3370
    %v3372 = vpop.f32.mrf.mxu0
    %3373 = vdwg.mxu0
    %3374 = vmatpush.bf16.msra.mxu0 %v2491
    %3375 = vmatpush.bf16.msra.mxu0 %v2489
    %3376 = vmatpush.bf16.msra.mxu0 %v2487
    %3377 = vmatpush.bf16.msra.mxu0 %v2485
    %3378 = vmatpush.bf16.msra.mxu0 %v2483
    %3379 = vmatpush.bf16.msra.mxu0 %v2481
    %3380 = vmatpush.bf16.msra.mxu0 %v2479
    %3381 = vmatpush.bf16.msra.mxu0 %v2477
    %3382 = vmatmul.bf16.gmra.mxu0 %v3306
    %v3383 = vpop.f32.mrf.mxu0
    %v3384 = vadd.f32 %v3371, %v3383
    %v3385 = vpop.f32.mrf.mxu0
    %3386 = vdwg.mxu0
    %3387 = vmatpush.bf16.msra.mxu0 %v2507
    %3388 = vmatpush.bf16.msra.mxu0 %v2505
    %3389 = vmatpush.bf16.msra.mxu0 %v2503
    %3390 = vmatpush.bf16.msra.mxu0 %v2501
    %3391 = vmatpush.bf16.msra.mxu0 %v2499
    %3392 = vmatpush.bf16.msra.mxu0 %v2497
    %3393 = vmatpush.bf16.msra.mxu0 %v2495
    %3394 = vmatpush.bf16.msra.mxu0 %v2493
    %3395 = vmatmul.bf16.gmra.mxu0 %v3307
    %v3396 = vpop.f32.mrf.mxu0
    %v3397 = vadd.f32 %v3384, %v3396
    %v3398 = vpop.f32.mrf.mxu0
    %3399 = vdwg.mxu0
    %3400 = vmatpush.bf16.msra.mxu0 %v2523
    %3401 = vmatpush.bf16.msra.mxu0 %v2521
    %3402 = vmatpush.bf16.msra.mxu0 %v2519
    %3403 = vmatpush.bf16.msra.mxu0 %v2517
    %3404 = vmatpush.bf16.msra.mxu0 %v2515
    %3405 = vmatpush.bf16.msra.mxu0 %v2513
    %3406 = vmatpush.bf16.msra.mxu0 %v2511
    %3407 = vmatpush.bf16.msra.mxu0 %v2509
    %3408 = vmatmul.bf16.gmra.mxu0 %v3308
    %v3409 = vpop.f32.mrf.mxu0
    %v3410 = vadd.f32 %v3397, %v3409
    %v3411 = vpop.f32.mrf.mxu0
    %3412 = vdwg.mxu0
    %v3413 = vmax.f32 %v3358, 0.0
    %v3414 = vmax.f32 %v3410, 0.0
    %v3415 = vpack.c.bf16 %v3413, %v3413
    %v3416 = vpack.c.bf16 %v3414, %v3414
    %3417 = vmatpush.bf16.msra.mxu0 %v2803
    %3418 = vmatpush.bf16.msra.mxu0 %v2802
    %3419 = vmatpush.bf16.msra.mxu0 %v2801
    %3420 = vmatpush.bf16.msra.mxu0 %v2800
    %3421 = vmatpush.bf16.msra.mxu0 %v2799
    %3422 = vmatpush.bf16.msra.mxu0 %v2798
    %3423 = vmatpush.bf16.msra.mxu0 %v2797
    %3424 = vmatpush.bf16.msra.mxu0 %v2796
    %3425 = vmatmul.bf16.gmra.mxu0 %v3415
    %v3426 = vpop.f32.mrf.mxu0
    %v3427 = vadd.f32 %v2730, %v3426
    %v3428 = vpop.f32.mrf.mxu0
    %3429 = vdwg.mxu0
    %3430 = vmatpush.bf16.msra.mxu0 %v2811
    %3431 = vmatpush.bf16.msra.mxu0 %v2810
    %3432 = vmatpush.bf16.msra.mxu0 %v2809
    %3433 = vmatpush.bf16.msra.mxu0 %v2808
    %3434 = vmatpush.bf16.msra.mxu0 %v2807
    %3435 = vmatpush.bf16.msra.mxu0 %v2806
    %3436 = vmatpush.bf16.msra.mxu0 %v2805
    %3437 = vmatpush.bf16.msra.mxu0 %v2804
    %3438 = vmatmul.bf16.gmra.mxu0 %v3416
    %v3439 = vpop.f32.mrf.mxu0
    %v3440 = vadd.f32 %v3427, %v3439
    %v3441 = vpop.f32.mrf.mxu0
    %3442 = vdwg.mxu0
    %3443 = vst [vmem:[%s22] sm:$0x3] %v2851
    %s3444 = scalar_lea.vmem %s22, 2
    %3445 = vst [vmem:[%s3444] sm:$0x3] %v3440
    %v3446 = vld [vmem:[%s0] sm:$0xff]
    %v3447 = vld [vmem:[%s0 + $0x8] sm:$0xff]
    %3450 = vst [vmem:[#allocation1] ss:$4 sm:$0xff] %v3446
    %s3451 = scalar_lea.vmem [#allocation1], 32
    %3452 = vst [vmem:[%s3451] ss:$4 sm:$0xff] %v3447
    %v3453 = vld.sshfl [vmem:[#allocation1] sm:$0xff pattern:$0x73625140]
    %v3454 = vld.sshfl [vmem:[#allocation1 + $0x8] sm:$0xff pattern:$0x73625140]
    %v3455 = vld.sshfl [vmem:[#allocation1 + $0x10] sm:$0xff pattern:$0x73625140]
    %v3456 = vld.sshfl [vmem:[#allocation1 + $0x18] sm:$0xff pattern:$0x73625140]
    %v3457 = vld.sshfl [vmem:[#allocation1 + $0x20] sm:$0xff pattern:$0x73625140]
    %v3458 = vld.sshfl [vmem:[#allocation1 + $0x28] sm:$0xff pattern:$0x73625140]
    %v3459 = vld.sshfl [vmem:[#allocation1 + $0x30] sm:$0xff pattern:$0x73625140]
    %v3460 = vld.sshfl [vmem:[#allocation1 + $0x38] sm:$0xff pattern:$0x73625140]
    %v3469 = vpack.c.bf16 %v3453, %v3453
    %v3470 = vpack.c.bf16 %v3454, %v3454
    %v3471 = vpack.c.bf16 %v3455, %v3455
    %v3472 = vpack.c.bf16 %v3456, %v3456
    %v3473 = vpack.c.bf16 %v3457, %v3457
    %v3474 = vpack.c.bf16 %v3458, %v3458
    %v3475 = vpack.c.bf16 %v3459, %v3459
    %v3476 = vpack.c.bf16 %v3460, %v3460
    %v3477 = vld [vmem:[#allocation7] sm:$0xff]
    %v3478 = vld [vmem:[#allocation7 + $0x8] sm:$0xff]
    %v3479 = vld [vmem:[#allocation7 + $0x10] sm:$0xff]
    %v3480 = vld [vmem:[#allocation7 + $0x18] sm:$0xff]
    %v3481 = vld [vmem:[#allocation7 + $0x20] sm:$0xff]
    %v3482 = vld [vmem:[#allocation7 + $0x28] sm:$0xff]
    %v3483 = vld [vmem:[#allocation7 + $0x30] sm:$0xff]
    %v3484 = vld [vmem:[#allocation7 + $0x38] sm:$0xff]
    %v3485 = vld [vmem:[#allocation7 + $0x40] sm:$0xff]
    %v3486 = vld [vmem:[#allocation7 + $0x48] sm:$0xff]
    %v3487 = vld [vmem:[#allocation7 + $0x50] sm:$0xff]
    %v3488 = vld [vmem:[#allocation7 + $0x58] sm:$0xff]
    %v3489 = vld [vmem:[#allocation7 + $0x60] sm:$0xff]
    %v3490 = vld [vmem:[#allocation7 + $0x68] sm:$0xff]
    %v3491 = vld [vmem:[#allocation7 + $0x70] sm:$0xff]
    %v3492 = vld [vmem:[#allocation7 + $0x78] sm:$0xff]
    %v3493 = vld [vmem:[#allocation7 + $0x80] sm:$0xff]
    %v3494 = vld [vmem:[#allocation7 + $0x88] sm:$0xff]
    %v3495 = vld [vmem:[#allocation7 + $0x90] sm:$0xff]
    %v3496 = vld [vmem:[#allocation7 + $0x98] sm:$0xff]
    %v3497 = vld [vmem:[#allocation7 + $0xa0] sm:$0xff]
    %v3498 = vld [vmem:[#allocation7 + $0xa8] sm:$0xff]
    %v3499 = vld [vmem:[#allocation7 + $0xb0] sm:$0xff]
    %v3500 = vld [vmem:[#allocation7 + $0xb8] sm:$0xff]
    %v3501 = vld [vmem:[#allocation7 + $0xc0] sm:$0xff]
    %v3502 = vld [vmem:[#allocation7 + $0xc8] sm:$0xff]
    %v3503 = vld [vmem:[#allocation7 + $0xd0] sm:$0xff]
    %v3504 = vld [vmem:[#allocation7 + $0xd8] sm:$0xff]
    %v3505 = vld [vmem:[#allocation7 + $0xe0] sm:$0xff]
    %v3506 = vld [vmem:[#allocation7 + $0xe8] sm:$0xff]
    %v3507 = vld [vmem:[#allocation7 + $0xf0] sm:$0xff]
    %v3508 = vld [vmem:[#allocation7 + $0xf8] sm:$0xff]
    %v3509 = vld [vmem:[#allocation7 + $0x100] sm:$0xff]
    %v3510 = vld [vmem:[#allocation7 + $0x108] sm:$0xff]
    %v3511 = vld [vmem:[#allocation7 + $0x110] sm:$0xff]
    %v3512 = vld [vmem:[#allocation7 + $0x118] sm:$0xff]
    %v3513 = vld [vmem:[#allocation7 + $0x120] sm:$0xff]
    %v3514 = vld [vmem:[#allocation7 + $0x128] sm:$0xff]
    %v3515 = vld [vmem:[#allocation7 + $0x130] sm:$0xff]
    %v3516 = vld [vmem:[#allocation7 + $0x138] sm:$0xff]
    %v3517 = vld [vmem:[#allocation7 + $0x140] sm:$0xff]
    %v3518 = vld [vmem:[#allocation7 + $0x148] sm:$0xff]
    %v3519 = vld [vmem:[#allocation7 + $0x150] sm:$0xff]
    %v3520 = vld [vmem:[#allocation7 + $0x158] sm:$0xff]
    %v3521 = vld [vmem:[#allocation7 + $0x160] sm:$0xff]
    %v3522 = vld [vmem:[#allocation7 + $0x168] sm:$0xff]
    %v3523 = vld [vmem:[#allocation7 + $0x170] sm:$0xff]
    %v3524 = vld [vmem:[#allocation7 + $0x178] sm:$0xff]
    %v3525 = vld [vmem:[#allocation7 + $0x180] sm:$0xff]
    %v3526 = vld [vmem:[#allocation7 + $0x188] sm:$0xff]
    %v3527 = vld [vmem:[#allocation7 + $0x190] sm:$0xff]
    %v3528 = vld [vmem:[#allocation7 + $0x198] sm:$0xff]
    %v3529 = vld [vmem:[#allocation7 + $0x1a0] sm:$0xff]
    %v3530 = vld [vmem:[#allocation7 + $0x1a8] sm:$0xff]
    %v3531 = vld [vmem:[#allocation7 + $0x1b0] sm:$0xff]
    %v3532 = vld [vmem:[#allocation7 + $0x1b8] sm:$0xff]
    %v3533 = vld [vmem:[#allocation7 + $0x1c0] sm:$0xff]
    %v3534 = vld [vmem:[#allocation7 + $0x1c8] sm:$0xff]
    %v3535 = vld [vmem:[#allocation7 + $0x1d0] sm:$0xff]
    %v3536 = vld [vmem:[#allocation7 + $0x1d8] sm:$0xff]
    %v3537 = vld [vmem:[#allocation7 + $0x1e0] sm:$0xff]
    %v3538 = vld [vmem:[#allocation7 + $0x1e8] sm:$0xff]
    %v3539 = vld [vmem:[#allocation7 + $0x1f0] sm:$0xff]
    %v3540 = vld [vmem:[#allocation7 + $0x1f8] sm:$0xff]
    %v3541 = vld [vmem:[#allocation7 + $0x200] sm:$0xff]
    %v3542 = vld [vmem:[#allocation7 + $0x208] sm:$0xff]
    %v3543 = vld [vmem:[#allocation7 + $0x210] sm:$0xff]
    %v3544 = vld [vmem:[#allocation7 + $0x218] sm:$0xff]
    %v3545 = vld [vmem:[#allocation7 + $0x220] sm:$0xff]
    %v3546 = vld [vmem:[#allocation7 + $0x228] sm:$0xff]
    %v3547 = vld [vmem:[#allocation7 + $0x230] sm:$0xff]
    %v3548 = vld [vmem:[#allocation7 + $0x238] sm:$0xff]
    %v3549 = vld [vmem:[#allocation7 + $0x240] sm:$0xff]
    %v3550 = vld [vmem:[#allocation7 + $0x248] sm:$0xff]
    %v3551 = vld [vmem:[#allocation7 + $0x250] sm:$0xff]
    %v3552 = vld [vmem:[#allocation7 + $0x258] sm:$0xff]
    %v3553 = vld [vmem:[#allocation7 + $0x260] sm:$0xff]
    %v3554 = vld [vmem:[#allocation7 + $0x268] sm:$0xff]
    %v3555 = vld [vmem:[#allocation7 + $0x270] sm:$0xff]
    %v3556 = vld [vmem:[#allocation7 + $0x278] sm:$0xff]
    %v3557 = vld [vmem:[#allocation7 + $0x280] sm:$0xff]
    %v3558 = vld [vmem:[#allocation7 + $0x288] sm:$0xff]
    %v3559 = vld [vmem:[#allocation7 + $0x290] sm:$0xff]
    %v3560 = vld [vmem:[#allocation7 + $0x298] sm:$0xff]
    %v3561 = vld [vmem:[#allocation7 + $0x2a0] sm:$0xff]
    %v3562 = vld [vmem:[#allocation7 + $0x2a8] sm:$0xff]
    %v3563 = vld [vmem:[#allocation7 + $0x2b0] sm:$0xff]
    %v3564 = vld [vmem:[#allocation7 + $0x2b8] sm:$0xff]
    %v3565 = vld [vmem:[#allocation7 + $0x2c0] sm:$0xff]
    %v3566 = vld [vmem:[#allocation7 + $0x2c8] sm:$0xff]
    %v3567 = vld [vmem:[#allocation7 + $0x2d0] sm:$0xff]
    %v3568 = vld [vmem:[#allocation7 + $0x2d8] sm:$0xff]
    %v3569 = vld [vmem:[#allocation7 + $0x2e0] sm:$0xff]
    %v3570 = vld [vmem:[#allocation7 + $0x2e8] sm:$0xff]
    %v3571 = vld [vmem:[#allocation7 + $0x2f0] sm:$0xff]
    %v3572 = vld [vmem:[#allocation7 + $0x2f8] sm:$0xff]
    %v3573 = vld [vmem:[#allocation7 + $0x300] sm:$0xff]
    %v3574 = vld [vmem:[#allocation7 + $0x308] sm:$0xff]
    %v3575 = vld [vmem:[#allocation7 + $0x310] sm:$0xff]
    %v3576 = vld [vmem:[#allocation7 + $0x318] sm:$0xff]
    %v3577 = vld [vmem:[#allocation7 + $0x320] sm:$0xff]
    %v3578 = vld [vmem:[#allocation7 + $0x328] sm:$0xff]
    %v3579 = vld [vmem:[#allocation7 + $0x330] sm:$0xff]
    %v3580 = vld [vmem:[#allocation7 + $0x338] sm:$0xff]
    %v3581 = vld [vmem:[#allocation7 + $0x340] sm:$0xff]
    %v3582 = vld [vmem:[#allocation7 + $0x348] sm:$0xff]
    %v3583 = vld [vmem:[#allocation7 + $0x350] sm:$0xff]
    %v3584 = vld [vmem:[#allocation7 + $0x358] sm:$0xff]
    %v3585 = vld [vmem:[#allocation7 + $0x360] sm:$0xff]
    %v3586 = vld [vmem:[#allocation7 + $0x368] sm:$0xff]
    %v3587 = vld [vmem:[#allocation7 + $0x370] sm:$0xff]
    %v3588 = vld [vmem:[#allocation7 + $0x378] sm:$0xff]
    %v3589 = vld [vmem:[#allocation7 + $0x380] sm:$0xff]
    %v3590 = vld [vmem:[#allocation7 + $0x388] sm:$0xff]
    %v3591 = vld [vmem:[#allocation7 + $0x390] sm:$0xff]
    %v3592 = vld [vmem:[#allocation7 + $0x398] sm:$0xff]
    %v3593 = vld [vmem:[#allocation7 + $0x3a0] sm:$0xff]
    %v3594 = vld [vmem:[#allocation7 + $0x3a8] sm:$0xff]
    %v3595 = vld [vmem:[#allocation7 + $0x3b0] sm:$0xff]
    %v3596 = vld [vmem:[#allocation7 + $0x3b8] sm:$0xff]
    %v3597 = vld [vmem:[#allocation7 + $0x3c0] sm:$0xff]
    %v3598 = vld [vmem:[#allocation7 + $0x3c8] sm:$0xff]
    %v3599 = vld [vmem:[#allocation7 + $0x3d0] sm:$0xff]
    %v3600 = vld [vmem:[#allocation7 + $0x3d8] sm:$0xff]
    %v3601 = vld [vmem:[#allocation7 + $0x3e0] sm:$0xff]
    %v3602 = vld [vmem:[#allocation7 + $0x3e8] sm:$0xff]
    %v3603 = vld [vmem:[#allocation7 + $0x3f0] sm:$0xff]
    %v3604 = vld [vmem:[#allocation7 + $0x3f8] sm:$0xff]
    %v3605 = vld [vmem:[#allocation7 + $0x400] sm:$0xff]
    %v3606 = vld [vmem:[#allocation7 + $0x408] sm:$0xff]
    %v3607 = vld [vmem:[#allocation7 + $0x410] sm:$0xff]
    %v3608 = vld [vmem:[#allocation7 + $0x418] sm:$0xff]
    %v3609 = vld [vmem:[#allocation7 + $0x420] sm:$0xff]
    %v3610 = vld [vmem:[#allocation7 + $0x428] sm:$0xff]
    %v3611 = vld [vmem:[#allocation7 + $0x430] sm:$0xff]
    %v3612 = vld [vmem:[#allocation7 + $0x438] sm:$0xff]
    %v3613 = vld [vmem:[#allocation7 + $0x440] sm:$0xff]
    %v3614 = vld [vmem:[#allocation7 + $0x448] sm:$0xff]
    %v3615 = vld [vmem:[#allocation7 + $0x450] sm:$0xff]
    %v3616 = vld [vmem:[#allocation7 + $0x458] sm:$0xff]
    %v3617 = vld [vmem:[#allocation7 + $0x460] sm:$0xff]
    %v3618 = vld [vmem:[#allocation7 + $0x468] sm:$0xff]
    %v3619 = vld [vmem:[#allocation7 + $0x470] sm:$0xff]
    %v3620 = vld [vmem:[#allocation7 + $0x478] sm:$0xff]
    %v3621 = vld [vmem:[#allocation7 + $0x480] sm:$0xff]
    %v3622 = vld [vmem:[#allocation7 + $0x488] sm:$0xff]
    %v3623 = vld [vmem:[#allocation7 + $0x490] sm:$0xff]
    %v3624 = vld [vmem:[#allocation7 + $0x498] sm:$0xff]
    %v3625 = vld [vmem:[#allocation7 + $0x4a0] sm:$0xff]
    %v3626 = vld [vmem:[#allocation7 + $0x4a8] sm:$0xff]
    %v3627 = vld [vmem:[#allocation7 + $0x4b0] sm:$0xff]
    %v3628 = vld [vmem:[#allocation7 + $0x4b8] sm:$0xff]
    %v3629 = vld [vmem:[#allocation7 + $0x4c0] sm:$0xff]
    %v3630 = vld [vmem:[#allocation7 + $0x4c8] sm:$0xff]
    %v3631 = vld [vmem:[#allocation7 + $0x4d0] sm:$0xff]
    %v3632 = vld [vmem:[#allocation7 + $0x4d8] sm:$0xff]
    %v3633 = vld [vmem:[#allocation7 + $0x4e0] sm:$0xff]
    %v3634 = vld [vmem:[#allocation7 + $0x4e8] sm:$0xff]
    %v3635 = vld [vmem:[#allocation7 + $0x4f0] sm:$0xff]
    %v3636 = vld [vmem:[#allocation7 + $0x4f8] sm:$0xff]
    %v3637 = vld [vmem:[#allocation7 + $0x500] sm:$0xff]
    %v3638 = vld [vmem:[#allocation7 + $0x508] sm:$0xff]
    %v3639 = vld [vmem:[#allocation7 + $0x510] sm:$0xff]
    %v3640 = vld [vmem:[#allocation7 + $0x518] sm:$0xff]
    %v3641 = vld [vmem:[#allocation7 + $0x520] sm:$0xff]
    %v3642 = vld [vmem:[#allocation7 + $0x528] sm:$0xff]
    %v3643 = vld [vmem:[#allocation7 + $0x530] sm:$0xff]
    %v3644 = vld [vmem:[#allocation7 + $0x538] sm:$0xff]
    %v3645 = vld [vmem:[#allocation7 + $0x540] sm:$0xff]
    %v3646 = vld [vmem:[#allocation7 + $0x548] sm:$0xff]
    %v3647 = vld [vmem:[#allocation7 + $0x550] sm:$0xff]
    %v3648 = vld [vmem:[#allocation7 + $0x558] sm:$0xff]
    %v3649 = vld [vmem:[#allocation7 + $0x560] sm:$0xff]
    %v3650 = vld [vmem:[#allocation7 + $0x568] sm:$0xff]
    %v3651 = vld [vmem:[#allocation7 + $0x570] sm:$0xff]
    %v3652 = vld [vmem:[#allocation7 + $0x578] sm:$0xff]
    %v3653 = vld [vmem:[#allocation7 + $0x580] sm:$0xff]
    %v3654 = vld [vmem:[#allocation7 + $0x588] sm:$0xff]
    %v3655 = vld [vmem:[#allocation7 + $0x590] sm:$0xff]
    %v3656 = vld [vmem:[#allocation7 + $0x598] sm:$0xff]
    %v3657 = vld [vmem:[#allocation7 + $0x5a0] sm:$0xff]
    %v3658 = vld [vmem:[#allocation7 + $0x5a8] sm:$0xff]
    %v3659 = vld [vmem:[#allocation7 + $0x5b0] sm:$0xff]
    %v3660 = vld [vmem:[#allocation7 + $0x5b8] sm:$0xff]
    %v3661 = vld [vmem:[#allocation7 + $0x5c0] sm:$0xff]
    %v3662 = vld [vmem:[#allocation7 + $0x5c8] sm:$0xff]
    %v3663 = vld [vmem:[#allocation7 + $0x5d0] sm:$0xff]
    %v3664 = vld [vmem:[#allocation7 + $0x5d8] sm:$0xff]
    %v3665 = vld [vmem:[#allocation7 + $0x5e0] sm:$0xff]
    %v3666 = vld [vmem:[#allocation7 + $0x5e8] sm:$0xff]
    %v3667 = vld [vmem:[#allocation7 + $0x5f0] sm:$0xff]
    %v3668 = vld [vmem:[#allocation7 + $0x5f8] sm:$0xff]
    %v3669 = vld [vmem:[#allocation7 + $0x600] sm:$0xff]
    %v3670 = vld [vmem:[#allocation7 + $0x608] sm:$0xff]
    %v3671 = vld [vmem:[#allocation7 + $0x610] sm:$0xff]
    %v3672 = vld [vmem:[#allocation7 + $0x618] sm:$0xff]
    %v3673 = vld [vmem:[#allocation7 + $0x620] sm:$0xff]
    %v3674 = vld [vmem:[#allocation7 + $0x628] sm:$0xff]
    %v3675 = vld [vmem:[#allocation7 + $0x630] sm:$0xff]
    %v3676 = vld [vmem:[#allocation7 + $0x638] sm:$0xff]
    %v3677 = vld [vmem:[#allocation7 + $0x640] sm:$0xff]
    %v3678 = vld [vmem:[#allocation7 + $0x648] sm:$0xff]
    %v3679 = vld [vmem:[#allocation7 + $0x650] sm:$0xff]
    %v3680 = vld [vmem:[#allocation7 + $0x658] sm:$0xff]
    %v3681 = vld [vmem:[#allocation7 + $0x660] sm:$0xff]
    %v3682 = vld [vmem:[#allocation7 + $0x668] sm:$0xff]
    %v3683 = vld [vmem:[#allocation7 + $0x670] sm:$0xff]
    %v3684 = vld [vmem:[#allocation7 + $0x678] sm:$0xff]
    %v3685 = vld [vmem:[#allocation7 + $0x680] sm:$0xff]
    %v3686 = vld [vmem:[#allocation7 + $0x688] sm:$0xff]
    %v3687 = vld [vmem:[#allocation7 + $0x690] sm:$0xff]
    %v3688 = vld [vmem:[#allocation7 + $0x698] sm:$0xff]
    %v3689 = vld [vmem:[#allocation7 + $0x6a0] sm:$0xff]
    %v3690 = vld [vmem:[#allocation7 + $0x6a8] sm:$0xff]
    %v3691 = vld [vmem:[#allocation7 + $0x6b0] sm:$0xff]
    %v3692 = vld [vmem:[#allocation7 + $0x6b8] sm:$0xff]
    %v3693 = vld [vmem:[#allocation7 + $0x6c0] sm:$0xff]
    %v3694 = vld [vmem:[#allocation7 + $0x6c8] sm:$0xff]
    %v3695 = vld [vmem:[#allocation7 + $0x6d0] sm:$0xff]
    %v3696 = vld [vmem:[#allocation7 + $0x6d8] sm:$0xff]
    %v3697 = vld [vmem:[#allocation7 + $0x6e0] sm:$0xff]
    %v3698 = vld [vmem:[#allocation7 + $0x6e8] sm:$0xff]
    %v3699 = vld [vmem:[#allocation7 + $0x6f0] sm:$0xff]
    %v3700 = vld [vmem:[#allocation7 + $0x6f8] sm:$0xff]
    %v3701 = vld [vmem:[#allocation7 + $0x700] sm:$0xff]
    %v3702 = vld [vmem:[#allocation7 + $0x708] sm:$0xff]
    %v3703 = vld [vmem:[#allocation7 + $0x710] sm:$0xff]
    %v3704 = vld [vmem:[#allocation7 + $0x718] sm:$0xff]
    %v3705 = vld [vmem:[#allocation7 + $0x720] sm:$0xff]
    %v3706 = vld [vmem:[#allocation7 + $0x728] sm:$0xff]
    %v3707 = vld [vmem:[#allocation7 + $0x730] sm:$0xff]
    %v3708 = vld [vmem:[#allocation7 + $0x738] sm:$0xff]
    %v3709 = vld [vmem:[#allocation7 + $0x740] sm:$0xff]
    %v3710 = vld [vmem:[#allocation7 + $0x748] sm:$0xff]
    %v3711 = vld [vmem:[#allocation7 + $0x750] sm:$0xff]
    %v3712 = vld [vmem:[#allocation7 + $0x758] sm:$0xff]
    %v3713 = vld [vmem:[#allocation7 + $0x760] sm:$0xff]
    %v3714 = vld [vmem:[#allocation7 + $0x768] sm:$0xff]
    %v3715 = vld [vmem:[#allocation7 + $0x770] sm:$0xff]
    %v3716 = vld [vmem:[#allocation7 + $0x778] sm:$0xff]
    %v3717 = vld [vmem:[#allocation7 + $0x780] sm:$0xff]
    %v3718 = vld [vmem:[#allocation7 + $0x788] sm:$0xff]
    %v3719 = vld [vmem:[#allocation7 + $0x790] sm:$0xff]
    %v3720 = vld [vmem:[#allocation7 + $0x798] sm:$0xff]
    %v3721 = vld [vmem:[#allocation7 + $0x7a0] sm:$0xff]
    %v3722 = vld [vmem:[#allocation7 + $0x7a8] sm:$0xff]
    %v3723 = vld [vmem:[#allocation7 + $0x7b0] sm:$0xff]
    %v3724 = vld [vmem:[#allocation7 + $0x7b8] sm:$0xff]
    %v3725 = vld [vmem:[#allocation7 + $0x7c0] sm:$0xff]
    %v3726 = vld [vmem:[#allocation7 + $0x7c8] sm:$0xff]
    %v3727 = vld [vmem:[#allocation7 + $0x7d0] sm:$0xff]
    %v3728 = vld [vmem:[#allocation7 + $0x7d8] sm:$0xff]
    %v3729 = vld [vmem:[#allocation7 + $0x7e0] sm:$0xff]
    %v3730 = vld [vmem:[#allocation7 + $0x7e8] sm:$0xff]
    %v3731 = vld [vmem:[#allocation7 + $0x7f0] sm:$0xff]
    %v3732 = vld [vmem:[#allocation7 + $0x7f8] sm:$0xff]
    %v3733 = vld [vmem:[%s9] sm:$0xf]
    %v3735 = vperm.slane %v3733, 0
    %v3736 = vperm.slane %v3733, 1
    %v3737 = vperm.slane %v3733, 2
    %v3738 = vperm.slane %v3733, 3
    %v3999 = vunpack.c.l.b16 %v3477
    %v4000 = vunpack.c.h.b16 %v3477
    %v4001 = vunpack.c.l.b16 %v3478
    %v4002 = vunpack.c.h.b16 %v3478
    %v4003 = vunpack.c.l.b16 %v3479
    %v4004 = vunpack.c.h.b16 %v3479
    %v4005 = vunpack.c.l.b16 %v3480
    %v4006 = vunpack.c.h.b16 %v3480
    %v4007 = vunpack.c.l.b16 %v3481
    %v4008 = vunpack.c.h.b16 %v3481
    %v4009 = vunpack.c.l.b16 %v3482
    %v4010 = vunpack.c.h.b16 %v3482
    %v4011 = vunpack.c.l.b16 %v3483
    %v4012 = vunpack.c.h.b16 %v3483
    %v4013 = vunpack.c.l.b16 %v3484
    %v4014 = vunpack.c.h.b16 %v3484
    %v4015 = vunpack.c.l.b16 %v3485
    %v4016 = vunpack.c.h.b16 %v3485
    %v4017 = vunpack.c.l.b16 %v3486
    %v4018 = vunpack.c.h.b16 %v3486
    %v4019 = vunpack.c.l.b16 %v3487
    %v4020 = vunpack.c.h.b16 %v3487
    %v4021 = vunpack.c.l.b16 %v3488
    %v4022 = vunpack.c.h.b16 %v3488
    %v4023 = vunpack.c.l.b16 %v3489
    %v4024 = vunpack.c.h.b16 %v3489
    %v4025 = vunpack.c.l.b16 %v3490
    %v4026 = vunpack.c.h.b16 %v3490
    %v4027 = vunpack.c.l.b16 %v3491
    %v4028 = vunpack.c.h.b16 %v3491
    %v4029 = vunpack.c.l.b16 %v3492
    %v4030 = vunpack.c.h.b16 %v3492
    %v4031 = vunpack.c.l.b16 %v3493
    %v4032 = vunpack.c.h.b16 %v3493
    %v4033 = vunpack.c.l.b16 %v3494
    %v4034 = vunpack.c.h.b16 %v3494
    %v4035 = vunpack.c.l.b16 %v3495
    %v4036 = vunpack.c.h.b16 %v3495
    %v4037 = vunpack.c.l.b16 %v3496
    %v4038 = vunpack.c.h.b16 %v3496
    %v4039 = vunpack.c.l.b16 %v3497
    %v4040 = vunpack.c.h.b16 %v3497
    %v4041 = vunpack.c.l.b16 %v3498
    %v4042 = vunpack.c.h.b16 %v3498
    %v4043 = vunpack.c.l.b16 %v3499
    %v4044 = vunpack.c.h.b16 %v3499
    %v4045 = vunpack.c.l.b16 %v3500
    %v4046 = vunpack.c.h.b16 %v3500
    %v4047 = vunpack.c.l.b16 %v3501
    %v4048 = vunpack.c.h.b16 %v3501
    %v4049 = vunpack.c.l.b16 %v3502
    %v4050 = vunpack.c.h.b16 %v3502
    %v4051 = vunpack.c.l.b16 %v3503
    %v4052 = vunpack.c.h.b16 %v3503
    %v4053 = vunpack.c.l.b16 %v3504
    %v4054 = vunpack.c.h.b16 %v3504
    %v4055 = vunpack.c.l.b16 %v3505
    %v4056 = vunpack.c.h.b16 %v3505
    %v4057 = vunpack.c.l.b16 %v3506
    %v4058 = vunpack.c.h.b16 %v3506
    %v4059 = vunpack.c.l.b16 %v3507
    %v4060 = vunpack.c.h.b16 %v3507
    %v4061 = vunpack.c.l.b16 %v3508
    %v4062 = vunpack.c.h.b16 %v3508
    %v4063 = vunpack.c.l.b16 %v3509
    %v4064 = vunpack.c.h.b16 %v3509
    %v4065 = vunpack.c.l.b16 %v3510
    %v4066 = vunpack.c.h.b16 %v3510
    %v4067 = vunpack.c.l.b16 %v3511
    %v4068 = vunpack.c.h.b16 %v3511
    %v4069 = vunpack.c.l.b16 %v3512
    %v4070 = vunpack.c.h.b16 %v3512
    %v4071 = vunpack.c.l.b16 %v3513
    %v4072 = vunpack.c.h.b16 %v3513
    %v4073 = vunpack.c.l.b16 %v3514
    %v4074 = vunpack.c.h.b16 %v3514
    %v4075 = vunpack.c.l.b16 %v3515
    %v4076 = vunpack.c.h.b16 %v3515
    %v4077 = vunpack.c.l.b16 %v3516
    %v4078 = vunpack.c.h.b16 %v3516
    %v4079 = vunpack.c.l.b16 %v3517
    %v4080 = vunpack.c.h.b16 %v3517
    %v4081 = vunpack.c.l.b16 %v3518
    %v4082 = vunpack.c.h.b16 %v3518
    %v4083 = vunpack.c.l.b16 %v3519
    %v4084 = vunpack.c.h.b16 %v3519
    %v4085 = vunpack.c.l.b16 %v3520
    %v4086 = vunpack.c.h.b16 %v3520
    %v4087 = vunpack.c.l.b16 %v3521
    %v4088 = vunpack.c.h.b16 %v3521
    %v4089 = vunpack.c.l.b16 %v3522
    %v4090 = vunpack.c.h.b16 %v3522
    %v4091 = vunpack.c.l.b16 %v3523
    %v4092 = vunpack.c.h.b16 %v3523
    %v4093 = vunpack.c.l.b16 %v3524
    %v4094 = vunpack.c.h.b16 %v3524
    %v4095 = vunpack.c.l.b16 %v3525
    %v4096 = vunpack.c.h.b16 %v3525
    %v4097 = vunpack.c.l.b16 %v3526
    %v4098 = vunpack.c.h.b16 %v3526
    %v4099 = vunpack.c.l.b16 %v3527
    %v4100 = vunpack.c.h.b16 %v3527
    %v4101 = vunpack.c.l.b16 %v3528
    %v4102 = vunpack.c.h.b16 %v3528
    %v4103 = vunpack.c.l.b16 %v3529
    %v4104 = vunpack.c.h.b16 %v3529
    %v4105 = vunpack.c.l.b16 %v3530
    %v4106 = vunpack.c.h.b16 %v3530
    %v4107 = vunpack.c.l.b16 %v3531
    %v4108 = vunpack.c.h.b16 %v3531
    %v4109 = vunpack.c.l.b16 %v3532
    %v4110 = vunpack.c.h.b16 %v3532
    %v4111 = vunpack.c.l.b16 %v3533
    %v4112 = vunpack.c.h.b16 %v3533
    %v4113 = vunpack.c.l.b16 %v3534
    %v4114 = vunpack.c.h.b16 %v3534
    %v4115 = vunpack.c.l.b16 %v3535
    %v4116 = vunpack.c.h.b16 %v3535
    %v4117 = vunpack.c.l.b16 %v3536
    %v4118 = vunpack.c.h.b16 %v3536
    %v4119 = vunpack.c.l.b16 %v3537
    %v4120 = vunpack.c.h.b16 %v3537
    %v4121 = vunpack.c.l.b16 %v3538
    %v4122 = vunpack.c.h.b16 %v3538
    %v4123 = vunpack.c.l.b16 %v3539
    %v4124 = vunpack.c.h.b16 %v3539
    %v4125 = vunpack.c.l.b16 %v3540
    %v4126 = vunpack.c.h.b16 %v3540
    %v4127 = vunpack.c.l.b16 %v3541
    %v4128 = vunpack.c.h.b16 %v3541
    %v4129 = vunpack.c.l.b16 %v3542
    %v4130 = vunpack.c.h.b16 %v3542
    %v4131 = vunpack.c.l.b16 %v3543
    %v4132 = vunpack.c.h.b16 %v3543
    %v4133 = vunpack.c.l.b16 %v3544
    %v4134 = vunpack.c.h.b16 %v3544
    %v4135 = vunpack.c.l.b16 %v3545
    %v4136 = vunpack.c.h.b16 %v3545
    %v4137 = vunpack.c.l.b16 %v3546
    %v4138 = vunpack.c.h.b16 %v3546
    %v4139 = vunpack.c.l.b16 %v3547
    %v4140 = vunpack.c.h.b16 %v3547
    %v4141 = vunpack.c.l.b16 %v3548
    %v4142 = vunpack.c.h.b16 %v3548
    %v4143 = vunpack.c.l.b16 %v3549
    %v4144 = vunpack.c.h.b16 %v3549
    %v4145 = vunpack.c.l.b16 %v3550
    %v4146 = vunpack.c.h.b16 %v3550
    %v4147 = vunpack.c.l.b16 %v3551
    %v4148 = vunpack.c.h.b16 %v3551
    %v4149 = vunpack.c.l.b16 %v3552
    %v4150 = vunpack.c.h.b16 %v3552
    %v4151 = vunpack.c.l.b16 %v3553
    %v4152 = vunpack.c.h.b16 %v3553
    %v4153 = vunpack.c.l.b16 %v3554
    %v4154 = vunpack.c.h.b16 %v3554
    %v4155 = vunpack.c.l.b16 %v3555
    %v4156 = vunpack.c.h.b16 %v3555
    %v4157 = vunpack.c.l.b16 %v3556
    %v4158 = vunpack.c.h.b16 %v3556
    %v4159 = vunpack.c.l.b16 %v3557
    %v4160 = vunpack.c.h.b16 %v3557
    %v4161 = vunpack.c.l.b16 %v3558
    %v4162 = vunpack.c.h.b16 %v3558
    %v4163 = vunpack.c.l.b16 %v3559
    %v4164 = vunpack.c.h.b16 %v3559
    %v4165 = vunpack.c.l.b16 %v3560
    %v4166 = vunpack.c.h.b16 %v3560
    %v4167 = vunpack.c.l.b16 %v3561
    %v4168 = vunpack.c.h.b16 %v3561
    %v4169 = vunpack.c.l.b16 %v3562
    %v4170 = vunpack.c.h.b16 %v3562
    %v4171 = vunpack.c.l.b16 %v3563
    %v4172 = vunpack.c.h.b16 %v3563
    %v4173 = vunpack.c.l.b16 %v3564
    %v4174 = vunpack.c.h.b16 %v3564
    %v4175 = vunpack.c.l.b16 %v3565
    %v4176 = vunpack.c.h.b16 %v3565
    %v4177 = vunpack.c.l.b16 %v3566
    %v4178 = vunpack.c.h.b16 %v3566
    %v4179 = vunpack.c.l.b16 %v3567
    %v4180 = vunpack.c.h.b16 %v3567
    %v4181 = vunpack.c.l.b16 %v3568
    %v4182 = vunpack.c.h.b16 %v3568
    %v4183 = vunpack.c.l.b16 %v3569
    %v4184 = vunpack.c.h.b16 %v3569
    %v4185 = vunpack.c.l.b16 %v3570
    %v4186 = vunpack.c.h.b16 %v3570
    %v4187 = vunpack.c.l.b16 %v3571
    %v4188 = vunpack.c.h.b16 %v3571
    %v4189 = vunpack.c.l.b16 %v3572
    %v4190 = vunpack.c.h.b16 %v3572
    %v4191 = vunpack.c.l.b16 %v3573
    %v4192 = vunpack.c.h.b16 %v3573
    %v4193 = vunpack.c.l.b16 %v3574
    %v4194 = vunpack.c.h.b16 %v3574
    %v4195 = vunpack.c.l.b16 %v3575
    %v4196 = vunpack.c.h.b16 %v3575
    %v4197 = vunpack.c.l.b16 %v3576
    %v4198 = vunpack.c.h.b16 %v3576
    %v4199 = vunpack.c.l.b16 %v3577
    %v4200 = vunpack.c.h.b16 %v3577
    %v4201 = vunpack.c.l.b16 %v3578
    %v4202 = vunpack.c.h.b16 %v3578
    %v4203 = vunpack.c.l.b16 %v3579
    %v4204 = vunpack.c.h.b16 %v3579
    %v4205 = vunpack.c.l.b16 %v3580
    %v4206 = vunpack.c.h.b16 %v3580
    %v4207 = vunpack.c.l.b16 %v3581
    %v4208 = vunpack.c.h.b16 %v3581
    %v4209 = vunpack.c.l.b16 %v3582
    %v4210 = vunpack.c.h.b16 %v3582
    %v4211 = vunpack.c.l.b16 %v3583
    %v4212 = vunpack.c.h.b16 %v3583
    %v4213 = vunpack.c.l.b16 %v3584
    %v4214 = vunpack.c.h.b16 %v3584
    %v4215 = vunpack.c.l.b16 %v3585
    %v4216 = vunpack.c.h.b16 %v3585
    %v4217 = vunpack.c.l.b16 %v3586
    %v4218 = vunpack.c.h.b16 %v3586
    %v4219 = vunpack.c.l.b16 %v3587
    %v4220 = vunpack.c.h.b16 %v3587
    %v4221 = vunpack.c.l.b16 %v3588
    %v4222 = vunpack.c.h.b16 %v3588
    %v4223 = vunpack.c.l.b16 %v3589
    %v4224 = vunpack.c.h.b16 %v3589
    %v4225 = vunpack.c.l.b16 %v3590
    %v4226 = vunpack.c.h.b16 %v3590
    %v4227 = vunpack.c.l.b16 %v3591
    %v4228 = vunpack.c.h.b16 %v3591
    %v4229 = vunpack.c.l.b16 %v3592
    %v4230 = vunpack.c.h.b16 %v3592
    %v4231 = vunpack.c.l.b16 %v3593
    %v4232 = vunpack.c.h.b16 %v3593
    %v4233 = vunpack.c.l.b16 %v3594
    %v4234 = vunpack.c.h.b16 %v3594
    %v4235 = vunpack.c.l.b16 %v3595
    %v4236 = vunpack.c.h.b16 %v3595
    %v4237 = vunpack.c.l.b16 %v3596
    %v4238 = vunpack.c.h.b16 %v3596
    %v4239 = vunpack.c.l.b16 %v3597
    %v4240 = vunpack.c.h.b16 %v3597
    %v4241 = vunpack.c.l.b16 %v3598
    %v4242 = vunpack.c.h.b16 %v3598
    %v4243 = vunpack.c.l.b16 %v3599
    %v4244 = vunpack.c.h.b16 %v3599
    %v4245 = vunpack.c.l.b16 %v3600
    %v4246 = vunpack.c.h.b16 %v3600
    %v4247 = vunpack.c.l.b16 %v3601
    %v4248 = vunpack.c.h.b16 %v3601
    %v4249 = vunpack.c.l.b16 %v3602
    %v4250 = vunpack.c.h.b16 %v3602
    %v4251 = vunpack.c.l.b16 %v3603
    %v4252 = vunpack.c.h.b16 %v3603
    %v4253 = vunpack.c.l.b16 %v3604
    %v4254 = vunpack.c.h.b16 %v3604
    %v4255 = vunpack.c.l.b16 %v3605
    %v4256 = vunpack.c.h.b16 %v3605
    %v4257 = vunpack.c.l.b16 %v3606
    %v4258 = vunpack.c.h.b16 %v3606
    %v4259 = vunpack.c.l.b16 %v3607
    %v4260 = vunpack.c.h.b16 %v3607
    %v4261 = vunpack.c.l.b16 %v3608
    %v4262 = vunpack.c.h.b16 %v3608
    %v4263 = vunpack.c.l.b16 %v3609
    %v4264 = vunpack.c.h.b16 %v3609
    %v4265 = vunpack.c.l.b16 %v3610
    %v4266 = vunpack.c.h.b16 %v3610
    %v4267 = vunpack.c.l.b16 %v3611
    %v4268 = vunpack.c.h.b16 %v3611
    %v4269 = vunpack.c.l.b16 %v3612
    %v4270 = vunpack.c.h.b16 %v3612
    %v4271 = vunpack.c.l.b16 %v3613
    %v4272 = vunpack.c.h.b16 %v3613
    %v4273 = vunpack.c.l.b16 %v3614
    %v4274 = vunpack.c.h.b16 %v3614
    %v4275 = vunpack.c.l.b16 %v3615
    %v4276 = vunpack.c.h.b16 %v3615
    %v4277 = vunpack.c.l.b16 %v3616
    %v4278 = vunpack.c.h.b16 %v3616
    %v4279 = vunpack.c.l.b16 %v3617
    %v4280 = vunpack.c.h.b16 %v3617
    %v4281 = vunpack.c.l.b16 %v3618
    %v4282 = vunpack.c.h.b16 %v3618
    %v4283 = vunpack.c.l.b16 %v3619
    %v4284 = vunpack.c.h.b16 %v3619
    %v4285 = vunpack.c.l.b16 %v3620
    %v4286 = vunpack.c.h.b16 %v3620
    %v4287 = vunpack.c.l.b16 %v3621
    %v4288 = vunpack.c.h.b16 %v3621
    %v4289 = vunpack.c.l.b16 %v3622
    %v4290 = vunpack.c.h.b16 %v3622
    %v4291 = vunpack.c.l.b16 %v3623
    %v4292 = vunpack.c.h.b16 %v3623
    %v4293 = vunpack.c.l.b16 %v3624
    %v4294 = vunpack.c.h.b16 %v3624
    %v4295 = vunpack.c.l.b16 %v3625
    %v4296 = vunpack.c.h.b16 %v3625
    %v4297 = vunpack.c.l.b16 %v3626
    %v4298 = vunpack.c.h.b16 %v3626
    %v4299 = vunpack.c.l.b16 %v3627
    %v4300 = vunpack.c.h.b16 %v3627
    %v4301 = vunpack.c.l.b16 %v3628
    %v4302 = vunpack.c.h.b16 %v3628
    %v4303 = vunpack.c.l.b16 %v3629
    %v4304 = vunpack.c.h.b16 %v3629
    %v4305 = vunpack.c.l.b16 %v3630
    %v4306 = vunpack.c.h.b16 %v3630
    %v4307 = vunpack.c.l.b16 %v3631
    %v4308 = vunpack.c.h.b16 %v3631
    %v4309 = vunpack.c.l.b16 %v3632
    %v4310 = vunpack.c.h.b16 %v3632
    %v4311 = vunpack.c.l.b16 %v3633
    %v4312 = vunpack.c.h.b16 %v3633
    %v4313 = vunpack.c.l.b16 %v3634
    %v4314 = vunpack.c.h.b16 %v3634
    %v4315 = vunpack.c.l.b16 %v3635
    %v4316 = vunpack.c.h.b16 %v3635
    %v4317 = vunpack.c.l.b16 %v3636
    %v4318 = vunpack.c.h.b16 %v3636
    %v4319 = vunpack.c.l.b16 %v3637
    %v4320 = vunpack.c.h.b16 %v3637
    %v4321 = vunpack.c.l.b16 %v3638
    %v4322 = vunpack.c.h.b16 %v3638
    %v4323 = vunpack.c.l.b16 %v3639
    %v4324 = vunpack.c.h.b16 %v3639
    %v4325 = vunpack.c.l.b16 %v3640
    %v4326 = vunpack.c.h.b16 %v3640
    %v4327 = vunpack.c.l.b16 %v3641
    %v4328 = vunpack.c.h.b16 %v3641
    %v4329 = vunpack.c.l.b16 %v3642
    %v4330 = vunpack.c.h.b16 %v3642
    %v4331 = vunpack.c.l.b16 %v3643
    %v4332 = vunpack.c.h.b16 %v3643
    %v4333 = vunpack.c.l.b16 %v3644
    %v4334 = vunpack.c.h.b16 %v3644
    %v4335 = vunpack.c.l.b16 %v3645
    %v4336 = vunpack.c.h.b16 %v3645
    %v4337 = vunpack.c.l.b16 %v3646
    %v4338 = vunpack.c.h.b16 %v3646
    %v4339 = vunpack.c.l.b16 %v3647
    %v4340 = vunpack.c.h.b16 %v3647
    %v4341 = vunpack.c.l.b16 %v3648
    %v4342 = vunpack.c.h.b16 %v3648
    %v4343 = vunpack.c.l.b16 %v3649
    %v4344 = vunpack.c.h.b16 %v3649
    %v4345 = vunpack.c.l.b16 %v3650
    %v4346 = vunpack.c.h.b16 %v3650
    %v4347 = vunpack.c.l.b16 %v3651
    %v4348 = vunpack.c.h.b16 %v3651
    %v4349 = vunpack.c.l.b16 %v3652
    %v4350 = vunpack.c.h.b16 %v3652
    %v4351 = vunpack.c.l.b16 %v3653
    %v4352 = vunpack.c.h.b16 %v3653
    %v4353 = vunpack.c.l.b16 %v3654
    %v4354 = vunpack.c.h.b16 %v3654
    %v4355 = vunpack.c.l.b16 %v3655
    %v4356 = vunpack.c.h.b16 %v3655
    %v4357 = vunpack.c.l.b16 %v3656
    %v4358 = vunpack.c.h.b16 %v3656
    %v4359 = vunpack.c.l.b16 %v3657
    %v4360 = vunpack.c.h.b16 %v3657
    %v4361 = vunpack.c.l.b16 %v3658
    %v4362 = vunpack.c.h.b16 %v3658
    %v4363 = vunpack.c.l.b16 %v3659
    %v4364 = vunpack.c.h.b16 %v3659
    %v4365 = vunpack.c.l.b16 %v3660
    %v4366 = vunpack.c.h.b16 %v3660
    %v4367 = vunpack.c.l.b16 %v3661
    %v4368 = vunpack.c.h.b16 %v3661
    %v4369 = vunpack.c.l.b16 %v3662
    %v4370 = vunpack.c.h.b16 %v3662
    %v4371 = vunpack.c.l.b16 %v3663
    %v4372 = vunpack.c.h.b16 %v3663
    %v4373 = vunpack.c.l.b16 %v3664
    %v4374 = vunpack.c.h.b16 %v3664
    %v4375 = vunpack.c.l.b16 %v3665
    %v4376 = vunpack.c.h.b16 %v3665
    %v4377 = vunpack.c.l.b16 %v3666
    %v4378 = vunpack.c.h.b16 %v3666
    %v4379 = vunpack.c.l.b16 %v3667
    %v4380 = vunpack.c.h.b16 %v3667
    %v4381 = vunpack.c.l.b16 %v3668
    %v4382 = vunpack.c.h.b16 %v3668
    %v4383 = vunpack.c.l.b16 %v3669
    %v4384 = vunpack.c.h.b16 %v3669
    %v4385 = vunpack.c.l.b16 %v3670
    %v4386 = vunpack.c.h.b16 %v3670
    %v4387 = vunpack.c.l.b16 %v3671
    %v4388 = vunpack.c.h.b16 %v3671
    %v4389 = vunpack.c.l.b16 %v3672
    %v4390 = vunpack.c.h.b16 %v3672
    %v4391 = vunpack.c.l.b16 %v3673
    %v4392 = vunpack.c.h.b16 %v3673
    %v4393 = vunpack.c.l.b16 %v3674
    %v4394 = vunpack.c.h.b16 %v3674
    %v4395 = vunpack.c.l.b16 %v3675
    %v4396 = vunpack.c.h.b16 %v3675
    %v4397 = vunpack.c.l.b16 %v3676
    %v4398 = vunpack.c.h.b16 %v3676
    %v4399 = vunpack.c.l.b16 %v3677
    %v4400 = vunpack.c.h.b16 %v3677
    %v4401 = vunpack.c.l.b16 %v3678
    %v4402 = vunpack.c.h.b16 %v3678
    %v4403 = vunpack.c.l.b16 %v3679
    %v4404 = vunpack.c.h.b16 %v3679
    %v4405 = vunpack.c.l.b16 %v3680
    %v4406 = vunpack.c.h.b16 %v3680
    %v4407 = vunpack.c.l.b16 %v3681
    %v4408 = vunpack.c.h.b16 %v3681
    %v4409 = vunpack.c.l.b16 %v3682
    %v4410 = vunpack.c.h.b16 %v3682
    %v4411 = vunpack.c.l.b16 %v3683
    %v4412 = vunpack.c.h.b16 %v3683
    %v4413 = vunpack.c.l.b16 %v3684
    %v4414 = vunpack.c.h.b16 %v3684
    %v4415 = vunpack.c.l.b16 %v3685
    %v4416 = vunpack.c.h.b16 %v3685
    %v4417 = vunpack.c.l.b16 %v3686
    %v4418 = vunpack.c.h.b16 %v3686
    %v4419 = vunpack.c.l.b16 %v3687
    %v4420 = vunpack.c.h.b16 %v3687
    %v4421 = vunpack.c.l.b16 %v3688
    %v4422 = vunpack.c.h.b16 %v3688
    %v4423 = vunpack.c.l.b16 %v3689
    %v4424 = vunpack.c.h.b16 %v3689
    %v4425 = vunpack.c.l.b16 %v3690
    %v4426 = vunpack.c.h.b16 %v3690
    %v4427 = vunpack.c.l.b16 %v3691
    %v4428 = vunpack.c.h.b16 %v3691
    %v4429 = vunpack.c.l.b16 %v3692
    %v4430 = vunpack.c.h.b16 %v3692
    %v4431 = vunpack.c.l.b16 %v3693
    %v4432 = vunpack.c.h.b16 %v3693
    %v4433 = vunpack.c.l.b16 %v3694
    %v4434 = vunpack.c.h.b16 %v3694
    %v4435 = vunpack.c.l.b16 %v3695
    %v4436 = vunpack.c.h.b16 %v3695
    %v4437 = vunpack.c.l.b16 %v3696
    %v4438 = vunpack.c.h.b16 %v3696
    %v4439 = vunpack.c.l.b16 %v3697
    %v4440 = vunpack.c.h.b16 %v3697
    %v4441 = vunpack.c.l.b16 %v3698
    %v4442 = vunpack.c.h.b16 %v3698
    %v4443 = vunpack.c.l.b16 %v3699
    %v4444 = vunpack.c.h.b16 %v3699
    %v4445 = vunpack.c.l.b16 %v3700
    %v4446 = vunpack.c.h.b16 %v3700
    %v4447 = vunpack.c.l.b16 %v3701
    %v4448 = vunpack.c.h.b16 %v3701
    %v4449 = vunpack.c.l.b16 %v3702
    %v4450 = vunpack.c.h.b16 %v3702
    %v4451 = vunpack.c.l.b16 %v3703
    %v4452 = vunpack.c.h.b16 %v3703
    %v4453 = vunpack.c.l.b16 %v3704
    %v4454 = vunpack.c.h.b16 %v3704
    %v4455 = vunpack.c.l.b16 %v3705
    %v4456 = vunpack.c.h.b16 %v3705
    %v4457 = vunpack.c.l.b16 %v3706
    %v4458 = vunpack.c.h.b16 %v3706
    %v4459 = vunpack.c.l.b16 %v3707
    %v4460 = vunpack.c.h.b16 %v3707
    %v4461 = vunpack.c.l.b16 %v3708
    %v4462 = vunpack.c.h.b16 %v3708
    %v4463 = vunpack.c.l.b16 %v3709
    %v4464 = vunpack.c.h.b16 %v3709
    %v4465 = vunpack.c.l.b16 %v3710
    %v4466 = vunpack.c.h.b16 %v3710
    %v4467 = vunpack.c.l.b16 %v3711
    %v4468 = vunpack.c.h.b16 %v3711
    %v4469 = vunpack.c.l.b16 %v3712
    %v4470 = vunpack.c.h.b16 %v3712
    %v4471 = vunpack.c.l.b16 %v3713
    %v4472 = vunpack.c.h.b16 %v3713
    %v4473 = vunpack.c.l.b16 %v3714
    %v4474 = vunpack.c.h.b16 %v3714
    %v4475 = vunpack.c.l.b16 %v3715
    %v4476 = vunpack.c.h.b16 %v3715
    %v4477 = vunpack.c.l.b16 %v3716
    %v4478 = vunpack.c.h.b16 %v3716
    %v4479 = vunpack.c.l.b16 %v3717
    %v4480 = vunpack.c.h.b16 %v3717
    %v4481 = vunpack.c.l.b16 %v3718
    %v4482 = vunpack.c.h.b16 %v3718
    %v4483 = vunpack.c.l.b16 %v3719
    %v4484 = vunpack.c.h.b16 %v3719
    %v4485 = vunpack.c.l.b16 %v3720
    %v4486 = vunpack.c.h.b16 %v3720
    %v4487 = vunpack.c.l.b16 %v3721
    %v4488 = vunpack.c.h.b16 %v3721
    %v4489 = vunpack.c.l.b16 %v3722
    %v4490 = vunpack.c.h.b16 %v3722
    %v4491 = vunpack.c.l.b16 %v3723
    %v4492 = vunpack.c.h.b16 %v3723
    %v4493 = vunpack.c.l.b16 %v3724
    %v4494 = vunpack.c.h.b16 %v3724
    %v4495 = vunpack.c.l.b16 %v3725
    %v4496 = vunpack.c.h.b16 %v3725
    %v4497 = vunpack.c.l.b16 %v3726
    %v4498 = vunpack.c.h.b16 %v3726
    %v4499 = vunpack.c.l.b16 %v3727
    %v4500 = vunpack.c.h.b16 %v3727
    %v4501 = vunpack.c.l.b16 %v3728
    %v4502 = vunpack.c.h.b16 %v3728
    %v4503 = vunpack.c.l.b16 %v3729
    %v4504 = vunpack.c.h.b16 %v3729
    %v4505 = vunpack.c.l.b16 %v3730
    %v4506 = vunpack.c.h.b16 %v3730
    %v4507 = vunpack.c.l.b16 %v3731
    %v4508 = vunpack.c.h.b16 %v3731
    %v4509 = vunpack.c.l.b16 %v3732
    %v4510 = vunpack.c.h.b16 %v3732
    %v4511 = vpack.c.b16 %v4003, %v3999
    %v4512 = vpack.c.b16 %v4004, %v4000
    %v4513 = vpack.c.b16 %v4005, %v4001
    %v4514 = vpack.c.b16 %v4006, %v4002
    %v4515 = vpack.c.b16 %v4011, %v4007
    %v4516 = vpack.c.b16 %v4012, %v4008
    %v4517 = vpack.c.b16 %v4013, %v4009
    %v4518 = vpack.c.b16 %v4014, %v4010
    %v4519 = vpack.c.b16 %v4019, %v4015
    %v4520 = vpack.c.b16 %v4020, %v4016
    %v4521 = vpack.c.b16 %v4021, %v4017
    %v4522 = vpack.c.b16 %v4022, %v4018
    %v4523 = vpack.c.b16 %v4027, %v4023
    %v4524 = vpack.c.b16 %v4028, %v4024
    %v4525 = vpack.c.b16 %v4029, %v4025
    %v4526 = vpack.c.b16 %v4030, %v4026
    %v4527 = vpack.c.b16 %v4035, %v4031
    %v4528 = vpack.c.b16 %v4036, %v4032
    %v4529 = vpack.c.b16 %v4037, %v4033
    %v4530 = vpack.c.b16 %v4038, %v4034
    %v4531 = vpack.c.b16 %v4043, %v4039
    %v4532 = vpack.c.b16 %v4044, %v4040
    %v4533 = vpack.c.b16 %v4045, %v4041
    %v4534 = vpack.c.b16 %v4046, %v4042
    %v4535 = vpack.c.b16 %v4051, %v4047
    %v4536 = vpack.c.b16 %v4052, %v4048
    %v4537 = vpack.c.b16 %v4053, %v4049
    %v4538 = vpack.c.b16 %v4054, %v4050
    %v4539 = vpack.c.b16 %v4059, %v4055
    %v4540 = vpack.c.b16 %v4060, %v4056
    %v4541 = vpack.c.b16 %v4061, %v4057
    %v4542 = vpack.c.b16 %v4062, %v4058
    %v4543 = vpack.c.b16 %v4067, %v4063
    %v4544 = vpack.c.b16 %v4068, %v4064
    %v4545 = vpack.c.b16 %v4069, %v4065
    %v4546 = vpack.c.b16 %v4070, %v4066
    %v4547 = vpack.c.b16 %v4075, %v4071
    %v4548 = vpack.c.b16 %v4076, %v4072
    %v4549 = vpack.c.b16 %v4077, %v4073
    %v4550 = vpack.c.b16 %v4078, %v4074
    %v4551 = vpack.c.b16 %v4083, %v4079
    %v4552 = vpack.c.b16 %v4084, %v4080
    %v4553 = vpack.c.b16 %v4085, %v4081
    %v4554 = vpack.c.b16 %v4086, %v4082
    %v4555 = vpack.c.b16 %v4091, %v4087
    %v4556 = vpack.c.b16 %v4092, %v4088
    %v4557 = vpack.c.b16 %v4093, %v4089
    %v4558 = vpack.c.b16 %v4094, %v4090
    %v4559 = vpack.c.b16 %v4099, %v4095
    %v4560 = vpack.c.b16 %v4100, %v4096
    %v4561 = vpack.c.b16 %v4101, %v4097
    %v4562 = vpack.c.b16 %v4102, %v4098
    %v4563 = vpack.c.b16 %v4107, %v4103
    %v4564 = vpack.c.b16 %v4108, %v4104
    %v4565 = vpack.c.b16 %v4109, %v4105
    %v4566 = vpack.c.b16 %v4110, %v4106
    %v4567 = vpack.c.b16 %v4115, %v4111
    %v4568 = vpack.c.b16 %v4116, %v4112
    %v4569 = vpack.c.b16 %v4117, %v4113
    %v4570 = vpack.c.b16 %v4118, %v4114
    %v4571 = vpack.c.b16 %v4123, %v4119
    %v4572 = vpack.c.b16 %v4124, %v4120
    %v4573 = vpack.c.b16 %v4125, %v4121
    %v4574 = vpack.c.b16 %v4126, %v4122
    %v4575 = vpack.c.b16 %v4131, %v4127
    %v4576 = vpack.c.b16 %v4132, %v4128
    %v4577 = vpack.c.b16 %v4133, %v4129
    %v4578 = vpack.c.b16 %v4134, %v4130
    %v4579 = vpack.c.b16 %v4139, %v4135
    %v4580 = vpack.c.b16 %v4140, %v4136
    %v4581 = vpack.c.b16 %v4141, %v4137
    %v4582 = vpack.c.b16 %v4142, %v4138
    %v4583 = vpack.c.b16 %v4147, %v4143
    %v4584 = vpack.c.b16 %v4148, %v4144
    %v4585 = vpack.c.b16 %v4149, %v4145
    %v4586 = vpack.c.b16 %v4150, %v4146
    %v4587 = vpack.c.b16 %v4155, %v4151
    %v4588 = vpack.c.b16 %v4156, %v4152
    %v4589 = vpack.c.b16 %v4157, %v4153
    %v4590 = vpack.c.b16 %v4158, %v4154
    %v4591 = vpack.c.b16 %v4163, %v4159
    %v4592 = vpack.c.b16 %v4164, %v4160
    %v4593 = vpack.c.b16 %v4165, %v4161
    %v4594 = vpack.c.b16 %v4166, %v4162
    %v4595 = vpack.c.b16 %v4171, %v4167
    %v4596 = vpack.c.b16 %v4172, %v4168
    %v4597 = vpack.c.b16 %v4173, %v4169
    %v4598 = vpack.c.b16 %v4174, %v4170
    %v4599 = vpack.c.b16 %v4179, %v4175
    %v4600 = vpack.c.b16 %v4180, %v4176
    %v4601 = vpack.c.b16 %v4181, %v4177
    %v4602 = vpack.c.b16 %v4182, %v4178
    %v4603 = vpack.c.b16 %v4187, %v4183
    %v4604 = vpack.c.b16 %v4188, %v4184
    %v4605 = vpack.c.b16 %v4189, %v4185
    %v4606 = vpack.c.b16 %v4190, %v4186
    %v4607 = vpack.c.b16 %v4195, %v4191
    %v4608 = vpack.c.b16 %v4196, %v4192
    %v4609 = vpack.c.b16 %v4197, %v4193
    %v4610 = vpack.c.b16 %v4198, %v4194
    %v4611 = vpack.c.b16 %v4203, %v4199
    %v4612 = vpack.c.b16 %v4204, %v4200
    %v4613 = vpack.c.b16 %v4205, %v4201
    %v4614 = vpack.c.b16 %v4206, %v4202
    %v4615 = vpack.c.b16 %v4211, %v4207
    %v4616 = vpack.c.b16 %v4212, %v4208
    %v4617 = vpack.c.b16 %v4213, %v4209
    %v4618 = vpack.c.b16 %v4214, %v4210
    %v4619 = vpack.c.b16 %v4219, %v4215
    %v4620 = vpack.c.b16 %v4220, %v4216
    %v4621 = vpack.c.b16 %v4221, %v4217
    %v4622 = vpack.c.b16 %v4222, %v4218
    %v4623 = vpack.c.b16 %v4227, %v4223
    %v4624 = vpack.c.b16 %v4228, %v4224
    %v4625 = vpack.c.b16 %v4229, %v4225
    %v4626 = vpack.c.b16 %v4230, %v4226
    %v4627 = vpack.c.b16 %v4235, %v4231
    %v4628 = vpack.c.b16 %v4236, %v4232
    %v4629 = vpack.c.b16 %v4237, %v4233
    %v4630 = vpack.c.b16 %v4238, %v4234
    %v4631 = vpack.c.b16 %v4243, %v4239
    %v4632 = vpack.c.b16 %v4244, %v4240
    %v4633 = vpack.c.b16 %v4245, %v4241
    %v4634 = vpack.c.b16 %v4246, %v4242
    %v4635 = vpack.c.b16 %v4251, %v4247
    %v4636 = vpack.c.b16 %v4252, %v4248
    %v4637 = vpack.c.b16 %v4253, %v4249
    %v4638 = vpack.c.b16 %v4254, %v4250
    %v4639 = vpack.c.b16 %v4259, %v4255
    %v4640 = vpack.c.b16 %v4260, %v4256
    %v4641 = vpack.c.b16 %v4261, %v4257
    %v4642 = vpack.c.b16 %v4262, %v4258
    %v4643 = vpack.c.b16 %v4267, %v4263
    %v4644 = vpack.c.b16 %v4268, %v4264
    %v4645 = vpack.c.b16 %v4269, %v4265
    %v4646 = vpack.c.b16 %v4270, %v4266
    %v4647 = vpack.c.b16 %v4275, %v4271
    %v4648 = vpack.c.b16 %v4276, %v4272
    %v4649 = vpack.c.b16 %v4277, %v4273
    %v4650 = vpack.c.b16 %v4278, %v4274
    %v4651 = vpack.c.b16 %v4283, %v4279
    %v4652 = vpack.c.b16 %v4284, %v4280
    %v4653 = vpack.c.b16 %v4285, %v4281
    %v4654 = vpack.c.b16 %v4286, %v4282
    %v4655 = vpack.c.b16 %v4291, %v4287
    %v4656 = vpack.c.b16 %v4292, %v4288
    %v4657 = vpack.c.b16 %v4293, %v4289
    %v4658 = vpack.c.b16 %v4294, %v4290
    %v4659 = vpack.c.b16 %v4299, %v4295
    %v4660 = vpack.c.b16 %v4300, %v4296
    %v4661 = vpack.c.b16 %v4301, %v4297
    %v4662 = vpack.c.b16 %v4302, %v4298
    %v4663 = vpack.c.b16 %v4307, %v4303
    %v4664 = vpack.c.b16 %v4308, %v4304
    %v4665 = vpack.c.b16 %v4309, %v4305
    %v4666 = vpack.c.b16 %v4310, %v4306
    %v4667 = vpack.c.b16 %v4315, %v4311
    %v4668 = vpack.c.b16 %v4316, %v4312
    %v4669 = vpack.c.b16 %v4317, %v4313
    %v4670 = vpack.c.b16 %v4318, %v4314
    %v4671 = vpack.c.b16 %v4323, %v4319
    %v4672 = vpack.c.b16 %v4324, %v4320
    %v4673 = vpack.c.b16 %v4325, %v4321
    %v4674 = vpack.c.b16 %v4326, %v4322
    %v4675 = vpack.c.b16 %v4331, %v4327
    %v4676 = vpack.c.b16 %v4332, %v4328
    %v4677 = vpack.c.b16 %v4333, %v4329
    %v4678 = vpack.c.b16 %v4334, %v4330
    %v4679 = vpack.c.b16 %v4339, %v4335
    %v4680 = vpack.c.b16 %v4340, %v4336
    %v4681 = vpack.c.b16 %v4341, %v4337
    %v4682 = vpack.c.b16 %v4342, %v4338
    %v4683 = vpack.c.b16 %v4347, %v4343
    %v4684 = vpack.c.b16 %v4348, %v4344
    %v4685 = vpack.c.b16 %v4349, %v4345
    %v4686 = vpack.c.b16 %v4350, %v4346
    %v4687 = vpack.c.b16 %v4355, %v4351
    %v4688 = vpack.c.b16 %v4356, %v4352
    %v4689 = vpack.c.b16 %v4357, %v4353
    %v4690 = vpack.c.b16 %v4358, %v4354
    %v4691 = vpack.c.b16 %v4363, %v4359
    %v4692 = vpack.c.b16 %v4364, %v4360
    %v4693 = vpack.c.b16 %v4365, %v4361
    %v4694 = vpack.c.b16 %v4366, %v4362
    %v4695 = vpack.c.b16 %v4371, %v4367
    %v4696 = vpack.c.b16 %v4372, %v4368
    %v4697 = vpack.c.b16 %v4373, %v4369
    %v4698 = vpack.c.b16 %v4374, %v4370
    %v4699 = vpack.c.b16 %v4379, %v4375
    %v4700 = vpack.c.b16 %v4380, %v4376
    %v4701 = vpack.c.b16 %v4381, %v4377
    %v4702 = vpack.c.b16 %v4382, %v4378
    %v4703 = vpack.c.b16 %v4387, %v4383
    %v4704 = vpack.c.b16 %v4388, %v4384
    %v4705 = vpack.c.b16 %v4389, %v4385
    %v4706 = vpack.c.b16 %v4390, %v4386
    %v4707 = vpack.c.b16 %v4395, %v4391
    %v4708 = vpack.c.b16 %v4396, %v4392
    %v4709 = vpack.c.b16 %v4397, %v4393
    %v4710 = vpack.c.b16 %v4398, %v4394
    %v4711 = vpack.c.b16 %v4403, %v4399
    %v4712 = vpack.c.b16 %v4404, %v4400
    %v4713 = vpack.c.b16 %v4405, %v4401
    %v4714 = vpack.c.b16 %v4406, %v4402
    %v4715 = vpack.c.b16 %v4411, %v4407
    %v4716 = vpack.c.b16 %v4412, %v4408
    %v4717 = vpack.c.b16 %v4413, %v4409
    %v4718 = vpack.c.b16 %v4414, %v4410
    %v4719 = vpack.c.b16 %v4419, %v4415
    %v4720 = vpack.c.b16 %v4420, %v4416
    %v4721 = vpack.c.b16 %v4421, %v4417
    %v4722 = vpack.c.b16 %v4422, %v4418
    %v4723 = vpack.c.b16 %v4427, %v4423
    %v4724 = vpack.c.b16 %v4428, %v4424
    %v4725 = vpack.c.b16 %v4429, %v4425
    %v4726 = vpack.c.b16 %v4430, %v4426
    %v4727 = vpack.c.b16 %v4435, %v4431
    %v4728 = vpack.c.b16 %v4436, %v4432
    %v4729 = vpack.c.b16 %v4437, %v4433
    %v4730 = vpack.c.b16 %v4438, %v4434
    %v4731 = vpack.c.b16 %v4443, %v4439
    %v4732 = vpack.c.b16 %v4444, %v4440
    %v4733 = vpack.c.b16 %v4445, %v4441
    %v4734 = vpack.c.b16 %v4446, %v4442
    %v4735 = vpack.c.b16 %v4451, %v4447
    %v4736 = vpack.c.b16 %v4452, %v4448
    %v4737 = vpack.c.b16 %v4453, %v4449
    %v4738 = vpack.c.b16 %v4454, %v4450
    %v4739 = vpack.c.b16 %v4459, %v4455
    %v4740 = vpack.c.b16 %v4460, %v4456
    %v4741 = vpack.c.b16 %v4461, %v4457
    %v4742 = vpack.c.b16 %v4462, %v4458
    %v4743 = vpack.c.b16 %v4467, %v4463
    %v4744 = vpack.c.b16 %v4468, %v4464
    %v4745 = vpack.c.b16 %v4469, %v4465
    %v4746 = vpack.c.b16 %v4470, %v4466
    %v4747 = vpack.c.b16 %v4475, %v4471
    %v4748 = vpack.c.b16 %v4476, %v4472
    %v4749 = vpack.c.b16 %v4477, %v4473
    %v4750 = vpack.c.b16 %v4478, %v4474
    %v4751 = vpack.c.b16 %v4483, %v4479
    %v4752 = vpack.c.b16 %v4484, %v4480
    %v4753 = vpack.c.b16 %v4485, %v4481
    %v4754 = vpack.c.b16 %v4486, %v4482
    %v4755 = vpack.c.b16 %v4491, %v4487
    %v4756 = vpack.c.b16 %v4492, %v4488
    %v4757 = vpack.c.b16 %v4493, %v4489
    %v4758 = vpack.c.b16 %v4494, %v4490
    %v4759 = vpack.c.b16 %v4499, %v4495
    %v4760 = vpack.c.b16 %v4500, %v4496
    %v4761 = vpack.c.b16 %v4501, %v4497
    %v4762 = vpack.c.b16 %v4502, %v4498
    %v4763 = vpack.c.b16 %v4507, %v4503
    %v4764 = vpack.c.b16 %v4508, %v4504
    %v4765 = vpack.c.b16 %v4509, %v4505
    %v4766 = vpack.c.b16 %v4510, %v4506
    %5023 = vmatpush.bf16.msra.mxu0 %v4539
    %5024 = vmatpush.bf16.msra.mxu0 %v4535
    %5025 = vmatpush.bf16.msra.mxu0 %v4531
    %5026 = vmatpush.bf16.msra.mxu0 %v4527
    %5027 = vmatpush.bf16.msra.mxu0 %v4523
    %5028 = vmatpush.bf16.msra.mxu0 %v4519
    %5029 = vmatpush.bf16.msra.mxu0 %v4515
    %5030 = vmatpush.bf16.msra.mxu0 %v4511
    %5031 = vmatmul.bf16.gmra.mxu0 %v3469
    %v5032 = vpop.f32.mrf.mxu0
    %v5033 = vadd.f32 %v3735, %v5032
    %v5034 = vpop.f32.mrf.mxu0
    %5035 = vdwg.mxu0
    %5036 = vmatpush.bf16.msra.mxu0 %v4571
    %5037 = vmatpush.bf16.msra.mxu0 %v4567
    %5038 = vmatpush.bf16.msra.mxu0 %v4563
    %5039 = vmatpush.bf16.msra.mxu0 %v4559
    %5040 = vmatpush.bf16.msra.mxu0 %v4555
    %5041 = vmatpush.bf16.msra.mxu0 %v4551
    %5042 = vmatpush.bf16.msra.mxu0 %v4547
    %5043 = vmatpush.bf16.msra.mxu0 %v4543
    %5044 = vmatmul.bf16.gmra.mxu0 %v3470
    %v5045 = vpop.f32.mrf.mxu0
    %v5046 = vadd.f32 %v5033, %v5045
    %v5047 = vpop.f32.mrf.mxu0
    %5048 = vdwg.mxu0
    %5049 = vmatpush.bf16.msra.mxu0 %v4603
    %5050 = vmatpush.bf16.msra.mxu0 %v4599
    %5051 = vmatpush.bf16.msra.mxu0 %v4595
    %5052 = vmatpush.bf16.msra.mxu0 %v4591
    %5053 = vmatpush.bf16.msra.mxu0 %v4587
    %5054 = vmatpush.bf16.msra.mxu0 %v4583
    %5055 = vmatpush.bf16.msra.mxu0 %v4579
    %5056 = vmatpush.bf16.msra.mxu0 %v4575
    %5057 = vmatmul.bf16.gmra.mxu0 %v3471
    %v5058 = vpop.f32.mrf.mxu0
    %v5059 = vadd.f32 %v5046, %v5058
    %v5060 = vpop.f32.mrf.mxu0
    %5061 = vdwg.mxu0
    %5062 = vmatpush.bf16.msra.mxu0 %v4635
    %5063 = vmatpush.bf16.msra.mxu0 %v4631
    %5064 = vmatpush.bf16.msra.mxu0 %v4627
    %5065 = vmatpush.bf16.msra.mxu0 %v4623
    %5066 = vmatpush.bf16.msra.mxu0 %v4619
    %5067 = vmatpush.bf16.msra.mxu0 %v4615
    %5068 = vmatpush.bf16.msra.mxu0 %v4611
    %5069 = vmatpush.bf16.msra.mxu0 %v4607
    %5070 = vmatmul.bf16.gmra.mxu0 %v3472
    %v5071 = vpop.f32.mrf.mxu0
    %v5072 = vadd.f32 %v5059, %v5071
    %v5073 = vpop.f32.mrf.mxu0
    %5074 = vdwg.mxu0
    %5075 = vmatpush.bf16.msra.mxu0 %v4667
    %5076 = vmatpush.bf16.msra.mxu0 %v4663
    %5077 = vmatpush.bf16.msra.mxu0 %v4659
    %5078 = vmatpush.bf16.msra.mxu0 %v4655
    %5079 = vmatpush.bf16.msra.mxu0 %v4651
    %5080 = vmatpush.bf16.msra.mxu0 %v4647
    %5081 = vmatpush.bf16.msra.mxu0 %v4643
    %5082 = vmatpush.bf16.msra.mxu0 %v4639
    %5083 = vmatmul.bf16.gmra.mxu0 %v3473
    %v5084 = vpop.f32.mrf.mxu0
    %v5085 = vadd.f32 %v5072, %v5084
    %v5086 = vpop.f32.mrf.mxu0
    %5087 = vdwg.mxu0
    %5088 = vmatpush.bf16.msra.mxu0 %v4699
    %5089 = vmatpush.bf16.msra.mxu0 %v4695
    %5090 = vmatpush.bf16.msra.mxu0 %v4691
    %5091 = vmatpush.bf16.msra.mxu0 %v4687
    %5092 = vmatpush.bf16.msra.mxu0 %v4683
    %5093 = vmatpush.bf16.msra.mxu0 %v4679
    %5094 = vmatpush.bf16.msra.mxu0 %v4675
    %5095 = vmatpush.bf16.msra.mxu0 %v4671
    %5096 = vmatmul.bf16.gmra.mxu0 %v3474
    %v5097 = vpop.f32.mrf.mxu0
    %v5098 = vadd.f32 %v5085, %v5097
    %v5099 = vpop.f32.mrf.mxu0
    %5100 = vdwg.mxu0
    %5101 = vmatpush.bf16.msra.mxu0 %v4731
    %5102 = vmatpush.bf16.msra.mxu0 %v4727
    %5103 = vmatpush.bf16.msra.mxu0 %v4723
    %5104 = vmatpush.bf16.msra.mxu0 %v4719
    %5105 = vmatpush.bf16.msra.mxu0 %v4715
    %5106 = vmatpush.bf16.msra.mxu0 %v4711
    %5107 = vmatpush.bf16.msra.mxu0 %v4707
    %5108 = vmatpush.bf16.msra.mxu0 %v4703
    %5109 = vmatmul.bf16.gmra.mxu0 %v3475
    %v5110 = vpop.f32.mrf.mxu0
    %v5111 = vadd.f32 %v5098, %v5110
    %v5112 = vpop.f32.mrf.mxu0
    %5113 = vdwg.mxu0
    %5114 = vmatpush.bf16.msra.mxu0 %v4763
    %5115 = vmatpush.bf16.msra.mxu0 %v4759
    %5116 = vmatpush.bf16.msra.mxu0 %v4755
    %5117 = vmatpush.bf16.msra.mxu0 %v4751
    %5118 = vmatpush.bf16.msra.mxu0 %v4747
    %5119 = vmatpush.bf16.msra.mxu0 %v4743
    %5120 = vmatpush.bf16.msra.mxu0 %v4739
    %5121 = vmatpush.bf16.msra.mxu0 %v4735
    %5122 = vmatmul.bf16.gmra.mxu0 %v3476
    %v5123 = vpop.f32.mrf.mxu0
    %v5124 = vadd.f32 %v5111, %v5123
    %v5125 = vpop.f32.mrf.mxu0
    %5126 = vdwg.mxu0
    %5127 = vmatpush.bf16.msra.mxu0 %v4540
    %5128 = vmatpush.bf16.msra.mxu0 %v4536
    %5129 = vmatpush.bf16.msra.mxu0 %v4532
    %5130 = vmatpush.bf16.msra.mxu0 %v4528
    %5131 = vmatpush.bf16.msra.mxu0 %v4524
    %5132 = vmatpush.bf16.msra.mxu0 %v4520
    %5133 = vmatpush.bf16.msra.mxu0 %v4516
    %5134 = vmatpush.bf16.msra.mxu0 %v4512
    %5135 = vmatmul.bf16.gmra.mxu0 %v3469
    %v5136 = vpop.f32.mrf.mxu0
    %v5137 = vadd.f32 %v3736, %v5136
    %v5138 = vpop.f32.mrf.mxu0
    %5139 = vdwg.mxu0
    %5140 = vmatpush.bf16.msra.mxu0 %v4572
    %5141 = vmatpush.bf16.msra.mxu0 %v4568
    %5142 = vmatpush.bf16.msra.mxu0 %v4564
    %5143 = vmatpush.bf16.msra.mxu0 %v4560
    %5144 = vmatpush.bf16.msra.mxu0 %v4556
    %5145 = vmatpush.bf16.msra.mxu0 %v4552
    %5146 = vmatpush.bf16.msra.mxu0 %v4548
    %5147 = vmatpush.bf16.msra.mxu0 %v4544
    %5148 = vmatmul.bf16.gmra.mxu0 %v3470
    %v5149 = vpop.f32.mrf.mxu0
    %v5150 = vadd.f32 %v5137, %v5149
    %v5151 = vpop.f32.mrf.mxu0
    %5152 = vdwg.mxu0
    %5153 = vmatpush.bf16.msra.mxu0 %v4604
    %5154 = vmatpush.bf16.msra.mxu0 %v4600
    %5155 = vmatpush.bf16.msra.mxu0 %v4596
    %5156 = vmatpush.bf16.msra.mxu0 %v4592
    %5157 = vmatpush.bf16.msra.mxu0 %v4588
    %5158 = vmatpush.bf16.msra.mxu0 %v4584
    %5159 = vmatpush.bf16.msra.mxu0 %v4580
    %5160 = vmatpush.bf16.msra.mxu0 %v4576
    %5161 = vmatmul.bf16.gmra.mxu0 %v3471
    %v5162 = vpop.f32.mrf.mxu0
    %v5163 = vadd.f32 %v5150, %v5162
    %v5164 = vpop.f32.mrf.mxu0
    %5165 = vdwg.mxu0
    %5166 = vmatpush.bf16.msra.mxu0 %v4636
    %5167 = vmatpush.bf16.msra.mxu0 %v4632
    %5168 = vmatpush.bf16.msra.mxu0 %v4628
    %5169 = vmatpush.bf16.msra.mxu0 %v4624
    %5170 = vmatpush.bf16.msra.mxu0 %v4620
    %5171 = vmatpush.bf16.msra.mxu0 %v4616
    %5172 = vmatpush.bf16.msra.mxu0 %v4612
    %5173 = vmatpush.bf16.msra.mxu0 %v4608
    %5174 = vmatmul.bf16.gmra.mxu0 %v3472
    %v5175 = vpop.f32.mrf.mxu0
    %v5176 = vadd.f32 %v5163, %v5175
    %v5177 = vpop.f32.mrf.mxu0
    %5178 = vdwg.mxu0
    %5179 = vmatpush.bf16.msra.mxu0 %v4668
    %5180 = vmatpush.bf16.msra.mxu0 %v4664
    %5181 = vmatpush.bf16.msra.mxu0 %v4660
    %5182 = vmatpush.bf16.msra.mxu0 %v4656
    %5183 = vmatpush.bf16.msra.mxu0 %v4652
    %5184 = vmatpush.bf16.msra.mxu0 %v4648
    %5185 = vmatpush.bf16.msra.mxu0 %v4644
    %5186 = vmatpush.bf16.msra.mxu0 %v4640
    %5187 = vmatmul.bf16.gmra.mxu0 %v3473
    %v5188 = vpop.f32.mrf.mxu0
    %v5189 = vadd.f32 %v5176, %v5188
    %v5190 = vpop.f32.mrf.mxu0
    %5191 = vdwg.mxu0
    %5192 = vmatpush.bf16.msra.mxu0 %v4700
    %5193 = vmatpush.bf16.msra.mxu0 %v4696
    %5194 = vmatpush.bf16.msra.mxu0 %v4692
    %5195 = vmatpush.bf16.msra.mxu0 %v4688
    %5196 = vmatpush.bf16.msra.mxu0 %v4684
    %5197 = vmatpush.bf16.msra.mxu0 %v4680
    %5198 = vmatpush.bf16.msra.mxu0 %v4676
    %5199 = vmatpush.bf16.msra.mxu0 %v4672
    %5200 = vmatmul.bf16.gmra.mxu0 %v3474
    %v5201 = vpop.f32.mrf.mxu0
    %v5202 = vadd.f32 %v5189, %v5201
    %v5203 = vpop.f32.mrf.mxu0
    %5204 = vdwg.mxu0
    %5205 = vmatpush.bf16.msra.mxu0 %v4732
    %5206 = vmatpush.bf16.msra.mxu0 %v4728
    %5207 = vmatpush.bf16.msra.mxu0 %v4724
    %5208 = vmatpush.bf16.msra.mxu0 %v4720
    %5209 = vmatpush.bf16.msra.mxu0 %v4716
    %5210 = vmatpush.bf16.msra.mxu0 %v4712
    %5211 = vmatpush.bf16.msra.mxu0 %v4708
    %5212 = vmatpush.bf16.msra.mxu0 %v4704
    %5213 = vmatmul.bf16.gmra.mxu0 %v3475
    %v5214 = vpop.f32.mrf.mxu0
    %v5215 = vadd.f32 %v5202, %v5214
    %v5216 = vpop.f32.mrf.mxu0
    %5217 = vdwg.mxu0
    %5218 = vmatpush.bf16.msra.mxu0 %v4764
    %5219 = vmatpush.bf16.msra.mxu0 %v4760
    %5220 = vmatpush.bf16.msra.mxu0 %v4756
    %5221 = vmatpush.bf16.msra.mxu0 %v4752
    %5222 = vmatpush.bf16.msra.mxu0 %v4748
    %5223 = vmatpush.bf16.msra.mxu0 %v4744
    %5224 = vmatpush.bf16.msra.mxu0 %v4740
    %5225 = vmatpush.bf16.msra.mxu0 %v4736
    %5226 = vmatmul.bf16.gmra.mxu0 %v3476
    %v5227 = vpop.f32.mrf.mxu0
    %v5228 = vadd.f32 %v5215, %v5227
    %v5229 = vpop.f32.mrf.mxu0
    %5230 = vdwg.mxu0
    %5231 = vmatpush.bf16.msra.mxu0 %v4541
    %5232 = vmatpush.bf16.msra.mxu0 %v4537
    %5233 = vmatpush.bf16.msra.mxu0 %v4533
    %5234 = vmatpush.bf16.msra.mxu0 %v4529
    %5235 = vmatpush.bf16.msra.mxu0 %v4525
    %5236 = vmatpush.bf16.msra.mxu0 %v4521
    %5237 = vmatpush.bf16.msra.mxu0 %v4517
    %5238 = vmatpush.bf16.msra.mxu0 %v4513
    %5239 = vmatmul.bf16.gmra.mxu0 %v3469
    %v5240 = vpop.f32.mrf.mxu0
    %v5241 = vadd.f32 %v3737, %v5240
    %v5242 = vpop.f32.mrf.mxu0
    %5243 = vdwg.mxu0
    %5244 = vmatpush.bf16.msra.mxu0 %v4573
    %5245 = vmatpush.bf16.msra.mxu0 %v4569
    %5246 = vmatpush.bf16.msra.mxu0 %v4565
    %5247 = vmatpush.bf16.msra.mxu0 %v4561
    %5248 = vmatpush.bf16.msra.mxu0 %v4557
    %5249 = vmatpush.bf16.msra.mxu0 %v4553
    %5250 = vmatpush.bf16.msra.mxu0 %v4549
    %5251 = vmatpush.bf16.msra.mxu0 %v4545
    %5252 = vmatmul.bf16.gmra.mxu0 %v3470
    %v5253 = vpop.f32.mrf.mxu0
    %v5254 = vadd.f32 %v5241, %v5253
    %v5255 = vpop.f32.mrf.mxu0
    %5256 = vdwg.mxu0
    %5257 = vmatpush.bf16.msra.mxu0 %v4605
    %5258 = vmatpush.bf16.msra.mxu0 %v4601
    %5259 = vmatpush.bf16.msra.mxu0 %v4597
    %5260 = vmatpush.bf16.msra.mxu0 %v4593
    %5261 = vmatpush.bf16.msra.mxu0 %v4589
    %5262 = vmatpush.bf16.msra.mxu0 %v4585
    %5263 = vmatpush.bf16.msra.mxu0 %v4581
    %5264 = vmatpush.bf16.msra.mxu0 %v4577
    %5265 = vmatmul.bf16.gmra.mxu0 %v3471
    %v5266 = vpop.f32.mrf.mxu0
    %v5267 = vadd.f32 %v5254, %v5266
    %v5268 = vpop.f32.mrf.mxu0
    %5269 = vdwg.mxu0
    %5270 = vmatpush.bf16.msra.mxu0 %v4637
    %5271 = vmatpush.bf16.msra.mxu0 %v4633
    %5272 = vmatpush.bf16.msra.mxu0 %v4629
    %5273 = vmatpush.bf16.msra.mxu0 %v4625
    %5274 = vmatpush.bf16.msra.mxu0 %v4621
    %5275 = vmatpush.bf16.msra.mxu0 %v4617
    %5276 = vmatpush.bf16.msra.mxu0 %v4613
    %5277 = vmatpush.bf16.msra.mxu0 %v4609
    %5278 = vmatmul.bf16.gmra.mxu0 %v3472
    %v5279 = vpop.f32.mrf.mxu0
    %v5280 = vadd.f32 %v5267, %v5279
    %v5281 = vpop.f32.mrf.mxu0
    %5282 = vdwg.mxu0
    %5283 = vmatpush.bf16.msra.mxu0 %v4669
    %5284 = vmatpush.bf16.msra.mxu0 %v4665
    %5285 = vmatpush.bf16.msra.mxu0 %v4661
    %5286 = vmatpush.bf16.msra.mxu0 %v4657
    %5287 = vmatpush.bf16.msra.mxu0 %v4653
    %5288 = vmatpush.bf16.msra.mxu0 %v4649
    %5289 = vmatpush.bf16.msra.mxu0 %v4645
    %5290 = vmatpush.bf16.msra.mxu0 %v4641
    %5291 = vmatmul.bf16.gmra.mxu0 %v3473
    %v5292 = vpop.f32.mrf.mxu0
    %v5293 = vadd.f32 %v5280, %v5292
    %v5294 = vpop.f32.mrf.mxu0
    %5295 = vdwg.mxu0
    %5296 = vmatpush.bf16.msra.mxu0 %v4701
    %5297 = vmatpush.bf16.msra.mxu0 %v4697
    %5298 = vmatpush.bf16.msra.mxu0 %v4693
    %5299 = vmatpush.bf16.msra.mxu0 %v4689
    %5300 = vmatpush.bf16.msra.mxu0 %v4685
    %5301 = vmatpush.bf16.msra.mxu0 %v4681
    %5302 = vmatpush.bf16.msra.mxu0 %v4677
    %5303 = vmatpush.bf16.msra.mxu0 %v4673
    %5304 = vmatmul.bf16.gmra.mxu0 %v3474
    %v5305 = vpop.f32.mrf.mxu0
    %v5306 = vadd.f32 %v5293, %v5305
    %v5307 = vpop.f32.mrf.mxu0
    %5308 = vdwg.mxu0
    %5309 = vmatpush.bf16.msra.mxu0 %v4733
    %5310 = vmatpush.bf16.msra.mxu0 %v4729
    %5311 = vmatpush.bf16.msra.mxu0 %v4725
    %5312 = vmatpush.bf16.msra.mxu0 %v4721
    %5313 = vmatpush.bf16.msra.mxu0 %v4717
    %5314 = vmatpush.bf16.msra.mxu0 %v4713
    %5315 = vmatpush.bf16.msra.mxu0 %v4709
    %5316 = vmatpush.bf16.msra.mxu0 %v4705
    %5317 = vmatmul.bf16.gmra.mxu0 %v3475
    %v5318 = vpop.f32.mrf.mxu0
    %v5319 = vadd.f32 %v5306, %v5318
    %v5320 = vpop.f32.mrf.mxu0
    %5321 = vdwg.mxu0
    %5322 = vmatpush.bf16.msra.mxu0 %v4765
    %5323 = vmatpush.bf16.msra.mxu0 %v4761
    %5324 = vmatpush.bf16.msra.mxu0 %v4757
    %5325 = vmatpush.bf16.msra.mxu0 %v4753
    %5326 = vmatpush.bf16.msra.mxu0 %v4749
    %5327 = vmatpush.bf16.msra.mxu0 %v4745
    %5328 = vmatpush.bf16.msra.mxu0 %v4741
    %5329 = vmatpush.bf16.msra.mxu0 %v4737
    %5330 = vmatmul.bf16.gmra.mxu0 %v3476
    %v5331 = vpop.f32.mrf.mxu0
    %v5332 = vadd.f32 %v5319, %v5331
    %v5333 = vpop.f32.mrf.mxu0
    %5334 = vdwg.mxu0
    %5335 = vmatpush.bf16.msra.mxu0 %v4542
    %5336 = vmatpush.bf16.msra.mxu0 %v4538
    %5337 = vmatpush.bf16.msra.mxu0 %v4534
    %5338 = vmatpush.bf16.msra.mxu0 %v4530
    %5339 = vmatpush.bf16.msra.mxu0 %v4526
    %5340 = vmatpush.bf16.msra.mxu0 %v4522
    %5341 = vmatpush.bf16.msra.mxu0 %v4518
    %5342 = vmatpush.bf16.msra.mxu0 %v4514
    %5343 = vmatmul.bf16.gmra.mxu0 %v3469
    %v5344 = vpop.f32.mrf.mxu0
    %v5345 = vadd.f32 %v3738, %v5344
    %v5346 = vpop.f32.mrf.mxu0
    %5347 = vdwg.mxu0
    %5348 = vmatpush.bf16.msra.mxu0 %v4574
    %5349 = vmatpush.bf16.msra.mxu0 %v4570
    %5350 = vmatpush.bf16.msra.mxu0 %v4566
    %5351 = vmatpush.bf16.msra.mxu0 %v4562
    %5352 = vmatpush.bf16.msra.mxu0 %v4558
    %5353 = vmatpush.bf16.msra.mxu0 %v4554
    %5354 = vmatpush.bf16.msra.mxu0 %v4550
    %5355 = vmatpush.bf16.msra.mxu0 %v4546
    %5356 = vmatmul.bf16.gmra.mxu0 %v3470
    %v5357 = vpop.f32.mrf.mxu0
    %v5358 = vadd.f32 %v5345, %v5357
    %v5359 = vpop.f32.mrf.mxu0
    %5360 = vdwg.mxu0
    %5361 = vmatpush.bf16.msra.mxu0 %v4606
    %5362 = vmatpush.bf16.msra.mxu0 %v4602
    %5363 = vmatpush.bf16.msra.mxu0 %v4598
    %5364 = vmatpush.bf16.msra.mxu0 %v4594
    %5365 = vmatpush.bf16.msra.mxu0 %v4590
    %5366 = vmatpush.bf16.msra.mxu0 %v4586
    %5367 = vmatpush.bf16.msra.mxu0 %v4582
    %5368 = vmatpush.bf16.msra.mxu0 %v4578
    %5369 = vmatmul.bf16.gmra.mxu0 %v3471
    %v5370 = vpop.f32.mrf.mxu0
    %v5371 = vadd.f32 %v5358, %v5370
    %v5372 = vpop.f32.mrf.mxu0
    %5373 = vdwg.mxu0
    %5374 = vmatpush.bf16.msra.mxu0 %v4638
    %5375 = vmatpush.bf16.msra.mxu0 %v4634
    %5376 = vmatpush.bf16.msra.mxu0 %v4630
    %5377 = vmatpush.bf16.msra.mxu0 %v4626
    %5378 = vmatpush.bf16.msra.mxu0 %v4622
    %5379 = vmatpush.bf16.msra.mxu0 %v4618
    %5380 = vmatpush.bf16.msra.mxu0 %v4614
    %5381 = vmatpush.bf16.msra.mxu0 %v4610
    %5382 = vmatmul.bf16.gmra.mxu0 %v3472
    %v5383 = vpop.f32.mrf.mxu0
    %v5384 = vadd.f32 %v5371, %v5383
    %v5385 = vpop.f32.mrf.mxu0
    %5386 = vdwg.mxu0
    %5387 = vmatpush.bf16.msra.mxu0 %v4670
    %5388 = vmatpush.bf16.msra.mxu0 %v4666
    %5389 = vmatpush.bf16.msra.mxu0 %v4662
    %5390 = vmatpush.bf16.msra.mxu0 %v4658
    %5391 = vmatpush.bf16.msra.mxu0 %v4654
    %5392 = vmatpush.bf16.msra.mxu0 %v4650
    %5393 = vmatpush.bf16.msra.mxu0 %v4646
    %5394 = vmatpush.bf16.msra.mxu0 %v4642
    %5395 = vmatmul.bf16.gmra.mxu0 %v3473
    %v5396 = vpop.f32.mrf.mxu0
    %v5397 = vadd.f32 %v5384, %v5396
    %v5398 = vpop.f32.mrf.mxu0
    %5399 = vdwg.mxu0
    %5400 = vmatpush.bf16.msra.mxu0 %v4702
    %5401 = vmatpush.bf16.msra.mxu0 %v4698
    %5402 = vmatpush.bf16.msra.mxu0 %v4694
    %5403 = vmatpush.bf16.msra.mxu0 %v4690
    %5404 = vmatpush.bf16.msra.mxu0 %v4686
    %5405 = vmatpush.bf16.msra.mxu0 %v4682
    %5406 = vmatpush.bf16.msra.mxu0 %v4678
    %5407 = vmatpush.bf16.msra.mxu0 %v4674
    %5408 = vmatmul.bf16.gmra.mxu0 %v3474
    %v5409 = vpop.f32.mrf.mxu0
    %v5410 = vadd.f32 %v5397, %v5409
    %v5411 = vpop.f32.mrf.mxu0
    %5412 = vdwg.mxu0
    %5413 = vmatpush.bf16.msra.mxu0 %v4734
    %5414 = vmatpush.bf16.msra.mxu0 %v4730
    %5415 = vmatpush.bf16.msra.mxu0 %v4726
    %5416 = vmatpush.bf16.msra.mxu0 %v4722
    %5417 = vmatpush.bf16.msra.mxu0 %v4718
    %5418 = vmatpush.bf16.msra.mxu0 %v4714
    %5419 = vmatpush.bf16.msra.mxu0 %v4710
    %5420 = vmatpush.bf16.msra.mxu0 %v4706
    %5421 = vmatmul.bf16.gmra.mxu0 %v3475
    %v5422 = vpop.f32.mrf.mxu0
    %v5423 = vadd.f32 %v5410, %v5422
    %v5424 = vpop.f32.mrf.mxu0
    %5425 = vdwg.mxu0
    %5426 = vmatpush.bf16.msra.mxu0 %v4766
    %5427 = vmatpush.bf16.msra.mxu0 %v4762
    %5428 = vmatpush.bf16.msra.mxu0 %v4758
    %5429 = vmatpush.bf16.msra.mxu0 %v4754
    %5430 = vmatpush.bf16.msra.mxu0 %v4750
    %5431 = vmatpush.bf16.msra.mxu0 %v4746
    %5432 = vmatpush.bf16.msra.mxu0 %v4742
    %5433 = vmatpush.bf16.msra.mxu0 %v4738
    %5434 = vmatmul.bf16.gmra.mxu0 %v3476
    %v5435 = vpop.f32.mrf.mxu0
    %v5436 = vadd.f32 %v5423, %v5435
    %v5437 = vpop.f32.mrf.mxu0
    %5438 = vdwg.mxu0
    %v5439 = vmax.f32 %v5124, 0.0
    %v5440 = vmax.f32 %v5228, 0.0
    %v5441 = vmax.f32 %v5332, 0.0
    %v5442 = vmax.f32 %v5436, 0.0
    %v5443 = vpack.c.bf16 %v5439, %v5439
    %v5444 = vpack.c.bf16 %v5440, %v5440
    %v5445 = vpack.c.bf16 %v5441, %v5441
    %v5446 = vpack.c.bf16 %v5442, %v5442
    %v5447 = vld [vmem:[#allocation8] sm:$0xff]
    %v5448 = vld [vmem:[#allocation8 + $0x8] sm:$0xff]
    %v5449 = vld [vmem:[#allocation8 + $0x10] sm:$0xff]
    %v5450 = vld [vmem:[#allocation8 + $0x18] sm:$0xff]
    %v5451 = vld [vmem:[#allocation8 + $0x20] sm:$0xff]
    %v5452 = vld [vmem:[#allocation8 + $0x28] sm:$0xff]
    %v5453 = vld [vmem:[#allocation8 + $0x30] sm:$0xff]
    %v5454 = vld [vmem:[#allocation8 + $0x38] sm:$0xff]
    %v5455 = vld [vmem:[#allocation8 + $0x40] sm:$0xff]
    %v5456 = vld [vmem:[#allocation8 + $0x48] sm:$0xff]
    %v5457 = vld [vmem:[#allocation8 + $0x50] sm:$0xff]
    %v5458 = vld [vmem:[#allocation8 + $0x58] sm:$0xff]
    %v5459 = vld [vmem:[#allocation8 + $0x60] sm:$0xff]
    %v5460 = vld [vmem:[#allocation8 + $0x68] sm:$0xff]
    %v5461 = vld [vmem:[#allocation8 + $0x70] sm:$0xff]
    %v5462 = vld [vmem:[#allocation8 + $0x78] sm:$0xff]
    %v5463 = vld [vmem:[#allocation8 + $0x80] sm:$0xff]
    %v5464 = vld [vmem:[#allocation8 + $0x88] sm:$0xff]
    %v5465 = vld [vmem:[#allocation8 + $0x90] sm:$0xff]
    %v5466 = vld [vmem:[#allocation8 + $0x98] sm:$0xff]
    %v5467 = vld [vmem:[#allocation8 + $0xa0] sm:$0xff]
    %v5468 = vld [vmem:[#allocation8 + $0xa8] sm:$0xff]
    %v5469 = vld [vmem:[#allocation8 + $0xb0] sm:$0xff]
    %v5470 = vld [vmem:[#allocation8 + $0xb8] sm:$0xff]
    %v5471 = vld [vmem:[#allocation8 + $0xc0] sm:$0xff]
    %v5472 = vld [vmem:[#allocation8 + $0xc8] sm:$0xff]
    %v5473 = vld [vmem:[#allocation8 + $0xd0] sm:$0xff]
    %v5474 = vld [vmem:[#allocation8 + $0xd8] sm:$0xff]
    %v5475 = vld [vmem:[#allocation8 + $0xe0] sm:$0xff]
    %v5476 = vld [vmem:[#allocation8 + $0xe8] sm:$0xff]
    %v5477 = vld [vmem:[#allocation8 + $0xf0] sm:$0xff]
    %v5478 = vld [vmem:[#allocation8 + $0xf8] sm:$0xff]
    %v5479 = vld [vmem:[#allocation8 + $0x100] sm:$0xff]
    %v5480 = vld [vmem:[#allocation8 + $0x108] sm:$0xff]
    %v5481 = vld [vmem:[#allocation8 + $0x110] sm:$0xff]
    %v5482 = vld [vmem:[#allocation8 + $0x118] sm:$0xff]
    %v5483 = vld [vmem:[#allocation8 + $0x120] sm:$0xff]
    %v5484 = vld [vmem:[#allocation8 + $0x128] sm:$0xff]
    %v5485 = vld [vmem:[#allocation8 + $0x130] sm:$0xff]
    %v5486 = vld [vmem:[#allocation8 + $0x138] sm:$0xff]
    %v5487 = vld [vmem:[#allocation8 + $0x140] sm:$0xff]
    %v5488 = vld [vmem:[#allocation8 + $0x148] sm:$0xff]
    %v5489 = vld [vmem:[#allocation8 + $0x150] sm:$0xff]
    %v5490 = vld [vmem:[#allocation8 + $0x158] sm:$0xff]
    %v5491 = vld [vmem:[#allocation8 + $0x160] sm:$0xff]
    %v5492 = vld [vmem:[#allocation8 + $0x168] sm:$0xff]
    %v5493 = vld [vmem:[#allocation8 + $0x170] sm:$0xff]
    %v5494 = vld [vmem:[#allocation8 + $0x178] sm:$0xff]
    %v5495 = vld [vmem:[#allocation8 + $0x180] sm:$0xff]
    %v5496 = vld [vmem:[#allocation8 + $0x188] sm:$0xff]
    %v5497 = vld [vmem:[#allocation8 + $0x190] sm:$0xff]
    %v5498 = vld [vmem:[#allocation8 + $0x198] sm:$0xff]
    %v5499 = vld [vmem:[#allocation8 + $0x1a0] sm:$0xff]
    %v5500 = vld [vmem:[#allocation8 + $0x1a8] sm:$0xff]
    %v5501 = vld [vmem:[#allocation8 + $0x1b0] sm:$0xff]
    %v5502 = vld [vmem:[#allocation8 + $0x1b8] sm:$0xff]
    %v5503 = vld [vmem:[#allocation8 + $0x1c0] sm:$0xff]
    %v5504 = vld [vmem:[#allocation8 + $0x1c8] sm:$0xff]
    %v5505 = vld [vmem:[#allocation8 + $0x1d0] sm:$0xff]
    %v5506 = vld [vmem:[#allocation8 + $0x1d8] sm:$0xff]
    %v5507 = vld [vmem:[#allocation8 + $0x1e0] sm:$0xff]
    %v5508 = vld [vmem:[#allocation8 + $0x1e8] sm:$0xff]
    %v5509 = vld [vmem:[#allocation8 + $0x1f0] sm:$0xff]
    %v5510 = vld [vmem:[#allocation8 + $0x1f8] sm:$0xff]
    %v5511 = vld [vmem:[%s11] sm:$0x3]
    %v5513 = vperm.slane %v5511, 0
    %v5514 = vperm.slane %v5511, 1
    %v5581 = vunpack.c.l.b16 %v5447
    %v5582 = vunpack.c.h.b16 %v5447
    %v5583 = vunpack.c.l.b16 %v5448
    %v5584 = vunpack.c.h.b16 %v5448
    %v5585 = vunpack.c.l.b16 %v5449
    %v5586 = vunpack.c.h.b16 %v5449
    %v5587 = vunpack.c.l.b16 %v5450
    %v5588 = vunpack.c.h.b16 %v5450
    %v5589 = vunpack.c.l.b16 %v5451
    %v5590 = vunpack.c.h.b16 %v5451
    %v5591 = vunpack.c.l.b16 %v5452
    %v5592 = vunpack.c.h.b16 %v5452
    %v5593 = vunpack.c.l.b16 %v5453
    %v5594 = vunpack.c.h.b16 %v5453
    %v5595 = vunpack.c.l.b16 %v5454
    %v5596 = vunpack.c.h.b16 %v5454
    %v5597 = vunpack.c.l.b16 %v5455
    %v5598 = vunpack.c.h.b16 %v5455
    %v5599 = vunpack.c.l.b16 %v5456
    %v5600 = vunpack.c.h.b16 %v5456
    %v5601 = vunpack.c.l.b16 %v5457
    %v5602 = vunpack.c.h.b16 %v5457
    %v5603 = vunpack.c.l.b16 %v5458
    %v5604 = vunpack.c.h.b16 %v5458
    %v5605 = vunpack.c.l.b16 %v5459
    %v5606 = vunpack.c.h.b16 %v5459
    %v5607 = vunpack.c.l.b16 %v5460
    %v5608 = vunpack.c.h.b16 %v5460
    %v5609 = vunpack.c.l.b16 %v5461
    %v5610 = vunpack.c.h.b16 %v5461
    %v5611 = vunpack.c.l.b16 %v5462
    %v5612 = vunpack.c.h.b16 %v5462
    %v5613 = vunpack.c.l.b16 %v5463
    %v5614 = vunpack.c.h.b16 %v5463
    %v5615 = vunpack.c.l.b16 %v5464
    %v5616 = vunpack.c.h.b16 %v5464
    %v5617 = vunpack.c.l.b16 %v5465
    %v5618 = vunpack.c.h.b16 %v5465
    %v5619 = vunpack.c.l.b16 %v5466
    %v5620 = vunpack.c.h.b16 %v5466
    %v5621 = vunpack.c.l.b16 %v5467
    %v5622 = vunpack.c.h.b16 %v5467
    %v5623 = vunpack.c.l.b16 %v5468
    %v5624 = vunpack.c.h.b16 %v5468
    %v5625 = vunpack.c.l.b16 %v5469
    %v5626 = vunpack.c.h.b16 %v5469
    %v5627 = vunpack.c.l.b16 %v5470
    %v5628 = vunpack.c.h.b16 %v5470
    %v5629 = vunpack.c.l.b16 %v5471
    %v5630 = vunpack.c.h.b16 %v5471
    %v5631 = vunpack.c.l.b16 %v5472
    %v5632 = vunpack.c.h.b16 %v5472
    %v5633 = vunpack.c.l.b16 %v5473
    %v5634 = vunpack.c.h.b16 %v5473
    %v5635 = vunpack.c.l.b16 %v5474
    %v5636 = vunpack.c.h.b16 %v5474
    %v5637 = vunpack.c.l.b16 %v5475
    %v5638 = vunpack.c.h.b16 %v5475
    %v5639 = vunpack.c.l.b16 %v5476
    %v5640 = vunpack.c.h.b16 %v5476
    %v5641 = vunpack.c.l.b16 %v5477
    %v5642 = vunpack.c.h.b16 %v5477
    %v5643 = vunpack.c.l.b16 %v5478
    %v5644 = vunpack.c.h.b16 %v5478
    %v5645 = vunpack.c.l.b16 %v5479
    %v5646 = vunpack.c.h.b16 %v5479
    %v5647 = vunpack.c.l.b16 %v5480
    %v5648 = vunpack.c.h.b16 %v5480
    %v5649 = vunpack.c.l.b16 %v5481
    %v5650 = vunpack.c.h.b16 %v5481
    %v5651 = vunpack.c.l.b16 %v5482
    %v5652 = vunpack.c.h.b16 %v5482
    %v5653 = vunpack.c.l.b16 %v5483
    %v5654 = vunpack.c.h.b16 %v5483
    %v5655 = vunpack.c.l.b16 %v5484
    %v5656 = vunpack.c.h.b16 %v5484
    %v5657 = vunpack.c.l.b16 %v5485
    %v5658 = vunpack.c.h.b16 %v5485
    %v5659 = vunpack.c.l.b16 %v5486
    %v5660 = vunpack.c.h.b16 %v5486
    %v5661 = vunpack.c.l.b16 %v5487
    %v5662 = vunpack.c.h.b16 %v5487
    %v5663 = vunpack.c.l.b16 %v5488
    %v5664 = vunpack.c.h.b16 %v5488
    %v5665 = vunpack.c.l.b16 %v5489
    %v5666 = vunpack.c.h.b16 %v5489
    %v5667 = vunpack.c.l.b16 %v5490
    %v5668 = vunpack.c.h.b16 %v5490
    %v5669 = vunpack.c.l.b16 %v5491
    %v5670 = vunpack.c.h.b16 %v5491
    %v5671 = vunpack.c.l.b16 %v5492
    %v5672 = vunpack.c.h.b16 %v5492
    %v5673 = vunpack.c.l.b16 %v5493
    %v5674 = vunpack.c.h.b16 %v5493
    %v5675 = vunpack.c.l.b16 %v5494
    %v5676 = vunpack.c.h.b16 %v5494
    %v5677 = vunpack.c.l.b16 %v5495
    %v5678 = vunpack.c.h.b16 %v5495
    %v5679 = vunpack.c.l.b16 %v5496
    %v5680 = vunpack.c.h.b16 %v5496
    %v5681 = vunpack.c.l.b16 %v5497
    %v5682 = vunpack.c.h.b16 %v5497
    %v5683 = vunpack.c.l.b16 %v5498
    %v5684 = vunpack.c.h.b16 %v5498
    %v5685 = vunpack.c.l.b16 %v5499
    %v5686 = vunpack.c.h.b16 %v5499
    %v5687 = vunpack.c.l.b16 %v5500
    %v5688 = vunpack.c.h.b16 %v5500
    %v5689 = vunpack.c.l.b16 %v5501
    %v5690 = vunpack.c.h.b16 %v5501
    %v5691 = vunpack.c.l.b16 %v5502
    %v5692 = vunpack.c.h.b16 %v5502
    %v5693 = vunpack.c.l.b16 %v5503
    %v5694 = vunpack.c.h.b16 %v5503
    %v5695 = vunpack.c.l.b16 %v5504
    %v5696 = vunpack.c.h.b16 %v5504
    %v5697 = vunpack.c.l.b16 %v5505
    %v5698 = vunpack.c.h.b16 %v5505
    %v5699 = vunpack.c.l.b16 %v5506
    %v5700 = vunpack.c.h.b16 %v5506
    %v5701 = vunpack.c.l.b16 %v5507
    %v5702 = vunpack.c.h.b16 %v5507
    %v5703 = vunpack.c.l.b16 %v5508
    %v5704 = vunpack.c.h.b16 %v5508
    %v5705 = vunpack.c.l.b16 %v5509
    %v5706 = vunpack.c.h.b16 %v5509
    %v5707 = vunpack.c.l.b16 %v5510
    %v5708 = vunpack.c.h.b16 %v5510
    %v5709 = vpack.c.b16 %v5583, %v5581
    %v5710 = vpack.c.b16 %v5584, %v5582
    %v5711 = vpack.c.b16 %v5587, %v5585
    %v5712 = vpack.c.b16 %v5588, %v5586
    %v5713 = vpack.c.b16 %v5591, %v5589
    %v5714 = vpack.c.b16 %v5592, %v5590
    %v5715 = vpack.c.b16 %v5595, %v5593
    %v5716 = vpack.c.b16 %v5596, %v5594
    %v5717 = vpack.c.b16 %v5599, %v5597
    %v5718 = vpack.c.b16 %v5600, %v5598
    %v5719 = vpack.c.b16 %v5603, %v5601
    %v5720 = vpack.c.b16 %v5604, %v5602
    %v5721 = vpack.c.b16 %v5607, %v5605
    %v5722 = vpack.c.b16 %v5608, %v5606
    %v5723 = vpack.c.b16 %v5611, %v5609
    %v5724 = vpack.c.b16 %v5612, %v5610
    %v5725 = vpack.c.b16 %v5615, %v5613
    %v5726 = vpack.c.b16 %v5616, %v5614
    %v5727 = vpack.c.b16 %v5619, %v5617
    %v5728 = vpack.c.b16 %v5620, %v5618
    %v5729 = vpack.c.b16 %v5623, %v5621
    %v5730 = vpack.c.b16 %v5624, %v5622
    %v5731 = vpack.c.b16 %v5627, %v5625
    %v5732 = vpack.c.b16 %v5628, %v5626
    %v5733 = vpack.c.b16 %v5631, %v5629
    %v5734 = vpack.c.b16 %v5632, %v5630
    %v5735 = vpack.c.b16 %v5635, %v5633
    %v5736 = vpack.c.b16 %v5636, %v5634
    %v5737 = vpack.c.b16 %v5639, %v5637
    %v5738 = vpack.c.b16 %v5640, %v5638
    %v5739 = vpack.c.b16 %v5643, %v5641
    %v5740 = vpack.c.b16 %v5644, %v5642
    %v5741 = vpack.c.b16 %v5647, %v5645
    %v5742 = vpack.c.b16 %v5648, %v5646
    %v5743 = vpack.c.b16 %v5651, %v5649
    %v5744 = vpack.c.b16 %v5652, %v5650
    %v5745 = vpack.c.b16 %v5655, %v5653
    %v5746 = vpack.c.b16 %v5656, %v5654
    %v5747 = vpack.c.b16 %v5659, %v5657
    %v5748 = vpack.c.b16 %v5660, %v5658
    %v5749 = vpack.c.b16 %v5663, %v5661
    %v5750 = vpack.c.b16 %v5664, %v5662
    %v5751 = vpack.c.b16 %v5667, %v5665
    %v5752 = vpack.c.b16 %v5668, %v5666
    %v5753 = vpack.c.b16 %v5671, %v5669
    %v5754 = vpack.c.b16 %v5672, %v5670
    %v5755 = vpack.c.b16 %v5675, %v5673
    %v5756 = vpack.c.b16 %v5676, %v5674
    %v5757 = vpack.c.b16 %v5679, %v5677
    %v5758 = vpack.c.b16 %v5680, %v5678
    %v5759 = vpack.c.b16 %v5683, %v5681
    %v5760 = vpack.c.b16 %v5684, %v5682
    %v5761 = vpack.c.b16 %v5687, %v5685
    %v5762 = vpack.c.b16 %v5688, %v5686
    %v5763 = vpack.c.b16 %v5691, %v5689
    %v5764 = vpack.c.b16 %v5692, %v5690
    %v5765 = vpack.c.b16 %v5695, %v5693
    %v5766 = vpack.c.b16 %v5696, %v5694
    %v5767 = vpack.c.b16 %v5699, %v5697
    %v5768 = vpack.c.b16 %v5700, %v5698
    %v5769 = vpack.c.b16 %v5703, %v5701
    %v5770 = vpack.c.b16 %v5704, %v5702
    %v5771 = vpack.c.b16 %v5707, %v5705
    %v5772 = vpack.c.b16 %v5708, %v5706
    %5837 = vmatpush.bf16.msra.mxu0 %v5723
    %5838 = vmatpush.bf16.msra.mxu0 %v5721
    %5839 = vmatpush.bf16.msra.mxu0 %v5719
    %5840 = vmatpush.bf16.msra.mxu0 %v5717
    %5841 = vmatpush.bf16.msra.mxu0 %v5715
    %5842 = vmatpush.bf16.msra.mxu0 %v5713
    %5843 = vmatpush.bf16.msra.mxu0 %v5711
    %5844 = vmatpush.bf16.msra.mxu0 %v5709
    %5845 = vmatmul.bf16.gmra.mxu0 %v5443
    %v5846 = vpop.f32.mrf.mxu0
    %v5847 = vadd.f32 %v5513, %v5846
    %v5848 = vpop.f32.mrf.mxu0
    %5849 = vdwg.mxu0
    %5850 = vmatpush.bf16.msra.mxu0 %v5739
    %5851 = vmatpush.bf16.msra.mxu0 %v5737
    %5852 = vmatpush.bf16.msra.mxu0 %v5735
    %5853 = vmatpush.bf16.msra.mxu0 %v5733
    %5854 = vmatpush.bf16.msra.mxu0 %v5731
    %5855 = vmatpush.bf16.msra.mxu0 %v5729
    %5856 = vmatpush.bf16.msra.mxu0 %v5727
    %5857 = vmatpush.bf16.msra.mxu0 %v5725
    %5858 = vmatmul.bf16.gmra.mxu0 %v5444
    %v5859 = vpop.f32.mrf.mxu0
    %v5860 = vadd.f32 %v5847, %v5859
    %v5861 = vpop.f32.mrf.mxu0
    %5862 = vdwg.mxu0
    %5863 = vmatpush.bf16.msra.mxu0 %v5755
    %5864 = vmatpush.bf16.msra.mxu0 %v5753
    %5865 = vmatpush.bf16.msra.mxu0 %v5751
    %5866 = vmatpush.bf16.msra.mxu0 %v5749
    %5867 = vmatpush.bf16.msra.mxu0 %v5747
    %5868 = vmatpush.bf16.msra.mxu0 %v5745
    %5869 = vmatpush.bf16.msra.mxu0 %v5743
    %5870 = vmatpush.bf16.msra.mxu0 %v5741
    %5871 = vmatmul.bf16.gmra.mxu0 %v5445
    %v5872 = vpop.f32.mrf.mxu0
    %v5873 = vadd.f32 %v5860, %v5872
    %v5874 = vpop.f32.mrf.mxu0
    %5875 = vdwg.mxu0
    %5876 = vmatpush.bf16.msra.mxu0 %v5771
    %5877 = vmatpush.bf16.msra.mxu0 %v5769
    %5878 = vmatpush.bf16.msra.mxu0 %v5767
    %5879 = vmatpush.bf16.msra.mxu0 %v5765
    %5880 = vmatpush.bf16.msra.mxu0 %v5763
    %5881 = vmatpush.bf16.msra.mxu0 %v5761
    %5882 = vmatpush.bf16.msra.mxu0 %v5759
    %5883 = vmatpush.bf16.msra.mxu0 %v5757
    %5884 = vmatmul.bf16.gmra.mxu0 %v5446
    %v5885 = vpop.f32.mrf.mxu0
    %v5886 = vadd.f32 %v5873, %v5885
    %v5887 = vpop.f32.mrf.mxu0
    %5888 = vdwg.mxu0
    %5889 = vmatpush.bf16.msra.mxu0 %v5724
    %5890 = vmatpush.bf16.msra.mxu0 %v5722
    %5891 = vmatpush.bf16.msra.mxu0 %v5720
    %5892 = vmatpush.bf16.msra.mxu0 %v5718
    %5893 = vmatpush.bf16.msra.mxu0 %v5716
    %5894 = vmatpush.bf16.msra.mxu0 %v5714
    %5895 = vmatpush.bf16.msra.mxu0 %v5712
    %5896 = vmatpush.bf16.msra.mxu0 %v5710
    %5897 = vmatmul.bf16.gmra.mxu0 %v5443
    %v5898 = vpop.f32.mrf.mxu0
    %v5899 = vadd.f32 %v5514, %v5898
    %v5900 = vpop.f32.mrf.mxu0
    %5901 = vdwg.mxu0
    %5902 = vmatpush.bf16.msra.mxu0 %v5740
    %5903 = vmatpush.bf16.msra.mxu0 %v5738
    %5904 = vmatpush.bf16.msra.mxu0 %v5736
    %5905 = vmatpush.bf16.msra.mxu0 %v5734
    %5906 = vmatpush.bf16.msra.mxu0 %v5732
    %5907 = vmatpush.bf16.msra.mxu0 %v5730
    %5908 = vmatpush.bf16.msra.mxu0 %v5728
    %5909 = vmatpush.bf16.msra.mxu0 %v5726
    %5910 = vmatmul.bf16.gmra.mxu0 %v5444
    %v5911 = vpop.f32.mrf.mxu0
    %v5912 = vadd.f32 %v5899, %v5911
    %v5913 = vpop.f32.mrf.mxu0
    %5914 = vdwg.mxu0
    %5915 = vmatpush.bf16.msra.mxu0 %v5756
    %5916 = vmatpush.bf16.msra.mxu0 %v5754
    %5917 = vmatpush.bf16.msra.mxu0 %v5752
    %5918 = vmatpush.bf16.msra.mxu0 %v5750
    %5919 = vmatpush.bf16.msra.mxu0 %v5748
    %5920 = vmatpush.bf16.msra.mxu0 %v5746
    %5921 = vmatpush.bf16.msra.mxu0 %v5744
    %5922 = vmatpush.bf16.msra.mxu0 %v5742
    %5923 = vmatmul.bf16.gmra.mxu0 %v5445
    %v5924 = vpop.f32.mrf.mxu0
    %v5925 = vadd.f32 %v5912, %v5924
    %v5926 = vpop.f32.mrf.mxu0
    %5927 = vdwg.mxu0
    %5928 = vmatpush.bf16.msra.mxu0 %v5772
    %5929 = vmatpush.bf16.msra.mxu0 %v5770
    %5930 = vmatpush.bf16.msra.mxu0 %v5768
    %5931 = vmatpush.bf16.msra.mxu0 %v5766
    %5932 = vmatpush.bf16.msra.mxu0 %v5764
    %5933 = vmatpush.bf16.msra.mxu0 %v5762
    %5934 = vmatpush.bf16.msra.mxu0 %v5760
    %5935 = vmatpush.bf16.msra.mxu0 %v5758
    %5936 = vmatmul.bf16.gmra.mxu0 %v5446
    %v5937 = vpop.f32.mrf.mxu0
    %v5938 = vadd.f32 %v5925, %v5937
    %v5939 = vpop.f32.mrf.mxu0
    %5940 = vdwg.mxu0
    %v5941 = vmax.f32 %v5886, 0.0
    %v5942 = vmax.f32 %v5938, 0.0
    %v5943 = vpack.c.bf16 %v5941, %v5941
    %v5944 = vpack.c.bf16 %v5942, %v5942
    %v5945 = vld [vmem:[%s12] sm:$0xf]
    %v5946 = vld [vmem:[%s12 + $0x4] sm:$0xf]
    %v5947 = vld [vmem:[%s12 + $0x8] sm:$0xf]
    %v5948 = vld [vmem:[%s12 + $0xc] sm:$0xf]
    %v5949 = vld [vmem:[%s12 + $0x10] sm:$0xf]
    %v5950 = vld [vmem:[%s12 + $0x14] sm:$0xf]
    %v5951 = vld [vmem:[%s12 + $0x18] sm:$0xf]
    %v5952 = vld [vmem:[%s12 + $0x1c] sm:$0xf]
    %v5953 = vld [vmem:[%s12 + $0x20] sm:$0xf]
    %v5954 = vld [vmem:[%s12 + $0x24] sm:$0xf]
    %v5955 = vld [vmem:[%s12 + $0x28] sm:$0xf]
    %v5956 = vld [vmem:[%s12 + $0x2c] sm:$0xf]
    %v5957 = vld [vmem:[%s12 + $0x30] sm:$0xf]
    %v5958 = vld [vmem:[%s12 + $0x34] sm:$0xf]
    %v5959 = vld [vmem:[%s12 + $0x38] sm:$0xf]
    %v5960 = vld [vmem:[%s12 + $0x3c] sm:$0xf]
    %v5961 = vld [vmem:[%s12 + $0x40] sm:$0xf]
    %v5962 = vld [vmem:[%s12 + $0x44] sm:$0xf]
    %v5963 = vld [vmem:[%s12 + $0x48] sm:$0xf]
    %v5964 = vld [vmem:[%s12 + $0x4c] sm:$0xf]
    %v5965 = vld [vmem:[%s12 + $0x50] sm:$0xf]
    %v5966 = vld [vmem:[%s12 + $0x54] sm:$0xf]
    %v5967 = vld [vmem:[%s12 + $0x58] sm:$0xf]
    %v5968 = vld [vmem:[%s12 + $0x5c] sm:$0xf]
    %v5969 = vld [vmem:[%s12 + $0x60] sm:$0xf]
    %v5970 = vld [vmem:[%s12 + $0x64] sm:$0xf]
    %v5971 = vld [vmem:[%s12 + $0x68] sm:$0xf]
    %v5972 = vld [vmem:[%s12 + $0x6c] sm:$0xf]
    %v5973 = vld [vmem:[%s12 + $0x70] sm:$0xf]
    %v5974 = vld [vmem:[%s12 + $0x74] sm:$0xf]
    %v5975 = vld [vmem:[%s12 + $0x78] sm:$0xf]
    %v5976 = vld [vmem:[%s12 + $0x7c] sm:$0xf]
    %v5977 = vld [vmem:[%s13] sm:$0x1]
    %v5979 = vperm.slane %v5977, 0
    %v6013 = vunpack.c.l.b16 %v5945
    %v6014 = vunpack.c.l.b16 %v5946
    %v6015 = vunpack.c.l.b16 %v5947
    %v6016 = vunpack.c.l.b16 %v5948
    %v6017 = vunpack.c.l.b16 %v5949
    %v6018 = vunpack.c.l.b16 %v5950
    %v6019 = vunpack.c.l.b16 %v5951
    %v6020 = vunpack.c.l.b16 %v5952
    %v6021 = vunpack.c.l.b16 %v5953
    %v6022 = vunpack.c.l.b16 %v5954
    %v6023 = vunpack.c.l.b16 %v5955
    %v6024 = vunpack.c.l.b16 %v5956
    %v6025 = vunpack.c.l.b16 %v5957
    %v6026 = vunpack.c.l.b16 %v5958
    %v6027 = vunpack.c.l.b16 %v5959
    %v6028 = vunpack.c.l.b16 %v5960
    %v6029 = vunpack.c.l.b16 %v5961
    %v6030 = vunpack.c.l.b16 %v5962
    %v6031 = vunpack.c.l.b16 %v5963
    %v6032 = vunpack.c.l.b16 %v5964
    %v6033 = vunpack.c.l.b16 %v5965
    %v6034 = vunpack.c.l.b16 %v5966
    %v6035 = vunpack.c.l.b16 %v5967
    %v6036 = vunpack.c.l.b16 %v5968
    %v6037 = vunpack.c.l.b16 %v5969
    %v6038 = vunpack.c.l.b16 %v5970
    %v6039 = vunpack.c.l.b16 %v5971
    %v6040 = vunpack.c.l.b16 %v5972
    %v6041 = vunpack.c.l.b16 %v5973
    %v6042 = vunpack.c.l.b16 %v5974
    %v6043 = vunpack.c.l.b16 %v5975
    %v6044 = vunpack.c.l.b16 %v5976
    %v6045 = vpack.c.b16 %v6014, %v6013
    %v6046 = vpack.c.b16 %v6016, %v6015
    %v6047 = vpack.c.b16 %v6018, %v6017
    %v6048 = vpack.c.b16 %v6020, %v6019
    %v6049 = vpack.c.b16 %v6022, %v6021
    %v6050 = vpack.c.b16 %v6024, %v6023
    %v6051 = vpack.c.b16 %v6026, %v6025
    %v6052 = vpack.c.b16 %v6028, %v6027
    %v6053 = vpack.c.b16 %v6030, %v6029
    %v6054 = vpack.c.b16 %v6032, %v6031
    %v6055 = vpack.c.b16 %v6034, %v6033
    %v6056 = vpack.c.b16 %v6036, %v6035
    %v6057 = vpack.c.b16 %v6038, %v6037
    %v6058 = vpack.c.b16 %v6040, %v6039
    %v6059 = vpack.c.b16 %v6042, %v6041
    %v6060 = vpack.c.b16 %v6044, %v6043
    %6077 = vmatpush.bf16.msra.mxu0 %v6052
    %6078 = vmatpush.bf16.msra.mxu0 %v6051
    %6079 = vmatpush.bf16.msra.mxu0 %v6050
    %6080 = vmatpush.bf16.msra.mxu0 %v6049
    %6081 = vmatpush.bf16.msra.mxu0 %v6048
    %6082 = vmatpush.bf16.msra.mxu0 %v6047
    %6083 = vmatpush.bf16.msra.mxu0 %v6046
    %6084 = vmatpush.bf16.msra.mxu0 %v6045
    %6085 = vmatmul.bf16.gmra.mxu0 %v5943
    %v6086 = vpop.f32.mrf.mxu0
    %v6087 = vadd.f32 %v5979, %v6086
    %v6088 = vpop.f32.mrf.mxu0
    %6089 = vdwg.mxu0
    %6090 = vmatpush.bf16.msra.mxu0 %v6060
    %6091 = vmatpush.bf16.msra.mxu0 %v6059
    %6092 = vmatpush.bf16.msra.mxu0 %v6058
    %6093 = vmatpush.bf16.msra.mxu0 %v6057
    %6094 = vmatpush.bf16.msra.mxu0 %v6056
    %6095 = vmatpush.bf16.msra.mxu0 %v6055
    %6096 = vmatpush.bf16.msra.mxu0 %v6054
    %6097 = vmatpush.bf16.msra.mxu0 %v6053
    %6098 = vmatmul.bf16.gmra.mxu0 %v5944
    %v6099 = vpop.f32.mrf.mxu0
    %v6100 = vadd.f32 %v6087, %v6099
    %v6101 = vpop.f32.mrf.mxu0
    %6102 = vdwg.mxu0
    %6103 = vst [vmem:[#allocation16] sm:$0x3] %v6100
    %v6104 = vpack.c.bf16 %v2851, %v2851
    %v6105 = vld [vmem:[#allocation10] sm:$0xff]
    %v6106 = vld [vmem:[#allocation10 + $0x8] sm:$0xff]
    %v6107 = vld [vmem:[#allocation10 + $0x10] sm:$0xff]
    %v6108 = vld [vmem:[#allocation10 + $0x18] sm:$0xff]
    %v6109 = vld [vmem:[#allocation10 + $0x20] sm:$0xff]
    %v6110 = vld [vmem:[#allocation10 + $0x28] sm:$0xff]
    %v6111 = vld [vmem:[#allocation10 + $0x30] sm:$0xff]
    %v6112 = vld [vmem:[#allocation10 + $0x38] sm:$0xff]
    %v6113 = vld [vmem:[#allocation10 + $0x40] sm:$0xff]
    %v6114 = vld [vmem:[#allocation10 + $0x48] sm:$0xff]
    %v6115 = vld [vmem:[#allocation10 + $0x50] sm:$0xff]
    %v6116 = vld [vmem:[#allocation10 + $0x58] sm:$0xff]
    %v6117 = vld [vmem:[#allocation10 + $0x60] sm:$0xff]
    %v6118 = vld [vmem:[#allocation10 + $0x68] sm:$0xff]
    %v6119 = vld [vmem:[#allocation10 + $0x70] sm:$0xff]
    %v6120 = vld [vmem:[#allocation10 + $0x78] sm:$0xff]
    %v6121 = vpack.c.bf16 %v6100, %v6100
    %v6122 = vld [vmem:[#allocation11] sm:$0xff]
    %v6123 = vld [vmem:[#allocation11 + $0x8] sm:$0xff]
    %v6124 = vld [vmem:[#allocation11 + $0x10] sm:$0xff]
    %v6125 = vld [vmem:[#allocation11 + $0x18] sm:$0xff]
    %v6126 = vld [vmem:[#allocation11 + $0x20] sm:$0xff]
    %v6127 = vld [vmem:[#allocation11 + $0x28] sm:$0xff]
    %v6128 = vld [vmem:[#allocation11 + $0x30] sm:$0xff]
    %v6129 = vld [vmem:[#allocation11 + $0x38] sm:$0xff]
    %v6130 = vld [vmem:[#allocation11 + $0x40] sm:$0xff]
    %v6131 = vld [vmem:[#allocation11 + $0x48] sm:$0xff]
    %v6132 = vld [vmem:[#allocation11 + $0x50] sm:$0xff]
    %v6133 = vld [vmem:[#allocation11 + $0x58] sm:$0xff]
    %v6134 = vld [vmem:[#allocation11 + $0x60] sm:$0xff]
    %v6135 = vld [vmem:[#allocation11 + $0x68] sm:$0xff]
    %v6136 = vld [vmem:[#allocation11 + $0x70] sm:$0xff]
    %v6137 = vld [vmem:[#allocation11 + $0x78] sm:$0xff]
    %v6154 = vunpack.c.l.b16 %v6122
    %v6155 = vunpack.c.h.b16 %v6122
    %v6156 = vunpack.c.l.b16 %v6123
    %v6157 = vunpack.c.h.b16 %v6123
    %v6158 = vunpack.c.l.b16 %v6124
    %v6159 = vunpack.c.h.b16 %v6124
    %v6160 = vunpack.c.l.b16 %v6125
    %v6161 = vunpack.c.h.b16 %v6125
    %v6162 = vunpack.c.l.b16 %v6126
    %v6163 = vunpack.c.h.b16 %v6126
    %v6164 = vunpack.c.l.b16 %v6127
    %v6165 = vunpack.c.h.b16 %v6127
    %v6166 = vunpack.c.l.b16 %v6128
    %v6167 = vunpack.c.h.b16 %v6128
    %v6168 = vunpack.c.l.b16 %v6129
    %v6169 = vunpack.c.h.b16 %v6129
    %v6170 = vunpack.c.l.b16 %v6130
    %v6171 = vunpack.c.h.b16 %v6130
    %v6172 = vunpack.c.l.b16 %v6131
    %v6173 = vunpack.c.h.b16 %v6131
    %v6174 = vunpack.c.l.b16 %v6132
    %v6175 = vunpack.c.h.b16 %v6132
    %v6176 = vunpack.c.l.b16 %v6133
    %v6177 = vunpack.c.h.b16 %v6133
    %v6178 = vunpack.c.l.b16 %v6134
    %v6179 = vunpack.c.h.b16 %v6134
    %v6180 = vunpack.c.l.b16 %v6135
    %v6181 = vunpack.c.h.b16 %v6135
    %v6182 = vunpack.c.l.b16 %v6136
    %v6183 = vunpack.c.h.b16 %v6136
    %v6184 = vunpack.c.l.b16 %v6137
    %v6185 = vunpack.c.h.b16 %v6137
    %v6186 = vpack.c.b16 %v6156, %v6154
    %v6187 = vpack.c.b16 %v6157, %v6155
    %v6188 = vpack.c.b16 %v6160, %v6158
    %v6189 = vpack.c.b16 %v6161, %v6159
    %v6190 = vpack.c.b16 %v6164, %v6162
    %v6191 = vpack.c.b16 %v6165, %v6163
    %v6192 = vpack.c.b16 %v6168, %v6166
    %v6193 = vpack.c.b16 %v6169, %v6167
    %v6194 = vpack.c.b16 %v6172, %v6170
    %v6195 = vpack.c.b16 %v6173, %v6171
    %v6196 = vpack.c.b16 %v6176, %v6174
    %v6197 = vpack.c.b16 %v6177, %v6175
    %v6198 = vpack.c.b16 %v6180, %v6178
    %v6199 = vpack.c.b16 %v6181, %v6179
    %v6200 = vpack.c.b16 %v6184, %v6182
    %v6201 = vpack.c.b16 %v6185, %v6183
    %6218 = vmatpush.bf16.msra.mxu0 %v6200
    %6219 = vmatpush.bf16.msra.mxu0 %v6198
    %6220 = vmatpush.bf16.msra.mxu0 %v6196
    %6221 = vmatpush.bf16.msra.mxu0 %v6194
    %6222 = vmatpush.bf16.msra.mxu0 %v6192
    %6223 = vmatpush.bf16.msra.mxu0 %v6190
    %6224 = vmatpush.bf16.msra.mxu0 %v6188
    %6225 = vmatpush.bf16.msra.mxu0 %v6186
    %6226 = vmatmul.bf16.gmra.mxu0 %v6121
    %v6227 = vpop.f32.mrf.mxu0
    %v6228 = vadd.f32 0.0, %v6227
    %v6229 = vpop.f32.mrf.mxu0
    %6230 = vdwg.mxu0
    %6231 = vmatpush.bf16.msra.mxu0 %v6201
    %6232 = vmatpush.bf16.msra.mxu0 %v6199
    %6233 = vmatpush.bf16.msra.mxu0 %v6197
    %6234 = vmatpush.bf16.msra.mxu0 %v6195
    %6235 = vmatpush.bf16.msra.mxu0 %v6193
    %6236 = vmatpush.bf16.msra.mxu0 %v6191
    %6237 = vmatpush.bf16.msra.mxu0 %v6189
    %6238 = vmatpush.bf16.msra.mxu0 %v6187
    %6239 = vmatmul.bf16.gmra.mxu0 %v6121
    %v6240 = vpop.f32.mrf.mxu0
    %v6241 = vadd.f32 0.0, %v6240
    %v6242 = vpop.f32.mrf.mxu0
    %6243 = vdwg.mxu0
    %v6260 = vunpack.c.l.b16 %v6105
    %v6261 = vunpack.c.h.b16 %v6105
    %v6262 = vunpack.c.l.b16 %v6106
    %v6263 = vunpack.c.h.b16 %v6106
    %v6264 = vunpack.c.l.b16 %v6107
    %v6265 = vunpack.c.h.b16 %v6107
    %v6266 = vunpack.c.l.b16 %v6108
    %v6267 = vunpack.c.h.b16 %v6108
    %v6268 = vunpack.c.l.b16 %v6109
    %v6269 = vunpack.c.h.b16 %v6109
    %v6270 = vunpack.c.l.b16 %v6110
    %v6271 = vunpack.c.h.b16 %v6110
    %v6272 = vunpack.c.l.b16 %v6111
    %v6273 = vunpack.c.h.b16 %v6111
    %v6274 = vunpack.c.l.b16 %v6112
    %v6275 = vunpack.c.h.b16 %v6112
    %v6276 = vunpack.c.l.b16 %v6113
    %v6277 = vunpack.c.h.b16 %v6113
    %v6278 = vunpack.c.l.b16 %v6114
    %v6279 = vunpack.c.h.b16 %v6114
    %v6280 = vunpack.c.l.b16 %v6115
    %v6281 = vunpack.c.h.b16 %v6115
    %v6282 = vunpack.c.l.b16 %v6116
    %v6283 = vunpack.c.h.b16 %v6116
    %v6284 = vunpack.c.l.b16 %v6117
    %v6285 = vunpack.c.h.b16 %v6117
    %v6286 = vunpack.c.l.b16 %v6118
    %v6287 = vunpack.c.h.b16 %v6118
    %v6288 = vunpack.c.l.b16 %v6119
    %v6289 = vunpack.c.h.b16 %v6119
    %v6290 = vunpack.c.l.b16 %v6120
    %v6291 = vunpack.c.h.b16 %v6120
    %v6292 = vpack.c.b16 %v6262, %v6260
    %v6293 = vpack.c.b16 %v6263, %v6261
    %v6294 = vpack.c.b16 %v6266, %v6264
    %v6295 = vpack.c.b16 %v6267, %v6265
    %v6296 = vpack.c.b16 %v6270, %v6268
    %v6297 = vpack.c.b16 %v6271, %v6269
    %v6298 = vpack.c.b16 %v6274, %v6272
    %v6299 = vpack.c.b16 %v6275, %v6273
    %v6300 = vpack.c.b16 %v6278, %v6276
    %v6301 = vpack.c.b16 %v6279, %v6277
    %v6302 = vpack.c.b16 %v6282, %v6280
    %v6303 = vpack.c.b16 %v6283, %v6281
    %v6304 = vpack.c.b16 %v6286, %v6284
    %v6305 = vpack.c.b16 %v6287, %v6285
    %v6306 = vpack.c.b16 %v6290, %v6288
    %v6307 = vpack.c.b16 %v6291, %v6289
    %6324 = vmatpush.bf16.msra.mxu0 %v6306
    %6325 = vmatpush.bf16.msra.mxu0 %v6304
    %6326 = vmatpush.bf16.msra.mxu0 %v6302
    %6327 = vmatpush.bf16.msra.mxu0 %v6300
    %6328 = vmatpush.bf16.msra.mxu0 %v6298
    %6329 = vmatpush.bf16.msra.mxu0 %v6296
    %6330 = vmatpush.bf16.msra.mxu0 %v6294
    %6331 = vmatpush.bf16.msra.mxu0 %v6292
    %6332 = vmatmul.bf16.gmra.mxu0 %v6104
    %v6333 = vpop.f32.mrf.mxu0
    %v6334 = vadd.f32 %v6228, %v6333
    %v6335 = vpop.f32.mrf.mxu0
    %6336 = vdwg.mxu0
    %6337 = vmatpush.bf16.msra.mxu0 %v6307
    %6338 = vmatpush.bf16.msra.mxu0 %v6305
    %6339 = vmatpush.bf16.msra.mxu0 %v6303
    %6340 = vmatpush.bf16.msra.mxu0 %v6301
    %6341 = vmatpush.bf16.msra.mxu0 %v6299
    %6342 = vmatpush.bf16.msra.mxu0 %v6297
    %6343 = vmatpush.bf16.msra.mxu0 %v6295
    %6344 = vmatpush.bf16.msra.mxu0 %v6293
    %6345 = vmatmul.bf16.gmra.mxu0 %v6104
    %v6346 = vpop.f32.mrf.mxu0
    %v6347 = vadd.f32 %v6241, %v6346
    %v6348 = vpop.f32.mrf.mxu0
    %6349 = vdwg.mxu0
    %v6350 = vld [vmem:[%s16] sm:$0x3]
    %v6352 = vperm.slane %v6350, 0
    %v6353 = vperm.slane %v6350, 1
    %v6356 = vadd.f32 %v6334, %v6352
    %v6357 = vadd.f32 %v6347, %v6353
    %v6358 = vmax.f32 %v6356, 0.0
    %v6359 = vmax.f32 %v6357, 0.0
    %v6360 = vpack.c.bf16 %v6358, %v6358
    %v6361 = vpack.c.bf16 %v6359, %v6359
    %v6362 = vld [vmem:[#allocation13] sm:$0xff]
    %v6363 = vld [vmem:[#allocation13 + $0x8] sm:$0xff]
    %v6364 = vld [vmem:[#allocation13 + $0x10] sm:$0xff]
    %v6365 = vld [vmem:[#allocation13 + $0x18] sm:$0xff]
    %v6366 = vld [vmem:[#allocation13 + $0x20] sm:$0xff]
    %v6367 = vld [vmem:[#allocation13 + $0x28] sm:$0xff]
    %v6368 = vld [vmem:[#allocation13 + $0x30] sm:$0xff]
    %v6369 = vld [vmem:[#allocation13 + $0x38] sm:$0xff]
    %v6370 = vld [vmem:[#allocation13 + $0x40] sm:$0xff]
    %v6371 = vld [vmem:[#allocation13 + $0x48] sm:$0xff]
    %v6372 = vld [vmem:[#allocation13 + $0x50] sm:$0xff]
    %v6373 = vld [vmem:[#allocation13 + $0x58] sm:$0xff]
    %v6374 = vld [vmem:[#allocation13 + $0x60] sm:$0xff]
    %v6375 = vld [vmem:[#allocation13 + $0x68] sm:$0xff]
    %v6376 = vld [vmem:[#allocation13 + $0x70] sm:$0xff]
    %v6377 = vld [vmem:[#allocation13 + $0x78] sm:$0xff]
    %v6378 = vld [vmem:[#allocation13 + $0x80] sm:$0xff]
    %v6379 = vld [vmem:[#allocation13 + $0x88] sm:$0xff]
    %v6380 = vld [vmem:[#allocation13 + $0x90] sm:$0xff]
    %v6381 = vld [vmem:[#allocation13 + $0x98] sm:$0xff]
    %v6382 = vld [vmem:[#allocation13 + $0xa0] sm:$0xff]
    %v6383 = vld [vmem:[#allocation13 + $0xa8] sm:$0xff]
    %v6384 = vld [vmem:[#allocation13 + $0xb0] sm:$0xff]
    %v6385 = vld [vmem:[#allocation13 + $0xb8] sm:$0xff]
    %v6386 = vld [vmem:[#allocation13 + $0xc0] sm:$0xff]
    %v6387 = vld [vmem:[#allocation13 + $0xc8] sm:$0xff]
    %v6388 = vld [vmem:[#allocation13 + $0xd0] sm:$0xff]
    %v6389 = vld [vmem:[#allocation13 + $0xd8] sm:$0xff]
    %v6390 = vld [vmem:[#allocation13 + $0xe0] sm:$0xff]
    %v6391 = vld [vmem:[#allocation13 + $0xe8] sm:$0xff]
    %v6392 = vld [vmem:[#allocation13 + $0xf0] sm:$0xff]
    %v6393 = vld [vmem:[#allocation13 + $0xf8] sm:$0xff]
    %v6394 = vld [vmem:[#allocation13 + $0x100] sm:$0xff]
    %v6395 = vld [vmem:[#allocation13 + $0x108] sm:$0xff]
    %v6396 = vld [vmem:[#allocation13 + $0x110] sm:$0xff]
    %v6397 = vld [vmem:[#allocation13 + $0x118] sm:$0xff]
    %v6398 = vld [vmem:[#allocation13 + $0x120] sm:$0xff]
    %v6399 = vld [vmem:[#allocation13 + $0x128] sm:$0xff]
    %v6400 = vld [vmem:[#allocation13 + $0x130] sm:$0xff]
    %v6401 = vld [vmem:[#allocation13 + $0x138] sm:$0xff]
    %v6402 = vld [vmem:[#allocation13 + $0x140] sm:$0xff]
    %v6403 = vld [vmem:[#allocation13 + $0x148] sm:$0xff]
    %v6404 = vld [vmem:[#allocation13 + $0x150] sm:$0xff]
    %v6405 = vld [vmem:[#allocation13 + $0x158] sm:$0xff]
    %v6406 = vld [vmem:[#allocation13 + $0x160] sm:$0xff]
    %v6407 = vld [vmem:[#allocation13 + $0x168] sm:$0xff]
    %v6408 = vld [vmem:[#allocation13 + $0x170] sm:$0xff]
    %v6409 = vld [vmem:[#allocation13 + $0x178] sm:$0xff]
    %v6410 = vld [vmem:[#allocation13 + $0x180] sm:$0xff]
    %v6411 = vld [vmem:[#allocation13 + $0x188] sm:$0xff]
    %v6412 = vld [vmem:[#allocation13 + $0x190] sm:$0xff]
    %v6413 = vld [vmem:[#allocation13 + $0x198] sm:$0xff]
    %v6414 = vld [vmem:[#allocation13 + $0x1a0] sm:$0xff]
    %v6415 = vld [vmem:[#allocation13 + $0x1a8] sm:$0xff]
    %v6416 = vld [vmem:[#allocation13 + $0x1b0] sm:$0xff]
    %v6417 = vld [vmem:[#allocation13 + $0x1b8] sm:$0xff]
    %v6418 = vld [vmem:[#allocation13 + $0x1c0] sm:$0xff]
    %v6419 = vld [vmem:[#allocation13 + $0x1c8] sm:$0xff]
    %v6420 = vld [vmem:[#allocation13 + $0x1d0] sm:$0xff]
    %v6421 = vld [vmem:[#allocation13 + $0x1d8] sm:$0xff]
    %v6422 = vld [vmem:[#allocation13 + $0x1e0] sm:$0xff]
    %v6423 = vld [vmem:[#allocation13 + $0x1e8] sm:$0xff]
    %v6424 = vld [vmem:[#allocation13 + $0x1f0] sm:$0xff]
    %v6425 = vld [vmem:[#allocation13 + $0x1f8] sm:$0xff]
    %v6426 = vld [vmem:[%s18] sm:$0xf]
    %v6428 = vperm.slane %v6426, 0
    %v6429 = vperm.slane %v6426, 1
    %v6430 = vperm.slane %v6426, 2
    %v6431 = vperm.slane %v6426, 3
    %v6500 = vunpack.c.l.b16 %v6362
    %v6501 = vunpack.c.h.b16 %v6362
    %v6502 = vunpack.c.l.b16 %v6363
    %v6503 = vunpack.c.h.b16 %v6363
    %v6504 = vunpack.c.l.b16 %v6364
    %v6505 = vunpack.c.h.b16 %v6364
    %v6506 = vunpack.c.l.b16 %v6365
    %v6507 = vunpack.c.h.b16 %v6365
    %v6508 = vunpack.c.l.b16 %v6366
    %v6509 = vunpack.c.h.b16 %v6366
    %v6510 = vunpack.c.l.b16 %v6367
    %v6511 = vunpack.c.h.b16 %v6367
    %v6512 = vunpack.c.l.b16 %v6368
    %v6513 = vunpack.c.h.b16 %v6368
    %v6514 = vunpack.c.l.b16 %v6369
    %v6515 = vunpack.c.h.b16 %v6369
    %v6516 = vunpack.c.l.b16 %v6370
    %v6517 = vunpack.c.h.b16 %v6370
    %v6518 = vunpack.c.l.b16 %v6371
    %v6519 = vunpack.c.h.b16 %v6371
    %v6520 = vunpack.c.l.b16 %v6372
    %v6521 = vunpack.c.h.b16 %v6372
    %v6522 = vunpack.c.l.b16 %v6373
    %v6523 = vunpack.c.h.b16 %v6373
    %v6524 = vunpack.c.l.b16 %v6374
    %v6525 = vunpack.c.h.b16 %v6374
    %v6526 = vunpack.c.l.b16 %v6375
    %v6527 = vunpack.c.h.b16 %v6375
    %v6528 = vunpack.c.l.b16 %v6376
    %v6529 = vunpack.c.h.b16 %v6376
    %v6530 = vunpack.c.l.b16 %v6377
    %v6531 = vunpack.c.h.b16 %v6377
    %v6532 = vunpack.c.l.b16 %v6378
    %v6533 = vunpack.c.h.b16 %v6378
    %v6534 = vunpack.c.l.b16 %v6379
    %v6535 = vunpack.c.h.b16 %v6379
    %v6536 = vunpack.c.l.b16 %v6380
    %v6537 = vunpack.c.h.b16 %v6380
    %v6538 = vunpack.c.l.b16 %v6381
    %v6539 = vunpack.c.h.b16 %v6381
    %v6540 = vunpack.c.l.b16 %v6382
    %v6541 = vunpack.c.h.b16 %v6382
    %v6542 = vunpack.c.l.b16 %v6383
    %v6543 = vunpack.c.h.b16 %v6383
    %v6544 = vunpack.c.l.b16 %v6384
    %v6545 = vunpack.c.h.b16 %v6384
    %v6546 = vunpack.c.l.b16 %v6385
    %v6547 = vunpack.c.h.b16 %v6385
    %v6548 = vunpack.c.l.b16 %v6386
    %v6549 = vunpack.c.h.b16 %v6386
    %v6550 = vunpack.c.l.b16 %v6387
    %v6551 = vunpack.c.h.b16 %v6387
    %v6552 = vunpack.c.l.b16 %v6388
    %v6553 = vunpack.c.h.b16 %v6388
    %v6554 = vunpack.c.l.b16 %v6389
    %v6555 = vunpack.c.h.b16 %v6389
    %v6556 = vunpack.c.l.b16 %v6390
    %v6557 = vunpack.c.h.b16 %v6390
    %v6558 = vunpack.c.l.b16 %v6391
    %v6559 = vunpack.c.h.b16 %v6391
    %v6560 = vunpack.c.l.b16 %v6392
    %v6561 = vunpack.c.h.b16 %v6392
    %v6562 = vunpack.c.l.b16 %v6393
    %v6563 = vunpack.c.h.b16 %v6393
    %v6564 = vunpack.c.l.b16 %v6394
    %v6565 = vunpack.c.h.b16 %v6394
    %v6566 = vunpack.c.l.b16 %v6395
    %v6567 = vunpack.c.h.b16 %v6395
    %v6568 = vunpack.c.l.b16 %v6396
    %v6569 = vunpack.c.h.b16 %v6396
    %v6570 = vunpack.c.l.b16 %v6397
    %v6571 = vunpack.c.h.b16 %v6397
    %v6572 = vunpack.c.l.b16 %v6398
    %v6573 = vunpack.c.h.b16 %v6398
    %v6574 = vunpack.c.l.b16 %v6399
    %v6575 = vunpack.c.h.b16 %v6399
    %v6576 = vunpack.c.l.b16 %v6400
    %v6577 = vunpack.c.h.b16 %v6400
    %v6578 = vunpack.c.l.b16 %v6401
    %v6579 = vunpack.c.h.b16 %v6401
    %v6580 = vunpack.c.l.b16 %v6402
    %v6581 = vunpack.c.h.b16 %v6402
    %v6582 = vunpack.c.l.b16 %v6403
    %v6583 = vunpack.c.h.b16 %v6403
    %v6584 = vunpack.c.l.b16 %v6404
    %v6585 = vunpack.c.h.b16 %v6404
    %v6586 = vunpack.c.l.b16 %v6405
    %v6587 = vunpack.c.h.b16 %v6405
    %v6588 = vunpack.c.l.b16 %v6406
    %v6589 = vunpack.c.h.b16 %v6406
    %v6590 = vunpack.c.l.b16 %v6407
    %v6591 = vunpack.c.h.b16 %v6407
    %v6592 = vunpack.c.l.b16 %v6408
    %v6593 = vunpack.c.h.b16 %v6408
    %v6594 = vunpack.c.l.b16 %v6409
    %v6595 = vunpack.c.h.b16 %v6409
    %v6596 = vunpack.c.l.b16 %v6410
    %v6597 = vunpack.c.h.b16 %v6410
    %v6598 = vunpack.c.l.b16 %v6411
    %v6599 = vunpack.c.h.b16 %v6411
    %v6600 = vunpack.c.l.b16 %v6412
    %v6601 = vunpack.c.h.b16 %v6412
    %v6602 = vunpack.c.l.b16 %v6413
    %v6603 = vunpack.c.h.b16 %v6413
    %v6604 = vunpack.c.l.b16 %v6414
    %v6605 = vunpack.c.h.b16 %v6414
    %v6606 = vunpack.c.l.b16 %v6415
    %v6607 = vunpack.c.h.b16 %v6415
    %v6608 = vunpack.c.l.b16 %v6416
    %v6609 = vunpack.c.h.b16 %v6416
    %v6610 = vunpack.c.l.b16 %v6417
    %v6611 = vunpack.c.h.b16 %v6417
    %v6612 = vunpack.c.l.b16 %v6418
    %v6613 = vunpack.c.h.b16 %v6418
    %v6614 = vunpack.c.l.b16 %v6419
    %v6615 = vunpack.c.h.b16 %v6419
    %v6616 = vunpack.c.l.b16 %v6420
    %v6617 = vunpack.c.h.b16 %v6420
    %v6618 = vunpack.c.l.b16 %v6421
    %v6619 = vunpack.c.h.b16 %v6421
    %v6620 = vunpack.c.l.b16 %v6422
    %v6621 = vunpack.c.h.b16 %v6422
    %v6622 = vunpack.c.l.b16 %v6423
    %v6623 = vunpack.c.h.b16 %v6423
    %v6624 = vunpack.c.l.b16 %v6424
    %v6625 = vunpack.c.h.b16 %v6424
    %v6626 = vunpack.c.l.b16 %v6425
    %v6627 = vunpack.c.h.b16 %v6425
    %v6628 = vpack.c.b16 %v6504, %v6500
    %v6629 = vpack.c.b16 %v6505, %v6501
    %v6630 = vpack.c.b16 %v6506, %v6502
    %v6631 = vpack.c.b16 %v6507, %v6503
    %v6632 = vpack.c.b16 %v6512, %v6508
    %v6633 = vpack.c.b16 %v6513, %v6509
    %v6634 = vpack.c.b16 %v6514, %v6510
    %v6635 = vpack.c.b16 %v6515, %v6511
    %v6636 = vpack.c.b16 %v6520, %v6516
    %v6637 = vpack.c.b16 %v6521, %v6517
    %v6638 = vpack.c.b16 %v6522, %v6518
    %v6639 = vpack.c.b16 %v6523, %v6519
    %v6640 = vpack.c.b16 %v6528, %v6524
    %v6641 = vpack.c.b16 %v6529, %v6525
    %v6642 = vpack.c.b16 %v6530, %v6526
    %v6643 = vpack.c.b16 %v6531, %v6527
    %v6644 = vpack.c.b16 %v6536, %v6532
    %v6645 = vpack.c.b16 %v6537, %v6533
    %v6646 = vpack.c.b16 %v6538, %v6534
    %v6647 = vpack.c.b16 %v6539, %v6535
    %v6648 = vpack.c.b16 %v6544, %v6540
    %v6649 = vpack.c.b16 %v6545, %v6541
    %v6650 = vpack.c.b16 %v6546, %v6542
    %v6651 = vpack.c.b16 %v6547, %v6543
    %v6652 = vpack.c.b16 %v6552, %v6548
    %v6653 = vpack.c.b16 %v6553, %v6549
    %v6654 = vpack.c.b16 %v6554, %v6550
    %v6655 = vpack.c.b16 %v6555, %v6551
    %v6656 = vpack.c.b16 %v6560, %v6556
    %v6657 = vpack.c.b16 %v6561, %v6557
    %v6658 = vpack.c.b16 %v6562, %v6558
    %v6659 = vpack.c.b16 %v6563, %v6559
    %v6660 = vpack.c.b16 %v6568, %v6564
    %v6661 = vpack.c.b16 %v6569, %v6565
    %v6662 = vpack.c.b16 %v6570, %v6566
    %v6663 = vpack.c.b16 %v6571, %v6567
    %v6664 = vpack.c.b16 %v6576, %v6572
    %v6665 = vpack.c.b16 %v6577, %v6573
    %v6666 = vpack.c.b16 %v6578, %v6574
    %v6667 = vpack.c.b16 %v6579, %v6575
    %v6668 = vpack.c.b16 %v6584, %v6580
    %v6669 = vpack.c.b16 %v6585, %v6581
    %v6670 = vpack.c.b16 %v6586, %v6582
    %v6671 = vpack.c.b16 %v6587, %v6583
    %v6672 = vpack.c.b16 %v6592, %v6588
    %v6673 = vpack.c.b16 %v6593, %v6589
    %v6674 = vpack.c.b16 %v6594, %v6590
    %v6675 = vpack.c.b16 %v6595, %v6591
    %v6676 = vpack.c.b16 %v6600, %v6596
    %v6677 = vpack.c.b16 %v6601, %v6597
    %v6678 = vpack.c.b16 %v6602, %v6598
    %v6679 = vpack.c.b16 %v6603, %v6599
    %v6680 = vpack.c.b16 %v6608, %v6604
    %v6681 = vpack.c.b16 %v6609, %v6605
    %v6682 = vpack.c.b16 %v6610, %v6606
    %v6683 = vpack.c.b16 %v6611, %v6607
    %v6684 = vpack.c.b16 %v6616, %v6612
    %v6685 = vpack.c.b16 %v6617, %v6613
    %v6686 = vpack.c.b16 %v6618, %v6614
    %v6687 = vpack.c.b16 %v6619, %v6615
    %v6688 = vpack.c.b16 %v6624, %v6620
    %v6689 = vpack.c.b16 %v6625, %v6621
    %v6690 = vpack.c.b16 %v6626, %v6622
    %v6691 = vpack.c.b16 %v6627, %v6623
    %6756 = vmatpush.bf16.msra.mxu0 %v6656
    %6757 = vmatpush.bf16.msra.mxu0 %v6652
    %6758 = vmatpush.bf16.msra.mxu0 %v6648
    %6759 = vmatpush.bf16.msra.mxu0 %v6644
    %6760 = vmatpush.bf16.msra.mxu0 %v6640
    %6761 = vmatpush.bf16.msra.mxu0 %v6636
    %6762 = vmatpush.bf16.msra.mxu0 %v6632
    %6763 = vmatpush.bf16.msra.mxu0 %v6628
    %6764 = vmatmul.bf16.gmra.mxu0 %v6360
    %v6765 = vpop.f32.mrf.mxu0
    %v6766 = vadd.f32 %v6428, %v6765
    %v6767 = vpop.f32.mrf.mxu0
    %6768 = vdwg.mxu0
    %6769 = vmatpush.bf16.msra.mxu0 %v6688
    %6770 = vmatpush.bf16.msra.mxu0 %v6684
    %6771 = vmatpush.bf16.msra.mxu0 %v6680
    %6772 = vmatpush.bf16.msra.mxu0 %v6676
    %6773 = vmatpush.bf16.msra.mxu0 %v6672
    %6774 = vmatpush.bf16.msra.mxu0 %v6668
    %6775 = vmatpush.bf16.msra.mxu0 %v6664
    %6776 = vmatpush.bf16.msra.mxu0 %v6660
    %6777 = vmatmul.bf16.gmra.mxu0 %v6361
    %v6778 = vpop.f32.mrf.mxu0
    %v6779 = vadd.f32 %v6766, %v6778
    %v6780 = vpop.f32.mrf.mxu0
    %6781 = vdwg.mxu0
    %6782 = vmatpush.bf16.msra.mxu0 %v6657
    %6783 = vmatpush.bf16.msra.mxu0 %v6653
    %6784 = vmatpush.bf16.msra.mxu0 %v6649
    %6785 = vmatpush.bf16.msra.mxu0 %v6645
    %6786 = vmatpush.bf16.msra.mxu0 %v6641
    %6787 = vmatpush.bf16.msra.mxu0 %v6637
    %6788 = vmatpush.bf16.msra.mxu0 %v6633
    %6789 = vmatpush.bf16.msra.mxu0 %v6629
    %6790 = vmatmul.bf16.gmra.mxu0 %v6360
    %v6791 = vpop.f32.mrf.mxu0
    %v6792 = vadd.f32 %v6429, %v6791
    %v6793 = vpop.f32.mrf.mxu0
    %6794 = vdwg.mxu0
    %6795 = vmatpush.bf16.msra.mxu0 %v6689
    %6796 = vmatpush.bf16.msra.mxu0 %v6685
    %6797 = vmatpush.bf16.msra.mxu0 %v6681
    %6798 = vmatpush.bf16.msra.mxu0 %v6677
    %6799 = vmatpush.bf16.msra.mxu0 %v6673
    %6800 = vmatpush.bf16.msra.mxu0 %v6669
    %6801 = vmatpush.bf16.msra.mxu0 %v6665
    %6802 = vmatpush.bf16.msra.mxu0 %v6661
    %6803 = vmatmul.bf16.gmra.mxu0 %v6361
    %v6804 = vpop.f32.mrf.mxu0
    %v6805 = vadd.f32 %v6792, %v6804
    %v6806 = vpop.f32.mrf.mxu0
    %6807 = vdwg.mxu0
    %6808 = vmatpush.bf16.msra.mxu0 %v6658
    %6809 = vmatpush.bf16.msra.mxu0 %v6654
    %6810 = vmatpush.bf16.msra.mxu0 %v6650
    %6811 = vmatpush.bf16.msra.mxu0 %v6646
    %6812 = vmatpush.bf16.msra.mxu0 %v6642
    %6813 = vmatpush.bf16.msra.mxu0 %v6638
    %6814 = vmatpush.bf16.msra.mxu0 %v6634
    %6815 = vmatpush.bf16.msra.mxu0 %v6630
    %6816 = vmatmul.bf16.gmra.mxu0 %v6360
    %v6817 = vpop.f32.mrf.mxu0
    %v6818 = vadd.f32 %v6430, %v6817
    %v6819 = vpop.f32.mrf.mxu0
    %6820 = vdwg.mxu0
    %6821 = vmatpush.bf16.msra.mxu0 %v6690
    %6822 = vmatpush.bf16.msra.mxu0 %v6686
    %6823 = vmatpush.bf16.msra.mxu0 %v6682
    %6824 = vmatpush.bf16.msra.mxu0 %v6678
    %6825 = vmatpush.bf16.msra.mxu0 %v6674
    %6826 = vmatpush.bf16.msra.mxu0 %v6670
    %6827 = vmatpush.bf16.msra.mxu0 %v6666
    %6828 = vmatpush.bf16.msra.mxu0 %v6662
    %6829 = vmatmul.bf16.gmra.mxu0 %v6361
    %v6830 = vpop.f32.mrf.mxu0
    %v6831 = vadd.f32 %v6818, %v6830
    %v6832 = vpop.f32.mrf.mxu0
    %6833 = vdwg.mxu0
    %6834 = vmatpush.bf16.msra.mxu0 %v6659
    %6835 = vmatpush.bf16.msra.mxu0 %v6655
    %6836 = vmatpush.bf16.msra.mxu0 %v6651
    %6837 = vmatpush.bf16.msra.mxu0 %v6647
    %6838 = vmatpush.bf16.msra.mxu0 %v6643
    %6839 = vmatpush.bf16.msra.mxu0 %v6639
    %6840 = vmatpush.bf16.msra.mxu0 %v6635
    %6841 = vmatpush.bf16.msra.mxu0 %v6631
    %6842 = vmatmul.bf16.gmra.mxu0 %v6360
    %v6843 = vpop.f32.mrf.mxu0
    %v6844 = vadd.f32 %v6431, %v6843
    %v6845 = vpop.f32.mrf.mxu0
    %6846 = vdwg.mxu0
    %6847 = vmatpush.bf16.msra.mxu0 %v6691
    %6848 = vmatpush.bf16.msra.mxu0 %v6687
    %6849 = vmatpush.bf16.msra.mxu0 %v6683
    %6850 = vmatpush.bf16.msra.mxu0 %v6679
    %6851 = vmatpush.bf16.msra.mxu0 %v6675
    %6852 = vmatpush.bf16.msra.mxu0 %v6671
    %6853 = vmatpush.bf16.msra.mxu0 %v6667
    %6854 = vmatpush.bf16.msra.mxu0 %v6663
    %6855 = vmatmul.bf16.gmra.mxu0 %v6361
    %v6856 = vpop.f32.mrf.mxu0
    %v6857 = vadd.f32 %v6844, %v6856
    %v6858 = vpop.f32.mrf.mxu0
    %6859 = vdwg.mxu0
    %v6860 = vmax.f32 %v6779, 0.0
    %v6861 = vmax.f32 %v6805, 0.0
    %v6862 = vmax.f32 %v6831, 0.0
    %v6863 = vmax.f32 %v6857, 0.0
    %v6864 = vpack.c.bf16 %v6860, %v6860
    %v6865 = vpack.c.bf16 %v6861, %v6861
    %v6866 = vpack.c.bf16 %v6862, %v6862
    %v6867 = vpack.c.bf16 %v6863, %v6863
    %v6868 = vld [vmem:[#allocation14] sm:$0xff]
    %v6869 = vld [vmem:[#allocation14 + $0x8] sm:$0xff]
    %v6870 = vld [vmem:[#allocation14 + $0x10] sm:$0xff]
    %v6871 = vld [vmem:[#allocation14 + $0x18] sm:$0xff]
    %v6872 = vld [vmem:[#allocation14 + $0x20] sm:$0xff]
    %v6873 = vld [vmem:[#allocation14 + $0x28] sm:$0xff]
    %v6874 = vld [vmem:[#allocation14 + $0x30] sm:$0xff]
    %v6875 = vld [vmem:[#allocation14 + $0x38] sm:$0xff]
    %v6876 = vld [vmem:[#allocation14 + $0x40] sm:$0xff]
    %v6877 = vld [vmem:[#allocation14 + $0x48] sm:$0xff]
    %v6878 = vld [vmem:[#allocation14 + $0x50] sm:$0xff]
    %v6879 = vld [vmem:[#allocation14 + $0x58] sm:$0xff]
    %v6880 = vld [vmem:[#allocation14 + $0x60] sm:$0xff]
    %v6881 = vld [vmem:[#allocation14 + $0x68] sm:$0xff]
    %v6882 = vld [vmem:[#allocation14 + $0x70] sm:$0xff]
    %v6883 = vld [vmem:[#allocation14 + $0x78] sm:$0xff]
    %v6884 = vld [vmem:[#allocation14 + $0x80] sm:$0xff]
    %v6885 = vld [vmem:[#allocation14 + $0x88] sm:$0xff]
    %v6886 = vld [vmem:[#allocation14 + $0x90] sm:$0xff]
    %v6887 = vld [vmem:[#allocation14 + $0x98] sm:$0xff]
    %v6888 = vld [vmem:[#allocation14 + $0xa0] sm:$0xff]
    %v6889 = vld [vmem:[#allocation14 + $0xa8] sm:$0xff]
    %v6890 = vld [vmem:[#allocation14 + $0xb0] sm:$0xff]
    %v6891 = vld [vmem:[#allocation14 + $0xb8] sm:$0xff]
    %v6892 = vld [vmem:[#allocation14 + $0xc0] sm:$0xff]
    %v6893 = vld [vmem:[#allocation14 + $0xc8] sm:$0xff]
    %v6894 = vld [vmem:[#allocation14 + $0xd0] sm:$0xff]
    %v6895 = vld [vmem:[#allocation14 + $0xd8] sm:$0xff]
    %v6896 = vld [vmem:[#allocation14 + $0xe0] sm:$0xff]
    %v6897 = vld [vmem:[#allocation14 + $0xe8] sm:$0xff]
    %v6898 = vld [vmem:[#allocation14 + $0xf0] sm:$0xff]
    %v6899 = vld [vmem:[#allocation14 + $0xf8] sm:$0xff]
    %v6900 = vld [vmem:[#allocation14 + $0x100] sm:$0xff]
    %v6901 = vld [vmem:[#allocation14 + $0x108] sm:$0xff]
    %v6902 = vld [vmem:[#allocation14 + $0x110] sm:$0xff]
    %v6903 = vld [vmem:[#allocation14 + $0x118] sm:$0xff]
    %v6904 = vld [vmem:[#allocation14 + $0x120] sm:$0xff]
    %v6905 = vld [vmem:[#allocation14 + $0x128] sm:$0xff]
    %v6906 = vld [vmem:[#allocation14 + $0x130] sm:$0xff]
    %v6907 = vld [vmem:[#allocation14 + $0x138] sm:$0xff]
    %v6908 = vld [vmem:[#allocation14 + $0x140] sm:$0xff]
    %v6909 = vld [vmem:[#allocation14 + $0x148] sm:$0xff]
    %v6910 = vld [vmem:[#allocation14 + $0x150] sm:$0xff]
    %v6911 = vld [vmem:[#allocation14 + $0x158] sm:$0xff]
    %v6912 = vld [vmem:[#allocation14 + $0x160] sm:$0xff]
    %v6913 = vld [vmem:[#allocation14 + $0x168] sm:$0xff]
    %v6914 = vld [vmem:[#allocation14 + $0x170] sm:$0xff]
    %v6915 = vld [vmem:[#allocation14 + $0x178] sm:$0xff]
    %v6916 = vld [vmem:[#allocation14 + $0x180] sm:$0xff]
    %v6917 = vld [vmem:[#allocation14 + $0x188] sm:$0xff]
    %v6918 = vld [vmem:[#allocation14 + $0x190] sm:$0xff]
    %v6919 = vld [vmem:[#allocation14 + $0x198] sm:$0xff]
    %v6920 = vld [vmem:[#allocation14 + $0x1a0] sm:$0xff]
    %v6921 = vld [vmem:[#allocation14 + $0x1a8] sm:$0xff]
    %v6922 = vld [vmem:[#allocation14 + $0x1b0] sm:$0xff]
    %v6923 = vld [vmem:[#allocation14 + $0x1b8] sm:$0xff]
    %v6924 = vld [vmem:[#allocation14 + $0x1c0] sm:$0xff]
    %v6925 = vld [vmem:[#allocation14 + $0x1c8] sm:$0xff]
    %v6926 = vld [vmem:[#allocation14 + $0x1d0] sm:$0xff]
    %v6927 = vld [vmem:[#allocation14 + $0x1d8] sm:$0xff]
    %v6928 = vld [vmem:[#allocation14 + $0x1e0] sm:$0xff]
    %v6929 = vld [vmem:[#allocation14 + $0x1e8] sm:$0xff]
    %v6930 = vld [vmem:[#allocation14 + $0x1f0] sm:$0xff]
    %v6931 = vld [vmem:[#allocation14 + $0x1f8] sm:$0xff]
    %v6932 = vld [vmem:[#allocation14 + $0x200] sm:$0xff]
    %v6933 = vld [vmem:[#allocation14 + $0x208] sm:$0xff]
    %v6934 = vld [vmem:[#allocation14 + $0x210] sm:$0xff]
    %v6935 = vld [vmem:[#allocation14 + $0x218] sm:$0xff]
    %v6936 = vld [vmem:[#allocation14 + $0x220] sm:$0xff]
    %v6937 = vld [vmem:[#allocation14 + $0x228] sm:$0xff]
    %v6938 = vld [vmem:[#allocation14 + $0x230] sm:$0xff]
    %v6939 = vld [vmem:[#allocation14 + $0x238] sm:$0xff]
    %v6940 = vld [vmem:[#allocation14 + $0x240] sm:$0xff]
    %v6941 = vld [vmem:[#allocation14 + $0x248] sm:$0xff]
    %v6942 = vld [vmem:[#allocation14 + $0x250] sm:$0xff]
    %v6943 = vld [vmem:[#allocation14 + $0x258] sm:$0xff]
    %v6944 = vld [vmem:[#allocation14 + $0x260] sm:$0xff]
    %v6945 = vld [vmem:[#allocation14 + $0x268] sm:$0xff]
    %v6946 = vld [vmem:[#allocation14 + $0x270] sm:$0xff]
    %v6947 = vld [vmem:[#allocation14 + $0x278] sm:$0xff]
    %v6948 = vld [vmem:[#allocation14 + $0x280] sm:$0xff]
    %v6949 = vld [vmem:[#allocation14 + $0x288] sm:$0xff]
    %v6950 = vld [vmem:[#allocation14 + $0x290] sm:$0xff]
    %v6951 = vld [vmem:[#allocation14 + $0x298] sm:$0xff]
    %v6952 = vld [vmem:[#allocation14 + $0x2a0] sm:$0xff]
    %v6953 = vld [vmem:[#allocation14 + $0x2a8] sm:$0xff]
    %v6954 = vld [vmem:[#allocation14 + $0x2b0] sm:$0xff]
    %v6955 = vld [vmem:[#allocation14 + $0x2b8] sm:$0xff]
    %v6956 = vld [vmem:[#allocation14 + $0x2c0] sm:$0xff]
    %v6957 = vld [vmem:[#allocation14 + $0x2c8] sm:$0xff]
    %v6958 = vld [vmem:[#allocation14 + $0x2d0] sm:$0xff]
    %v6959 = vld [vmem:[#allocation14 + $0x2d8] sm:$0xff]
    %v6960 = vld [vmem:[#allocation14 + $0x2e0] sm:$0xff]
    %v6961 = vld [vmem:[#allocation14 + $0x2e8] sm:$0xff]
    %v6962 = vld [vmem:[#allocation14 + $0x2f0] sm:$0xff]
    %v6963 = vld [vmem:[#allocation14 + $0x2f8] sm:$0xff]
    %v6964 = vld [vmem:[#allocation14 + $0x300] sm:$0xff]
    %v6965 = vld [vmem:[#allocation14 + $0x308] sm:$0xff]
    %v6966 = vld [vmem:[#allocation14 + $0x310] sm:$0xff]
    %v6967 = vld [vmem:[#allocation14 + $0x318] sm:$0xff]
    %v6968 = vld [vmem:[#allocation14 + $0x320] sm:$0xff]
    %v6969 = vld [vmem:[#allocation14 + $0x328] sm:$0xff]
    %v6970 = vld [vmem:[#allocation14 + $0x330] sm:$0xff]
    %v6971 = vld [vmem:[#allocation14 + $0x338] sm:$0xff]
    %v6972 = vld [vmem:[#allocation14 + $0x340] sm:$0xff]
    %v6973 = vld [vmem:[#allocation14 + $0x348] sm:$0xff]
    %v6974 = vld [vmem:[#allocation14 + $0x350] sm:$0xff]
    %v6975 = vld [vmem:[#allocation14 + $0x358] sm:$0xff]
    %v6976 = vld [vmem:[#allocation14 + $0x360] sm:$0xff]
    %v6977 = vld [vmem:[#allocation14 + $0x368] sm:$0xff]
    %v6978 = vld [vmem:[#allocation14 + $0x370] sm:$0xff]
    %v6979 = vld [vmem:[#allocation14 + $0x378] sm:$0xff]
    %v6980 = vld [vmem:[#allocation14 + $0x380] sm:$0xff]
    %v6981 = vld [vmem:[#allocation14 + $0x388] sm:$0xff]
    %v6982 = vld [vmem:[#allocation14 + $0x390] sm:$0xff]
    %v6983 = vld [vmem:[#allocation14 + $0x398] sm:$0xff]
    %v6984 = vld [vmem:[#allocation14 + $0x3a0] sm:$0xff]
    %v6985 = vld [vmem:[#allocation14 + $0x3a8] sm:$0xff]
    %v6986 = vld [vmem:[#allocation14 + $0x3b0] sm:$0xff]
    %v6987 = vld [vmem:[#allocation14 + $0x3b8] sm:$0xff]
    %v6988 = vld [vmem:[#allocation14 + $0x3c0] sm:$0xff]
    %v6989 = vld [vmem:[#allocation14 + $0x3c8] sm:$0xff]
    %v6990 = vld [vmem:[#allocation14 + $0x3d0] sm:$0xff]
    %v6991 = vld [vmem:[#allocation14 + $0x3d8] sm:$0xff]
    %v6992 = vld [vmem:[#allocation14 + $0x3e0] sm:$0xff]
    %v6993 = vld [vmem:[#allocation14 + $0x3e8] sm:$0xff]
    %v6994 = vld [vmem:[#allocation14 + $0x3f0] sm:$0xff]
    %v6995 = vld [vmem:[#allocation14 + $0x3f8] sm:$0xff]
    %v6996 = vld [vmem:[#allocation14 + $0x400] sm:$0xff]
    %v6997 = vld [vmem:[#allocation14 + $0x408] sm:$0xff]
    %v6998 = vld [vmem:[#allocation14 + $0x410] sm:$0xff]
    %v6999 = vld [vmem:[#allocation14 + $0x418] sm:$0xff]
    %v7000 = vld [vmem:[#allocation14 + $0x420] sm:$0xff]
    %v7001 = vld [vmem:[#allocation14 + $0x428] sm:$0xff]
    %v7002 = vld [vmem:[#allocation14 + $0x430] sm:$0xff]
    %v7003 = vld [vmem:[#allocation14 + $0x438] sm:$0xff]
    %v7004 = vld [vmem:[#allocation14 + $0x440] sm:$0xff]
    %v7005 = vld [vmem:[#allocation14 + $0x448] sm:$0xff]
    %v7006 = vld [vmem:[#allocation14 + $0x450] sm:$0xff]
    %v7007 = vld [vmem:[#allocation14 + $0x458] sm:$0xff]
    %v7008 = vld [vmem:[#allocation14 + $0x460] sm:$0xff]
    %v7009 = vld [vmem:[#allocation14 + $0x468] sm:$0xff]
    %v7010 = vld [vmem:[#allocation14 + $0x470] sm:$0xff]
    %v7011 = vld [vmem:[#allocation14 + $0x478] sm:$0xff]
    %v7012 = vld [vmem:[#allocation14 + $0x480] sm:$0xff]
    %v7013 = vld [vmem:[#allocation14 + $0x488] sm:$0xff]
    %v7014 = vld [vmem:[#allocation14 + $0x490] sm:$0xff]
    %v7015 = vld [vmem:[#allocation14 + $0x498] sm:$0xff]
    %v7016 = vld [vmem:[#allocation14 + $0x4a0] sm:$0xff]
    %v7017 = vld [vmem:[#allocation14 + $0x4a8] sm:$0xff]
    %v7018 = vld [vmem:[#allocation14 + $0x4b0] sm:$0xff]
    %v7019 = vld [vmem:[#allocation14 + $0x4b8] sm:$0xff]
    %v7020 = vld [vmem:[#allocation14 + $0x4c0] sm:$0xff]
    %v7021 = vld [vmem:[#allocation14 + $0x4c8] sm:$0xff]
    %v7022 = vld [vmem:[#allocation14 + $0x4d0] sm:$0xff]
    %v7023 = vld [vmem:[#allocation14 + $0x4d8] sm:$0xff]
    %v7024 = vld [vmem:[#allocation14 + $0x4e0] sm:$0xff]
    %v7025 = vld [vmem:[#allocation14 + $0x4e8] sm:$0xff]
    %v7026 = vld [vmem:[#allocation14 + $0x4f0] sm:$0xff]
    %v7027 = vld [vmem:[#allocation14 + $0x4f8] sm:$0xff]
    %v7028 = vld [vmem:[#allocation14 + $0x500] sm:$0xff]
    %v7029 = vld [vmem:[#allocation14 + $0x508] sm:$0xff]
    %v7030 = vld [vmem:[#allocation14 + $0x510] sm:$0xff]
    %v7031 = vld [vmem:[#allocation14 + $0x518] sm:$0xff]
    %v7032 = vld [vmem:[#allocation14 + $0x520] sm:$0xff]
    %v7033 = vld [vmem:[#allocation14 + $0x528] sm:$0xff]
    %v7034 = vld [vmem:[#allocation14 + $0x530] sm:$0xff]
    %v7035 = vld [vmem:[#allocation14 + $0x538] sm:$0xff]
    %v7036 = vld [vmem:[#allocation14 + $0x540] sm:$0xff]
    %v7037 = vld [vmem:[#allocation14 + $0x548] sm:$0xff]
    %v7038 = vld [vmem:[#allocation14 + $0x550] sm:$0xff]
    %v7039 = vld [vmem:[#allocation14 + $0x558] sm:$0xff]
    %v7040 = vld [vmem:[#allocation14 + $0x560] sm:$0xff]
    %v7041 = vld [vmem:[#allocation14 + $0x568] sm:$0xff]
    %v7042 = vld [vmem:[#allocation14 + $0x570] sm:$0xff]
    %v7043 = vld [vmem:[#allocation14 + $0x578] sm:$0xff]
    %v7044 = vld [vmem:[#allocation14 + $0x580] sm:$0xff]
    %v7045 = vld [vmem:[#allocation14 + $0x588] sm:$0xff]
    %v7046 = vld [vmem:[#allocation14 + $0x590] sm:$0xff]
    %v7047 = vld [vmem:[#allocation14 + $0x598] sm:$0xff]
    %v7048 = vld [vmem:[#allocation14 + $0x5a0] sm:$0xff]
    %v7049 = vld [vmem:[#allocation14 + $0x5a8] sm:$0xff]
    %v7050 = vld [vmem:[#allocation14 + $0x5b0] sm:$0xff]
    %v7051 = vld [vmem:[#allocation14 + $0x5b8] sm:$0xff]
    %v7052 = vld [vmem:[#allocation14 + $0x5c0] sm:$0xff]
    %v7053 = vld [vmem:[#allocation14 + $0x5c8] sm:$0xff]
    %v7054 = vld [vmem:[#allocation14 + $0x5d0] sm:$0xff]
    %v7055 = vld [vmem:[#allocation14 + $0x5d8] sm:$0xff]
    %v7056 = vld [vmem:[#allocation14 + $0x5e0] sm:$0xff]
    %v7057 = vld [vmem:[#allocation14 + $0x5e8] sm:$0xff]
    %v7058 = vld [vmem:[#allocation14 + $0x5f0] sm:$0xff]
    %v7059 = vld [vmem:[#allocation14 + $0x5f8] sm:$0xff]
    %v7060 = vld [vmem:[#allocation14 + $0x600] sm:$0xff]
    %v7061 = vld [vmem:[#allocation14 + $0x608] sm:$0xff]
    %v7062 = vld [vmem:[#allocation14 + $0x610] sm:$0xff]
    %v7063 = vld [vmem:[#allocation14 + $0x618] sm:$0xff]
    %v7064 = vld [vmem:[#allocation14 + $0x620] sm:$0xff]
    %v7065 = vld [vmem:[#allocation14 + $0x628] sm:$0xff]
    %v7066 = vld [vmem:[#allocation14 + $0x630] sm:$0xff]
    %v7067 = vld [vmem:[#allocation14 + $0x638] sm:$0xff]
    %v7068 = vld [vmem:[#allocation14 + $0x640] sm:$0xff]
    %v7069 = vld [vmem:[#allocation14 + $0x648] sm:$0xff]
    %v7070 = vld [vmem:[#allocation14 + $0x650] sm:$0xff]
    %v7071 = vld [vmem:[#allocation14 + $0x658] sm:$0xff]
    %v7072 = vld [vmem:[#allocation14 + $0x660] sm:$0xff]
    %v7073 = vld [vmem:[#allocation14 + $0x668] sm:$0xff]
    %v7074 = vld [vmem:[#allocation14 + $0x670] sm:$0xff]
    %v7075 = vld [vmem:[#allocation14 + $0x678] sm:$0xff]
    %v7076 = vld [vmem:[#allocation14 + $0x680] sm:$0xff]
    %v7077 = vld [vmem:[#allocation14 + $0x688] sm:$0xff]
    %v7078 = vld [vmem:[#allocation14 + $0x690] sm:$0xff]
    %v7079 = vld [vmem:[#allocation14 + $0x698] sm:$0xff]
    %v7080 = vld [vmem:[#allocation14 + $0x6a0] sm:$0xff]
    %v7081 = vld [vmem:[#allocation14 + $0x6a8] sm:$0xff]
    %v7082 = vld [vmem:[#allocation14 + $0x6b0] sm:$0xff]
    %v7083 = vld [vmem:[#allocation14 + $0x6b8] sm:$0xff]
    %v7084 = vld [vmem:[#allocation14 + $0x6c0] sm:$0xff]
    %v7085 = vld [vmem:[#allocation14 + $0x6c8] sm:$0xff]
    %v7086 = vld [vmem:[#allocation14 + $0x6d0] sm:$0xff]
    %v7087 = vld [vmem:[#allocation14 + $0x6d8] sm:$0xff]
    %v7088 = vld [vmem:[#allocation14 + $0x6e0] sm:$0xff]
    %v7089 = vld [vmem:[#allocation14 + $0x6e8] sm:$0xff]
    %v7090 = vld [vmem:[#allocation14 + $0x6f0] sm:$0xff]
    %v7091 = vld [vmem:[#allocation14 + $0x6f8] sm:$0xff]
    %v7092 = vld [vmem:[#allocation14 + $0x700] sm:$0xff]
    %v7093 = vld [vmem:[#allocation14 + $0x708] sm:$0xff]
    %v7094 = vld [vmem:[#allocation14 + $0x710] sm:$0xff]
    %v7095 = vld [vmem:[#allocation14 + $0x718] sm:$0xff]
    %v7096 = vld [vmem:[#allocation14 + $0x720] sm:$0xff]
    %v7097 = vld [vmem:[#allocation14 + $0x728] sm:$0xff]
    %v7098 = vld [vmem:[#allocation14 + $0x730] sm:$0xff]
    %v7099 = vld [vmem:[#allocation14 + $0x738] sm:$0xff]
    %v7100 = vld [vmem:[#allocation14 + $0x740] sm:$0xff]
    %v7101 = vld [vmem:[#allocation14 + $0x748] sm:$0xff]
    %v7102 = vld [vmem:[#allocation14 + $0x750] sm:$0xff]
    %v7103 = vld [vmem:[#allocation14 + $0x758] sm:$0xff]
    %v7104 = vld [vmem:[#allocation14 + $0x760] sm:$0xff]
    %v7105 = vld [vmem:[#allocation14 + $0x768] sm:$0xff]
    %v7106 = vld [vmem:[#allocation14 + $0x770] sm:$0xff]
    %v7107 = vld [vmem:[#allocation14 + $0x778] sm:$0xff]
    %v7108 = vld [vmem:[#allocation14 + $0x780] sm:$0xff]
    %v7109 = vld [vmem:[#allocation14 + $0x788] sm:$0xff]
    %v7110 = vld [vmem:[#allocation14 + $0x790] sm:$0xff]
    %v7111 = vld [vmem:[#allocation14 + $0x798] sm:$0xff]
    %v7112 = vld [vmem:[#allocation14 + $0x7a0] sm:$0xff]
    %v7113 = vld [vmem:[#allocation14 + $0x7a8] sm:$0xff]
    %v7114 = vld [vmem:[#allocation14 + $0x7b0] sm:$0xff]
    %v7115 = vld [vmem:[#allocation14 + $0x7b8] sm:$0xff]
    %v7116 = vld [vmem:[#allocation14 + $0x7c0] sm:$0xff]
    %v7117 = vld [vmem:[#allocation14 + $0x7c8] sm:$0xff]
    %v7118 = vld [vmem:[#allocation14 + $0x7d0] sm:$0xff]
    %v7119 = vld [vmem:[#allocation14 + $0x7d8] sm:$0xff]
    %v7120 = vld [vmem:[#allocation14 + $0x7e0] sm:$0xff]
    %v7121 = vld [vmem:[#allocation14 + $0x7e8] sm:$0xff]
    %v7122 = vld [vmem:[#allocation14 + $0x7f0] sm:$0xff]
    %v7123 = vld [vmem:[#allocation14 + $0x7f8] sm:$0xff]
    %v7124 = vld [vmem:[%s20] sm:$0xff]
    %v7126 = vperm.slane %v7124, 0
    %v7127 = vperm.slane %v7124, 1
    %v7128 = vperm.slane %v7124, 2
    %v7129 = vperm.slane %v7124, 3
    %v7130 = vperm.slane %v7124, 4
    %v7131 = vperm.slane %v7124, 5
    %v7132 = vperm.slane %v7124, 6
    %v7133 = vperm.slane %v7124, 7
    %v7398 = vunpack.c.l.b16 %v6868
    %v7399 = vunpack.c.h.b16 %v6868
    %v7400 = vunpack.c.l.b16 %v6869
    %v7401 = vunpack.c.h.b16 %v6869
    %v7402 = vunpack.c.l.b16 %v6870
    %v7403 = vunpack.c.h.b16 %v6870
    %v7404 = vunpack.c.l.b16 %v6871
    %v7405 = vunpack.c.h.b16 %v6871
    %v7406 = vunpack.c.l.b16 %v6872
    %v7407 = vunpack.c.h.b16 %v6872
    %v7408 = vunpack.c.l.b16 %v6873
    %v7409 = vunpack.c.h.b16 %v6873
    %v7410 = vunpack.c.l.b16 %v6874
    %v7411 = vunpack.c.h.b16 %v6874
    %v7412 = vunpack.c.l.b16 %v6875
    %v7413 = vunpack.c.h.b16 %v6875
    %v7414 = vunpack.c.l.b16 %v6876
    %v7415 = vunpack.c.h.b16 %v6876
    %v7416 = vunpack.c.l.b16 %v6877
    %v7417 = vunpack.c.h.b16 %v6877
    %v7418 = vunpack.c.l.b16 %v6878
    %v7419 = vunpack.c.h.b16 %v6878
    %v7420 = vunpack.c.l.b16 %v6879
    %v7421 = vunpack.c.h.b16 %v6879
    %v7422 = vunpack.c.l.b16 %v6880
    %v7423 = vunpack.c.h.b16 %v6880
    %v7424 = vunpack.c.l.b16 %v6881
    %v7425 = vunpack.c.h.b16 %v6881
    %v7426 = vunpack.c.l.b16 %v6882
    %v7427 = vunpack.c.h.b16 %v6882
    %v7428 = vunpack.c.l.b16 %v6883
    %v7429 = vunpack.c.h.b16 %v6883
    %v7430 = vunpack.c.l.b16 %v6884
    %v7431 = vunpack.c.h.b16 %v6884
    %v7432 = vunpack.c.l.b16 %v6885
    %v7433 = vunpack.c.h.b16 %v6885
    %v7434 = vunpack.c.l.b16 %v6886
    %v7435 = vunpack.c.h.b16 %v6886
    %v7436 = vunpack.c.l.b16 %v6887
    %v7437 = vunpack.c.h.b16 %v6887
    %v7438 = vunpack.c.l.b16 %v6888
    %v7439 = vunpack.c.h.b16 %v6888
    %v7440 = vunpack.c.l.b16 %v6889
    %v7441 = vunpack.c.h.b16 %v6889
    %v7442 = vunpack.c.l.b16 %v6890
    %v7443 = vunpack.c.h.b16 %v6890
    %v7444 = vunpack.c.l.b16 %v6891
    %v7445 = vunpack.c.h.b16 %v6891
    %v7446 = vunpack.c.l.b16 %v6892
    %v7447 = vunpack.c.h.b16 %v6892
    %v7448 = vunpack.c.l.b16 %v6893
    %v7449 = vunpack.c.h.b16 %v6893
    %v7450 = vunpack.c.l.b16 %v6894
    %v7451 = vunpack.c.h.b16 %v6894
    %v7452 = vunpack.c.l.b16 %v6895
    %v7453 = vunpack.c.h.b16 %v6895
    %v7454 = vunpack.c.l.b16 %v6896
    %v7455 = vunpack.c.h.b16 %v6896
    %v7456 = vunpack.c.l.b16 %v6897
    %v7457 = vunpack.c.h.b16 %v6897
    %v7458 = vunpack.c.l.b16 %v6898
    %v7459 = vunpack.c.h.b16 %v6898
    %v7460 = vunpack.c.l.b16 %v6899
    %v7461 = vunpack.c.h.b16 %v6899
    %v7462 = vunpack.c.l.b16 %v6900
    %v7463 = vunpack.c.h.b16 %v6900
    %v7464 = vunpack.c.l.b16 %v6901
    %v7465 = vunpack.c.h.b16 %v6901
    %v7466 = vunpack.c.l.b16 %v6902
    %v7467 = vunpack.c.h.b16 %v6902
    %v7468 = vunpack.c.l.b16 %v6903
    %v7469 = vunpack.c.h.b16 %v6903
    %v7470 = vunpack.c.l.b16 %v6904
    %v7471 = vunpack.c.h.b16 %v6904
    %v7472 = vunpack.c.l.b16 %v6905
    %v7473 = vunpack.c.h.b16 %v6905
    %v7474 = vunpack.c.l.b16 %v6906
    %v7475 = vunpack.c.h.b16 %v6906
    %v7476 = vunpack.c.l.b16 %v6907
    %v7477 = vunpack.c.h.b16 %v6907
    %v7478 = vunpack.c.l.b16 %v6908
    %v7479 = vunpack.c.h.b16 %v6908
    %v7480 = vunpack.c.l.b16 %v6909
    %v7481 = vunpack.c.h.b16 %v6909
    %v7482 = vunpack.c.l.b16 %v6910
    %v7483 = vunpack.c.h.b16 %v6910
    %v7484 = vunpack.c.l.b16 %v6911
    %v7485 = vunpack.c.h.b16 %v6911
    %v7486 = vunpack.c.l.b16 %v6912
    %v7487 = vunpack.c.h.b16 %v6912
    %v7488 = vunpack.c.l.b16 %v6913
    %v7489 = vunpack.c.h.b16 %v6913
    %v7490 = vunpack.c.l.b16 %v6914
    %v7491 = vunpack.c.h.b16 %v6914
    %v7492 = vunpack.c.l.b16 %v6915
    %v7493 = vunpack.c.h.b16 %v6915
    %v7494 = vunpack.c.l.b16 %v6916
    %v7495 = vunpack.c.h.b16 %v6916
    %v7496 = vunpack.c.l.b16 %v6917
    %v7497 = vunpack.c.h.b16 %v6917
    %v7498 = vunpack.c.l.b16 %v6918
    %v7499 = vunpack.c.h.b16 %v6918
    %v7500 = vunpack.c.l.b16 %v6919
    %v7501 = vunpack.c.h.b16 %v6919
    %v7502 = vunpack.c.l.b16 %v6920
    %v7503 = vunpack.c.h.b16 %v6920
    %v7504 = vunpack.c.l.b16 %v6921
    %v7505 = vunpack.c.h.b16 %v6921
    %v7506 = vunpack.c.l.b16 %v6922
    %v7507 = vunpack.c.h.b16 %v6922
    %v7508 = vunpack.c.l.b16 %v6923
    %v7509 = vunpack.c.h.b16 %v6923
    %v7510 = vunpack.c.l.b16 %v6924
    %v7511 = vunpack.c.h.b16 %v6924
    %v7512 = vunpack.c.l.b16 %v6925
    %v7513 = vunpack.c.h.b16 %v6925
    %v7514 = vunpack.c.l.b16 %v6926
    %v7515 = vunpack.c.h.b16 %v6926
    %v7516 = vunpack.c.l.b16 %v6927
    %v7517 = vunpack.c.h.b16 %v6927
    %v7518 = vunpack.c.l.b16 %v6928
    %v7519 = vunpack.c.h.b16 %v6928
    %v7520 = vunpack.c.l.b16 %v6929
    %v7521 = vunpack.c.h.b16 %v6929
    %v7522 = vunpack.c.l.b16 %v6930
    %v7523 = vunpack.c.h.b16 %v6930
    %v7524 = vunpack.c.l.b16 %v6931
    %v7525 = vunpack.c.h.b16 %v6931
    %v7526 = vunpack.c.l.b16 %v6932
    %v7527 = vunpack.c.h.b16 %v6932
    %v7528 = vunpack.c.l.b16 %v6933
    %v7529 = vunpack.c.h.b16 %v6933
    %v7530 = vunpack.c.l.b16 %v6934
    %v7531 = vunpack.c.h.b16 %v6934
    %v7532 = vunpack.c.l.b16 %v6935
    %v7533 = vunpack.c.h.b16 %v6935
    %v7534 = vunpack.c.l.b16 %v6936
    %v7535 = vunpack.c.h.b16 %v6936
    %v7536 = vunpack.c.l.b16 %v6937
    %v7537 = vunpack.c.h.b16 %v6937
    %v7538 = vunpack.c.l.b16 %v6938
    %v7539 = vunpack.c.h.b16 %v6938
    %v7540 = vunpack.c.l.b16 %v6939
    %v7541 = vunpack.c.h.b16 %v6939
    %v7542 = vunpack.c.l.b16 %v6940
    %v7543 = vunpack.c.h.b16 %v6940
    %v7544 = vunpack.c.l.b16 %v6941
    %v7545 = vunpack.c.h.b16 %v6941
    %v7546 = vunpack.c.l.b16 %v6942
    %v7547 = vunpack.c.h.b16 %v6942
    %v7548 = vunpack.c.l.b16 %v6943
    %v7549 = vunpack.c.h.b16 %v6943
    %v7550 = vunpack.c.l.b16 %v6944
    %v7551 = vunpack.c.h.b16 %v6944
    %v7552 = vunpack.c.l.b16 %v6945
    %v7553 = vunpack.c.h.b16 %v6945
    %v7554 = vunpack.c.l.b16 %v6946
    %v7555 = vunpack.c.h.b16 %v6946
    %v7556 = vunpack.c.l.b16 %v6947
    %v7557 = vunpack.c.h.b16 %v6947
    %v7558 = vunpack.c.l.b16 %v6948
    %v7559 = vunpack.c.h.b16 %v6948
    %v7560 = vunpack.c.l.b16 %v6949
    %v7561 = vunpack.c.h.b16 %v6949
    %v7562 = vunpack.c.l.b16 %v6950
    %v7563 = vunpack.c.h.b16 %v6950
    %v7564 = vunpack.c.l.b16 %v6951
    %v7565 = vunpack.c.h.b16 %v6951
    %v7566 = vunpack.c.l.b16 %v6952
    %v7567 = vunpack.c.h.b16 %v6952
    %v7568 = vunpack.c.l.b16 %v6953
    %v7569 = vunpack.c.h.b16 %v6953
    %v7570 = vunpack.c.l.b16 %v6954
    %v7571 = vunpack.c.h.b16 %v6954
    %v7572 = vunpack.c.l.b16 %v6955
    %v7573 = vunpack.c.h.b16 %v6955
    %v7574 = vunpack.c.l.b16 %v6956
    %v7575 = vunpack.c.h.b16 %v6956
    %v7576 = vunpack.c.l.b16 %v6957
    %v7577 = vunpack.c.h.b16 %v6957
    %v7578 = vunpack.c.l.b16 %v6958
    %v7579 = vunpack.c.h.b16 %v6958
    %v7580 = vunpack.c.l.b16 %v6959
    %v7581 = vunpack.c.h.b16 %v6959
    %v7582 = vunpack.c.l.b16 %v6960
    %v7583 = vunpack.c.h.b16 %v6960
    %v7584 = vunpack.c.l.b16 %v6961
    %v7585 = vunpack.c.h.b16 %v6961
    %v7586 = vunpack.c.l.b16 %v6962
    %v7587 = vunpack.c.h.b16 %v6962
    %v7588 = vunpack.c.l.b16 %v6963
    %v7589 = vunpack.c.h.b16 %v6963
    %v7590 = vunpack.c.l.b16 %v6964
    %v7591 = vunpack.c.h.b16 %v6964
    %v7592 = vunpack.c.l.b16 %v6965
    %v7593 = vunpack.c.h.b16 %v6965
    %v7594 = vunpack.c.l.b16 %v6966
    %v7595 = vunpack.c.h.b16 %v6966
    %v7596 = vunpack.c.l.b16 %v6967
    %v7597 = vunpack.c.h.b16 %v6967
    %v7598 = vunpack.c.l.b16 %v6968
    %v7599 = vunpack.c.h.b16 %v6968
    %v7600 = vunpack.c.l.b16 %v6969
    %v7601 = vunpack.c.h.b16 %v6969
    %v7602 = vunpack.c.l.b16 %v6970
    %v7603 = vunpack.c.h.b16 %v6970
    %v7604 = vunpack.c.l.b16 %v6971
    %v7605 = vunpack.c.h.b16 %v6971
    %v7606 = vunpack.c.l.b16 %v6972
    %v7607 = vunpack.c.h.b16 %v6972
    %v7608 = vunpack.c.l.b16 %v6973
    %v7609 = vunpack.c.h.b16 %v6973
    %v7610 = vunpack.c.l.b16 %v6974
    %v7611 = vunpack.c.h.b16 %v6974
    %v7612 = vunpack.c.l.b16 %v6975
    %v7613 = vunpack.c.h.b16 %v6975
    %v7614 = vunpack.c.l.b16 %v6976
    %v7615 = vunpack.c.h.b16 %v6976
    %v7616 = vunpack.c.l.b16 %v6977
    %v7617 = vunpack.c.h.b16 %v6977
    %v7618 = vunpack.c.l.b16 %v6978
    %v7619 = vunpack.c.h.b16 %v6978
    %v7620 = vunpack.c.l.b16 %v6979
    %v7621 = vunpack.c.h.b16 %v6979
    %v7622 = vunpack.c.l.b16 %v6980
    %v7623 = vunpack.c.h.b16 %v6980
    %v7624 = vunpack.c.l.b16 %v6981
    %v7625 = vunpack.c.h.b16 %v6981
    %v7626 = vunpack.c.l.b16 %v6982
    %v7627 = vunpack.c.h.b16 %v6982
    %v7628 = vunpack.c.l.b16 %v6983
    %v7629 = vunpack.c.h.b16 %v6983
    %v7630 = vunpack.c.l.b16 %v6984
    %v7631 = vunpack.c.h.b16 %v6984
    %v7632 = vunpack.c.l.b16 %v6985
    %v7633 = vunpack.c.h.b16 %v6985
    %v7634 = vunpack.c.l.b16 %v6986
    %v7635 = vunpack.c.h.b16 %v6986
    %v7636 = vunpack.c.l.b16 %v6987
    %v7637 = vunpack.c.h.b16 %v6987
    %v7638 = vunpack.c.l.b16 %v6988
    %v7639 = vunpack.c.h.b16 %v6988
    %v7640 = vunpack.c.l.b16 %v6989
    %v7641 = vunpack.c.h.b16 %v6989
    %v7642 = vunpack.c.l.b16 %v6990
    %v7643 = vunpack.c.h.b16 %v6990
    %v7644 = vunpack.c.l.b16 %v6991
    %v7645 = vunpack.c.h.b16 %v6991
    %v7646 = vunpack.c.l.b16 %v6992
    %v7647 = vunpack.c.h.b16 %v6992
    %v7648 = vunpack.c.l.b16 %v6993
    %v7649 = vunpack.c.h.b16 %v6993
    %v7650 = vunpack.c.l.b16 %v6994
    %v7651 = vunpack.c.h.b16 %v6994
    %v7652 = vunpack.c.l.b16 %v6995
    %v7653 = vunpack.c.h.b16 %v6995
    %v7654 = vunpack.c.l.b16 %v6996
    %v7655 = vunpack.c.h.b16 %v6996
    %v7656 = vunpack.c.l.b16 %v6997
    %v7657 = vunpack.c.h.b16 %v6997
    %v7658 = vunpack.c.l.b16 %v6998
    %v7659 = vunpack.c.h.b16 %v6998
    %v7660 = vunpack.c.l.b16 %v6999
    %v7661 = vunpack.c.h.b16 %v6999
    %v7662 = vunpack.c.l.b16 %v7000
    %v7663 = vunpack.c.h.b16 %v7000
    %v7664 = vunpack.c.l.b16 %v7001
    %v7665 = vunpack.c.h.b16 %v7001
    %v7666 = vunpack.c.l.b16 %v7002
    %v7667 = vunpack.c.h.b16 %v7002
    %v7668 = vunpack.c.l.b16 %v7003
    %v7669 = vunpack.c.h.b16 %v7003
    %v7670 = vunpack.c.l.b16 %v7004
    %v7671 = vunpack.c.h.b16 %v7004
    %v7672 = vunpack.c.l.b16 %v7005
    %v7673 = vunpack.c.h.b16 %v7005
    %v7674 = vunpack.c.l.b16 %v7006
    %v7675 = vunpack.c.h.b16 %v7006
    %v7676 = vunpack.c.l.b16 %v7007
    %v7677 = vunpack.c.h.b16 %v7007
    %v7678 = vunpack.c.l.b16 %v7008
    %v7679 = vunpack.c.h.b16 %v7008
    %v7680 = vunpack.c.l.b16 %v7009
    %v7681 = vunpack.c.h.b16 %v7009
    %v7682 = vunpack.c.l.b16 %v7010
    %v7683 = vunpack.c.h.b16 %v7010
    %v7684 = vunpack.c.l.b16 %v7011
    %v7685 = vunpack.c.h.b16 %v7011
    %v7686 = vunpack.c.l.b16 %v7012
    %v7687 = vunpack.c.h.b16 %v7012
    %v7688 = vunpack.c.l.b16 %v7013
    %v7689 = vunpack.c.h.b16 %v7013
    %v7690 = vunpack.c.l.b16 %v7014
    %v7691 = vunpack.c.h.b16 %v7014
    %v7692 = vunpack.c.l.b16 %v7015
    %v7693 = vunpack.c.h.b16 %v7015
    %v7694 = vunpack.c.l.b16 %v7016
    %v7695 = vunpack.c.h.b16 %v7016
    %v7696 = vunpack.c.l.b16 %v7017
    %v7697 = vunpack.c.h.b16 %v7017
    %v7698 = vunpack.c.l.b16 %v7018
    %v7699 = vunpack.c.h.b16 %v7018
    %v7700 = vunpack.c.l.b16 %v7019
    %v7701 = vunpack.c.h.b16 %v7019
    %v7702 = vunpack.c.l.b16 %v7020
    %v7703 = vunpack.c.h.b16 %v7020
    %v7704 = vunpack.c.l.b16 %v7021
    %v7705 = vunpack.c.h.b16 %v7021
    %v7706 = vunpack.c.l.b16 %v7022
    %v7707 = vunpack.c.h.b16 %v7022
    %v7708 = vunpack.c.l.b16 %v7023
    %v7709 = vunpack.c.h.b16 %v7023
    %v7710 = vunpack.c.l.b16 %v7024
    %v7711 = vunpack.c.h.b16 %v7024
    %v7712 = vunpack.c.l.b16 %v7025
    %v7713 = vunpack.c.h.b16 %v7025
    %v7714 = vunpack.c.l.b16 %v7026
    %v7715 = vunpack.c.h.b16 %v7026
    %v7716 = vunpack.c.l.b16 %v7027
    %v7717 = vunpack.c.h.b16 %v7027
    %v7718 = vunpack.c.l.b16 %v7028
    %v7719 = vunpack.c.h.b16 %v7028
    %v7720 = vunpack.c.l.b16 %v7029
    %v7721 = vunpack.c.h.b16 %v7029
    %v7722 = vunpack.c.l.b16 %v7030
    %v7723 = vunpack.c.h.b16 %v7030
    %v7724 = vunpack.c.l.b16 %v7031
    %v7725 = vunpack.c.h.b16 %v7031
    %v7726 = vunpack.c.l.b16 %v7032
    %v7727 = vunpack.c.h.b16 %v7032
    %v7728 = vunpack.c.l.b16 %v7033
    %v7729 = vunpack.c.h.b16 %v7033
    %v7730 = vunpack.c.l.b16 %v7034
    %v7731 = vunpack.c.h.b16 %v7034
    %v7732 = vunpack.c.l.b16 %v7035
    %v7733 = vunpack.c.h.b16 %v7035
    %v7734 = vunpack.c.l.b16 %v7036
    %v7735 = vunpack.c.h.b16 %v7036
    %v7736 = vunpack.c.l.b16 %v7037
    %v7737 = vunpack.c.h.b16 %v7037
    %v7738 = vunpack.c.l.b16 %v7038
    %v7739 = vunpack.c.h.b16 %v7038
    %v7740 = vunpack.c.l.b16 %v7039
    %v7741 = vunpack.c.h.b16 %v7039
    %v7742 = vunpack.c.l.b16 %v7040
    %v7743 = vunpack.c.h.b16 %v7040
    %v7744 = vunpack.c.l.b16 %v7041
    %v7745 = vunpack.c.h.b16 %v7041
    %v7746 = vunpack.c.l.b16 %v7042
    %v7747 = vunpack.c.h.b16 %v7042
    %v7748 = vunpack.c.l.b16 %v7043
    %v7749 = vunpack.c.h.b16 %v7043
    %v7750 = vunpack.c.l.b16 %v7044
    %v7751 = vunpack.c.h.b16 %v7044
    %v7752 = vunpack.c.l.b16 %v7045
    %v7753 = vunpack.c.h.b16 %v7045
    %v7754 = vunpack.c.l.b16 %v7046
    %v7755 = vunpack.c.h.b16 %v7046
    %v7756 = vunpack.c.l.b16 %v7047
    %v7757 = vunpack.c.h.b16 %v7047
    %v7758 = vunpack.c.l.b16 %v7048
    %v7759 = vunpack.c.h.b16 %v7048
    %v7760 = vunpack.c.l.b16 %v7049
    %v7761 = vunpack.c.h.b16 %v7049
    %v7762 = vunpack.c.l.b16 %v7050
    %v7763 = vunpack.c.h.b16 %v7050
    %v7764 = vunpack.c.l.b16 %v7051
    %v7765 = vunpack.c.h.b16 %v7051
    %v7766 = vunpack.c.l.b16 %v7052
    %v7767 = vunpack.c.h.b16 %v7052
    %v7768 = vunpack.c.l.b16 %v7053
    %v7769 = vunpack.c.h.b16 %v7053
    %v7770 = vunpack.c.l.b16 %v7054
    %v7771 = vunpack.c.h.b16 %v7054
    %v7772 = vunpack.c.l.b16 %v7055
    %v7773 = vunpack.c.h.b16 %v7055
    %v7774 = vunpack.c.l.b16 %v7056
    %v7775 = vunpack.c.h.b16 %v7056
    %v7776 = vunpack.c.l.b16 %v7057
    %v7777 = vunpack.c.h.b16 %v7057
    %v7778 = vunpack.c.l.b16 %v7058
    %v7779 = vunpack.c.h.b16 %v7058
    %v7780 = vunpack.c.l.b16 %v7059
    %v7781 = vunpack.c.h.b16 %v7059
    %v7782 = vunpack.c.l.b16 %v7060
    %v7783 = vunpack.c.h.b16 %v7060
    %v7784 = vunpack.c.l.b16 %v7061
    %v7785 = vunpack.c.h.b16 %v7061
    %v7786 = vunpack.c.l.b16 %v7062
    %v7787 = vunpack.c.h.b16 %v7062
    %v7788 = vunpack.c.l.b16 %v7063
    %v7789 = vunpack.c.h.b16 %v7063
    %v7790 = vunpack.c.l.b16 %v7064
    %v7791 = vunpack.c.h.b16 %v7064
    %v7792 = vunpack.c.l.b16 %v7065
    %v7793 = vunpack.c.h.b16 %v7065
    %v7794 = vunpack.c.l.b16 %v7066
    %v7795 = vunpack.c.h.b16 %v7066
    %v7796 = vunpack.c.l.b16 %v7067
    %v7797 = vunpack.c.h.b16 %v7067
    %v7798 = vunpack.c.l.b16 %v7068
    %v7799 = vunpack.c.h.b16 %v7068
    %v7800 = vunpack.c.l.b16 %v7069
    %v7801 = vunpack.c.h.b16 %v7069
    %v7802 = vunpack.c.l.b16 %v7070
    %v7803 = vunpack.c.h.b16 %v7070
    %v7804 = vunpack.c.l.b16 %v7071
    %v7805 = vunpack.c.h.b16 %v7071
    %v7806 = vunpack.c.l.b16 %v7072
    %v7807 = vunpack.c.h.b16 %v7072
    %v7808 = vunpack.c.l.b16 %v7073
    %v7809 = vunpack.c.h.b16 %v7073
    %v7810 = vunpack.c.l.b16 %v7074
    %v7811 = vunpack.c.h.b16 %v7074
    %v7812 = vunpack.c.l.b16 %v7075
    %v7813 = vunpack.c.h.b16 %v7075
    %v7814 = vunpack.c.l.b16 %v7076
    %v7815 = vunpack.c.h.b16 %v7076
    %v7816 = vunpack.c.l.b16 %v7077
    %v7817 = vunpack.c.h.b16 %v7077
    %v7818 = vunpack.c.l.b16 %v7078
    %v7819 = vunpack.c.h.b16 %v7078
    %v7820 = vunpack.c.l.b16 %v7079
    %v7821 = vunpack.c.h.b16 %v7079
    %v7822 = vunpack.c.l.b16 %v7080
    %v7823 = vunpack.c.h.b16 %v7080
    %v7824 = vunpack.c.l.b16 %v7081
    %v7825 = vunpack.c.h.b16 %v7081
    %v7826 = vunpack.c.l.b16 %v7082
    %v7827 = vunpack.c.h.b16 %v7082
    %v7828 = vunpack.c.l.b16 %v7083
    %v7829 = vunpack.c.h.b16 %v7083
    %v7830 = vunpack.c.l.b16 %v7084
    %v7831 = vunpack.c.h.b16 %v7084
    %v7832 = vunpack.c.l.b16 %v7085
    %v7833 = vunpack.c.h.b16 %v7085
    %v7834 = vunpack.c.l.b16 %v7086
    %v7835 = vunpack.c.h.b16 %v7086
    %v7836 = vunpack.c.l.b16 %v7087
    %v7837 = vunpack.c.h.b16 %v7087
    %v7838 = vunpack.c.l.b16 %v7088
    %v7839 = vunpack.c.h.b16 %v7088
    %v7840 = vunpack.c.l.b16 %v7089
    %v7841 = vunpack.c.h.b16 %v7089
    %v7842 = vunpack.c.l.b16 %v7090
    %v7843 = vunpack.c.h.b16 %v7090
    %v7844 = vunpack.c.l.b16 %v7091
    %v7845 = vunpack.c.h.b16 %v7091
    %v7846 = vunpack.c.l.b16 %v7092
    %v7847 = vunpack.c.h.b16 %v7092
    %v7848 = vunpack.c.l.b16 %v7093
    %v7849 = vunpack.c.h.b16 %v7093
    %v7850 = vunpack.c.l.b16 %v7094
    %v7851 = vunpack.c.h.b16 %v7094
    %v7852 = vunpack.c.l.b16 %v7095
    %v7853 = vunpack.c.h.b16 %v7095
    %v7854 = vunpack.c.l.b16 %v7096
    %v7855 = vunpack.c.h.b16 %v7096
    %v7856 = vunpack.c.l.b16 %v7097
    %v7857 = vunpack.c.h.b16 %v7097
    %v7858 = vunpack.c.l.b16 %v7098
    %v7859 = vunpack.c.h.b16 %v7098
    %v7860 = vunpack.c.l.b16 %v7099
    %v7861 = vunpack.c.h.b16 %v7099
    %v7862 = vunpack.c.l.b16 %v7100
    %v7863 = vunpack.c.h.b16 %v7100
    %v7864 = vunpack.c.l.b16 %v7101
    %v7865 = vunpack.c.h.b16 %v7101
    %v7866 = vunpack.c.l.b16 %v7102
    %v7867 = vunpack.c.h.b16 %v7102
    %v7868 = vunpack.c.l.b16 %v7103
    %v7869 = vunpack.c.h.b16 %v7103
    %v7870 = vunpack.c.l.b16 %v7104
    %v7871 = vunpack.c.h.b16 %v7104
    %v7872 = vunpack.c.l.b16 %v7105
    %v7873 = vunpack.c.h.b16 %v7105
    %v7874 = vunpack.c.l.b16 %v7106
    %v7875 = vunpack.c.h.b16 %v7106
    %v7876 = vunpack.c.l.b16 %v7107
    %v7877 = vunpack.c.h.b16 %v7107
    %v7878 = vunpack.c.l.b16 %v7108
    %v7879 = vunpack.c.h.b16 %v7108
    %v7880 = vunpack.c.l.b16 %v7109
    %v7881 = vunpack.c.h.b16 %v7109
    %v7882 = vunpack.c.l.b16 %v7110
    %v7883 = vunpack.c.h.b16 %v7110
    %v7884 = vunpack.c.l.b16 %v7111
    %v7885 = vunpack.c.h.b16 %v7111
    %v7886 = vunpack.c.l.b16 %v7112
    %v7887 = vunpack.c.h.b16 %v7112
    %v7888 = vunpack.c.l.b16 %v7113
    %v7889 = vunpack.c.h.b16 %v7113
    %v7890 = vunpack.c.l.b16 %v7114
    %v7891 = vunpack.c.h.b16 %v7114
    %v7892 = vunpack.c.l.b16 %v7115
    %v7893 = vunpack.c.h.b16 %v7115
    %v7894 = vunpack.c.l.b16 %v7116
    %v7895 = vunpack.c.h.b16 %v7116
    %v7896 = vunpack.c.l.b16 %v7117
    %v7897 = vunpack.c.h.b16 %v7117
    %v7898 = vunpack.c.l.b16 %v7118
    %v7899 = vunpack.c.h.b16 %v7118
    %v7900 = vunpack.c.l.b16 %v7119
    %v7901 = vunpack.c.h.b16 %v7119
    %v7902 = vunpack.c.l.b16 %v7120
    %v7903 = vunpack.c.h.b16 %v7120
    %v7904 = vunpack.c.l.b16 %v7121
    %v7905 = vunpack.c.h.b16 %v7121
    %v7906 = vunpack.c.l.b16 %v7122
    %v7907 = vunpack.c.h.b16 %v7122
    %v7908 = vunpack.c.l.b16 %v7123
    %v7909 = vunpack.c.h.b16 %v7123
    %v7910 = vpack.c.b16 %v7406, %v7398
    %v7911 = vpack.c.b16 %v7407, %v7399
    %v7912 = vpack.c.b16 %v7408, %v7400
    %v7913 = vpack.c.b16 %v7409, %v7401
    %v7914 = vpack.c.b16 %v7410, %v7402
    %v7915 = vpack.c.b16 %v7411, %v7403
    %v7916 = vpack.c.b16 %v7412, %v7404
    %v7917 = vpack.c.b16 %v7413, %v7405
    %v7918 = vpack.c.b16 %v7422, %v7414
    %v7919 = vpack.c.b16 %v7423, %v7415
    %v7920 = vpack.c.b16 %v7424, %v7416
    %v7921 = vpack.c.b16 %v7425, %v7417
    %v7922 = vpack.c.b16 %v7426, %v7418
    %v7923 = vpack.c.b16 %v7427, %v7419
    %v7924 = vpack.c.b16 %v7428, %v7420
    %v7925 = vpack.c.b16 %v7429, %v7421
    %v7926 = vpack.c.b16 %v7438, %v7430
    %v7927 = vpack.c.b16 %v7439, %v7431
    %v7928 = vpack.c.b16 %v7440, %v7432
    %v7929 = vpack.c.b16 %v7441, %v7433
    %v7930 = vpack.c.b16 %v7442, %v7434
    %v7931 = vpack.c.b16 %v7443, %v7435
    %v7932 = vpack.c.b16 %v7444, %v7436
    %v7933 = vpack.c.b16 %v7445, %v7437
    %v7934 = vpack.c.b16 %v7454, %v7446
    %v7935 = vpack.c.b16 %v7455, %v7447
    %v7936 = vpack.c.b16 %v7456, %v7448
    %v7937 = vpack.c.b16 %v7457, %v7449
    %v7938 = vpack.c.b16 %v7458, %v7450
    %v7939 = vpack.c.b16 %v7459, %v7451
    %v7940 = vpack.c.b16 %v7460, %v7452
    %v7941 = vpack.c.b16 %v7461, %v7453
    %v7942 = vpack.c.b16 %v7470, %v7462
    %v7943 = vpack.c.b16 %v7471, %v7463
    %v7944 = vpack.c.b16 %v7472, %v7464
    %v7945 = vpack.c.b16 %v7473, %v7465
    %v7946 = vpack.c.b16 %v7474, %v7466
    %v7947 = vpack.c.b16 %v7475, %v7467
    %v7948 = vpack.c.b16 %v7476, %v7468
    %v7949 = vpack.c.b16 %v7477, %v7469
    %v7950 = vpack.c.b16 %v7486, %v7478
    %v7951 = vpack.c.b16 %v7487, %v7479
    %v7952 = vpack.c.b16 %v7488, %v7480
    %v7953 = vpack.c.b16 %v7489, %v7481
    %v7954 = vpack.c.b16 %v7490, %v7482
    %v7955 = vpack.c.b16 %v7491, %v7483
    %v7956 = vpack.c.b16 %v7492, %v7484
    %v7957 = vpack.c.b16 %v7493, %v7485
    %v7958 = vpack.c.b16 %v7502, %v7494
    %v7959 = vpack.c.b16 %v7503, %v7495
    %v7960 = vpack.c.b16 %v7504, %v7496
    %v7961 = vpack.c.b16 %v7505, %v7497
    %v7962 = vpack.c.b16 %v7506, %v7498
    %v7963 = vpack.c.b16 %v7507, %v7499
    %v7964 = vpack.c.b16 %v7508, %v7500
    %v7965 = vpack.c.b16 %v7509, %v7501
    %v7966 = vpack.c.b16 %v7518, %v7510
    %v7967 = vpack.c.b16 %v7519, %v7511
    %v7968 = vpack.c.b16 %v7520, %v7512
    %v7969 = vpack.c.b16 %v7521, %v7513
    %v7970 = vpack.c.b16 %v7522, %v7514
    %v7971 = vpack.c.b16 %v7523, %v7515
    %v7972 = vpack.c.b16 %v7524, %v7516
    %v7973 = vpack.c.b16 %v7525, %v7517
    %v7974 = vpack.c.b16 %v7534, %v7526
    %v7975 = vpack.c.b16 %v7535, %v7527
    %v7976 = vpack.c.b16 %v7536, %v7528
    %v7977 = vpack.c.b16 %v7537, %v7529
    %v7978 = vpack.c.b16 %v7538, %v7530
    %v7979 = vpack.c.b16 %v7539, %v7531
    %v7980 = vpack.c.b16 %v7540, %v7532
    %v7981 = vpack.c.b16 %v7541, %v7533
    %v7982 = vpack.c.b16 %v7550, %v7542
    %v7983 = vpack.c.b16 %v7551, %v7543
    %v7984 = vpack.c.b16 %v7552, %v7544
    %v7985 = vpack.c.b16 %v7553, %v7545
    %v7986 = vpack.c.b16 %v7554, %v7546
    %v7987 = vpack.c.b16 %v7555, %v7547
    %v7988 = vpack.c.b16 %v7556, %v7548
    %v7989 = vpack.c.b16 %v7557, %v7549
    %v7990 = vpack.c.b16 %v7566, %v7558
    %v7991 = vpack.c.b16 %v7567, %v7559
    %v7992 = vpack.c.b16 %v7568, %v7560
    %v7993 = vpack.c.b16 %v7569, %v7561
    %v7994 = vpack.c.b16 %v7570, %v7562
    %v7995 = vpack.c.b16 %v7571, %v7563
    %v7996 = vpack.c.b16 %v7572, %v7564
    %v7997 = vpack.c.b16 %v7573, %v7565
    %v7998 = vpack.c.b16 %v7582, %v7574
    %v7999 = vpack.c.b16 %v7583, %v7575
    %v8000 = vpack.c.b16 %v7584, %v7576
    %v8001 = vpack.c.b16 %v7585, %v7577
    %v8002 = vpack.c.b16 %v7586, %v7578
    %v8003 = vpack.c.b16 %v7587, %v7579
    %v8004 = vpack.c.b16 %v7588, %v7580
    %v8005 = vpack.c.b16 %v7589, %v7581
    %v8006 = vpack.c.b16 %v7598, %v7590
    %v8007 = vpack.c.b16 %v7599, %v7591
    %v8008 = vpack.c.b16 %v7600, %v7592
    %v8009 = vpack.c.b16 %v7601, %v7593
    %v8010 = vpack.c.b16 %v7602, %v7594
    %v8011 = vpack.c.b16 %v7603, %v7595
    %v8012 = vpack.c.b16 %v7604, %v7596
    %v8013 = vpack.c.b16 %v7605, %v7597
    %v8014 = vpack.c.b16 %v7614, %v7606
    %v8015 = vpack.c.b16 %v7615, %v7607
    %v8016 = vpack.c.b16 %v7616, %v7608
    %v8017 = vpack.c.b16 %v7617, %v7609
    %v8018 = vpack.c.b16 %v7618, %v7610
    %v8019 = vpack.c.b16 %v7619, %v7611
    %v8020 = vpack.c.b16 %v7620, %v7612
    %v8021 = vpack.c.b16 %v7621, %v7613
    %v8022 = vpack.c.b16 %v7630, %v7622
    %v8023 = vpack.c.b16 %v7631, %v7623
    %v8024 = vpack.c.b16 %v7632, %v7624
    %v8025 = vpack.c.b16 %v7633, %v7625
    %v8026 = vpack.c.b16 %v7634, %v7626
    %v8027 = vpack.c.b16 %v7635, %v7627
    %v8028 = vpack.c.b16 %v7636, %v7628
    %v8029 = vpack.c.b16 %v7637, %v7629
    %v8030 = vpack.c.b16 %v7646, %v7638
    %v8031 = vpack.c.b16 %v7647, %v7639
    %v8032 = vpack.c.b16 %v7648, %v7640
    %v8033 = vpack.c.b16 %v7649, %v7641
    %v8034 = vpack.c.b16 %v7650, %v7642
    %v8035 = vpack.c.b16 %v7651, %v7643
    %v8036 = vpack.c.b16 %v7652, %v7644
    %v8037 = vpack.c.b16 %v7653, %v7645
    %v8038 = vpack.c.b16 %v7662, %v7654
    %v8039 = vpack.c.b16 %v7663, %v7655
    %v8040 = vpack.c.b16 %v7664, %v7656
    %v8041 = vpack.c.b16 %v7665, %v7657
    %v8042 = vpack.c.b16 %v7666, %v7658
    %v8043 = vpack.c.b16 %v7667, %v7659
    %v8044 = vpack.c.b16 %v7668, %v7660
    %v8045 = vpack.c.b16 %v7669, %v7661
    %v8046 = vpack.c.b16 %v7678, %v7670
    %v8047 = vpack.c.b16 %v7679, %v7671
    %v8048 = vpack.c.b16 %v7680, %v7672
    %v8049 = vpack.c.b16 %v7681, %v7673
    %v8050 = vpack.c.b16 %v7682, %v7674
    %v8051 = vpack.c.b16 %v7683, %v7675
    %v8052 = vpack.c.b16 %v7684, %v7676
    %v8053 = vpack.c.b16 %v7685, %v7677
    %v8054 = vpack.c.b16 %v7694, %v7686
    %v8055 = vpack.c.b16 %v7695, %v7687
    %v8056 = vpack.c.b16 %v7696, %v7688
    %v8057 = vpack.c.b16 %v7697, %v7689
    %v8058 = vpack.c.b16 %v7698, %v7690
    %v8059 = vpack.c.b16 %v7699, %v7691
    %v8060 = vpack.c.b16 %v7700, %v7692
    %v8061 = vpack.c.b16 %v7701, %v7693
    %v8062 = vpack.c.b16 %v7710, %v7702
    %v8063 = vpack.c.b16 %v7711, %v7703
    %v8064 = vpack.c.b16 %v7712, %v7704
    %v8065 = vpack.c.b16 %v7713, %v7705
    %v8066 = vpack.c.b16 %v7714, %v7706
    %v8067 = vpack.c.b16 %v7715, %v7707
    %v8068 = vpack.c.b16 %v7716, %v7708
    %v8069 = vpack.c.b16 %v7717, %v7709
    %v8070 = vpack.c.b16 %v7726, %v7718
    %v8071 = vpack.c.b16 %v7727, %v7719
    %v8072 = vpack.c.b16 %v7728, %v7720
    %v8073 = vpack.c.b16 %v7729, %v7721
    %v8074 = vpack.c.b16 %v7730, %v7722
    %v8075 = vpack.c.b16 %v7731, %v7723
    %v8076 = vpack.c.b16 %v7732, %v7724
    %v8077 = vpack.c.b16 %v7733, %v7725
    %v8078 = vpack.c.b16 %v7742, %v7734
    %v8079 = vpack.c.b16 %v7743, %v7735
    %v8080 = vpack.c.b16 %v7744, %v7736
    %v8081 = vpack.c.b16 %v7745, %v7737
    %v8082 = vpack.c.b16 %v7746, %v7738
    %v8083 = vpack.c.b16 %v7747, %v7739
    %v8084 = vpack.c.b16 %v7748, %v7740
    %v8085 = vpack.c.b16 %v7749, %v7741
    %v8086 = vpack.c.b16 %v7758, %v7750
    %v8087 = vpack.c.b16 %v7759, %v7751
    %v8088 = vpack.c.b16 %v7760, %v7752
    %v8089 = vpack.c.b16 %v7761, %v7753
    %v8090 = vpack.c.b16 %v7762, %v7754
    %v8091 = vpack.c.b16 %v7763, %v7755
    %v8092 = vpack.c.b16 %v7764, %v7756
    %v8093 = vpack.c.b16 %v7765, %v7757
    %v8094 = vpack.c.b16 %v7774, %v7766
    %v8095 = vpack.c.b16 %v7775, %v7767
    %v8096 = vpack.c.b16 %v7776, %v7768
    %v8097 = vpack.c.b16 %v7777, %v7769
    %v8098 = vpack.c.b16 %v7778, %v7770
    %v8099 = vpack.c.b16 %v7779, %v7771
    %v8100 = vpack.c.b16 %v7780, %v7772
    %v8101 = vpack.c.b16 %v7781, %v7773
    %v8102 = vpack.c.b16 %v7790, %v7782
    %v8103 = vpack.c.b16 %v7791, %v7783
    %v8104 = vpack.c.b16 %v7792, %v7784
    %v8105 = vpack.c.b16 %v7793, %v7785
    %v8106 = vpack.c.b16 %v7794, %v7786
    %v8107 = vpack.c.b16 %v7795, %v7787
    %v8108 = vpack.c.b16 %v7796, %v7788
    %v8109 = vpack.c.b16 %v7797, %v7789
    %v8110 = vpack.c.b16 %v7806, %v7798
    %v8111 = vpack.c.b16 %v7807, %v7799
    %v8112 = vpack.c.b16 %v7808, %v7800
    %v8113 = vpack.c.b16 %v7809, %v7801
    %v8114 = vpack.c.b16 %v7810, %v7802
    %v8115 = vpack.c.b16 %v7811, %v7803
    %v8116 = vpack.c.b16 %v7812, %v7804
    %v8117 = vpack.c.b16 %v7813, %v7805
    %v8118 = vpack.c.b16 %v7822, %v7814
    %v8119 = vpack.c.b16 %v7823, %v7815
    %v8120 = vpack.c.b16 %v7824, %v7816
    %v8121 = vpack.c.b16 %v7825, %v7817
    %v8122 = vpack.c.b16 %v7826, %v7818
    %v8123 = vpack.c.b16 %v7827, %v7819
    %v8124 = vpack.c.b16 %v7828, %v7820
    %v8125 = vpack.c.b16 %v7829, %v7821
    %v8126 = vpack.c.b16 %v7838, %v7830
    %v8127 = vpack.c.b16 %v7839, %v7831
    %v8128 = vpack.c.b16 %v7840, %v7832
    %v8129 = vpack.c.b16 %v7841, %v7833
    %v8130 = vpack.c.b16 %v7842, %v7834
    %v8131 = vpack.c.b16 %v7843, %v7835
    %v8132 = vpack.c.b16 %v7844, %v7836
    %v8133 = vpack.c.b16 %v7845, %v7837
    %v8134 = vpack.c.b16 %v7854, %v7846
    %v8135 = vpack.c.b16 %v7855, %v7847
    %v8136 = vpack.c.b16 %v7856, %v7848
    %v8137 = vpack.c.b16 %v7857, %v7849
    %v8138 = vpack.c.b16 %v7858, %v7850
    %v8139 = vpack.c.b16 %v7859, %v7851
    %v8140 = vpack.c.b16 %v7860, %v7852
    %v8141 = vpack.c.b16 %v7861, %v7853
    %v8142 = vpack.c.b16 %v7870, %v7862
    %v8143 = vpack.c.b16 %v7871, %v7863
    %v8144 = vpack.c.b16 %v7872, %v7864
    %v8145 = vpack.c.b16 %v7873, %v7865
    %v8146 = vpack.c.b16 %v7874, %v7866
    %v8147 = vpack.c.b16 %v7875, %v7867
    %v8148 = vpack.c.b16 %v7876, %v7868
    %v8149 = vpack.c.b16 %v7877, %v7869
    %v8150 = vpack.c.b16 %v7886, %v7878
    %v8151 = vpack.c.b16 %v7887, %v7879
    %v8152 = vpack.c.b16 %v7888, %v7880
    %v8153 = vpack.c.b16 %v7889, %v7881
    %v8154 = vpack.c.b16 %v7890, %v7882
    %v8155 = vpack.c.b16 %v7891, %v7883
    %v8156 = vpack.c.b16 %v7892, %v7884
    %v8157 = vpack.c.b16 %v7893, %v7885
    %v8158 = vpack.c.b16 %v7902, %v7894
    %v8159 = vpack.c.b16 %v7903, %v7895
    %v8160 = vpack.c.b16 %v7904, %v7896
    %v8161 = vpack.c.b16 %v7905, %v7897
    %v8162 = vpack.c.b16 %v7906, %v7898
    %v8163 = vpack.c.b16 %v7907, %v7899
    %v8164 = vpack.c.b16 %v7908, %v7900
    %v8165 = vpack.c.b16 %v7909, %v7901
    %8422 = vmatpush.bf16.msra.mxu0 %v7966
    %8423 = vmatpush.bf16.msra.mxu0 %v7958
    %8424 = vmatpush.bf16.msra.mxu0 %v7950
    %8425 = vmatpush.bf16.msra.mxu0 %v7942
    %8426 = vmatpush.bf16.msra.mxu0 %v7934
    %8427 = vmatpush.bf16.msra.mxu0 %v7926
    %8428 = vmatpush.bf16.msra.mxu0 %v7918
    %8429 = vmatpush.bf16.msra.mxu0 %v7910
    %8430 = vmatmul.bf16.gmra.mxu0 %v6864
    %v8431 = vpop.f32.mrf.mxu0
    %v8432 = vadd.f32 %v7126, %v8431
    %v8433 = vpop.f32.mrf.mxu0
    %8434 = vdwg.mxu0
    %8435 = vmatpush.bf16.msra.mxu0 %v8030
    %8436 = vmatpush.bf16.msra.mxu0 %v8022
    %8437 = vmatpush.bf16.msra.mxu0 %v8014
    %8438 = vmatpush.bf16.msra.mxu0 %v8006
    %8439 = vmatpush.bf16.msra.mxu0 %v7998
    %8440 = vmatpush.bf16.msra.mxu0 %v7990
    %8441 = vmatpush.bf16.msra.mxu0 %v7982
    %8442 = vmatpush.bf16.msra.mxu0 %v7974
    %8443 = vmatmul.bf16.gmra.mxu0 %v6865
    %v8444 = vpop.f32.mrf.mxu0
    %v8445 = vadd.f32 %v8432, %v8444
    %v8446 = vpop.f32.mrf.mxu0
    %8447 = vdwg.mxu0
    %8448 = vmatpush.bf16.msra.mxu0 %v8094
    %8449 = vmatpush.bf16.msra.mxu0 %v8086
    %8450 = vmatpush.bf16.msra.mxu0 %v8078
    %8451 = vmatpush.bf16.msra.mxu0 %v8070
    %8452 = vmatpush.bf16.msra.mxu0 %v8062
    %8453 = vmatpush.bf16.msra.mxu0 %v8054
    %8454 = vmatpush.bf16.msra.mxu0 %v8046
    %8455 = vmatpush.bf16.msra.mxu0 %v8038
    %8456 = vmatmul.bf16.gmra.mxu0 %v6866
    %v8457 = vpop.f32.mrf.mxu0
    %v8458 = vadd.f32 %v8445, %v8457
    %v8459 = vpop.f32.mrf.mxu0
    %8460 = vdwg.mxu0
    %8461 = vmatpush.bf16.msra.mxu0 %v8158
    %8462 = vmatpush.bf16.msra.mxu0 %v8150
    %8463 = vmatpush.bf16.msra.mxu0 %v8142
    %8464 = vmatpush.bf16.msra.mxu0 %v8134
    %8465 = vmatpush.bf16.msra.mxu0 %v8126
    %8466 = vmatpush.bf16.msra.mxu0 %v8118
    %8467 = vmatpush.bf16.msra.mxu0 %v8110
    %8468 = vmatpush.bf16.msra.mxu0 %v8102
    %8469 = vmatmul.bf16.gmra.mxu0 %v6867
    %v8470 = vpop.f32.mrf.mxu0
    %v8471 = vadd.f32 %v8458, %v8470
    %v8472 = vpop.f32.mrf.mxu0
    %8473 = vdwg.mxu0
    %8474 = vmatpush.bf16.msra.mxu0 %v7967
    %8475 = vmatpush.bf16.msra.mxu0 %v7959
    %8476 = vmatpush.bf16.msra.mxu0 %v7951
    %8477 = vmatpush.bf16.msra.mxu0 %v7943
    %8478 = vmatpush.bf16.msra.mxu0 %v7935
    %8479 = vmatpush.bf16.msra.mxu0 %v7927
    %8480 = vmatpush.bf16.msra.mxu0 %v7919
    %8481 = vmatpush.bf16.msra.mxu0 %v7911
    %8482 = vmatmul.bf16.gmra.mxu0 %v6864
    %v8483 = vpop.f32.mrf.mxu0
    %v8484 = vadd.f32 %v7127, %v8483
    %v8485 = vpop.f32.mrf.mxu0
    %8486 = vdwg.mxu0
    %8487 = vmatpush.bf16.msra.mxu0 %v8031
    %8488 = vmatpush.bf16.msra.mxu0 %v8023
    %8489 = vmatpush.bf16.msra.mxu0 %v8015
    %8490 = vmatpush.bf16.msra.mxu0 %v8007
    %8491 = vmatpush.bf16.msra.mxu0 %v7999
    %8492 = vmatpush.bf16.msra.mxu0 %v7991
    %8493 = vmatpush.bf16.msra.mxu0 %v7983
    %8494 = vmatpush.bf16.msra.mxu0 %v7975
    %8495 = vmatmul.bf16.gmra.mxu0 %v6865
    %v8496 = vpop.f32.mrf.mxu0
    %v8497 = vadd.f32 %v8484, %v8496
    %v8498 = vpop.f32.mrf.mxu0
    %8499 = vdwg.mxu0
    %8500 = vmatpush.bf16.msra.mxu0 %v8095
    %8501 = vmatpush.bf16.msra.mxu0 %v8087
    %8502 = vmatpush.bf16.msra.mxu0 %v8079
    %8503 = vmatpush.bf16.msra.mxu0 %v8071
    %8504 = vmatpush.bf16.msra.mxu0 %v8063
    %8505 = vmatpush.bf16.msra.mxu0 %v8055
    %8506 = vmatpush.bf16.msra.mxu0 %v8047
    %8507 = vmatpush.bf16.msra.mxu0 %v8039
    %8508 = vmatmul.bf16.gmra.mxu0 %v6866
    %v8509 = vpop.f32.mrf.mxu0
    %v8510 = vadd.f32 %v8497, %v8509
    %v8511 = vpop.f32.mrf.mxu0
    %8512 = vdwg.mxu0
    %8513 = vmatpush.bf16.msra.mxu0 %v8159
    %8514 = vmatpush.bf16.msra.mxu0 %v8151
    %8515 = vmatpush.bf16.msra.mxu0 %v8143
    %8516 = vmatpush.bf16.msra.mxu0 %v8135
    %8517 = vmatpush.bf16.msra.mxu0 %v8127
    %8518 = vmatpush.bf16.msra.mxu0 %v8119
    %8519 = vmatpush.bf16.msra.mxu0 %v8111
    %8520 = vmatpush.bf16.msra.mxu0 %v8103
    %8521 = vmatmul.bf16.gmra.mxu0 %v6867
    %v8522 = vpop.f32.mrf.mxu0
    %v8523 = vadd.f32 %v8510, %v8522
    %v8524 = vpop.f32.mrf.mxu0
    %8525 = vdwg.mxu0
    %8526 = vmatpush.bf16.msra.mxu0 %v7968
    %8527 = vmatpush.bf16.msra.mxu0 %v7960
    %8528 = vmatpush.bf16.msra.mxu0 %v7952
    %8529 = vmatpush.bf16.msra.mxu0 %v7944
    %8530 = vmatpush.bf16.msra.mxu0 %v7936
    %8531 = vmatpush.bf16.msra.mxu0 %v7928
    %8532 = vmatpush.bf16.msra.mxu0 %v7920
    %8533 = vmatpush.bf16.msra.mxu0 %v7912
    %8534 = vmatmul.bf16.gmra.mxu0 %v6864
    %v8535 = vpop.f32.mrf.mxu0
    %v8536 = vadd.f32 %v7128, %v8535
    %v8537 = vpop.f32.mrf.mxu0
    %8538 = vdwg.mxu0
    %8539 = vmatpush.bf16.msra.mxu0 %v8032
    %8540 = vmatpush.bf16.msra.mxu0 %v8024
    %8541 = vmatpush.bf16.msra.mxu0 %v8016
    %8542 = vmatpush.bf16.msra.mxu0 %v8008
    %8543 = vmatpush.bf16.msra.mxu0 %v8000
    %8544 = vmatpush.bf16.msra.mxu0 %v7992
    %8545 = vmatpush.bf16.msra.mxu0 %v7984
    %8546 = vmatpush.bf16.msra.mxu0 %v7976
    %8547 = vmatmul.bf16.gmra.mxu0 %v6865
    %v8548 = vpop.f32.mrf.mxu0
    %v8549 = vadd.f32 %v8536, %v8548
    %v8550 = vpop.f32.mrf.mxu0
    %8551 = vdwg.mxu0
    %8552 = vmatpush.bf16.msra.mxu0 %v8096
    %8553 = vmatpush.bf16.msra.mxu0 %v8088
    %8554 = vmatpush.bf16.msra.mxu0 %v8080
    %8555 = vmatpush.bf16.msra.mxu0 %v8072
    %8556 = vmatpush.bf16.msra.mxu0 %v8064
    %8557 = vmatpush.bf16.msra.mxu0 %v8056
    %8558 = vmatpush.bf16.msra.mxu0 %v8048
    %8559 = vmatpush.bf16.msra.mxu0 %v8040
    %8560 = vmatmul.bf16.gmra.mxu0 %v6866
    %v8561 = vpop.f32.mrf.mxu0
    %v8562 = vadd.f32 %v8549, %v8561
    %v8563 = vpop.f32.mrf.mxu0
    %8564 = vdwg.mxu0
    %8565 = vmatpush.bf16.msra.mxu0 %v8160
    %8566 = vmatpush.bf16.msra.mxu0 %v8152
    %8567 = vmatpush.bf16.msra.mxu0 %v8144
    %8568 = vmatpush.bf16.msra.mxu0 %v8136
    %8569 = vmatpush.bf16.msra.mxu0 %v8128
    %8570 = vmatpush.bf16.msra.mxu0 %v8120
    %8571 = vmatpush.bf16.msra.mxu0 %v8112
    %8572 = vmatpush.bf16.msra.mxu0 %v8104
    %8573 = vmatmul.bf16.gmra.mxu0 %v6867
    %v8574 = vpop.f32.mrf.mxu0
    %v8575 = vadd.f32 %v8562, %v8574
    %v8576 = vpop.f32.mrf.mxu0
    %8577 = vdwg.mxu0
    %8578 = vmatpush.bf16.msra.mxu0 %v7969
    %8579 = vmatpush.bf16.msra.mxu0 %v7961
    %8580 = vmatpush.bf16.msra.mxu0 %v7953
    %8581 = vmatpush.bf16.msra.mxu0 %v7945
    %8582 = vmatpush.bf16.msra.mxu0 %v7937
    %8583 = vmatpush.bf16.msra.mxu0 %v7929
    %8584 = vmatpush.bf16.msra.mxu0 %v7921
    %8585 = vmatpush.bf16.msra.mxu0 %v7913
    %8586 = vmatmul.bf16.gmra.mxu0 %v6864
    %v8587 = vpop.f32.mrf.mxu0
    %v8588 = vadd.f32 %v7129, %v8587
    %v8589 = vpop.f32.mrf.mxu0
    %8590 = vdwg.mxu0
    %8591 = vmatpush.bf16.msra.mxu0 %v8033
    %8592 = vmatpush.bf16.msra.mxu0 %v8025
    %8593 = vmatpush.bf16.msra.mxu0 %v8017
    %8594 = vmatpush.bf16.msra.mxu0 %v8009
    %8595 = vmatpush.bf16.msra.mxu0 %v8001
    %8596 = vmatpush.bf16.msra.mxu0 %v7993
    %8597 = vmatpush.bf16.msra.mxu0 %v7985
    %8598 = vmatpush.bf16.msra.mxu0 %v7977
    %8599 = vmatmul.bf16.gmra.mxu0 %v6865
    %v8600 = vpop.f32.mrf.mxu0
    %v8601 = vadd.f32 %v8588, %v8600
    %v8602 = vpop.f32.mrf.mxu0
    %8603 = vdwg.mxu0
    %8604 = vmatpush.bf16.msra.mxu0 %v8097
    %8605 = vmatpush.bf16.msra.mxu0 %v8089
    %8606 = vmatpush.bf16.msra.mxu0 %v8081
    %8607 = vmatpush.bf16.msra.mxu0 %v8073
    %8608 = vmatpush.bf16.msra.mxu0 %v8065
    %8609 = vmatpush.bf16.msra.mxu0 %v8057
    %8610 = vmatpush.bf16.msra.mxu0 %v8049
    %8611 = vmatpush.bf16.msra.mxu0 %v8041
    %8612 = vmatmul.bf16.gmra.mxu0 %v6866
    %v8613 = vpop.f32.mrf.mxu0
    %v8614 = vadd.f32 %v8601, %v8613
    %v8615 = vpop.f32.mrf.mxu0
    %8616 = vdwg.mxu0
    %8617 = vmatpush.bf16.msra.mxu0 %v8161
    %8618 = vmatpush.bf16.msra.mxu0 %v8153
    %8619 = vmatpush.bf16.msra.mxu0 %v8145
    %8620 = vmatpush.bf16.msra.mxu0 %v8137
    %8621 = vmatpush.bf16.msra.mxu0 %v8129
    %8622 = vmatpush.bf16.msra.mxu0 %v8121
    %8623 = vmatpush.bf16.msra.mxu0 %v8113
    %8624 = vmatpush.bf16.msra.mxu0 %v8105
    %8625 = vmatmul.bf16.gmra.mxu0 %v6867
    %v8626 = vpop.f32.mrf.mxu0
    %v8627 = vadd.f32 %v8614, %v8626
    %v8628 = vpop.f32.mrf.mxu0
    %8629 = vdwg.mxu0
    %8630 = vmatpush.bf16.msra.mxu0 %v7970
    %8631 = vmatpush.bf16.msra.mxu0 %v7962
    %8632 = vmatpush.bf16.msra.mxu0 %v7954
    %8633 = vmatpush.bf16.msra.mxu0 %v7946
    %8634 = vmatpush.bf16.msra.mxu0 %v7938
    %8635 = vmatpush.bf16.msra.mxu0 %v7930
    %8636 = vmatpush.bf16.msra.mxu0 %v7922
    %8637 = vmatpush.bf16.msra.mxu0 %v7914
    %8638 = vmatmul.bf16.gmra.mxu0 %v6864
    %v8639 = vpop.f32.mrf.mxu0
    %v8640 = vadd.f32 %v7130, %v8639
    %v8641 = vpop.f32.mrf.mxu0
    %8642 = vdwg.mxu0
    %8643 = vmatpush.bf16.msra.mxu0 %v8034
    %8644 = vmatpush.bf16.msra.mxu0 %v8026
    %8645 = vmatpush.bf16.msra.mxu0 %v8018
    %8646 = vmatpush.bf16.msra.mxu0 %v8010
    %8647 = vmatpush.bf16.msra.mxu0 %v8002
    %8648 = vmatpush.bf16.msra.mxu0 %v7994
    %8649 = vmatpush.bf16.msra.mxu0 %v7986
    %8650 = vmatpush.bf16.msra.mxu0 %v7978
    %8651 = vmatmul.bf16.gmra.mxu0 %v6865
    %v8652 = vpop.f32.mrf.mxu0
    %v8653 = vadd.f32 %v8640, %v8652
    %v8654 = vpop.f32.mrf.mxu0
    %8655 = vdwg.mxu0
    %8656 = vmatpush.bf16.msra.mxu0 %v8098
    %8657 = vmatpush.bf16.msra.mxu0 %v8090
    %8658 = vmatpush.bf16.msra.mxu0 %v8082
    %8659 = vmatpush.bf16.msra.mxu0 %v8074
    %8660 = vmatpush.bf16.msra.mxu0 %v8066
    %8661 = vmatpush.bf16.msra.mxu0 %v8058
    %8662 = vmatpush.bf16.msra.mxu0 %v8050
    %8663 = vmatpush.bf16.msra.mxu0 %v8042
    %8664 = vmatmul.bf16.gmra.mxu0 %v6866
    %v8665 = vpop.f32.mrf.mxu0
    %v8666 = vadd.f32 %v8653, %v8665
    %v8667 = vpop.f32.mrf.mxu0
    %8668 = vdwg.mxu0
    %8669 = vmatpush.bf16.msra.mxu0 %v8162
    %8670 = vmatpush.bf16.msra.mxu0 %v8154
    %8671 = vmatpush.bf16.msra.mxu0 %v8146
    %8672 = vmatpush.bf16.msra.mxu0 %v8138
    %8673 = vmatpush.bf16.msra.mxu0 %v8130
    %8674 = vmatpush.bf16.msra.mxu0 %v8122
    %8675 = vmatpush.bf16.msra.mxu0 %v8114
    %8676 = vmatpush.bf16.msra.mxu0 %v8106
    %8677 = vmatmul.bf16.gmra.mxu0 %v6867
    %v8678 = vpop.f32.mrf.mxu0
    %v8679 = vadd.f32 %v8666, %v8678
    %v8680 = vpop.f32.mrf.mxu0
    %8681 = vdwg.mxu0
    %8682 = vmatpush.bf16.msra.mxu0 %v7971
    %8683 = vmatpush.bf16.msra.mxu0 %v7963
    %8684 = vmatpush.bf16.msra.mxu0 %v7955
    %8685 = vmatpush.bf16.msra.mxu0 %v7947
    %8686 = vmatpush.bf16.msra.mxu0 %v7939
    %8687 = vmatpush.bf16.msra.mxu0 %v7931
    %8688 = vmatpush.bf16.msra.mxu0 %v7923
    %8689 = vmatpush.bf16.msra.mxu0 %v7915
    %8690 = vmatmul.bf16.gmra.mxu0 %v6864
    %v8691 = vpop.f32.mrf.mxu0
    %v8692 = vadd.f32 %v7131, %v8691
    %v8693 = vpop.f32.mrf.mxu0
    %8694 = vdwg.mxu0
    %8695 = vmatpush.bf16.msra.mxu0 %v8035
    %8696 = vmatpush.bf16.msra.mxu0 %v8027
    %8697 = vmatpush.bf16.msra.mxu0 %v8019
    %8698 = vmatpush.bf16.msra.mxu0 %v8011
    %8699 = vmatpush.bf16.msra.mxu0 %v8003
    %8700 = vmatpush.bf16.msra.mxu0 %v7995
    %8701 = vmatpush.bf16.msra.mxu0 %v7987
    %8702 = vmatpush.bf16.msra.mxu0 %v7979
    %8703 = vmatmul.bf16.gmra.mxu0 %v6865
    %v8704 = vpop.f32.mrf.mxu0
    %v8705 = vadd.f32 %v8692, %v8704
    %v8706 = vpop.f32.mrf.mxu0
    %8707 = vdwg.mxu0
    %8708 = vmatpush.bf16.msra.mxu0 %v8099
    %8709 = vmatpush.bf16.msra.mxu0 %v8091
    %8710 = vmatpush.bf16.msra.mxu0 %v8083
    %8711 = vmatpush.bf16.msra.mxu0 %v8075
    %8712 = vmatpush.bf16.msra.mxu0 %v8067
    %8713 = vmatpush.bf16.msra.mxu0 %v8059
    %8714 = vmatpush.bf16.msra.mxu0 %v8051
    %8715 = vmatpush.bf16.msra.mxu0 %v8043
    %8716 = vmatmul.bf16.gmra.mxu0 %v6866
    %v8717 = vpop.f32.mrf.mxu0
    %v8718 = vadd.f32 %v8705, %v8717
    %v8719 = vpop.f32.mrf.mxu0
    %8720 = vdwg.mxu0
    %8721 = vmatpush.bf16.msra.mxu0 %v8163
    %8722 = vmatpush.bf16.msra.mxu0 %v8155
    %8723 = vmatpush.bf16.msra.mxu0 %v8147
    %8724 = vmatpush.bf16.msra.mxu0 %v8139
    %8725 = vmatpush.bf16.msra.mxu0 %v8131
    %8726 = vmatpush.bf16.msra.mxu0 %v8123
    %8727 = vmatpush.bf16.msra.mxu0 %v8115
    %8728 = vmatpush.bf16.msra.mxu0 %v8107
    %8729 = vmatmul.bf16.gmra.mxu0 %v6867
    %v8730 = vpop.f32.mrf.mxu0
    %v8731 = vadd.f32 %v8718, %v8730
    %v8732 = vpop.f32.mrf.mxu0
    %8733 = vdwg.mxu0
    %8734 = vmatpush.bf16.msra.mxu0 %v7972
    %8735 = vmatpush.bf16.msra.mxu0 %v7964
    %8736 = vmatpush.bf16.msra.mxu0 %v7956
    %8737 = vmatpush.bf16.msra.mxu0 %v7948
    %8738 = vmatpush.bf16.msra.mxu0 %v7940
    %8739 = vmatpush.bf16.msra.mxu0 %v7932
    %8740 = vmatpush.bf16.msra.mxu0 %v7924
    %8741 = vmatpush.bf16.msra.mxu0 %v7916
    %8742 = vmatmul.bf16.gmra.mxu0 %v6864
    %v8743 = vpop.f32.mrf.mxu0
    %v8744 = vadd.f32 %v7132, %v8743
    %v8745 = vpop.f32.mrf.mxu0
    %8746 = vdwg.mxu0
    %8747 = vmatpush.bf16.msra.mxu0 %v8036
    %8748 = vmatpush.bf16.msra.mxu0 %v8028
    %8749 = vmatpush.bf16.msra.mxu0 %v8020
    %8750 = vmatpush.bf16.msra.mxu0 %v8012
    %8751 = vmatpush.bf16.msra.mxu0 %v8004
    %8752 = vmatpush.bf16.msra.mxu0 %v7996
    %8753 = vmatpush.bf16.msra.mxu0 %v7988
    %8754 = vmatpush.bf16.msra.mxu0 %v7980
    %8755 = vmatmul.bf16.gmra.mxu0 %v6865
    %v8756 = vpop.f32.mrf.mxu0
    %v8757 = vadd.f32 %v8744, %v8756
    %v8758 = vpop.f32.mrf.mxu0
    %8759 = vdwg.mxu0
    %8760 = vmatpush.bf16.msra.mxu0 %v8100
    %8761 = vmatpush.bf16.msra.mxu0 %v8092
    %8762 = vmatpush.bf16.msra.mxu0 %v8084
    %8763 = vmatpush.bf16.msra.mxu0 %v8076
    %8764 = vmatpush.bf16.msra.mxu0 %v8068
    %8765 = vmatpush.bf16.msra.mxu0 %v8060
    %8766 = vmatpush.bf16.msra.mxu0 %v8052
    %8767 = vmatpush.bf16.msra.mxu0 %v8044
    %8768 = vmatmul.bf16.gmra.mxu0 %v6866
    %v8769 = vpop.f32.mrf.mxu0
    %v8770 = vadd.f32 %v8757, %v8769
    %v8771 = vpop.f32.mrf.mxu0
    %8772 = vdwg.mxu0
    %8773 = vmatpush.bf16.msra.mxu0 %v8164
    %8774 = vmatpush.bf16.msra.mxu0 %v8156
    %8775 = vmatpush.bf16.msra.mxu0 %v8148
    %8776 = vmatpush.bf16.msra.mxu0 %v8140
    %8777 = vmatpush.bf16.msra.mxu0 %v8132
    %8778 = vmatpush.bf16.msra.mxu0 %v8124
    %8779 = vmatpush.bf16.msra.mxu0 %v8116
    %8780 = vmatpush.bf16.msra.mxu0 %v8108
    %8781 = vmatmul.bf16.gmra.mxu0 %v6867
    %v8782 = vpop.f32.mrf.mxu0
    %v8783 = vadd.f32 %v8770, %v8782
    %v8784 = vpop.f32.mrf.mxu0
    %8785 = vdwg.mxu0
    %8786 = vmatpush.bf16.msra.mxu0 %v7973
    %8787 = vmatpush.bf16.msra.mxu0 %v7965
    %8788 = vmatpush.bf16.msra.mxu0 %v7957
    %8789 = vmatpush.bf16.msra.mxu0 %v7949
    %8790 = vmatpush.bf16.msra.mxu0 %v7941
    %8791 = vmatpush.bf16.msra.mxu0 %v7933
    %8792 = vmatpush.bf16.msra.mxu0 %v7925
    %8793 = vmatpush.bf16.msra.mxu0 %v7917
    %8794 = vmatmul.bf16.gmra.mxu0 %v6864
    %v8795 = vpop.f32.mrf.mxu0
    %v8796 = vadd.f32 %v7133, %v8795
    %v8797 = vpop.f32.mrf.mxu0
    %8798 = vdwg.mxu0
    %8799 = vmatpush.bf16.msra.mxu0 %v8037
    %8800 = vmatpush.bf16.msra.mxu0 %v8029
    %8801 = vmatpush.bf16.msra.mxu0 %v8021
    %8802 = vmatpush.bf16.msra.mxu0 %v8013
    %8803 = vmatpush.bf16.msra.mxu0 %v8005
    %8804 = vmatpush.bf16.msra.mxu0 %v7997
    %8805 = vmatpush.bf16.msra.mxu0 %v7989
    %8806 = vmatpush.bf16.msra.mxu0 %v7981
    %8807 = vmatmul.bf16.gmra.mxu0 %v6865
    %v8808 = vpop.f32.mrf.mxu0
    %v8809 = vadd.f32 %v8796, %v8808
    %v8810 = vpop.f32.mrf.mxu0
    %8811 = vdwg.mxu0
    %8812 = vmatpush.bf16.msra.mxu0 %v8101
    %8813 = vmatpush.bf16.msra.mxu0 %v8093
    %8814 = vmatpush.bf16.msra.mxu0 %v8085
    %8815 = vmatpush.bf16.msra.mxu0 %v8077
    %8816 = vmatpush.bf16.msra.mxu0 %v8069
    %8817 = vmatpush.bf16.msra.mxu0 %v8061
    %8818 = vmatpush.bf16.msra.mxu0 %v8053
    %8819 = vmatpush.bf16.msra.mxu0 %v8045
    %8820 = vmatmul.bf16.gmra.mxu0 %v6866
    %v8821 = vpop.f32.mrf.mxu0
    %v8822 = vadd.f32 %v8809, %v8821
    %v8823 = vpop.f32.mrf.mxu0
    %8824 = vdwg.mxu0
    %8825 = vmatpush.bf16.msra.mxu0 %v8165
    %8826 = vmatpush.bf16.msra.mxu0 %v8157
    %8827 = vmatpush.bf16.msra.mxu0 %v8149
    %8828 = vmatpush.bf16.msra.mxu0 %v8141
    %8829 = vmatpush.bf16.msra.mxu0 %v8133
    %8830 = vmatpush.bf16.msra.mxu0 %v8125
    %8831 = vmatpush.bf16.msra.mxu0 %v8117
    %8832 = vmatpush.bf16.msra.mxu0 %v8109
    %8833 = vmatmul.bf16.gmra.mxu0 %v6867
    %v8834 = vpop.f32.mrf.mxu0
    %v8835 = vadd.f32 %v8822, %v8834
    %v8836 = vpop.f32.mrf.mxu0
    %8837 = vdwg.mxu0
    %v8838 = vxor.u32 %v8471, 2147483648
    %v8839 = vxor.u32 %v8523, 2147483648
    %v8840 = vxor.u32 %v8575, 2147483648
    %v8841 = vxor.u32 %v8627, 2147483648
    %v8842 = vxor.u32 %v8679, 2147483648
    %v8843 = vxor.u32 %v8731, 2147483648
    %v8844 = vxor.u32 %v8783, 2147483648
    %v8845 = vxor.u32 %v8835, 2147483648
    %v8846 = vmul.f32 %v8838, 1.442695
    %v8847 = vpow.pop %v8846
    %v8848 = vmul.f32 %v8839, 1.442695
    %v8849 = vpow.pop %v8848
    %v8850 = vmul.f32 %v8840, 1.442695
    %v8851 = vpow.pop %v8850
    %v8852 = vmul.f32 %v8841, 1.442695
    %v8853 = vpow.pop %v8852
    %v8854 = vmul.f32 %v8842, 1.442695
    %v8855 = vpow.pop %v8854
    %v8856 = vmul.f32 %v8843, 1.442695
    %v8857 = vpow.pop %v8856
    %v8858 = vmul.f32 %v8844, 1.442695
    %v8859 = vpow.pop %v8858
    %v8860 = vmul.f32 %v8845, 1.442695
    %v8861 = vpow.pop %v8860
    %v8862 = vadd.f32 %v8847, 1.0
    %v8863 = vadd.f32 %v8849, 1.0
    %v8864 = vadd.f32 %v8851, 1.0
    %v8865 = vadd.f32 %v8853, 1.0
    %v8866 = vadd.f32 %v8855, 1.0
    %v8867 = vadd.f32 %v8857, 1.0
    %v8868 = vadd.f32 %v8859, 1.0
    %v8869 = vadd.f32 %v8861, 1.0
    %v8870 = vrcp.pop %v8862
    %v8871 = vmul.f32 %v8862, %v8870
    %v8872 = vsub.f32 1.0, %v8871
    %v8873 = vmul.f32 %v8870, %v8872
    %v8874 = vadd.f32 %v8870, %v8873
    %vm8875 = vweird.f32 %v8862
    %vm8876 = vweird.f32 %v8870
    %vm8877 = vmor %vm8875, %vm8876
    %v8878 = vsel %vm8877, %v8870, %v8874
    %v8879 = vand.u32 2147483647, %v8862
    %vm8880 = vcmp.eq.f32.partialorder %v8879, 8.507059e+37
    %v8881 = vand.u32 %v8862, 2147483648
    %v8882 = vor.u32 1.1754944e-38, %v8881
    %v8883 = vsel %vm8880, %v8882, %v8878
    %v8884 = vmul.f32 1.0, %v8883
    %v8885 = vrcp.pop %v8863
    %v8886 = vmul.f32 %v8863, %v8885
    %v8887 = vsub.f32 1.0, %v8886
    %v8888 = vmul.f32 %v8885, %v8887
    %v8889 = vadd.f32 %v8885, %v8888
    %vm8890 = vweird.f32 %v8863
    %vm8891 = vweird.f32 %v8885
    %vm8892 = vmor %vm8890, %vm8891
    %v8893 = vsel %vm8892, %v8885, %v8889
    %v8894 = vand.u32 2147483647, %v8863
    %vm8895 = vcmp.eq.f32.partialorder %v8894, 8.507059e+37
    %v8896 = vand.u32 %v8863, 2147483648
    %v8897 = vor.u32 1.1754944e-38, %v8896
    %v8898 = vsel %vm8895, %v8897, %v8893
    %v8899 = vmul.f32 1.0, %v8898
    %v8900 = vrcp.pop %v8864
    %v8901 = vmul.f32 %v8864, %v8900
    %v8902 = vsub.f32 1.0, %v8901
    %v8903 = vmul.f32 %v8900, %v8902
    %v8904 = vadd.f32 %v8900, %v8903
    %vm8905 = vweird.f32 %v8864
    %vm8906 = vweird.f32 %v8900
    %vm8907 = vmor %vm8905, %vm8906
    %v8908 = vsel %vm8907, %v8900, %v8904
    %v8909 = vand.u32 2147483647, %v8864
    %vm8910 = vcmp.eq.f32.partialorder %v8909, 8.507059e+37
    %v8911 = vand.u32 %v8864, 2147483648
    %v8912 = vor.u32 1.1754944e-38, %v8911
    %v8913 = vsel %vm8910, %v8912, %v8908
    %v8914 = vmul.f32 1.0, %v8913
    %v8915 = vrcp.pop %v8865
    %v8916 = vmul.f32 %v8865, %v8915
    %v8917 = vsub.f32 1.0, %v8916
    %v8918 = vmul.f32 %v8915, %v8917
    %v8919 = vadd.f32 %v8915, %v8918
    %vm8920 = vweird.f32 %v8865
    %vm8921 = vweird.f32 %v8915
    %vm8922 = vmor %vm8920, %vm8921
    %v8923 = vsel %vm8922, %v8915, %v8919
    %v8924 = vand.u32 2147483647, %v8865
    %vm8925 = vcmp.eq.f32.partialorder %v8924, 8.507059e+37
    %v8926 = vand.u32 %v8865, 2147483648
    %v8927 = vor.u32 1.1754944e-38, %v8926
    %v8928 = vsel %vm8925, %v8927, %v8923
    %v8929 = vmul.f32 1.0, %v8928
    %v8930 = vrcp.pop %v8866
    %v8931 = vmul.f32 %v8866, %v8930
    %v8932 = vsub.f32 1.0, %v8931
    %v8933 = vmul.f32 %v8930, %v8932
    %v8934 = vadd.f32 %v8930, %v8933
    %vm8935 = vweird.f32 %v8866
    %vm8936 = vweird.f32 %v8930
    %vm8937 = vmor %vm8935, %vm8936
    %v8938 = vsel %vm8937, %v8930, %v8934
    %v8939 = vand.u32 2147483647, %v8866
    %vm8940 = vcmp.eq.f32.partialorder %v8939, 8.507059e+37
    %v8941 = vand.u32 %v8866, 2147483648
    %v8942 = vor.u32 1.1754944e-38, %v8941
    %v8943 = vsel %vm8940, %v8942, %v8938
    %v8944 = vmul.f32 1.0, %v8943
    %v8945 = vrcp.pop %v8867
    %v8946 = vmul.f32 %v8867, %v8945
    %v8947 = vsub.f32 1.0, %v8946
    %v8948 = vmul.f32 %v8945, %v8947
    %v8949 = vadd.f32 %v8945, %v8948
    %vm8950 = vweird.f32 %v8867
    %vm8951 = vweird.f32 %v8945
    %vm8952 = vmor %vm8950, %vm8951
    %v8953 = vsel %vm8952, %v8945, %v8949
    %v8954 = vand.u32 2147483647, %v8867
    %vm8955 = vcmp.eq.f32.partialorder %v8954, 8.507059e+37
    %v8956 = vand.u32 %v8867, 2147483648
    %v8957 = vor.u32 1.1754944e-38, %v8956
    %v8958 = vsel %vm8955, %v8957, %v8953
    %v8959 = vmul.f32 1.0, %v8958
    %v8960 = vrcp.pop %v8868
    %v8961 = vmul.f32 %v8868, %v8960
    %v8962 = vsub.f32 1.0, %v8961
    %v8963 = vmul.f32 %v8960, %v8962
    %v8964 = vadd.f32 %v8960, %v8963
    %vm8965 = vweird.f32 %v8868
    %vm8966 = vweird.f32 %v8960
    %vm8967 = vmor %vm8965, %vm8966
    %v8968 = vsel %vm8967, %v8960, %v8964
    %v8969 = vand.u32 2147483647, %v8868
    %vm8970 = vcmp.eq.f32.partialorder %v8969, 8.507059e+37
    %v8971 = vand.u32 %v8868, 2147483648
    %v8972 = vor.u32 1.1754944e-38, %v8971
    %v8973 = vsel %vm8970, %v8972, %v8968
    %v8974 = vmul.f32 1.0, %v8973
    %v8975 = vrcp.pop %v8869
    %v8976 = vmul.f32 %v8869, %v8975
    %v8977 = vsub.f32 1.0, %v8976
    %v8978 = vmul.f32 %v8975, %v8977
    %v8979 = vadd.f32 %v8975, %v8978
    %vm8980 = vweird.f32 %v8869
    %vm8981 = vweird.f32 %v8975
    %vm8982 = vmor %vm8980, %vm8981
    %v8983 = vsel %vm8982, %v8975, %v8979
    %v8984 = vand.u32 2147483647, %v8869
    %vm8985 = vcmp.eq.f32.partialorder %v8984, 8.507059e+37
    %v8986 = vand.u32 %v8869, 2147483648
    %v8987 = vor.u32 1.1754944e-38, %v8986
    %v8988 = vsel %vm8985, %v8987, %v8983
    %v8989 = vmul.f32 1.0, %v8988
    %v8998 = vrot.slane %v8899, 6
    %v8999 = vrot.slane %v8914, 4
    %v9000 = vrot.slane %v8929, 2
    %v9001 = vrot.slane %v8959, 6
    %v9002 = vrot.slane %v8974, 4
    %v9003 = vrot.slane %v8989, 2
    %vm9004 = vcmask 1041408
    %v9005 = vsel %vm9004, %v8884, %v8998
    %vm9006 = vcmask 1045508
    %v9007 = vsel %vm9006, %v8999, %v9000
    %vm9008 = vcmask 1043456
    %v9009 = vsel %vm9008, %v9005, %v9007
    %v9010 = vsel %vm9004, %v8944, %v9001
    %v9011 = vsel %vm9006, %v9002, %v9003
    %v9012 = vsel %vm9008, %v9010, %v9011
    %9015 = vst [vmem:[%s21] sm:$0xff] %v9009
    %9016 = vst [vmem:[%s21 + $0x8] sm:$0xff] %v9012
    // Predicated region
    $region118: #{inertial_autoencoder_forward.1} parent=1 // pred_check
      _
    $region119: #{inertial_autoencoder_forward.1} parent=1 // pred_check_branch
      %9018 = sbr.rel (0) target = $region121
    $region120: #{inertial_autoencoder_forward.1} parent=1 // pred_region
      _
    $region121: #{inertial_autoencoder_forward.1} parent=1 // pred_fallthru
      _
    // Predicated region
    $region122: #{inertial_autoencoder_forward.1} parent=1 // pred_check
      _
    $region123: #{inertial_autoencoder_forward.1} parent=1 // pred_check_branch
      %9020 = sbr.rel (0) target = $region125
    $region124: #{inertial_autoencoder_forward.1} parent=1 // pred_region
      _
    $region125: #{inertial_autoencoder_forward.1} parent=1 // pred_fallthru
      _
    // Predicated region
    $region126: #{inertial_autoencoder_forward.1} parent=1 // pred_check
      _
    $region127: #{inertial_autoencoder_forward.1} parent=1 // pred_check_branch
      %9022 = sbr.rel (0) target = $region129
    $region128: #{inertial_autoencoder_forward.1} parent=1 // pred_region
      %9024 = vsyncadd [#allocation4], 0
      %s9026 = sshll.u32 [#allocation16], 4
      %s9027 = int_to_ptr.vmem [resolvable:$true] %s9026
      %s9028 = sshll.u32 %s23, 4
      %s9029 = int_to_ptr.hbm [resolvable:$true] %s9028
      %9031 = dma.vmem_to_hbm [thread:$0]  %s9027, 32, %s9029, [#allocation4]
    $region129: #{inertial_autoencoder_forward.1} parent=1 // pred_fallthru
      _
    // Predicated region
    $region130: #{inertial_autoencoder_forward.1} parent=1 // pred_check
      _
    $region131: #{inertial_autoencoder_forward.1} parent=1 // pred_check_branch
      %9033 = sbr.rel (0) target = $region133
    $region132: #{inertial_autoencoder_forward.1} parent=1 // pred_region
      _
    $region133: #{inertial_autoencoder_forward.1} parent=1 // pred_fallthru
      _
    // Predicated region
    $region134: #{inertial_autoencoder_forward.1} parent=1 // pred_check
      _
    $region135: #{inertial_autoencoder_forward.1} parent=1 // pred_check_branch
      %9035 = sbr.rel (0) target = $region137
    $region136: #{inertial_autoencoder_forward.1} parent=1 // pred_region
      _
    $region137: #{inertial_autoencoder_forward.1} parent=1 // pred_fallthru
      _
    // Predicated region
    $region138: #{inertial_autoencoder_forward.1} parent=1 // pred_check
      _
    $region139: #{inertial_autoencoder_forward.1} parent=1 // pred_check_branch
      %9037 = sbr.rel (0) target = $region141
    $region140: #{inertial_autoencoder_forward.1} parent=1 // pred_region
      %9039 = dma.done [#allocation4], 32
    $region141: #{inertial_autoencoder_forward.1} parent=1 // pred_fallthru
      _
    %9040 = vsyncpa [#allocation3], 1
    %9041 = vsyncpa [#allocation6], 1
    %9042 = vsyncpa [#allocation9], 1
    %9043 = vsyncpa [#allocation12], 1
    %9044 = vsyncpa [#allocation15], 1
    %9045 = vsyncpa [#allocation4], 1

</llo_original>
